<compile_context>
chip_gen: v7x
topology: tpu7x:2x2x1
jax: 0.10.0
libtpu: 0.0.40
codegen_flags: <defaults>
</compile_context>

<pallas_src>
import jax
import jax.numpy as jnp
from jax.experimental import pallas as pl
from jax.experimental.pallas import tpu as pltpu


# ----------------------------------------------------------------------------
# Fused kernel: one invocation computes the full network for one image.
# ----------------------------------------------------------------------------
def _cnn_kernel(p_ref,
                w1_ref, b1_ref, w2_ref, b2_ref, w3_ref, b3_ref,
                wd_ref, bd_ref, wo_ref, bo_ref,
                o_ref,
                p1e_ref, p1o_ref, p2_ref):
    f32 = jnp.float32
    C1 = w1_ref.shape[1]                 # 64
    C2 = w2_ref.shape[3]                 # 128
    C3 = w3_ref.shape[3]                 # 256
    H = p1e_ref.shape[0] - 2             # image height
    Wh = p1e_ref.shape[1] - 1            # W // 2
    Hp, Wp = H // 2, Wh                  # pooled spatial size

    # ---------------- conv1 + ReLU: both column parities in ONE matmul ------
    a1 = jnp.maximum(
        jnp.dot(p_ref[0], w1_ref[...], preferred_element_type=f32)
        + b1_ref[...], 0.0)                               # (2*H*Wh, C1)
    a1_even = a1[:H * Wh].reshape(H, Wh, C1)              # orig cols 0,2,...
    a1_odd = a1[H * Wh:].reshape(H, Wh, C1)               # orig cols 1,3,...

    # Zero-padded conv1 activation P1 (H+2, W+2, C1), stored split by parity
    # of the *padded* column index:
    #   p1e[hp, u, :] = P1[hp, 2u, :]     p1o[hp, u, :] = P1[hp, 2u+1, :]
    p1e_ref[...] = jnp.zeros_like(p1e_ref)
    p1o_ref[...] = jnp.zeros_like(p1o_ref)
    p1o_ref[1:H + 1, 0:Wh, :] = a1_even                   # even orig cols -> odd padded
    p1e_ref[1:H + 1, 1:Wh + 1, :] = a1_odd                # odd orig cols -> even padded

    # ---------------- conv2 + ReLU + fused 2x2 max pool ---------------------
    pooled = None
    for pw in range(2):                  # parity of the conv2 output column
        acc = jnp.zeros((H * Wh, C2), f32)
        for kh in range(3):
            for kw in range(3):
                s = pw + kw              # padded-column offset for this tap
                src = p1e_ref if s % 2 == 0 else p1o_ref
                c0 = s // 2
                patch = src[kh:kh + H, c0:c0 + Wh, :].reshape(H * Wh, C1)
                acc = acc + jnp.dot(patch, w2_ref[kh, kw],
                                    preferred_element_type=f32)
        a2 = jnp.maximum(acc + b2_ref[...], 0.0)
        a2 = a2.reshape(Hp, 2, Wh, C2)                    # [h//2, h%2, w//2, c]
        m = jnp.maximum(a2[:, 0], a2[:, 1])               # max over row pairs
        pooled = m if pooled is None else jnp.maximum(pooled, m)
    # pooled: (Hp, Wp, C2) == maxpool2x2(relu(conv2))

    # ---------------- conv3 + ReLU ------------------------------------------
    p2_ref[...] = jnp.zeros_like(p2_ref)
    p2_ref[1:Hp + 1, 1:Wp + 1, :] = pooled
    acc3 = jnp.zeros((Hp * Wp, C3), f32)
    for kh in range(3):
        for kw in range(3):
            patch = p2_ref[kh:kh + Hp, kw:kw + Wp, :].reshape(Hp * Wp, C2)
            acc3 = acc3 + jnp.dot(patch, w3_ref[kh, kw],
                                  preferred_element_type=f32)
    a3 = jnp.maximum(acc3 + b3_ref[...], 0.0)             # (Hp*Wp, C3)

    # ---------------- deconv(k=2, s=2) + ReLU, all 4 phases in ONE matmul ---
    #   y[:, k*Cd:(k+1)*Cd] = relu(a3 @ Wd[a,b] + bd),  k = 2a+b
    y = jnp.maximum(
        jnp.dot(a3, wd_ref[...], preferred_element_type=f32) + bd_ref[...],
        0.0)                                              # (Hp*Wp, 4*Cd)
    # ---------------- 1x1 output conv via block-diagonal weight -------------
    o = jnp.dot(y, wo_ref[...], preferred_element_type=f32) + bo_ref[...]
    o_ref[0] = o.astype(o_ref.dtype)                      # (Hp*Wp, 4*Co)


# ----------------------------------------------------------------------------
# Public forward: NCHW in / NCHW out, like the PyTorch module.
# ----------------------------------------------------------------------------
def cnn_forward_pallas(x_nchw, params):
    x = jnp.transpose(x_nchw, (0, 2, 3, 1)).astype(jnp.float32)   # -> NHWC
    N, H, W, Cin = x.shape
    assert H % 2 == 0 and W % 2 == 0 and (W // 2) % 8 == 0, \
        "kernel assumes even H/W and W//2 a multiple of 8"
    Wh = W // 2
    Hp, Wp = H // 2, Wh

    # Host-side im2col for conv1 (Cin=3 -> K=9*Cin), split by output-column
    # parity and stacked along M so the kernel's conv1 is ONE matmul.
    xpad = jnp.pad(x, ((0, 0), (1, 1), (1, 1), (0, 0)))
    taps = [xpad[:, kh:kh + H, kw:kw + W, :] for kh in range(3) for kw in range(3)]
    patches = jnp.concatenate(taps, axis=-1)              # (N, H, W, 9*Cin)
    K1 = 9 * Cin
    p_even = patches[:, :, 0::2, :].reshape(N, H * Wh, K1)
    p_odd = patches[:, :, 1::2, :].reshape(N, H * Wh, K1)
    patches_ph = jnp.concatenate([p_even, p_odd], axis=1)  # (N, 2*H*Wh, K1)

    C1 = params["conv1_w"].shape[3]
    C2 = params["conv2_w"].shape[3]
    C3 = params["conv3_w"].shape[3]
    Cd = params["deconv1_w"].shape[3]
    Co = params["out_w"].shape[1]

    w1f = params["conv1_w"].reshape(K1, C1)               # (kh,kw,cin) x cout

    # Deconv weight flattened so all 4 output phases come from one matmul:
    #   wd_flat[:, k*Cd:(k+1)*Cd] = Wd[a, b],  k = 2a+b
    wd = params["deconv1_w"]                               # (2,2,C3,Cd)
    wd_flat = jnp.concatenate([wd[0, 0], wd[0, 1], wd[1, 0], wd[1, 1]], axis=1)
    bd_flat = jnp.tile(params["deconv1_b"], 4).reshape(1, 4 * Cd)
    # Block-diagonal 1x1-conv weight: diag(Wo, Wo, Wo, Wo)  -> (4*Cd, 4*Co)
    wo_bd = jnp.kron(jnp.eye(4, dtype=jnp.float32), params["out_w"])
    bo_flat = jnp.tile(params["out_b"], 4).reshape(1, 4 * Co)

    args = (
        patches_ph,
        w1f, params["conv1_b"].reshape(1, C1),
        params["conv2_w"], params["conv2_b"].reshape(1, C2),
        params["conv3_w"], params["conv3_b"].reshape(1, C3),
        wd_flat, bd_flat,
        wo_bd, bo_flat,
    )

    def const(rank):
        return lambda n: (0,) * rank

    out_k = pl.pallas_call(
        _cnn_kernel,
        out_shape=jax.ShapeDtypeStruct((N, Hp * Wp, 4 * Co), jnp.float32),
        grid_spec=pltpu.PrefetchScalarGridSpec(
            num_scalar_prefetch=0,
            grid=(N,),
            in_specs=[
                pl.BlockSpec((1, 2 * H * Wh, K1), lambda n: (n, 0, 0)),
                pl.BlockSpec((K1, C1), const(2)),
                pl.BlockSpec((1, C1), const(2)),
                pl.BlockSpec((3, 3, C1, C2), const(4)),
                pl.BlockSpec((1, C2), const(2)),
                pl.BlockSpec((3, 3, C2, C3), const(4)),
                pl.BlockSpec((1, C3), const(2)),
                pl.BlockSpec((C3, 4 * Cd), const(2)),
                pl.BlockSpec((1, 4 * Cd), const(2)),
                pl.BlockSpec((4 * Cd, 4 * Co), const(2)),
                pl.BlockSpec((1, 4 * Co), const(2)),
            ],
            out_specs=pl.BlockSpec((1, Hp * Wp, 4 * Co), lambda n: (n, 0, 0)),
            scratch_shapes=[
                pltpu.VMEM((H + 2, Wh + 1, C1), jnp.float32),   # p1e (even padded cols)
                pltpu.VMEM((H + 2, Wh + 1, C1), jnp.float32),   # p1o (odd padded cols)
                pltpu.VMEM((Hp + 2, Wp + 2, C2), jnp.float32),  # padded pool output
            ],
        ),
        compiler_params=pltpu.CompilerParams(
            dimension_semantics=("parallel",)),   # one image per TensorCore
    )(*args)

    # Un-phase the output: out_k[n, i*Wp + j, (2a+b)*Co + c] is pixel (2i+a, 2j+b).
    out6 = out_k.reshape(N, Hp, Wp, 2, 2, Co)
    y = jnp.transpose(out6, (0, 5, 1, 3, 2, 4)).reshape(N, Co, H, W)
    return y


@jax.jit
def cnn_forward(x_nchw, params):
    return cnn_forward_pallas(x_nchw, params)


# ----------------------------------------------------------------------------
# Pure-JAX reference (same math) for a numerical self-check.
# ----------------------------------------------------------------------------
def cnn_forward_reference(x_nchw, params):
    hi = jax.lax.Precision.HIGHEST
    x = jnp.transpose(x_nchw, (0, 2, 3, 1)).astype(jnp.float32)

    def conv(v, w, b):
        y = jax.lax.conv_general_dilated(
            v, w, window_strides=(1, 1), padding="SAME",
            dimension_numbers=("NHWC", "HWIO", "NHWC"), precision=hi)
        return y + b

    a1 = jax.nn.relu(conv(x, params["conv1_w"], params["conv1_b"]))
    a2 = jax.nn.relu(conv(a1, params["conv2_w"], params["conv2_b"]))
    p = jax.lax.reduce_window(a2, -jnp.inf, jax.lax.max,
                              (1, 2, 2, 1), (1, 2, 2, 1), "VALID")
    a3 = jax.nn.relu(conv(p, params["conv3_w"], params["conv3_b"]))
    yd = jnp.einsum("nijc,abcd->niajbd", a3, params["deconv1_w"], precision=hi)
    n, hp, _, wp, _, cd = yd.shape
    yd = jax.nn.relu(yd.reshape(n, 2 * hp, 2 * wp, cd) + params["deconv1_b"])
    out = jnp.einsum("nhwc,cd->nhwd", yd, params["out_w"], precision=hi)
    out = out + params["out_b"]
    return jnp.transpose(out, (0, 3, 1, 2))


# ----------------------------------------------------------------------------
# Parameters (deterministic synthetic init; shapes follow the PyTorch module).
# conv weights: (kh, kw, Cin, Cout); deconv: (a, b, Cin, Cout); 1x1: (Cin, Cout)
# ----------------------------------------------------------------------------
def init_params(key):
    ks = jax.random.split(key, 10)

    def w(k, shape, scale=0.05):
        return scale * jax.random.normal(k, shape, jnp.float32)

    return {
        "conv1_w": w(ks[0], (3, 3, 3, 64)),
        "conv1_b": w(ks[1], (64,)),
        "conv2_w": w(ks[2], (3, 3, 64, 128)),
        "conv2_b": w(ks[3], (128,)),
        "conv3_w": w(ks[4], (3, 3, 128, 256)),
        "conv3_b": w(ks[5], (256,)),
        "deconv1_w": w(ks[6], (2, 2, 256, 128)),
        "deconv1_b": w(ks[7], (128,)),
        "out_w": w(ks[8], (128, 3)),
        "out_b": w(ks[9], (3,)),
    }


if __name__ == "__main__":
    key = jax.random.PRNGKey(0)
    pkey, xkey = jax.random.split(key)
    params = init_params(pkey)
    x = jax.random.normal(xkey, (2, 3, 16, 16), jnp.float32)   # NCHW, like PyTorch

    y = cnn_forward(x, params)
    jax.block_until_ready(y)
    assert y.shape == (2, 3, 16, 16), y.shape

    y_ref = cnn_forward_reference(x, params)
    err = float(jnp.max(jnp.abs(y - y_ref)))
    assert err < 1e-3, f"max abs error vs reference: {err}"
    print("KERNEL_OK")
</pallas_src>

<mosaic_0001>
module attributes {stable_mosaic.version = 11 : i64} {
  func.func @_cnn_kernel(%arg0: i32, %arg1: memref<1x256x27xf32, #tpu.memory_space<vmem>>, %arg2: memref<27x64xf32, #tpu.memory_space<vmem>>, %arg3: memref<1x64xf32, #tpu.memory_space<vmem>>, %arg4: memref<3x3x64x128xf32, #tpu.memory_space<vmem>>, %arg5: memref<1x128xf32, #tpu.memory_space<vmem>>, %arg6: memref<3x3x128x256xf32, #tpu.memory_space<vmem>>, %arg7: memref<1x256xf32, #tpu.memory_space<vmem>>, %arg8: memref<256x512xf32, #tpu.memory_space<vmem>>, %arg9: memref<1x512xf32, #tpu.memory_space<vmem>>, %arg10: memref<512x12xf32, #tpu.memory_space<vmem>>, %arg11: memref<1x12xf32, #tpu.memory_space<vmem>>, %arg12: memref<1x64x12xf32, #tpu.memory_space<vmem>>, %arg13: memref<18x9x64xf32, #tpu.memory_space<vmem>>, %arg14: memref<18x9x64xf32, #tpu.memory_space<vmem>>, %arg15: memref<10x10x128xf32, #tpu.memory_space<vmem>>) attributes {dimension_semantics = [#tpu.dimension_semantics<parallel>], iteration_bounds = array<i64: 2>, scalar_prefetch = 0 : i64, scratch_operands = 3 : i64, tpu.core_type = #tpu.core_type<tc>, window_params = [{transform_indices = @transform_0, window_bounds = array<i64: 1, 256, 27>}, {pipeline_mode = #tpu.pipeline_mode<synchronous>, transform_indices = @transform_1, window_bounds = array<i64: 27, 64>}, {pipeline_mode = #tpu.pipeline_mode<synchronous>, transform_indices = @transform_2, window_bounds = array<i64: 1, 64>}, {pipeline_mode = #tpu.pipeline_mode<synchronous>, transform_indices = @transform_3, window_bounds = array<i64: 3, 3, 64, 128>}, {pipeline_mode = #tpu.pipeline_mode<synchronous>, transform_indices = @transform_4, window_bounds = array<i64: 1, 128>}, {pipeline_mode = #tpu.pipeline_mode<synchronous>, transform_indices = @transform_5, window_bounds = array<i64: 3, 3, 128, 256>}, {pipeline_mode = #tpu.pipeline_mode<synchronous>, transform_indices = @transform_6, window_bounds = array<i64: 1, 256>}, {pipeline_mode = #tpu.pipeline_mode<synchronous>, transform_indices = @transform_7, window_bounds = array<i64: 256, 512>}, {pipeline_mode = #tpu.pipeline_mode<synchronous>, transform_indices = @transform_8, window_bounds = array<i64: 1, 512>}, {pipeline_mode = #tpu.pipeline_mode<synchronous>, transform_indices = @transform_9, window_bounds = array<i64: 512, 12>}, {pipeline_mode = #tpu.pipeline_mode<synchronous>, transform_indices = @transform_10, window_bounds = array<i64: 1, 12>}, {transform_indices = @transform_11, window_bounds = array<i64: 1, 64, 12>}]} {
    %c0 = arith.constant 0 : index
    %c0_0 = arith.constant 0 : index
    %c0_1 = arith.constant 0 : index
    %0 = vector.load %arg1[%c0, %c0_0, %c0_1] : memref<1x256x27xf32, #tpu.memory_space<vmem>>, vector<1x256x27xf32>
    %1 = vector.shape_cast %0 : vector<1x256x27xf32> to vector<256x27xf32>
    %c0_2 = arith.constant 0 : index
    %c0_3 = arith.constant 0 : index
    %2 = vector.load %arg2[%c0_2, %c0_3] : memref<27x64xf32, #tpu.memory_space<vmem>>, vector<27x64xf32>
    %cst = arith.constant dense<0.000000e+00> : vector<256x64xf32>
    %3 = tpu.matmul %1, %2, %cst {dimension_numbers = #tpu.dot_dimension_numbers<[1], [0], [0], [1], [0, 0, 1, 1], [], []>} : vector<256x27xf32>, vector<27x64xf32>, vector<256x64xf32> -> vector<256x64xf32>
    %c0_4 = arith.constant 0 : index
    %c0_5 = arith.constant 0 : index
    %4 = vector.load %arg3[%c0_4, %c0_5] : memref<1x64xf32, #tpu.memory_space<vmem>>, vector<1x64xf32>
    %5 = vector.broadcast %4 : vector<1x64xf32> to vector<256x64xf32>
    %6 = arith.addf %3, %5 : vector<256x64xf32>
    %cst_6 = arith.constant 0.000000e+00 : f32
    %7 = vector.broadcast %cst_6 : f32 to vector<256x64xf32>
    %8 = arith.maximumf %6, %7 : vector<256x64xf32>
    %9 = vector.extract_strided_slice %8 {offsets = [0, 0], sizes = [128, 64], strides = [1, 1]} : vector<256x64xf32> to vector<128x64xf32>
    %10 = vector.shape_cast %9 : vector<128x64xf32> to vector<16x8x64xf32>
    %11 = vector.extract_strided_slice %8 {offsets = [128, 0], sizes = [128, 64], strides = [1, 1]} : vector<256x64xf32> to vector<128x64xf32>
    %12 = vector.shape_cast %11 : vector<128x64xf32> to vector<16x8x64xf32>
    %cst_7 = arith.constant 0.000000e+00 : f32
    %13 = vector.broadcast %cst_7 : f32 to vector<18x9x64xf32>
    %c0_8 = arith.constant 0 : index
    %c0_9 = arith.constant 0 : index
    %c0_10 = arith.constant 0 : index
    %14 = vector.load %arg13[%c0_8, %c0_9, %c0_10] : memref<18x9x64xf32, #tpu.memory_space<vmem>>, vector<18x9x64xf32>
    tpu.vector_store %arg13[%c0_8, %c0_9, %c0_10], %13 {strides = array<i32>} : memref<18x9x64xf32, #tpu.memory_space<vmem>>, vector<18x9x64xf32>,
    %cst_11 = arith.constant 0.000000e+00 : f32
    %15 = vector.broadcast %cst_11 : f32 to vector<18x9x64xf32>
    %c0_12 = arith.constant 0 : index
    %c0_13 = arith.constant 0 : index
    %c0_14 = arith.constant 0 : index
    %16 = vector.load %arg14[%c0_12, %c0_13, %c0_14] : memref<18x9x64xf32, #tpu.memory_space<vmem>>, vector<18x9x64xf32>
    tpu.vector_store %arg14[%c0_12, %c0_13, %c0_14], %15 {strides = array<i32>} : memref<18x9x64xf32, #tpu.memory_space<vmem>>, vector<18x9x64xf32>,
    %c1 = arith.constant 1 : index
    %c0_15 = arith.constant 0 : index
    %c0_16 = arith.constant 0 : index
    %17 = vector.load %arg14[%c1, %c0_15, %c0_16] : memref<18x9x64xf32, #tpu.memory_space<vmem>>, vector<16x8x64xf32>
    tpu.vector_store %arg14[%c1, %c0_15, %c0_16], %10 {strides = array<i32>} : memref<18x9x64xf32, #tpu.memory_space<vmem>>, vector<16x8x64xf32>,
    %c1_17 = arith.constant 1 : index
    %c1_18 = arith.constant 1 : index
    %c0_19 = arith.constant 0 : index
    %18 = vector.load %arg13[%c1_17, %c1_18, %c0_19] : memref<18x9x64xf32, #tpu.memory_space<vmem>>, vector<16x8x64xf32>
    tpu.vector_store %arg13[%c1_17, %c1_18, %c0_19], %12 {strides = array<i32>} : memref<18x9x64xf32, #tpu.memory_space<vmem>>, vector<16x8x64xf32>,
    %cst_20 = arith.constant 0.000000e+00 : f32
    %19 = vector.broadcast %cst_20 : f32 to vector<128x128xf32>
    %c0_21 = arith.constant 0 : index
    %c0_22 = arith.constant 0 : index
    %c0_23 = arith.constant 0 : index
    %20 = vector.load %arg13[%c0_21, %c0_22, %c0_23] : memref<18x9x64xf32, #tpu.memory_space<vmem>>, vector<16x8x64xf32>
    %21 = vector.shape_cast %20 : vector<16x8x64xf32> to vector<128x64xf32>
    %c0_24 = arith.constant 0 : index
    %c0_25 = arith.constant 0 : index
    %c0_26 = arith.constant 0 : index
    %c0_27 = arith.constant 0 : index
    %22 = vector.load %arg4[%c0_24, %c0_25, %c0_26, %c0_27] : memref<3x3x64x128xf32, #tpu.memory_space<vmem>>, vector<1x1x64x128xf32>
    %23 = vector.shape_cast %22 : vector<1x1x64x128xf32> to vector<64x128xf32>
    %cst_28 = arith.constant dense<0.000000e+00> : vector<128x128xf32>
    %24 = tpu.matmul %21, %23, %cst_28 {dimension_numbers = #tpu.dot_dimension_numbers<[1], [0], [0], [1], [0, 0, 1, 1], [], []>} : vector<128x64xf32>, vector<64x128xf32>, vector<128x128xf32> -> vector<128x128xf32>
    %25 = arith.addf %19, %24 : vector<128x128xf32>
    %c0_29 = arith.constant 0 : index
    %c0_30 = arith.constant 0 : index
    %c0_31 = arith.constant 0 : index
    %26 = vector.load %arg14[%c0_29, %c0_30, %c0_31] : memref<18x9x64xf32, #tpu.memory_space<vmem>>, vector<16x8x64xf32>
    %27 = vector.shape_cast %26 : vector<16x8x64xf32> to vector<128x64xf32>
    %c0_32 = arith.constant 0 : index
    %c1_33 = arith.constant 1 : index
    %c0_34 = arith.constant 0 : index
    %c0_35 = arith.constant 0 : index
    %28 = vector.load %arg4[%c0_32, %c1_33, %c0_34, %c0_35] : memref<3x3x64x128xf32, #tpu.memory_space<vmem>>, vector<1x1x64x128xf32>
    %29 = vector.shape_cast %28 : vector<1x1x64x128xf32> to vector<64x128xf32>
    %cst_36 = arith.constant dense<0.000000e+00> : vector<128x128xf32>
    %30 = tpu.matmul %27, %29, %cst_36 {dimension_numbers = #tpu.dot_dimension_numbers<[1], [0], [0], [1], [0, 0, 1, 1], [], []>} : vector<128x64xf32>, vector<64x128xf32>, vector<128x128xf32> -> vector<128x128xf32>
    %31 = arith.addf %25, %30 : vector<128x128xf32>
    %c0_37 = arith.constant 0 : index
    %c1_38 = arith.constant 1 : index
    %c0_39 = arith.constant 0 : index
    %32 = vector.load %arg13[%c0_37, %c1_38, %c0_39] : memref<18x9x64xf32, #tpu.memory_space<vmem>>, vector<16x8x64xf32>
    %33 = vector.shape_cast %32 : vector<16x8x64xf32> to vector<128x64xf32>
    %c0_40 = arith.constant 0 : index
    %c2 = arith.constant 2 : index
    %c0_41 = arith.constant 0 : index
    %c0_42 = arith.constant 0 : index
    %34 = vector.load %arg4[%c0_40, %c2, %c0_41, %c0_42] : memref<3x3x64x128xf32, #tpu.memory_space<vmem>>, vector<1x1x64x128xf32>
    %35 = vector.shape_cast %34 : vector<1x1x64x128xf32> to vector<64x128xf32>
    %cst_43 = arith.constant dense<0.000000e+00> : vector<128x128xf32>
    %36 = tpu.matmul %33, %35, %cst_43 {dimension_numbers = #tpu.dot_dimension_numbers<[1], [0], [0], [1], [0, 0, 1, 1], [], []>} : vector<128x64xf32>, vector<64x128xf32>, vector<128x128xf32> -> vector<128x128xf32>
    %37 = arith.addf %31, %36 : vector<128x128xf32>
    %c1_44 = arith.constant 1 : index
    %c0_45 = arith.constant 0 : index
    %c0_46 = arith.constant 0 : index
    %38 = vector.load %arg13[%c1_44, %c0_45, %c0_46] : memref<18x9x64xf32, #tpu.memory_space<vmem>>, vector<16x8x64xf32>
    %39 = vector.shape_cast %38 : vector<16x8x64xf32> to vector<128x64xf32>
    %c1_47 = arith.constant 1 : index
    %c0_48 = arith.constant 0 : index
    %c0_49 = arith.constant 0 : index
    %c0_50 = arith.constant 0 : index
    %40 = vector.load %arg4[%c1_47, %c0_48, %c0_49, %c0_50] : memref<3x3x64x128xf32, #tpu.memory_space<vmem>>, vector<1x1x64x128xf32>
    %41 = vector.shape_cast %40 : vector<1x1x64x128xf32> to vector<64x128xf32>
    %cst_51 = arith.constant dense<0.000000e+00> : vector<128x128xf32>
    %42 = tpu.matmul %39, %41, %cst_51 {dimension_numbers = #tpu.dot_dimension_numbers<[1], [0], [0], [1], [0, 0, 1, 1], [], []>} : vector<128x64xf32>, vector<64x128xf32>, vector<128x128xf32> -> vector<128x128xf32>
    %43 = arith.addf %37, %42 : vector<128x128xf32>
    %c1_52 = arith.constant 1 : index
    %c0_53 = arith.constant 0 : index
    %c0_54 = arith.constant 0 : index
    %44 = vector.load %arg14[%c1_52, %c0_53, %c0_54] : memref<18x9x64xf32, #tpu.memory_space<vmem>>, vector<16x8x64xf32>
    %45 = vector.shape_cast %44 : vector<16x8x64xf32> to vector<128x64xf32>
    %c1_55 = arith.constant 1 : index
    %c1_56 = arith.constant 1 : index
    %c0_57 = arith.constant 0 : index
    %c0_58 = arith.constant 0 : index
    %46 = vector.load %arg4[%c1_55, %c1_56, %c0_57, %c0_58] : memref<3x3x64x128xf32, #tpu.memory_space<vmem>>, vector<1x1x64x128xf32>
    %47 = vector.shape_cast %46 : vector<1x1x64x128xf32> to vector<64x128xf32>
    %cst_59 = arith.constant dense<0.000000e+00> : vector<128x128xf32>
    %48 = tpu.matmul %45, %47, %cst_59 {dimension_numbers = #tpu.dot_dimension_numbers<[1], [0], [0], [1], [0, 0, 1, 1], [], []>} : vector<128x64xf32>, vector<64x128xf32>, vector<128x128xf32> -> vector<128x128xf32>
    %49 = arith.addf %43, %48 : vector<128x128xf32>
    %c1_60 = arith.constant 1 : index
    %c1_61 = arith.constant 1 : index
    %c0_62 = arith.constant 0 : index
    %50 = vector.load %arg13[%c1_60, %c1_61, %c0_62] : memref<18x9x64xf32, #tpu.memory_space<vmem>>, vector<16x8x64xf32>
    %51 = vector.shape_cast %50 : vector<16x8x64xf32> to vector<128x64xf32>
    %c1_63 = arith.constant 1 : index
    %c2_64 = arith.constant 2 : index
    %c0_65 = arith.constant 0 : index
    %c0_66 = arith.constant 0 : index
    %52 = vector.load %arg4[%c1_63, %c2_64, %c0_65, %c0_66] : memref<3x3x64x128xf32, #tpu.memory_space<vmem>>, vector<1x1x64x128xf32>
    %53 = vector.shape_cast %52 : vector<1x1x64x128xf32> to vector<64x128xf32>
    %cst_67 = arith.constant dense<0.000000e+00> : vector<128x128xf32>
    %54 = tpu.matmul %51, %53, %cst_67 {dimension_numbers = #tpu.dot_dimension_numbers<[1], [0], [0], [1], [0, 0, 1, 1], [], []>} : vector<128x64xf32>, vector<64x128xf32>, vector<128x128xf32> -> vector<128x128xf32>
    %55 = arith.addf %49, %54 : vector<128x128xf32>
    %c2_68 = arith.constant 2 : index
    %c0_69 = arith.constant 0 : index
    %c0_70 = arith.constant 0 : index
    %56 = vector.load %arg13[%c2_68, %c0_69, %c0_70] : memref<18x9x64xf32, #tpu.memory_space<vmem>>, vector<16x8x64xf32>
    %57 = vector.shape_cast %56 : vector<16x8x64xf32> to vector<128x64xf32>
    %c2_71 = arith.constant 2 : index
    %c0_72 = arith.constant 0 : index
    %c0_73 = arith.constant 0 : index
    %c0_74 = arith.constant 0 : index
    %58 = vector.load %arg4[%c2_71, %c0_72, %c0_73, %c0_74] : memref<3x3x64x128xf32, #tpu.memory_space<vmem>>, vector<1x1x64x128xf32>
    %59 = vector.shape_cast %58 : vector<1x1x64x128xf32> to vector<64x128xf32>
    %cst_75 = arith.constant dense<0.000000e+00> : vector<128x128xf32>
    %60 = tpu.matmul %57, %59, %cst_75 {dimension_numbers = #tpu.dot_dimension_numbers<[1], [0], [0], [1], [0, 0, 1, 1], [], []>} : vector<128x64xf32>, vector<64x128xf32>, vector<128x128xf32> -> vector<128x128xf32>
    %61 = arith.addf %55, %60 : vector<128x128xf32>
    %c2_76 = arith.constant 2 : index
    %c0_77 = arith.constant 0 : index
    %c0_78 = arith.constant 0 : index
    %62 = vector.load %arg14[%c2_76, %c0_77, %c0_78] : memref<18x9x64xf32, #tpu.memory_space<vmem>>, vector<16x8x64xf32>
    %63 = vector.shape_cast %62 : vector<16x8x64xf32> to vector<128x64xf32>
    %c2_79 = arith.constant 2 : index
    %c1_80 = arith.constant 1 : index
    %c0_81 = arith.constant 0 : index
    %c0_82 = arith.constant 0 : index
    %64 = vector.load %arg4[%c2_79, %c1_80, %c0_81, %c0_82] : memref<3x3x64x128xf32, #tpu.memory_space<vmem>>, vector<1x1x64x128xf32>
    %65 = vector.shape_cast %64 : vector<1x1x64x128xf32> to vector<64x128xf32>
    %cst_83 = arith.constant dense<0.000000e+00> : vector<128x128xf32>
    %66 = tpu.matmul %63, %65, %cst_83 {dimension_numbers = #tpu.dot_dimension_numbers<[1], [0], [0], [1], [0, 0, 1, 1], [], []>} : vector<128x64xf32>, vector<64x128xf32>, vector<128x128xf32> -> vector<128x128xf32>
    %67 = arith.addf %61, %66 : vector<128x128xf32>
    %c2_84 = arith.constant 2 : index
    %c1_85 = arith.constant 1 : index
    %c0_86 = arith.constant 0 : index
    %68 = vector.load %arg13[%c2_84, %c1_85, %c0_86] : memref<18x9x64xf32, #tpu.memory_space<vmem>>, vector<16x8x64xf32>
    %69 = vector.shape_cast %68 : vector<16x8x64xf32> to vector<128x64xf32>
    %c2_87 = arith.constant 2 : index
    %c2_88 = arith.constant 2 : index
    %c0_89 = arith.constant 0 : index
    %c0_90 = arith.constant 0 : index
    %70 = vector.load %arg4[%c2_87, %c2_88, %c0_89, %c0_90] : memref<3x3x64x128xf32, #tpu.memory_space<vmem>>, vector<1x1x64x128xf32>
    %71 = vector.shape_cast %70 : vector<1x1x64x128xf32> to vector<64x128xf32>
    %cst_91 = arith.constant dense<0.000000e+00> : vector<128x128xf32>
    %72 = tpu.matmul %69, %71, %cst_91 {dimension_numbers = #tpu.dot_dimension_numbers<[1], [0], [0], [1], [0, 0, 1, 1], [], []>} : vector<128x64xf32>, vector<64x128xf32>, vector<128x128xf32> -> vector<128x128xf32>
    %73 = arith.addf %67, %72 : vector<128x128xf32>
    %c0_92 = arith.constant 0 : index
    %c0_93 = arith.constant 0 : index
    %74 = vector.load %arg5[%c0_92, %c0_93] : memref<1x128xf32, #tpu.memory_space<vmem>>, vector<1x128xf32>
    %75 = vector.broadcast %74 : vector<1x128xf32> to vector<128x128xf32>
    %76 = arith.addf %73, %75 : vector<128x128xf32>
    %cst_94 = arith.constant 0.000000e+00 : f32
    %77 = vector.broadcast %cst_94 : f32 to vector<128x128xf32>
    %78 = arith.maximumf %76, %77 : vector<128x128xf32>
    %79 = vector.shape_cast %78 : vector<128x128xf32> to vector<8x2x8x128xf32>
    %80 = vector.extract_strided_slice %79 {offsets = [0, 0, 0, 0], sizes = [8, 1, 8, 128], strides = [1, 1, 1, 1]} : vector<8x2x8x128xf32> to vector<8x1x8x128xf32>
    %81 = vector.shape_cast %80 : vector<8x1x8x128xf32> to vector<8x8x128xf32>
    %82 = vector.extract_strided_slice %79 {offsets = [0, 1, 0, 0], sizes = [8, 1, 8, 128], strides = [1, 1, 1, 1]} : vector<8x2x8x128xf32> to vector<8x1x8x128xf32>
    %83 = vector.shape_cast %82 : vector<8x1x8x128xf32> to vector<8x8x128xf32>
    %84 = arith.maximumf %81, %83 : vector<8x8x128xf32>
    %cst_95 = arith.constant 0.000000e+00 : f32
    %85 = vector.broadcast %cst_95 : f32 to vector<128x128xf32>
    %c0_96 = arith.constant 0 : index
    %c0_97 = arith.constant 0 : index
    %c0_98 = arith.constant 0 : index
    %86 = vector.load %arg14[%c0_96, %c0_97, %c0_98] : memref<18x9x64xf32, #tpu.memory_space<vmem>>, vector<16x8x64xf32>
    %87 = vector.shape_cast %86 : vector<16x8x64xf32> to vector<128x64xf32>
    %c0_99 = arith.constant 0 : index
    %c0_100 = arith.constant 0 : index
    %c0_101 = arith.constant 0 : index
    %c0_102 = arith.constant 0 : index
    %88 = vector.load %arg4[%c0_99, %c0_100, %c0_101, %c0_102] : memref<3x3x64x128xf32, #tpu.memory_space<vmem>>, vector<1x1x64x128xf32>
    %89 = vector.shape_cast %88 : vector<1x1x64x128xf32> to vector<64x128xf32>
    %cst_103 = arith.constant dense<0.000000e+00> : vector<128x128xf32>
    %90 = tpu.matmul %87, %89, %cst_103 {dimension_numbers = #tpu.dot_dimension_numbers<[1], [0], [0], [1], [0, 0, 1, 1], [], []>} : vector<128x64xf32>, vector<64x128xf32>, vector<128x128xf32> -> vector<128x128xf32>
    %91 = arith.addf %85, %90 : vector<128x128xf32>
    %c0_104 = arith.constant 0 : index
    %c1_105 = arith.constant 1 : index
    %c0_106 = arith.constant 0 : index
    %92 = vector.load %arg13[%c0_104, %c1_105, %c0_106] : memref<18x9x64xf32, #tpu.memory_space<vmem>>, vector<16x8x64xf32>
    %93 = vector.shape_cast %92 : vector<16x8x64xf32> to vector<128x64xf32>
    %c0_107 = arith.constant 0 : index
    %c1_108 = arith.constant 1 : index
    %c0_109 = arith.constant 0 : index
    %c0_110 = arith.constant 0 : index
    %94 = vector.load %arg4[%c0_107, %c1_108, %c0_109, %c0_110] : memref<3x3x64x128xf32, #tpu.memory_space<vmem>>, vector<1x1x64x128xf32>
    %95 = vector.shape_cast %94 : vector<1x1x64x128xf32> to vector<64x128xf32>
    %cst_111 = arith.constant dense<0.000000e+00> : vector<128x128xf32>
    %96 = tpu.matmul %93, %95, %cst_111 {dimension_numbers = #tpu.dot_dimension_numbers<[1], [0], [0], [1], [0, 0, 1, 1], [], []>} : vector<128x64xf32>, vector<64x128xf32>, vector<128x128xf32> -> vector<128x128xf32>
    %97 = arith.addf %91, %96 : vector<128x128xf32>
    %c0_112 = arith.constant 0 : index
    %c1_113 = arith.constant 1 : index
    %c0_114 = arith.constant 0 : index
    %98 = vector.load %arg14[%c0_112, %c1_113, %c0_114] : memref<18x9x64xf32, #tpu.memory_space<vmem>>, vector<16x8x64xf32>
    %99 = vector.shape_cast %98 : vector<16x8x64xf32> to vector<128x64xf32>
    %c0_115 = arith.constant 0 : index
    %c2_116 = arith.constant 2 : index
    %c0_117 = arith.constant 0 : index
    %c0_118 = arith.constant 0 : index
    %100 = vector.load %arg4[%c0_115, %c2_116, %c0_117, %c0_118] : memref<3x3x64x128xf32, #tpu.memory_space<vmem>>, vector<1x1x64x128xf32>
    %101 = vector.shape_cast %100 : vector<1x1x64x128xf32> to vector<64x128xf32>
    %cst_119 = arith.constant dense<0.000000e+00> : vector<128x128xf32>
    %102 = tpu.matmul %99, %101, %cst_119 {dimension_numbers = #tpu.dot_dimension_numbers<[1], [0], [0], [1], [0, 0, 1, 1], [], []>} : vector<128x64xf32>, vector<64x128xf32>, vector<128x128xf32> -> vector<128x128xf32>
    %103 = arith.addf %97, %102 : vector<128x128xf32>
    %c1_120 = arith.constant 1 : index
    %c0_121 = arith.constant 0 : index
    %c0_122 = arith.constant 0 : index
    %104 = vector.load %arg14[%c1_120, %c0_121, %c0_122] : memref<18x9x64xf32, #tpu.memory_space<vmem>>, vector<16x8x64xf32>
    %105 = vector.shape_cast %104 : vector<16x8x64xf32> to vector<128x64xf32>
    %c1_123 = arith.constant 1 : index
    %c0_124 = arith.constant 0 : index
    %c0_125 = arith.constant 0 : index
    %c0_126 = arith.constant 0 : index
    %106 = vector.load %arg4[%c1_123, %c0_124, %c0_125, %c0_126] : memref<3x3x64x128xf32, #tpu.memory_space<vmem>>, vector<1x1x64x128xf32>
    %107 = vector.shape_cast %106 : vector<1x1x64x128xf32> to vector<64x128xf32>
    %cst_127 = arith.constant dense<0.000000e+00> : vector<128x128xf32>
    %108 = tpu.matmul %105, %107, %cst_127 {dimension_numbers = #tpu.dot_dimension_numbers<[1], [0], [0], [1], [0, 0, 1, 1], [], []>} : vector<128x64xf32>, vector<64x128xf32>, vector<128x128xf32> -> vector<128x128xf32>
    %109 = arith.addf %103, %108 : vector<128x128xf32>
    %c1_128 = arith.constant 1 : index
    %c1_129 = arith.constant 1 : index
    %c0_130 = arith.constant 0 : index
    %110 = vector.load %arg13[%c1_128, %c1_129, %c0_130] : memref<18x9x64xf32, #tpu.memory_space<vmem>>, vector<16x8x64xf32>
    %111 = vector.shape_cast %110 : vector<16x8x64xf32> to vector<128x64xf32>
    %c1_131 = arith.constant 1 : index
    %c1_132 = arith.constant 1 : index
    %c0_133 = arith.constant 0 : index
    %c0_134 = arith.constant 0 : index
    %112 = vector.load %arg4[%c1_131, %c1_132, %c0_133, %c0_134] : memref<3x3x64x128xf32, #tpu.memory_space<vmem>>, vector<1x1x64x128xf32>
    %113 = vector.shape_cast %112 : vector<1x1x64x128xf32> to vector<64x128xf32>
    %cst_135 = arith.constant dense<0.000000e+00> : vector<128x128xf32>
    %114 = tpu.matmul %111, %113, %cst_135 {dimension_numbers = #tpu.dot_dimension_numbers<[1], [0], [0], [1], [0, 0, 1, 1], [], []>} : vector<128x64xf32>, vector<64x128xf32>, vector<128x128xf32> -> vector<128x128xf32>
    %115 = arith.addf %109, %114 : vector<128x128xf32>
    %c1_136 = arith.constant 1 : index
    %c1_137 = arith.constant 1 : index
    %c0_138 = arith.constant 0 : index
    %116 = vector.load %arg14[%c1_136, %c1_137, %c0_138] : memref<18x9x64xf32, #tpu.memory_space<vmem>>, vector<16x8x64xf32>
    %117 = vector.shape_cast %116 : vector<16x8x64xf32> to vector<128x64xf32>
    %c1_139 = arith.constant 1 : index
    %c2_140 = arith.constant 2 : index
    %c0_141 = arith.constant 0 : index
    %c0_142 = arith.constant 0 : index
    %118 = vector.load %arg4[%c1_139, %c2_140, %c0_141, %c0_142] : memref<3x3x64x128xf32, #tpu.memory_space<vmem>>, vector<1x1x64x128xf32>
    %119 = vector.shape_cast %118 : vector<1x1x64x128xf32> to vector<64x128xf32>
    %cst_143 = arith.constant dense<0.000000e+00> : vector<128x128xf32>
    %120 = tpu.matmul %117, %119, %cst_143 {dimension_numbers = #tpu.dot_dimension_numbers<[1], [0], [0], [1], [0, 0, 1, 1], [], []>} : vector<128x64xf32>, vector<64x128xf32>, vector<128x128xf32> -> vector<128x128xf32>
    %121 = arith.addf %115, %120 : vector<128x128xf32>
    %c2_144 = arith.constant 2 : index
    %c0_145 = arith.constant 0 : index
    %c0_146 = arith.constant 0 : index
    %122 = vector.load %arg14[%c2_144, %c0_145, %c0_146] : memref<18x9x64xf32, #tpu.memory_space<vmem>>, vector<16x8x64xf32>
    %123 = vector.shape_cast %122 : vector<16x8x64xf32> to vector<128x64xf32>
    %c2_147 = arith.constant 2 : index
    %c0_148 = arith.constant 0 : index
    %c0_149 = arith.constant 0 : index
    %c0_150 = arith.constant 0 : index
    %124 = vector.load %arg4[%c2_147, %c0_148, %c0_149, %c0_150] : memref<3x3x64x128xf32, #tpu.memory_space<vmem>>, vector<1x1x64x128xf32>
    %125 = vector.shape_cast %124 : vector<1x1x64x128xf32> to vector<64x128xf32>
    %cst_151 = arith.constant dense<0.000000e+00> : vector<128x128xf32>
    %126 = tpu.matmul %123, %125, %cst_151 {dimension_numbers = #tpu.dot_dimension_numbers<[1], [0], [0], [1], [0, 0, 1, 1], [], []>} : vector<128x64xf32>, vector<64x128xf32>, vector<128x128xf32> -> vector<128x128xf32>
    %127 = arith.addf %121, %126 : vector<128x128xf32>
    %c2_152 = arith.constant 2 : index
    %c1_153 = arith.constant 1 : index
    %c0_154 = arith.constant 0 : index
    %128 = vector.load %arg13[%c2_152, %c1_153, %c0_154] : memref<18x9x64xf32, #tpu.memory_space<vmem>>, vector<16x8x64xf32>
    %129 = vector.shape_cast %128 : vector<16x8x64xf32> to vector<128x64xf32>
    %c2_155 = arith.constant 2 : index
    %c1_156 = arith.constant 1 : index
    %c0_157 = arith.constant 0 : index
    %c0_158 = arith.constant 0 : index
    %130 = vector.load %arg4[%c2_155, %c1_156, %c0_157, %c0_158] : memref<3x3x64x128xf32, #tpu.memory_space<vmem>>, vector<1x1x64x128xf32>
    %131 = vector.shape_cast %130 : vector<1x1x64x128xf32> to vector<64x128xf32>
    %cst_159 = arith.constant dense<0.000000e+00> : vector<128x128xf32>
    %132 = tpu.matmul %129, %131, %cst_159 {dimension_numbers = #tpu.dot_dimension_numbers<[1], [0], [0], [1], [0, 0, 1, 1], [], []>} : vector<128x64xf32>, vector<64x128xf32>, vector<128x128xf32> -> vector<128x128xf32>
    %133 = arith.addf %127, %132 : vector<128x128xf32>
    %c2_160 = arith.constant 2 : index
    %c1_161 = arith.constant 1 : index
    %c0_162 = arith.constant 0 : index
    %134 = vector.load %arg14[%c2_160, %c1_161, %c0_162] : memref<18x9x64xf32, #tpu.memory_space<vmem>>, vector<16x8x64xf32>
    %135 = vector.shape_cast %134 : vector<16x8x64xf32> to vector<128x64xf32>
    %c2_163 = arith.constant 2 : index
    %c2_164 = arith.constant 2 : index
    %c0_165 = arith.constant 0 : index
    %c0_166 = arith.constant 0 : index
    %136 = vector.load %arg4[%c2_163, %c2_164, %c0_165, %c0_166] : memref<3x3x64x128xf32, #tpu.memory_space<vmem>>, vector<1x1x64x128xf32>
    %137 = vector.shape_cast %136 : vector<1x1x64x128xf32> to vector<64x128xf32>
    %cst_167 = arith.constant dense<0.000000e+00> : vector<128x128xf32>
    %138 = tpu.matmul %135, %137, %cst_167 {dimension_numbers = #tpu.dot_dimension_numbers<[1], [0], [0], [1], [0, 0, 1, 1], [], []>} : vector<128x64xf32>, vector<64x128xf32>, vector<128x128xf32> -> vector<128x128xf32>
    %139 = arith.addf %133, %138 : vector<128x128xf32>
    %c0_168 = arith.constant 0 : index
    %c0_169 = arith.constant 0 : index
    %140 = vector.load %arg5[%c0_168, %c0_169] : memref<1x128xf32, #tpu.memory_space<vmem>>, vector<1x128xf32>
    %141 = vector.broadcast %140 : vector<1x128xf32> to vector<128x128xf32>
    %142 = arith.addf %139, %141 : vector<128x128xf32>
    %cst_170 = arith.constant 0.000000e+00 : f32
    %143 = vector.broadcast %cst_170 : f32 to vector<128x128xf32>
    %144 = arith.maximumf %142, %143 : vector<128x128xf32>
    %145 = vector.shape_cast %144 : vector<128x128xf32> to vector<8x2x8x128xf32>
    %146 = vector.extract_strided_slice %145 {offsets = [0, 0, 0, 0], sizes = [8, 1, 8, 128], strides = [1, 1, 1, 1]} : vector<8x2x8x128xf32> to vector<8x1x8x128xf32>
    %147 = vector.shape_cast %146 : vector<8x1x8x128xf32> to vector<8x8x128xf32>
    %148 = vector.extract_strided_slice %145 {offsets = [0, 1, 0, 0], sizes = [8, 1, 8, 128], strides = [1, 1, 1, 1]} : vector<8x2x8x128xf32> to vector<8x1x8x128xf32>
    %149 = vector.shape_cast %148 : vector<8x1x8x128xf32> to vector<8x8x128xf32>
    %150 = arith.maximumf %147, %149 : vector<8x8x128xf32>
    %151 = arith.maximumf %84, %150 : vector<8x8x128xf32>
    %cst_171 = arith.constant 0.000000e+00 : f32
    %152 = vector.broadcast %cst_171 : f32 to vector<10x10x128xf32>
    %c0_172 = arith.constant 0 : index
    %c0_173 = arith.constant 0 : index
    %c0_174 = arith.constant 0 : index
    %153 = vector.load %arg15[%c0_172, %c0_173, %c0_174] : memref<10x10x128xf32, #tpu.memory_space<vmem>>, vector<10x10x128xf32>
    tpu.vector_store %arg15[%c0_172, %c0_173, %c0_174], %152 {strides = array<i32>} : memref<10x10x128xf32, #tpu.memory_space<vmem>>, vector<10x10x128xf32>,
    %c1_175 = arith.constant 1 : index
    %c1_176 = arith.constant 1 : index
    %c0_177 = arith.constant 0 : index
    %154 = vector.load %arg15[%c1_175, %c1_176, %c0_177] : memref<10x10x128xf32, #tpu.memory_space<vmem>>, vector<8x8x128xf32>
    tpu.vector_store %arg15[%c1_175, %c1_176, %c0_177], %151 {strides = array<i32>} : memref<10x10x128xf32, #tpu.memory_space<vmem>>, vector<8x8x128xf32>,
    %cst_178 = arith.constant 0.000000e+00 : f32
    %155 = vector.broadcast %cst_178 : f32 to vector<64x256xf32>
    %c0_179 = arith.constant 0 : index
    %c0_180 = arith.constant 0 : index
    %c0_181 = arith.constant 0 : index
    %156 = vector.load %arg15[%c0_179, %c0_180, %c0_181] : memref<10x10x128xf32, #tpu.memory_space<vmem>>, vector<8x8x128xf32>
    %157 = vector.shape_cast %156 : vector<8x8x128xf32> to vector<64x128xf32>
    %c0_182 = arith.constant 0 : index
    %c0_183 = arith.constant 0 : index
    %c0_184 = arith.constant 0 : index
    %c0_185 = arith.constant 0 : index
    %158 = vector.load %arg6[%c0_182, %c0_183, %c0_184, %c0_185] : memref<3x3x128x256xf32, #tpu.memory_space<vmem>>, vector<1x1x128x256xf32>
    %159 = vector.shape_cast %158 : vector<1x1x128x256xf32> to vector<128x256xf32>
    %cst_186 = arith.constant dense<0.000000e+00> : vector<64x256xf32>
    %160 = tpu.matmul %157, %159, %cst_186 {dimension_numbers = #tpu.dot_dimension_numbers<[1], [0], [0], [1], [0, 0, 1, 1], [], []>} : vector<64x128xf32>, vector<128x256xf32>, vector<64x256xf32> -> vector<64x256xf32>
    %161 = arith.addf %155, %160 : vector<64x256xf32>
    %c0_187 = arith.constant 0 : index
    %c1_188 = arith.constant 1 : index
    %c0_189 = arith.constant 0 : index
    %162 = vector.load %arg15[%c0_187, %c1_188, %c0_189] : memref<10x10x128xf32, #tpu.memory_space<vmem>>, vector<8x8x128xf32>
    %163 = vector.shape_cast %162 : vector<8x8x128xf32> to vector<64x128xf32>
    %c0_190 = arith.constant 0 : index
    %c1_191 = arith.constant 1 : index
    %c0_192 = arith.constant 0 : index
    %c0_193 = arith.constant 0 : index
    %164 = vector.load %arg6[%c0_190, %c1_191, %c0_192, %c0_193] : memref<3x3x128x256xf32, #tpu.memory_space<vmem>>, vector<1x1x128x256xf32>
    %165 = vector.shape_cast %164 : vector<1x1x128x256xf32> to vector<128x256xf32>
    %cst_194 = arith.constant dense<0.000000e+00> : vector<64x256xf32>
    %166 = tpu.matmul %163, %165, %cst_194 {dimension_numbers = #tpu.dot_dimension_numbers<[1], [0], [0], [1], [0, 0, 1, 1], [], []>} : vector<64x128xf32>, vector<128x256xf32>, vector<64x256xf32> -> vector<64x256xf32>
    %167 = arith.addf %161, %166 : vector<64x256xf32>
    %c0_195 = arith.constant 0 : index
    %c2_196 = arith.constant 2 : index
    %c0_197 = arith.constant 0 : index
    %168 = vector.load %arg15[%c0_195, %c2_196, %c0_197] : memref<10x10x128xf32, #tpu.memory_space<vmem>>, vector<8x8x128xf32>
    %169 = vector.shape_cast %168 : vector<8x8x128xf32> to vector<64x128xf32>
    %c0_198 = arith.constant 0 : index
    %c2_199 = arith.constant 2 : index
    %c0_200 = arith.constant 0 : index
    %c0_201 = arith.constant 0 : index
    %170 = vector.load %arg6[%c0_198, %c2_199, %c0_200, %c0_201] : memref<3x3x128x256xf32, #tpu.memory_space<vmem>>, vector<1x1x128x256xf32>
    %171 = vector.shape_cast %170 : vector<1x1x128x256xf32> to vector<128x256xf32>
    %cst_202 = arith.constant dense<0.000000e+00> : vector<64x256xf32>
    %172 = tpu.matmul %169, %171, %cst_202 {dimension_numbers = #tpu.dot_dimension_numbers<[1], [0], [0], [1], [0, 0, 1, 1], [], []>} : vector<64x128xf32>, vector<128x256xf32>, vector<64x256xf32> -> vector<64x256xf32>
    %173 = arith.addf %167, %172 : vector<64x256xf32>
    %c1_203 = arith.constant 1 : index
    %c0_204 = arith.constant 0 : index
    %c0_205 = arith.constant 0 : index
    %174 = vector.load %arg15[%c1_203, %c0_204, %c0_205] : memref<10x10x128xf32, #tpu.memory_space<vmem>>, vector<8x8x128xf32>
    %175 = vector.shape_cast %174 : vector<8x8x128xf32> to vector<64x128xf32>
    %c1_206 = arith.constant 1 : index
    %c0_207 = arith.constant 0 : index
    %c0_208 = arith.constant 0 : index
    %c0_209 = arith.constant 0 : index
    %176 = vector.load %arg6[%c1_206, %c0_207, %c0_208, %c0_209] : memref<3x3x128x256xf32, #tpu.memory_space<vmem>>, vector<1x1x128x256xf32>
    %177 = vector.shape_cast %176 : vector<1x1x128x256xf32> to vector<128x256xf32>
    %cst_210 = arith.constant dense<0.000000e+00> : vector<64x256xf32>
    %178 = tpu.matmul %175, %177, %cst_210 {dimension_numbers = #tpu.dot_dimension_numbers<[1], [0], [0], [1], [0, 0, 1, 1], [], []>} : vector<64x128xf32>, vector<128x256xf32>, vector<64x256xf32> -> vector<64x256xf32>
    %179 = arith.addf %173, %178 : vector<64x256xf32>
    %c1_211 = arith.constant 1 : index
    %c1_212 = arith.constant 1 : index
    %c0_213 = arith.constant 0 : index
    %180 = vector.load %arg15[%c1_211, %c1_212, %c0_213] : memref<10x10x128xf32, #tpu.memory_space<vmem>>, vector<8x8x128xf32>
    %181 = vector.shape_cast %180 : vector<8x8x128xf32> to vector<64x128xf32>
    %c1_214 = arith.constant 1 : index
    %c1_215 = arith.constant 1 : index
    %c0_216 = arith.constant 0 : index
    %c0_217 = arith.constant 0 : index
    %182 = vector.load %arg6[%c1_214, %c1_215, %c0_216, %c0_217] : memref<3x3x128x256xf32, #tpu.memory_space<vmem>>, vector<1x1x128x256xf32>
    %183 = vector.shape_cast %182 : vector<1x1x128x256xf32> to vector<128x256xf32>
    %cst_218 = arith.constant dense<0.000000e+00> : vector<64x256xf32>
    %184 = tpu.matmul %181, %183, %cst_218 {dimension_numbers = #tpu.dot_dimension_numbers<[1], [0], [0], [1], [0, 0, 1, 1], [], []>} : vector<64x128xf32>, vector<128x256xf32>, vector<64x256xf32> -> vector<64x256xf32>
    %185 = arith.addf %179, %184 : vector<64x256xf32>
    %c1_219 = arith.constant 1 : index
    %c2_220 = arith.constant 2 : index
    %c0_221 = arith.constant 0 : index
    %186 = vector.load %arg15[%c1_219, %c2_220, %c0_221] : memref<10x10x128xf32, #tpu.memory_space<vmem>>, vector<8x8x128xf32>
    %187 = vector.shape_cast %186 : vector<8x8x128xf32> to vector<64x128xf32>
    %c1_222 = arith.constant 1 : index
    %c2_223 = arith.constant 2 : index
    %c0_224 = arith.constant 0 : index
    %c0_225 = arith.constant 0 : index
    %188 = vector.load %arg6[%c1_222, %c2_223, %c0_224, %c0_225] : memref<3x3x128x256xf32, #tpu.memory_space<vmem>>, vector<1x1x128x256xf32>
    %189 = vector.shape_cast %188 : vector<1x1x128x256xf32> to vector<128x256xf32>
    %cst_226 = arith.constant dense<0.000000e+00> : vector<64x256xf32>
    %190 = tpu.matmul %187, %189, %cst_226 {dimension_numbers = #tpu.dot_dimension_numbers<[1], [0], [0], [1], [0, 0, 1, 1], [], []>} : vector<64x128xf32>, vector<128x256xf32>, vector<64x256xf32> -> vector<64x256xf32>
    %191 = arith.addf %185, %190 : vector<64x256xf32>
    %c2_227 = arith.constant 2 : index
    %c0_228 = arith.constant 0 : index
    %c0_229 = arith.constant 0 : index
    %192 = vector.load %arg15[%c2_227, %c0_228, %c0_229] : memref<10x10x128xf32, #tpu.memory_space<vmem>>, vector<8x8x128xf32>
    %193 = vector.shape_cast %192 : vector<8x8x128xf32> to vector<64x128xf32>
    %c2_230 = arith.constant 2 : index
    %c0_231 = arith.constant 0 : index
    %c0_232 = arith.constant 0 : index
    %c0_233 = arith.constant 0 : index
    %194 = vector.load %arg6[%c2_230, %c0_231, %c0_232, %c0_233] : memref<3x3x128x256xf32, #tpu.memory_space<vmem>>, vector<1x1x128x256xf32>
    %195 = vector.shape_cast %194 : vector<1x1x128x256xf32> to vector<128x256xf32>
    %cst_234 = arith.constant dense<0.000000e+00> : vector<64x256xf32>
    %196 = tpu.matmul %193, %195, %cst_234 {dimension_numbers = #tpu.dot_dimension_numbers<[1], [0], [0], [1], [0, 0, 1, 1], [], []>} : vector<64x128xf32>, vector<128x256xf32>, vector<64x256xf32> -> vector<64x256xf32>
    %197 = arith.addf %191, %196 : vector<64x256xf32>
    %c2_235 = arith.constant 2 : index
    %c1_236 = arith.constant 1 : index
    %c0_237 = arith.constant 0 : index
    %198 = vector.load %arg15[%c2_235, %c1_236, %c0_237] : memref<10x10x128xf32, #tpu.memory_space<vmem>>, vector<8x8x128xf32>
    %199 = vector.shape_cast %198 : vector<8x8x128xf32> to vector<64x128xf32>
    %c2_238 = arith.constant 2 : index
    %c1_239 = arith.constant 1 : index
    %c0_240 = arith.constant 0 : index
    %c0_241 = arith.constant 0 : index
    %200 = vector.load %arg6[%c2_238, %c1_239, %c0_240, %c0_241] : memref<3x3x128x256xf32, #tpu.memory_space<vmem>>, vector<1x1x128x256xf32>
    %201 = vector.shape_cast %200 : vector<1x1x128x256xf32> to vector<128x256xf32>
    %cst_242 = arith.constant dense<0.000000e+00> : vector<64x256xf32>
    %202 = tpu.matmul %199, %201, %cst_242 {dimension_numbers = #tpu.dot_dimension_numbers<[1], [0], [0], [1], [0, 0, 1, 1], [], []>} : vector<64x128xf32>, vector<128x256xf32>, vector<64x256xf32> -> vector<64x256xf32>
    %203 = arith.addf %197, %202 : vector<64x256xf32>
    %c2_243 = arith.constant 2 : index
    %c2_244 = arith.constant 2 : index
    %c0_245 = arith.constant 0 : index
    %204 = vector.load %arg15[%c2_243, %c2_244, %c0_245] : memref<10x10x128xf32, #tpu.memory_space<vmem>>, vector<8x8x128xf32>
    %205 = vector.shape_cast %204 : vector<8x8x128xf32> to vector<64x128xf32>
    %c2_246 = arith.constant 2 : index
    %c2_247 = arith.constant 2 : index
    %c0_248 = arith.constant 0 : index
    %c0_249 = arith.constant 0 : index
    %206 = vector.load %arg6[%c2_246, %c2_247, %c0_248, %c0_249] : memref<3x3x128x256xf32, #tpu.memory_space<vmem>>, vector<1x1x128x256xf32>
    %207 = vector.shape_cast %206 : vector<1x1x128x256xf32> to vector<128x256xf32>
    %cst_250 = arith.constant dense<0.000000e+00> : vector<64x256xf32>
    %208 = tpu.matmul %205, %207, %cst_250 {dimension_numbers = #tpu.dot_dimension_numbers<[1], [0], [0], [1], [0, 0, 1, 1], [], []>} : vector<64x128xf32>, vector<128x256xf32>, vector<64x256xf32> -> vector<64x256xf32>
    %209 = arith.addf %203, %208 : vector<64x256xf32>
    %c0_251 = arith.constant 0 : index
    %c0_252 = arith.constant 0 : index
    %210 = vector.load %arg7[%c0_251, %c0_252] : memref<1x256xf32, #tpu.memory_space<vmem>>, vector<1x256xf32>
    %211 = vector.broadcast %210 : vector<1x256xf32> to vector<64x256xf32>
    %212 = arith.addf %209, %211 : vector<64x256xf32>
    %cst_253 = arith.constant 0.000000e+00 : f32
    %213 = vector.broadcast %cst_253 : f32 to vector<64x256xf32>
    %214 = arith.maximumf %212, %213 : vector<64x256xf32>
    %c0_254 = arith.constant 0 : index
    %c0_255 = arith.constant 0 : index
    %215 = vector.load %arg8[%c0_254, %c0_255] : memref<256x512xf32, #tpu.memory_space<vmem>>, vector<256x512xf32>
    %cst_256 = arith.constant dense<0.000000e+00> : vector<64x512xf32>
    %216 = tpu.matmul %214, %215, %cst_256 {dimension_numbers = #tpu.dot_dimension_numbers<[1], [0], [0], [1], [0, 0, 1, 1], [], []>} : vector<64x256xf32>, vector<256x512xf32>, vector<64x512xf32> -> vector<64x512xf32>
    %c0_257 = arith.constant 0 : index
    %c0_258 = arith.constant 0 : index
    %217 = vector.load %arg9[%c0_257, %c0_258] : memref<1x512xf32, #tpu.memory_space<vmem>>, vector<1x512xf32>
    %218 = vector.broadcast %217 : vector<1x512xf32> to vector<64x512xf32>
    %219 = arith.addf %216, %218 : vector<64x512xf32>
    %cst_259 = arith.constant 0.000000e+00 : f32
    %220 = vector.broadcast %cst_259 : f32 to vector<64x512xf32>
    %221 = arith.maximumf %219, %220 : vector<64x512xf32>
    %c0_260 = arith.constant 0 : index
    %c0_261 = arith.constant 0 : index
    %222 = vector.load %arg10[%c0_260, %c0_261] : memref<512x12xf32, #tpu.memory_space<vmem>>, vector<512x12xf32>
    %cst_262 = arith.constant dense<0.000000e+00> : vector<64x12xf32>
    %223 = tpu.matmul %221, %222, %cst_262 {dimension_numbers = #tpu.dot_dimension_numbers<[1], [0], [0], [1], [0, 0, 1, 1], [], []>} : vector<64x512xf32>, vector<512x12xf32>, vector<64x12xf32> -> vector<64x12xf32>
    %c0_263 = arith.constant 0 : index
    %c0_264 = arith.constant 0 : index
    %224 = vector.load %arg11[%c0_263, %c0_264] : memref<1x12xf32, #tpu.memory_space<vmem>>, vector<1x12xf32>
    %225 = vector.broadcast %224 : vector<1x12xf32> to vector<64x12xf32>
    %226 = arith.addf %223, %225 : vector<64x12xf32>
    %c0_265 = arith.constant 0 : index
    %c0_266 = arith.constant 0 : index
    %c0_267 = arith.constant 0 : index
    %227 = vector.load %arg12[%c0_265, %c0_266, %c0_267] : memref<1x64x12xf32, #tpu.memory_space<vmem>>, vector<1x64x12xf32>
    %228 = vector.shape_cast %227 : vector<1x64x12xf32> to vector<64x12xf32>
    %229 = vector.shape_cast %226 : vector<64x12xf32> to vector<1x64x12xf32>
    tpu.vector_store %arg12[%c0_265, %c0_266, %c0_267], %229 {strides = array<i32>} : memref<1x64x12xf32, #tpu.memory_space<vmem>>, vector<1x64x12xf32>,
    return
  }
  func.func @transform_0(%arg0: i32) -> (i32, i32, i32) {
    %c0_i32 = arith.constant 0 : i32
    %c0_i32_0 = arith.constant 0 : i32
    %c0_i32_1 = arith.constant 0 : i32
    return %arg0, %c0_i32, %c0_i32_0 : i32, i32, i32
  }
  func.func @transform_1(%arg0: i32) -> (i32, i32) {
    %c0_i32 = arith.constant 0 : i32
    %c0_i32_0 = arith.constant 0 : i32
    %c0_i32_1 = arith.constant 0 : i32
    return %c0_i32, %c0_i32_0 : i32, i32
  }
  func.func @transform_2(%arg0: i32) -> (i32, i32) {
    %c0_i32 = arith.constant 0 : i32
    %c0_i32_0 = arith.constant 0 : i32
    %c0_i32_1 = arith.constant 0 : i32
    return %c0_i32, %c0_i32_0 : i32, i32
  }
  func.func @transform_3(%arg0: i32) -> (i32, i32, i32, i32) {
    %c0_i32 = arith.constant 0 : i32
    %c0_i32_0 = arith.constant 0 : i32
    %c0_i32_1 = arith.constant 0 : i32
    %c0_i32_2 = arith.constant 0 : i32
    %c0_i32_3 = arith.constant 0 : i32
    return %c0_i32, %c0_i32_0, %c0_i32_1, %c0_i32_2 : i32, i32, i32, i32
  }
  func.func @transform_4(%arg0: i32) -> (i32, i32) {
    %c0_i32 = arith.constant 0 : i32
    %c0_i32_0 = arith.constant 0 : i32
    %c0_i32_1 = arith.constant 0 : i32
    return %c0_i32, %c0_i32_0 : i32, i32
  }
  func.func @transform_5(%arg0: i32) -> (i32, i32, i32, i32) {
    %c0_i32 = arith.constant 0 : i32
    %c0_i32_0 = arith.constant 0 : i32
    %c0_i32_1 = arith.constant 0 : i32
    %c0_i32_2 = arith.constant 0 : i32
    %c0_i32_3 = arith.constant 0 : i32
    return %c0_i32, %c0_i32_0, %c0_i32_1, %c0_i32_2 : i32, i32, i32, i32
  }
  func.func @transform_6(%arg0: i32) -> (i32, i32) {
    %c0_i32 = arith.constant 0 : i32
    %c0_i32_0 = arith.constant 0 : i32
    %c0_i32_1 = arith.constant 0 : i32
    return %c0_i32, %c0_i32_0 : i32, i32
  }
  func.func @transform_7(%arg0: i32) -> (i32, i32) {
    %c0_i32 = arith.constant 0 : i32
    %c0_i32_0 = arith.constant 0 : i32
    %c0_i32_1 = arith.constant 0 : i32
    return %c0_i32, %c0_i32_0 : i32, i32
  }
  func.func @transform_8(%arg0: i32) -> (i32, i32) {
    %c0_i32 = arith.constant 0 : i32
    %c0_i32_0 = arith.constant 0 : i32
    %c0_i32_1 = arith.constant 0 : i32
    return %c0_i32, %c0_i32_0 : i32, i32
  }
  func.func @transform_9(%arg0: i32) -> (i32, i32) {
    %c0_i32 = arith.constant 0 : i32
    %c0_i32_0 = arith.constant 0 : i32
    %c0_i32_1 = arith.constant 0 : i32
    return %c0_i32, %c0_i32_0 : i32, i32
  }
  func.func @transform_10(%arg0: i32) -> (i32, i32) {
    %c0_i32 = arith.constant 0 : i32
    %c0_i32_0 = arith.constant 0 : i32
    %c0_i32_1 = arith.constant 0 : i32
    return %c0_i32, %c0_i32_0 : i32, i32
  }
  func.func @transform_11(%arg0: i32) -> (i32, i32, i32) {
    %c0_i32 = arith.constant 0 : i32
    %c0_i32_0 = arith.constant 0 : i32
    %c0_i32_1 = arith.constant 0 : i32
    return %arg0, %c0_i32, %c0_i32_0 : i32, i32, i32
  }
}

</mosaic_0001>

<llo_original>
// kernel: tile.18
$region0: #{tile.18}
  #allocation0 [shape = 's32[1]{0}', space=sflag, size = 0x4, scoped, tag = 'scoped memory for tile.18']
  %s0 = inlined_call_operand.vmem [shape: f32[3], index: 0, kind: input, shape index: {}]
  %s1 = inlined_call_operand.vmem [shape: f32[4,3], index: 1, kind: output, shape index: {}]
  // Predicated region
  $region2: #{tile.18} parent=0 // pred_check
    _
  $region3: #{tile.18} parent=0 // pred_check_branch
    %3 = sbr.rel (0) target = $region5
  $region4: #{tile.18} parent=0 // pred_region
    _
  $region5: #{tile.18} parent=0 // pred_fallthru
    _
  %v4 = vld [vmem:[%s0] ss:$0 sm:$0xff]
  %5 = vst [vmem:[%s1] sm:$0xf] %v4

// kernel: tile.19
$region0: #{tile.19}
  %s0 = inlined_call_operand.vmem [shape: f32[4,3], index: 0, kind: input, shape index: {}]
  %s1 = inlined_call_operand.vmem [shape: f32[1,12], index: 1, kind: output, shape index: {}]
  $region1: #{tile.19} parent=0
    #allocation0 [shape = 'u8[4096]{0}', space=vmem, size = 0x1000, scoped, tag = 'scoped mem for output reshape']
    #allocation1 [shape = 'u8[4096]{0}', space=vmem, size = 0x1000, scoped, tag = 'scoped mem for input reshape']
    %s3 = sshllo.u32 0, 4
    %v4 = vld [vmem:[%s0] sm:%s3]
    %5 = vst [vmem:[#allocation1] sm:%s3] %v4
    %v6 = vld [vmem:[#allocation1] sm:$0x1]
    %vm7 = vcmask 23552
    %8 = vst.msk [vmem:[#allocation0] sm:$0x1] %vm7, %v6
    %s9 = scalar_lea.vmem [#allocation1], 3
    %v10 = vld [vmem:[%s9] sm:$0x1]
    %11 = vrot.lane.b32.xlu0 %v10, 9
    %v12 = vpop.permute.xlu0 %11
    %vm13 = vcmask 97352
    %14 = vst.msk [vmem:[#allocation0] sm:$0x1] %vm13, %v12
    %s15 = scalar_lea.vmem [#allocation1], 2
    %v16 = vld [vmem:[%s15] sm:$0x1]
    %17 = vrot.lane.b32.xlu0 %v16, 6
    %v18 = vpop.permute.xlu0 %17
    %vm19 = vcmask 72752
    %20 = vst.msk [vmem:[#allocation0] sm:$0x1] %vm19, %v18
    %s21 = scalar_lea.vmem [#allocation1], 1
    %v22 = vld [vmem:[%s21] sm:$0x1]
    %23 = vrot.lane.b32.xlu0 %v22, 3
    %v24 = vpop.permute.xlu0 %23
    %vm25 = vcmask 48152
    %26 = vst.msk [vmem:[#allocation0] sm:$0x1] %vm25, %v24
    %s28 = sshllo.u32 0, 1
    %v30 = vld [vmem:[#allocation0] sm:%s28]
    %s31 = sshllo.u32 0, 1
    %32 = vst [vmem:[%s1] sm:%s31] %v30

// kernel: tile.13
$region0: #{tile.13}
  #allocation0 [shape = 's32[1]{0}', space=sflag, size = 0x4, scoped, tag = 'scoped memory for tile.13']
  %s0 = inlined_call_operand.vmem [shape: f32[128], index: 0, kind: input, shape index: {}]
  %s1 = inlined_call_operand.vmem [shape: f32[4,128], index: 1, kind: output, shape index: {}]
  // Predicated region
  $region2: #{tile.13} parent=0 // pred_check
    _
  $region3: #{tile.13} parent=0 // pred_check_branch
    %3 = sbr.rel (0) target = $region5
  $region4: #{tile.13} parent=0 // pred_region
    _
  $region5: #{tile.13} parent=0 // pred_fallthru
    _
  %v4 = vld [vmem:[%s0] ss:$0 sm:$0xff]
  %5 = vst [vmem:[%s1] sm:$0xf] %v4

// kernel: cnn_forward.1
$region0: #{cnn_forward.1}
  #allocation0 [shape = 'u32[]', space=smem, size = 0x4, offset = 0x4, fixed_abs, tag = 'smem constant byte address 0x4 - core index']
  #allocation1 [shape = 'u32[144,128]{1,0:T(1,128)}', space=vmem, size = 0x12000, scoped, tag = 'internal scratch']
  #allocation2 [shape = 'f32[18,9,64]{2,1,0:T(8,128)}', space=vmem, size = 0x24000, scoped, tag = 'scratch operand']
  #allocation3 [shape = 'f32[18,9,64]{2,1,0:T(8,128)}', space=vmem, size = 0x24000, scoped, tag = 'scratch operand']
  #allocation4 [shape = 'f32[10,10,128]{2,1,0:T(8,128)}', space=vmem, size = 0x14000, scoped, tag = 'scratch operand']
  %s0 = inlined_call_operand.vmem [shape: f32[2,256,27], index: 0, kind: input, shape index: {}]
  %s1 = inlined_call_operand.vmem [shape: f32[27,64], index: 1, kind: input, shape index: {}]
  %s2 = inlined_call_operand.vmem [shape: f32[1,64], index: 2, kind: input, shape index: {}]
  %s3 = inlined_call_operand.vmem [shape: f32[3,3,64,128], index: 3, kind: input, shape index: {}]
  %s4 = inlined_call_operand.vmem [shape: f32[1,128], index: 4, kind: input, shape index: {}]
  %s5 = inlined_call_operand.vmem [shape: f32[3,3,128,256], index: 5, kind: input, shape index: {}]
  %s6 = inlined_call_operand.vmem [shape: f32[1,256], index: 6, kind: input, shape index: {}]
  %s7 = inlined_call_operand.vmem [shape: f32[256,512], index: 7, kind: input, shape index: {}]
  %s8 = inlined_call_operand.vmem [shape: f32[1,512], index: 8, kind: input, shape index: {}]
  %s9 = inlined_call_operand.vmem [shape: f32[512,12], index: 9, kind: input, shape index: {}]
  %s10 = inlined_call_operand.vmem [shape: f32[1,12], index: 10, kind: input, shape index: {}]
  %s11 = inlined_call_operand.vmem [shape: f32[2,64,12], index: 11, kind: output, shape index: {}]
  %s12 = sld [smem:[#allocation0]]
  $region77: #{cnn_forward.1} parent=0
    _
  %s14 = ssub.s32 1, %s12
  %s15 = scalar_select 0, %s14, %s12
  loop: start=0, step=1, limit=4
  $region2: #{cnn_forward.1} parent=0 // loop_pre_header
    _
  $region3: #{cnn_forward.1} parent=0 // loop_header
    %s17 = sphi 0, %s21
    %p18 = scmp.ge.s32.totalorder %s17, 4
    %s27 = sphi 0, %s29
    %s30 = sphi 0, %s27
    %s31 = sphi 0, %s30
    %s47 = sphi 0, %s31
    %s51 = sphi 0, %s51
    %s53 = sphi 0, %s51
    %s54 = sphi 0, %s53
    %s68 = sphi 0, %s54
    %s72 = sphi 0, %s72
    %s74 = sphi 0, %s72
    %s75 = sphi 0, %s74
    %s89 = sphi 0, %s75
    %s93 = sphi 0, %s93
    %s95 = sphi 0, %s93
    %s96 = sphi 0, %s95
    %s110 = sphi 0, %s96
    %s114 = sphi 0, %s114
    %s116 = sphi 0, %s114
    %s117 = sphi 0, %s116
    %s131 = sphi 0, %s117
    %s135 = sphi 0, %s135
    %s137 = sphi 0, %s135
    %s138 = sphi 0, %s137
    %s152 = sphi 0, %s138
    %s156 = sphi 0, %s156
    %s158 = sphi 0, %s156
    %s159 = sphi 0, %s158
    %s173 = sphi 0, %s159
    %s177 = sphi 0, %s177
    %s179 = sphi 0, %s177
    %s180 = sphi 0, %s179
    %s194 = sphi 0, %s180
    %s198 = sphi 0, %s198
    %s200 = sphi 0, %s198
    %s201 = sphi 0, %s200
    %s215 = sphi 0, %s201
    %s219 = sphi 0, %s219
    %s221 = sphi 0, %s219
    %s222 = sphi 0, %s221
    %s236 = sphi 0, %s222
    %s240 = sphi 0, %s240
    %s242 = sphi 0, %s240
    %s243 = sphi 0, %s242
    %s257 = sphi 0, %s243
    %s263 = sphi 0, %s265
    %s266 = sphi 0, %s263
    %s267 = sphi 0, %s266
    %s283 = sphi 0, %s267
  $region4: #{cnn_forward.1} parent=0 // loop_header_branch
    %20 = sbr.rel (%p18) target = $region8
  $region5: #{cnn_forward.1} parent=0 // loop_body
    %s22 = ssub.s32 %s17, 1
    %s23 = ssub.s32 %s17, 2
    %s24 = sadd.s32 %s17, 1
    %s25 = ssub.s32 %s17, %s24
    %p26 = scmp.eq.s32.totalorder %s25, 0
    %s28 = sadd.s32 %s27, 1
    %s29 = scalar_select %p26, %s27, %s28
    %p32 = pneg %p26
    %p33 = scmp.eq.s32.totalorder %s17, 1
    %p34 = por %p32, %p33
    %p35 = scmp.ne.s32.totalorder %s27, %s30
    %p36 = scmp.eq.s32.totalorder %s17, 0
    %p37 = por %p35, %p36
    %p38 = scmp.ne.s32.totalorder %s27, %s30
    %p39 = scmp.eq.s32.totalorder %s22, 1
    %p40 = por %p38, %p39
    %p41 = scmp.ne.s32.totalorder %s30, %s31
    %p42 = scmp.eq.s32.totalorder %s22, 0
    %p43 = por %p41, %p42
    %p44 = scmp.ne.s32.totalorder %s30, %s31
    %p45 = scmp.eq.s32.totalorder %s23, 1
    %p46 = por %p44, %p45
    %p48 = scmp.ne.s32.totalorder %s31, %s47
    %p49 = scmp.eq.s32.totalorder %s23, 0
    %p50 = por %p48, %p49
    %s52 = sadd.s32 %s51, 1
    %p55 = scmp.eq.s32.totalorder %s17, 1
    %p56 = scmp.ne.s32.totalorder %s51, %s53
    %p57 = scmp.eq.s32.totalorder %s17, 0
    %p58 = por %p56, %p57
    %p59 = scmp.ne.s32.totalorder %s51, %s53
    %p60 = scmp.eq.s32.totalorder %s22, 1
    %p61 = por %p59, %p60
    %p62 = scmp.ne.s32.totalorder %s53, %s54
    %p63 = scmp.eq.s32.totalorder %s22, 0
    %p64 = por %p62, %p63
    %p65 = scmp.ne.s32.totalorder %s53, %s54
    %p66 = scmp.eq.s32.totalorder %s23, 1
    %p67 = por %p65, %p66
    %p69 = scmp.ne.s32.totalorder %s54, %s68
    %p70 = scmp.eq.s32.totalorder %s23, 0
    %p71 = por %p69, %p70
    %s73 = sadd.s32 %s72, 1
    %p76 = scmp.eq.s32.totalorder %s17, 1
    %p77 = scmp.ne.s32.totalorder %s72, %s74
    %p78 = scmp.eq.s32.totalorder %s17, 0
    %p79 = por %p77, %p78
    %p80 = scmp.ne.s32.totalorder %s72, %s74
    %p81 = scmp.eq.s32.totalorder %s22, 1
    %p82 = por %p80, %p81
    %p83 = scmp.ne.s32.totalorder %s74, %s75
    %p84 = scmp.eq.s32.totalorder %s22, 0
    %p85 = por %p83, %p84
    %p86 = scmp.ne.s32.totalorder %s74, %s75
    %p87 = scmp.eq.s32.totalorder %s23, 1
    %p88 = por %p86, %p87
    %p90 = scmp.ne.s32.totalorder %s75, %s89
    %p91 = scmp.eq.s32.totalorder %s23, 0
    %p92 = por %p90, %p91
    %s94 = sadd.s32 %s93, 1
    %p97 = scmp.eq.s32.totalorder %s17, 1
    %p98 = scmp.ne.s32.totalorder %s93, %s95
    %p99 = scmp.eq.s32.totalorder %s17, 0
    %p100 = por %p98, %p99
    %p101 = scmp.ne.s32.totalorder %s93, %s95
    %p102 = scmp.eq.s32.totalorder %s22, 1
    %p103 = por %p101, %p102
    %p104 = scmp.ne.s32.totalorder %s95, %s96
    %p105 = scmp.eq.s32.totalorder %s22, 0
    %p106 = por %p104, %p105
    %p107 = scmp.ne.s32.totalorder %s95, %s96
    %p108 = scmp.eq.s32.totalorder %s23, 1
    %p109 = por %p107, %p108
    %p111 = scmp.ne.s32.totalorder %s96, %s110
    %p112 = scmp.eq.s32.totalorder %s23, 0
    %p113 = por %p111, %p112
    %s115 = sadd.s32 %s114, 1
    %p118 = scmp.eq.s32.totalorder %s17, 1
    %p119 = scmp.ne.s32.totalorder %s114, %s116
    %p120 = scmp.eq.s32.totalorder %s17, 0
    %p121 = por %p119, %p120
    %p122 = scmp.ne.s32.totalorder %s114, %s116
    %p123 = scmp.eq.s32.totalorder %s22, 1
    %p124 = por %p122, %p123
    %p125 = scmp.ne.s32.totalorder %s116, %s117
    %p126 = scmp.eq.s32.totalorder %s22, 0
    %p127 = por %p125, %p126
    %p128 = scmp.ne.s32.totalorder %s116, %s117
    %p129 = scmp.eq.s32.totalorder %s23, 1
    %p130 = por %p128, %p129
    %p132 = scmp.ne.s32.totalorder %s117, %s131
    %p133 = scmp.eq.s32.totalorder %s23, 0
    %p134 = por %p132, %p133
    %s136 = sadd.s32 %s135, 1
    %p139 = scmp.eq.s32.totalorder %s17, 1
    %p140 = scmp.ne.s32.totalorder %s135, %s137
    %p141 = scmp.eq.s32.totalorder %s17, 0
    %p142 = por %p140, %p141
    %p143 = scmp.ne.s32.totalorder %s135, %s137
    %p144 = scmp.eq.s32.totalorder %s22, 1
    %p145 = por %p143, %p144
    %p146 = scmp.ne.s32.totalorder %s137, %s138
    %p147 = scmp.eq.s32.totalorder %s22, 0
    %p148 = por %p146, %p147
    %p149 = scmp.ne.s32.totalorder %s137, %s138
    %p150 = scmp.eq.s32.totalorder %s23, 1
    %p151 = por %p149, %p150
    %p153 = scmp.ne.s32.totalorder %s138, %s152
    %p154 = scmp.eq.s32.totalorder %s23, 0
    %p155 = por %p153, %p154
    %s157 = sadd.s32 %s156, 1
    %p160 = scmp.eq.s32.totalorder %s17, 1
    %p161 = scmp.ne.s32.totalorder %s156, %s158
    %p162 = scmp.eq.s32.totalorder %s17, 0
    %p163 = por %p161, %p162
    %p164 = scmp.ne.s32.totalorder %s156, %s158
    %p165 = scmp.eq.s32.totalorder %s22, 1
    %p166 = por %p164, %p165
    %p167 = scmp.ne.s32.totalorder %s158, %s159
    %p168 = scmp.eq.s32.totalorder %s22, 0
    %p169 = por %p167, %p168
    %p170 = scmp.ne.s32.totalorder %s158, %s159
    %p171 = scmp.eq.s32.totalorder %s23, 1
    %p172 = por %p170, %p171
    %p174 = scmp.ne.s32.totalorder %s159, %s173
    %p175 = scmp.eq.s32.totalorder %s23, 0
    %p176 = por %p174, %p175
    %s178 = sadd.s32 %s177, 1
    %p181 = scmp.eq.s32.totalorder %s17, 1
    %p182 = scmp.ne.s32.totalorder %s177, %s179
    %p183 = scmp.eq.s32.totalorder %s17, 0
    %p184 = por %p182, %p183
    %p185 = scmp.ne.s32.totalorder %s177, %s179
    %p186 = scmp.eq.s32.totalorder %s22, 1
    %p187 = por %p185, %p186
    %p188 = scmp.ne.s32.totalorder %s179, %s180
    %p189 = scmp.eq.s32.totalorder %s22, 0
    %p190 = por %p188, %p189
    %p191 = scmp.ne.s32.totalorder %s179, %s180
    %p192 = scmp.eq.s32.totalorder %s23, 1
    %p193 = por %p191, %p192
    %p195 = scmp.ne.s32.totalorder %s180, %s194
    %p196 = scmp.eq.s32.totalorder %s23, 0
    %p197 = por %p195, %p196
    %s199 = sadd.s32 %s198, 1
    %p202 = scmp.eq.s32.totalorder %s17, 1
    %p203 = scmp.ne.s32.totalorder %s198, %s200
    %p204 = scmp.eq.s32.totalorder %s17, 0
    %p205 = por %p203, %p204
    %p206 = scmp.ne.s32.totalorder %s198, %s200
    %p207 = scmp.eq.s32.totalorder %s22, 1
    %p208 = por %p206, %p207
    %p209 = scmp.ne.s32.totalorder %s200, %s201
    %p210 = scmp.eq.s32.totalorder %s22, 0
    %p211 = por %p209, %p210
    %p212 = scmp.ne.s32.totalorder %s200, %s201
    %p213 = scmp.eq.s32.totalorder %s23, 1
    %p214 = por %p212, %p213
    %p216 = scmp.ne.s32.totalorder %s201, %s215
    %p217 = scmp.eq.s32.totalorder %s23, 0
    %p218 = por %p216, %p217
    %s220 = sadd.s32 %s219, 1
    %p223 = scmp.eq.s32.totalorder %s17, 1
    %p224 = scmp.ne.s32.totalorder %s219, %s221
    %p225 = scmp.eq.s32.totalorder %s17, 0
    %p226 = por %p224, %p225
    %p227 = scmp.ne.s32.totalorder %s219, %s221
    %p228 = scmp.eq.s32.totalorder %s22, 1
    %p229 = por %p227, %p228
    %p230 = scmp.ne.s32.totalorder %s221, %s222
    %p231 = scmp.eq.s32.totalorder %s22, 0
    %p232 = por %p230, %p231
    %p233 = scmp.ne.s32.totalorder %s221, %s222
    %p234 = scmp.eq.s32.totalorder %s23, 1
    %p235 = por %p233, %p234
    %p237 = scmp.ne.s32.totalorder %s222, %s236
    %p238 = scmp.eq.s32.totalorder %s23, 0
    %p239 = por %p237, %p238
    %s241 = sadd.s32 %s240, 1
    %p244 = scmp.eq.s32.totalorder %s17, 1
    %p245 = scmp.ne.s32.totalorder %s240, %s242
    %p246 = scmp.eq.s32.totalorder %s17, 0
    %p247 = por %p245, %p246
    %p248 = scmp.ne.s32.totalorder %s240, %s242
    %p249 = scmp.eq.s32.totalorder %s22, 1
    %p250 = por %p248, %p249
    %p251 = scmp.ne.s32.totalorder %s242, %s243
    %p252 = scmp.eq.s32.totalorder %s22, 0
    %p253 = por %p251, %p252
    %p254 = scmp.ne.s32.totalorder %s242, %s243
    %p255 = scmp.eq.s32.totalorder %s23, 1
    %p256 = por %p254, %p255
    %p258 = scmp.ne.s32.totalorder %s243, %s257
    %p259 = scmp.eq.s32.totalorder %s23, 0
    %p260 = por %p258, %p259
    %s261 = ssub.s32 %s17, %s24
    %p262 = scmp.eq.s32.totalorder %s261, 0
    %s264 = sadd.s32 %s263, 1
    %s265 = scalar_select %p262, %s263, %s264
    %p268 = pneg %p262
    %p269 = scmp.eq.s32.totalorder %s17, 1
    %p270 = por %p268, %p269
    %p271 = scmp.ne.s32.totalorder %s263, %s266
    %p272 = scmp.eq.s32.totalorder %s17, 0
    %p273 = por %p271, %p272
    %p274 = scmp.ne.s32.totalorder %s263, %s266
    %p275 = scmp.eq.s32.totalorder %s22, 1
    %p276 = por %p274, %p275
    %p277 = scmp.ne.s32.totalorder %s266, %s267
    %p278 = scmp.eq.s32.totalorder %s22, 0
    %p279 = por %p277, %p278
    %p280 = scmp.ne.s32.totalorder %s266, %s267
    %p281 = scmp.eq.s32.totalorder %s23, 1
    %p282 = por %p280, %p281
    %p284 = scmp.ne.s32.totalorder %s267, %s283
    %p285 = scmp.eq.s32.totalorder %s23, 0
    %p286 = por %p284, %p285
    %p287 = scmp.le.s32.totalorder 1, %s17
    %p288 = scmp.lt.s32.totalorder %s17, 3
    %p289 = pnand %p287, %p288
    %p290 = pneg %p289
    // Predicated region
    $region9: #{cnn_forward.1} parent=5 // pred_check
      _
    $region10: #{cnn_forward.1} parent=5 // pred_check_branch
      %292 = sbr.rel (%p289) target = $region12
    $region11: #{cnn_forward.1} parent=5 // pred_region
      %s293 = ssub.s32 %s17, 1
      // Predicated region
      $region13: #{cnn_forward.1} parent=11 // pred_check
        %p294 = pneg %p64
      $region14: #{cnn_forward.1} parent=11 // pred_check_branch
        %296 = sbr.rel (%p294) target = $region16
      $region15: #{cnn_forward.1} parent=11 // pred_region
        _
      $region16: #{cnn_forward.1} parent=11 // pred_fallthru
        _
      // Predicated region
      $region17: #{cnn_forward.1} parent=11 // pred_check
        %p297 = pneg %p85
      $region18: #{cnn_forward.1} parent=11 // pred_check_branch
        %299 = sbr.rel (%p297) target = $region20
      $region19: #{cnn_forward.1} parent=11 // pred_region
        _
      $region20: #{cnn_forward.1} parent=11 // pred_fallthru
        _
      // Predicated region
      $region21: #{cnn_forward.1} parent=11 // pred_check
        %p300 = pneg %p106
      $region22: #{cnn_forward.1} parent=11 // pred_check_branch
        %302 = sbr.rel (%p300) target = $region24
      $region23: #{cnn_forward.1} parent=11 // pred_region
        _
      $region24: #{cnn_forward.1} parent=11 // pred_fallthru
        _
      // Predicated region
      $region25: #{cnn_forward.1} parent=11 // pred_check
        %p303 = pneg %p127
      $region26: #{cnn_forward.1} parent=11 // pred_check_branch
        %305 = sbr.rel (%p303) target = $region28
      $region27: #{cnn_forward.1} parent=11 // pred_region
        _
      $region28: #{cnn_forward.1} parent=11 // pred_fallthru
        _
      // Predicated region
      $region29: #{cnn_forward.1} parent=11 // pred_check
        %p306 = pneg %p148
      $region30: #{cnn_forward.1} parent=11 // pred_check_branch
        %308 = sbr.rel (%p306) target = $region32
      $region31: #{cnn_forward.1} parent=11 // pred_region
        _
      $region32: #{cnn_forward.1} parent=11 // pred_fallthru
        _
      // Predicated region
      $region33: #{cnn_forward.1} parent=11 // pred_check
        %p309 = pneg %p169
      $region34: #{cnn_forward.1} parent=11 // pred_check_branch
        %311 = sbr.rel (%p309) target = $region36
      $region35: #{cnn_forward.1} parent=11 // pred_region
        _
      $region36: #{cnn_forward.1} parent=11 // pred_fallthru
        _
      // Predicated region
      $region37: #{cnn_forward.1} parent=11 // pred_check
        %p312 = pneg %p190
      $region38: #{cnn_forward.1} parent=11 // pred_check_branch
        %314 = sbr.rel (%p312) target = $region40
      $region39: #{cnn_forward.1} parent=11 // pred_region
        _
      $region40: #{cnn_forward.1} parent=11 // pred_fallthru
        _
      // Predicated region
      $region41: #{cnn_forward.1} parent=11 // pred_check
        %p315 = pneg %p211
      $region42: #{cnn_forward.1} parent=11 // pred_check_branch
        %317 = sbr.rel (%p315) target = $region44
      $region43: #{cnn_forward.1} parent=11 // pred_region
        _
      $region44: #{cnn_forward.1} parent=11 // pred_fallthru
        _
      // Predicated region
      $region45: #{cnn_forward.1} parent=11 // pred_check
        %p318 = pneg %p232
      $region46: #{cnn_forward.1} parent=11 // pred_check_branch
        %320 = sbr.rel (%p318) target = $region48
      $region47: #{cnn_forward.1} parent=11 // pred_region
        _
      $region48: #{cnn_forward.1} parent=11 // pred_fallthru
        _
      // Predicated region
      $region49: #{cnn_forward.1} parent=11 // pred_check
        %p321 = pneg %p253
      $region50: #{cnn_forward.1} parent=11 // pred_check_branch
        %323 = sbr.rel (%p321) target = $region52
      $region51: #{cnn_forward.1} parent=11 // pred_region
        _
      $region52: #{cnn_forward.1} parent=11 // pred_fallthru
        _
    $region12: #{cnn_forward.1} parent=5 // pred_fallthru
      _
    %p324 = scmp.lt.s32.totalorder %s17, 2
    // Predicated region
    $region53: #{cnn_forward.1} parent=5 // pred_check
      %p325 = pneg %p324
    $region54: #{cnn_forward.1} parent=5 // pred_check_branch
      %327 = sbr.rel (%p325) target = $region56
    $region55: #{cnn_forward.1} parent=5 // pred_region
      // Predicated region
      $region57: #{cnn_forward.1} parent=55 // pred_check
        %p328 = pneg %p37
      $region58: #{cnn_forward.1} parent=55 // pred_check_branch
        %330 = sbr.rel (%p328) target = $region60
      $region59: #{cnn_forward.1} parent=55 // pred_region
        %p331 = scmp.lt.s32.totalorder %s17, 1
        %s332 = scalar_select %p331, %s17, 1
        %s333 = smul.addr %s332, 32
        %s334 = smul.addr %s333, 8
        %s335 = scalar_lea.vmem %s0, %s334
      $region60: #{cnn_forward.1} parent=55 // pred_fallthru
        _
    $region56: #{cnn_forward.1} parent=5 // pred_fallthru
      _
    %p336 = scmp.le.s32.totalorder 1, %s17
    %p337 = scmp.lt.s32.totalorder %s17, 3
    %p338 = pnand %p336, %p337
    %p339 = pneg %p338
    // Predicated region
    $region61: #{cnn_forward.1} parent=5 // pred_check
      _
    $region62: #{cnn_forward.1} parent=5 // pred_check_branch
      %341 = sbr.rel (%p338) target = $region64
    $region63: #{cnn_forward.1} parent=5 // pred_region
      %s342 = ssub.s32 %s17, 1
      %p343 = scmp.lt.s32.totalorder %s22, 1
      %s344 = scalar_select %p343, %s22, 1
      %s345 = smul.addr %s344, 32
      %s346 = smul.addr %s345, 8
      %s347 = scalar_lea.vmem %s0, %s346
      %p348 = pneg %p43
      %p349 = pneg %p40
      %p350 = pneg %p64
      %p351 = pneg %p61
      %p352 = pneg %p85
      %p353 = pneg %p82
      %p354 = pneg %p106
      %p355 = pneg %p103
      %p356 = pneg %p127
      %p357 = pneg %p124
      %p358 = pneg %p148
      %p359 = pneg %p145
      %p360 = pneg %p169
      %p361 = pneg %p166
      %p362 = pneg %p190
      %p363 = pneg %p187
      %p364 = pneg %p211
      %p365 = pneg %p208
      %p366 = pneg %p232
      %p367 = pneg %p229
      %p368 = pneg %p253
      %p369 = pneg %p250
      %p370 = pneg %p279
      %p371 = pneg %p276
      %p372 = scmp.lt.s32.totalorder %s22, 1
      %s373 = scalar_select %p372, %s22, 1
      %s374 = smul.addr %s373, 8
      %s375 = smul.addr %s374, 8
      %s376 = scalar_lea.vmem %s11, %s375
      %p377 = scmp.lt.s32.totalorder %s22, 1
      %s378 = scalar_select %p377, %s22, 1
      %s379 = smul.addr %s378, 32
      %s380 = smul.addr %s379, 8
      %s381 = scalar_lea.vmem %s0, %s380
      %p382 = scmp.lt.s32.totalorder %s22, 1
      %s383 = scalar_select %p382, %s22, 1
      %s384 = smul.addr %s383, 8
      %s385 = smul.addr %s384, 8
      %s386 = scalar_lea.vmem %s11, %s385
      %v387 = vld [vmem:[%s381] sm:$0xff]
      %v388 = vld [vmem:[%s381 + $0x8] sm:$0xff]
      %v389 = vld [vmem:[%s381 + $0x10] sm:$0xff]
      %v390 = vld [vmem:[%s381 + $0x18] sm:$0xff]
      %v391 = vld [vmem:[%s381 + $0x20] sm:$0xff]
      %v392 = vld [vmem:[%s381 + $0x28] sm:$0xff]
      %v393 = vld [vmem:[%s381 + $0x30] sm:$0xff]
      %v394 = vld [vmem:[%s381 + $0x38] sm:$0xff]
      %v395 = vld [vmem:[%s381 + $0x40] sm:$0xff]
      %v396 = vld [vmem:[%s381 + $0x48] sm:$0xff]
      %v397 = vld [vmem:[%s381 + $0x50] sm:$0xff]
      %v398 = vld [vmem:[%s381 + $0x58] sm:$0xff]
      %v399 = vld [vmem:[%s381 + $0x60] sm:$0xff]
      %v400 = vld [vmem:[%s381 + $0x68] sm:$0xff]
      %v401 = vld [vmem:[%s381 + $0x70] sm:$0xff]
      %v402 = vld [vmem:[%s381 + $0x78] sm:$0xff]
      %v403 = vld [vmem:[%s381 + $0x80] sm:$0xff]
      %v404 = vld [vmem:[%s381 + $0x88] sm:$0xff]
      %v405 = vld [vmem:[%s381 + $0x90] sm:$0xff]
      %v406 = vld [vmem:[%s381 + $0x98] sm:$0xff]
      %v407 = vld [vmem:[%s381 + $0xa0] sm:$0xff]
      %v408 = vld [vmem:[%s381 + $0xa8] sm:$0xff]
      %v409 = vld [vmem:[%s381 + $0xb0] sm:$0xff]
      %v410 = vld [vmem:[%s381 + $0xb8] sm:$0xff]
      %v411 = vld [vmem:[%s381 + $0xc0] sm:$0xff]
      %v412 = vld [vmem:[%s381 + $0xc8] sm:$0xff]
      %v413 = vld [vmem:[%s381 + $0xd0] sm:$0xff]
      %v414 = vld [vmem:[%s381 + $0xd8] sm:$0xff]
      %v415 = vld [vmem:[%s381 + $0xe0] sm:$0xff]
      %v416 = vld [vmem:[%s381 + $0xe8] sm:$0xff]
      %v417 = vld [vmem:[%s381 + $0xf0] sm:$0xff]
      %v418 = vld [vmem:[%s381 + $0xf8] sm:$0xff]
      %v419 = vld [vmem:[%s1] sm:$0xff]
      %v420 = vld [vmem:[%s1 + $0x8] sm:$0xff]
      %v421 = vld [vmem:[%s1 + $0x10] sm:$0xff]
      %v422 = vld [vmem:[%s1 + $0x18] sm:$0x7]
      %v423 = vld [vmem:[%s2] sm:$0x1]
      %v425 = vlaneseq
      %v426 = vshrl.u32 %v425, 7
      %v427 = vsub.s32 0, %v426
      %v428 = vrot.slane %v423, %v427
      %vm430 = vcmask 220160
      %v432 = vsel %vm430, %v387, 0
      %v435 = vsel %vm430, %v388, 0
      %v438 = vsel %vm430, %v389, 0
      %v441 = vsel %vm430, %v390, 0
      %v444 = vsel %vm430, %v391, 0
      %v447 = vsel %vm430, %v392, 0
      %v450 = vsel %vm430, %v393, 0
      %v453 = vsel %vm430, %v394, 0
      %v456 = vsel %vm430, %v395, 0
      %v459 = vsel %vm430, %v396, 0
      %v462 = vsel %vm430, %v397, 0
      %v465 = vsel %vm430, %v398, 0
      %v468 = vsel %vm430, %v399, 0
      %v471 = vsel %vm430, %v400, 0
      %v474 = vsel %vm430, %v401, 0
      %v477 = vsel %vm430, %v402, 0
      %v480 = vsel %vm430, %v403, 0
      %v483 = vsel %vm430, %v404, 0
      %v486 = vsel %vm430, %v405, 0
      %v489 = vsel %vm430, %v406, 0
      %v492 = vsel %vm430, %v407, 0
      %v495 = vsel %vm430, %v408, 0
      %v498 = vsel %vm430, %v409, 0
      %v501 = vsel %vm430, %v410, 0
      %v504 = vsel %vm430, %v411, 0
      %v507 = vsel %vm430, %v412, 0
      %v510 = vsel %vm430, %v413, 0
      %v513 = vsel %vm430, %v414, 0
      %v516 = vsel %vm430, %v415, 0
      %v519 = vsel %vm430, %v416, 0
      %v522 = vsel %vm430, %v417, 0
      %v525 = vsel %vm430, %v418, 0
      %vm527 = vcmask 1042432
      %v529 = vsel %vm527, %v422, 0
      %531 = vmatprep.subr.mxu0 0.0
      %532 = vmatpush1.msra.mxu0 %v419
      %533 = vmatprep.subr.mxu0 0.0
      %534 = vmatpush1.msra.mxu0 %v420
      %535 = vmatprep.subr.mxu0 0.0
      %536 = vmatpush1.msra.mxu0 %v421
      %537 = vmatprep.subr.mxu0 0.0
      %538 = vmatpush1.msra.mxu0 %v529
      %539 = vmatprep.subr.mxu0 0.0
      %540 = vmatpush1.msra.mxu0 0.0
      %541 = vmatprep.subr.mxu0 0.0
      %542 = vmatpush1.msra.mxu0 0.0
      %543 = vmatprep.subr.mxu0 0.0
      %544 = vmatpush1.msra.mxu0 0.0
      %545 = vmatprep.subr.mxu0 0.0
      %546 = vmatpush1.msra.mxu0 0.0
      %547 = vmatprep.subr.mxu0 0.0
      %548 = vmatpush1.msra.mxu0 0.0
      %549 = vmatprep.subr.mxu0 0.0
      %550 = vmatpush1.msra.mxu0 0.0
      %551 = vmatprep.subr.mxu0 0.0
      %552 = vmatpush1.msra.mxu0 0.0
      %553 = vmatprep.subr.mxu0 0.0
      %554 = vmatpush1.msra.mxu0 0.0
      %555 = vmatprep.subr.mxu0 0.0
      %556 = vmatpush1.msra.mxu0 0.0
      %557 = vmatprep.subr.mxu0 0.0
      %558 = vmatpush1.msra.mxu0 0.0
      %559 = vmatprep.subr.mxu0 0.0
      %560 = vmatpush1.msra.mxu0 0.0
      %561 = vmatprep.subr.mxu0 0.0
      %562 = vmatpush1.msra.mxu0 0.0
      %563 = vmatprep.subr.mxu0 0.0
      %564 = vmatpush1.msra.mxu0 0.0
      %565 = vmatprep.subr.mxu0 0.0
      %566 = vmatpush1.msra.mxu0 0.0
      %567 = vmatprep.subr.mxu0 0.0
      %568 = vmatpush1.msra.mxu0 0.0
      %569 = vmatprep.subr.mxu0 0.0
      %570 = vmatpush1.msra.mxu0 0.0
      %571 = vmatprep.subr.mxu0 0.0
      %572 = vmatpush1.msra.mxu0 0.0
      %573 = vmatprep.subr.mxu0 0.0
      %574 = vmatpush1.msra.mxu0 0.0
      %575 = vmatprep.subr.mxu0 0.0
      %576 = vmatpush1.msra.mxu0 0.0
      %577 = vmatprep.subr.mxu0 0.0
      %578 = vmatpush1.msra.mxu0 0.0
      %579 = vmatprep.subr.mxu0 0.0
      %580 = vmatpush1.msra.mxu0 0.0
      %581 = vmatprep.subr.mxu0 0.0
      %582 = vmatpush1.msra.mxu0 0.0
      %583 = vmatprep.subr.mxu0 0.0
      %584 = vmatpush1.msra.mxu0 0.0
      %585 = vmatprep.subr.mxu0 0.0
      %586 = vmatpush1.msra.mxu0 0.0
      %587 = vmatprep.subr.mxu0 0.0
      %588 = vmatpush1.msra.mxu0 0.0
      %589 = vmatprep.subr.mxu0 0.0
      %590 = vmatpush1.msra.mxu0 0.0
      %591 = vmatprep.subr.mxu0 0.0
      %592 = vmatpush1.msra.mxu0 0.0
      %593 = vmatprep.subr.mxu0 0.0
      %594 = vmatpush1.msra.mxu0 0.0
      %595 = vmatprep.mubr.f32.mxu0 0.0
      %596 = vmatmul.mubr.f32.gmra.mrb[0].mxu0 %v432
      %v597 = vpop.f32.mrb[0].mxu0
      %v598 = vadd.f32 %v428, %v597
      %v599 = vpop.f32.mrb[0].mxu0
      %600 = vmatprep.mubr.f32.mxu0 0.0
      %601 = vmatmul.mubr.f32.gmra.mrb[0].mxu0 %v435
      %v602 = vpop.f32.mrb[0].mxu0
      %v603 = vadd.f32 %v428, %v602
      %v604 = vpop.f32.mrb[0].mxu0
      %605 = vmatprep.mubr.f32.mxu0 0.0
      %606 = vmatmul.mubr.f32.gmra.mrb[0].mxu0 %v438
      %v607 = vpop.f32.mrb[0].mxu0
      %v608 = vadd.f32 %v428, %v607
      %v609 = vpop.f32.mrb[0].mxu0
      %610 = vmatprep.mubr.f32.mxu0 0.0
      %611 = vmatmul.mubr.f32.gmra.mrb[0].mxu0 %v441
      %v612 = vpop.f32.mrb[0].mxu0
      %v613 = vadd.f32 %v428, %v612
      %v614 = vpop.f32.mrb[0].mxu0
      %615 = vmatprep.mubr.f32.mxu0 0.0
      %616 = vmatmul.mubr.f32.gmra.mrb[0].mxu0 %v444
      %v617 = vpop.f32.mrb[0].mxu0
      %v618 = vadd.f32 %v428, %v617
      %v619 = vpop.f32.mrb[0].mxu0
      %620 = vmatprep.mubr.f32.mxu0 0.0
      %621 = vmatmul.mubr.f32.gmra.mrb[0].mxu0 %v447
      %v622 = vpop.f32.mrb[0].mxu0
      %v623 = vadd.f32 %v428, %v622
      %v624 = vpop.f32.mrb[0].mxu0
      %625 = vmatprep.mubr.f32.mxu0 0.0
      %626 = vmatmul.mubr.f32.gmra.mrb[0].mxu0 %v450
      %v627 = vpop.f32.mrb[0].mxu0
      %v628 = vadd.f32 %v428, %v627
      %v629 = vpop.f32.mrb[0].mxu0
      %630 = vmatprep.mubr.f32.mxu0 0.0
      %631 = vmatmul.mubr.f32.gmra.mrb[0].mxu0 %v453
      %v632 = vpop.f32.mrb[0].mxu0
      %v633 = vadd.f32 %v428, %v632
      %v634 = vpop.f32.mrb[0].mxu0
      %635 = vmatprep.mubr.f32.mxu0 0.0
      %636 = vmatmul.mubr.f32.gmra.mrb[0].mxu0 %v456
      %v637 = vpop.f32.mrb[0].mxu0
      %v638 = vadd.f32 %v428, %v637
      %v639 = vpop.f32.mrb[0].mxu0
      %640 = vmatprep.mubr.f32.mxu0 0.0
      %641 = vmatmul.mubr.f32.gmra.mrb[0].mxu0 %v459
      %v642 = vpop.f32.mrb[0].mxu0
      %v643 = vadd.f32 %v428, %v642
      %v644 = vpop.f32.mrb[0].mxu0
      %645 = vmatprep.mubr.f32.mxu0 0.0
      %646 = vmatmul.mubr.f32.gmra.mrb[0].mxu0 %v462
      %v647 = vpop.f32.mrb[0].mxu0
      %v648 = vadd.f32 %v428, %v647
      %v649 = vpop.f32.mrb[0].mxu0
      %650 = vmatprep.mubr.f32.mxu0 0.0
      %651 = vmatmul.mubr.f32.gmra.mrb[0].mxu0 %v465
      %v652 = vpop.f32.mrb[0].mxu0
      %v653 = vadd.f32 %v428, %v652
      %v654 = vpop.f32.mrb[0].mxu0
      %655 = vmatprep.mubr.f32.mxu0 0.0
      %656 = vmatmul.mubr.f32.gmra.mrb[0].mxu0 %v468
      %v657 = vpop.f32.mrb[0].mxu0
      %v658 = vadd.f32 %v428, %v657
      %v659 = vpop.f32.mrb[0].mxu0
      %660 = vmatprep.mubr.f32.mxu0 0.0
      %661 = vmatmul.mubr.f32.gmra.mrb[0].mxu0 %v471
      %v662 = vpop.f32.mrb[0].mxu0
      %v663 = vadd.f32 %v428, %v662
      %v664 = vpop.f32.mrb[0].mxu0
      %665 = vmatprep.mubr.f32.mxu0 0.0
      %666 = vmatmul.mubr.f32.gmra.mrb[0].mxu0 %v474
      %v667 = vpop.f32.mrb[0].mxu0
      %v668 = vadd.f32 %v428, %v667
      %v669 = vpop.f32.mrb[0].mxu0
      %670 = vmatprep.mubr.f32.mxu0 0.0
      %671 = vmatmul.mubr.f32.gmra.mrb[0].mxu0 %v477
      %v672 = vpop.f32.mrb[0].mxu0
      %v673 = vadd.f32 %v428, %v672
      %v674 = vpop.f32.mrb[0].mxu0
      %675 = vmatprep.mubr.f32.mxu0 0.0
      %676 = vmatmul.mubr.f32.gmra.mrb[0].mxu0 %v480
      %v677 = vpop.f32.mrb[0].mxu0
      %v678 = vadd.f32 %v428, %v677
      %v679 = vpop.f32.mrb[0].mxu0
      %680 = vmatprep.mubr.f32.mxu0 0.0
      %681 = vmatmul.mubr.f32.gmra.mrb[0].mxu0 %v483
      %v682 = vpop.f32.mrb[0].mxu0
      %v683 = vadd.f32 %v428, %v682
      %v684 = vpop.f32.mrb[0].mxu0
      %685 = vmatprep.mubr.f32.mxu0 0.0
      %686 = vmatmul.mubr.f32.gmra.mrb[0].mxu0 %v486
      %v687 = vpop.f32.mrb[0].mxu0
      %v688 = vadd.f32 %v428, %v687
      %v689 = vpop.f32.mrb[0].mxu0
      %690 = vmatprep.mubr.f32.mxu0 0.0
      %691 = vmatmul.mubr.f32.gmra.mrb[0].mxu0 %v489
      %v692 = vpop.f32.mrb[0].mxu0
      %v693 = vadd.f32 %v428, %v692
      %v694 = vpop.f32.mrb[0].mxu0
      %695 = vmatprep.mubr.f32.mxu0 0.0
      %696 = vmatmul.mubr.f32.gmra.mrb[0].mxu0 %v492
      %v697 = vpop.f32.mrb[0].mxu0
      %v698 = vadd.f32 %v428, %v697
      %v699 = vpop.f32.mrb[0].mxu0
      %700 = vmatprep.mubr.f32.mxu0 0.0
      %701 = vmatmul.mubr.f32.gmra.mrb[0].mxu0 %v495
      %v702 = vpop.f32.mrb[0].mxu0
      %v703 = vadd.f32 %v428, %v702
      %v704 = vpop.f32.mrb[0].mxu0
      %705 = vmatprep.mubr.f32.mxu0 0.0
      %706 = vmatmul.mubr.f32.gmra.mrb[0].mxu0 %v498
      %v707 = vpop.f32.mrb[0].mxu0
      %v708 = vadd.f32 %v428, %v707
      %v709 = vpop.f32.mrb[0].mxu0
      %710 = vmatprep.mubr.f32.mxu0 0.0
      %711 = vmatmul.mubr.f32.gmra.mrb[0].mxu0 %v501
      %v712 = vpop.f32.mrb[0].mxu0
      %v713 = vadd.f32 %v428, %v712
      %v714 = vpop.f32.mrb[0].mxu0
      %715 = vmatprep.mubr.f32.mxu0 0.0
      %716 = vmatmul.mubr.f32.gmra.mrb[0].mxu0 %v504
      %v717 = vpop.f32.mrb[0].mxu0
      %v718 = vadd.f32 %v428, %v717
      %v719 = vpop.f32.mrb[0].mxu0
      %720 = vmatprep.mubr.f32.mxu0 0.0
      %721 = vmatmul.mubr.f32.gmra.mrb[0].mxu0 %v507
      %v722 = vpop.f32.mrb[0].mxu0
      %v723 = vadd.f32 %v428, %v722
      %v724 = vpop.f32.mrb[0].mxu0
      %725 = vmatprep.mubr.f32.mxu0 0.0
      %726 = vmatmul.mubr.f32.gmra.mrb[0].mxu0 %v510
      %v727 = vpop.f32.mrb[0].mxu0
      %v728 = vadd.f32 %v428, %v727
      %v729 = vpop.f32.mrb[0].mxu0
      %730 = vmatprep.mubr.f32.mxu0 0.0
      %731 = vmatmul.mubr.f32.gmra.mrb[0].mxu0 %v513
      %v732 = vpop.f32.mrb[0].mxu0
      %v733 = vadd.f32 %v428, %v732
      %v734 = vpop.f32.mrb[0].mxu0
      %735 = vmatprep.mubr.f32.mxu0 0.0
      %736 = vmatmul.mubr.f32.gmra.mrb[0].mxu0 %v516
      %v737 = vpop.f32.mrb[0].mxu0
      %v738 = vadd.f32 %v428, %v737
      %v739 = vpop.f32.mrb[0].mxu0
      %740 = vmatprep.mubr.f32.mxu0 0.0
      %741 = vmatmul.mubr.f32.gmra.mrb[0].mxu0 %v519
      %v742 = vpop.f32.mrb[0].mxu0
      %v743 = vadd.f32 %v428, %v742
      %v744 = vpop.f32.mrb[0].mxu0
      %745 = vmatprep.mubr.f32.mxu0 0.0
      %746 = vmatmul.mubr.f32.gmra.mrb[0].mxu0 %v522
      %v747 = vpop.f32.mrb[0].mxu0
      %v748 = vadd.f32 %v428, %v747
      %v749 = vpop.f32.mrb[0].mxu0
      %750 = vmatprep.mubr.f32.mxu0 0.0
      %751 = vmatmul.mubr.f32.gmra.mrb[0].mxu0 %v525
      %v752 = vpop.f32.mrb[0].mxu0
      %v753 = vadd.f32 %v428, %v752
      %v754 = vpop.f32.mrb[0].mxu0
      %755 = vdwg.mxu0
      %v756 = vmax.f32 %v598, 0.0
      %v757 = vmax.f32 %v603, 0.0
      %v758 = vmax.f32 %v608, 0.0
      %v759 = vmax.f32 %v613, 0.0
      %v760 = vmax.f32 %v618, 0.0
      %v761 = vmax.f32 %v623, 0.0
      %v762 = vmax.f32 %v628, 0.0
      %v763 = vmax.f32 %v633, 0.0
      %v764 = vmax.f32 %v638, 0.0
      %v765 = vmax.f32 %v643, 0.0
      %v766 = vmax.f32 %v648, 0.0
      %v767 = vmax.f32 %v653, 0.0
      %v768 = vmax.f32 %v658, 0.0
      %v769 = vmax.f32 %v663, 0.0
      %v770 = vmax.f32 %v668, 0.0
      %v771 = vmax.f32 %v673, 0.0
      %v772 = vmax.f32 %v678, 0.0
      %v773 = vmax.f32 %v683, 0.0
      %v774 = vmax.f32 %v688, 0.0
      %v775 = vmax.f32 %v693, 0.0
      %v776 = vmax.f32 %v698, 0.0
      %v777 = vmax.f32 %v703, 0.0
      %v778 = vmax.f32 %v708, 0.0
      %v779 = vmax.f32 %v713, 0.0
      %v780 = vmax.f32 %v718, 0.0
      %v781 = vmax.f32 %v723, 0.0
      %v782 = vmax.f32 %v728, 0.0
      %v783 = vmax.f32 %v733, 0.0
      %v784 = vmax.f32 %v738, 0.0
      %v785 = vmax.f32 %v743, 0.0
      %v786 = vmax.f32 %v748, 0.0
      %v787 = vmax.f32 %v753, 0.0
      %vm788 = vcmask 523264
      %789 = vst.msk [vmem:[#allocation2] sm:$0xff] %vm788, 0.0
      %vm790 = vcmask 516096
      %791 = vst.msk [vmem:[#allocation2 + $0x8] sm:$0x1] %vm790, 0.0
      %792 = vst.msk [vmem:[#allocation2 + $0x10] sm:$0xff] %vm788, 0.0
      %793 = vst.msk [vmem:[#allocation2 + $0x18] sm:$0x1] %vm790, 0.0
      %794 = vst.msk [vmem:[#allocation2 + $0x20] sm:$0xff] %vm788, 0.0
      %795 = vst.msk [vmem:[#allocation2 + $0x28] sm:$0x1] %vm790, 0.0
      %796 = vst.msk [vmem:[#allocation2 + $0x30] sm:$0xff] %vm788, 0.0
      %797 = vst.msk [vmem:[#allocation2 + $0x38] sm:$0x1] %vm790, 0.0
      %798 = vst.msk [vmem:[#allocation2 + $0x40] sm:$0xff] %vm788, 0.0
      %799 = vst.msk [vmem:[#allocation2 + $0x48] sm:$0x1] %vm790, 0.0
      %800 = vst.msk [vmem:[#allocation2 + $0x50] sm:$0xff] %vm788, 0.0
      %801 = vst.msk [vmem:[#allocation2 + $0x58] sm:$0x1] %vm790, 0.0
      %802 = vst.msk [vmem:[#allocation2 + $0x60] sm:$0xff] %vm788, 0.0
      %803 = vst.msk [vmem:[#allocation2 + $0x68] sm:$0x1] %vm790, 0.0
      %804 = vst.msk [vmem:[#allocation2 + $0x70] sm:$0xff] %vm788, 0.0
      %805 = vst.msk [vmem:[#allocation2 + $0x78] sm:$0x1] %vm790, 0.0
      %806 = vst.msk [vmem:[#allocation2 + $0x80] sm:$0xff] %vm788, 0.0
      %807 = vst.msk [vmem:[#allocation2 + $0x88] sm:$0x1] %vm790, 0.0
      %808 = vst.msk [vmem:[#allocation2 + $0x90] sm:$0xff] %vm788, 0.0
      %809 = vst.msk [vmem:[#allocation2 + $0x98] sm:$0x1] %vm790, 0.0
      %810 = vst.msk [vmem:[#allocation2 + $0xa0] sm:$0xff] %vm788, 0.0
      %811 = vst.msk [vmem:[#allocation2 + $0xa8] sm:$0x1] %vm790, 0.0
      %812 = vst.msk [vmem:[#allocation2 + $0xb0] sm:$0xff] %vm788, 0.0
      %813 = vst.msk [vmem:[#allocation2 + $0xb8] sm:$0x1] %vm790, 0.0
      %814 = vst.msk [vmem:[#allocation2 + $0xc0] sm:$0xff] %vm788, 0.0
      %815 = vst.msk [vmem:[#allocation2 + $0xc8] sm:$0x1] %vm790, 0.0
      %816 = vst.msk [vmem:[#allocation2 + $0xd0] sm:$0xff] %vm788, 0.0
      %817 = vst.msk [vmem:[#allocation2 + $0xd8] sm:$0x1] %vm790, 0.0
      %818 = vst.msk [vmem:[#allocation2 + $0xe0] sm:$0xff] %vm788, 0.0
      %819 = vst.msk [vmem:[#allocation2 + $0xe8] sm:$0x1] %vm790, 0.0
      %820 = vst.msk [vmem:[#allocation2 + $0xf0] sm:$0xff] %vm788, 0.0
      %821 = vst.msk [vmem:[#allocation2 + $0xf8] sm:$0x1] %vm790, 0.0
      %822 = vst.msk [vmem:[#allocation2 + $0x100] sm:$0xff] %vm788, 0.0
      %823 = vst.msk [vmem:[#allocation2 + $0x108] sm:$0x1] %vm790, 0.0
      %824 = vst.msk [vmem:[#allocation2 + $0x110] sm:$0xff] %vm788, 0.0
      %825 = vst.msk [vmem:[#allocation2 + $0x118] sm:$0x1] %vm790, 0.0
      %826 = vst.msk [vmem:[#allocation3] sm:$0xff] %vm788, 0.0
      %827 = vst.msk [vmem:[#allocation3 + $0x8] sm:$0x1] %vm790, 0.0
      %828 = vst.msk [vmem:[#allocation3 + $0x10] sm:$0xff] %vm788, 0.0
      %829 = vst.msk [vmem:[#allocation3 + $0x18] sm:$0x1] %vm790, 0.0
      %830 = vst.msk [vmem:[#allocation3 + $0x20] sm:$0xff] %vm788, 0.0
      %831 = vst.msk [vmem:[#allocation3 + $0x28] sm:$0x1] %vm790, 0.0
      %832 = vst.msk [vmem:[#allocation3 + $0x30] sm:$0xff] %vm788, 0.0
      %833 = vst.msk [vmem:[#allocation3 + $0x38] sm:$0x1] %vm790, 0.0
      %834 = vst.msk [vmem:[#allocation3 + $0x40] sm:$0xff] %vm788, 0.0
      %835 = vst.msk [vmem:[#allocation3 + $0x48] sm:$0x1] %vm790, 0.0
      %836 = vst.msk [vmem:[#allocation3 + $0x50] sm:$0xff] %vm788, 0.0
      %837 = vst.msk [vmem:[#allocation3 + $0x58] sm:$0x1] %vm790, 0.0
      %838 = vst.msk [vmem:[#allocation3 + $0x60] sm:$0xff] %vm788, 0.0
      %839 = vst.msk [vmem:[#allocation3 + $0x68] sm:$0x1] %vm790, 0.0
      %840 = vst.msk [vmem:[#allocation3 + $0x70] sm:$0xff] %vm788, 0.0
      %841 = vst.msk [vmem:[#allocation3 + $0x78] sm:$0x1] %vm790, 0.0
      %842 = vst.msk [vmem:[#allocation3 + $0x80] sm:$0xff] %vm788, 0.0
      %843 = vst.msk [vmem:[#allocation3 + $0x88] sm:$0x1] %vm790, 0.0
      %844 = vst.msk [vmem:[#allocation3 + $0x90] sm:$0xff] %vm788, 0.0
      %845 = vst.msk [vmem:[#allocation3 + $0x98] sm:$0x1] %vm790, 0.0
      %846 = vst.msk [vmem:[#allocation3 + $0xa0] sm:$0xff] %vm788, 0.0
      %847 = vst.msk [vmem:[#allocation3 + $0xa8] sm:$0x1] %vm790, 0.0
      %848 = vst.msk [vmem:[#allocation3 + $0xb0] sm:$0xff] %vm788, 0.0
      %849 = vst.msk [vmem:[#allocation3 + $0xb8] sm:$0x1] %vm790, 0.0
      %850 = vst.msk [vmem:[#allocation3 + $0xc0] sm:$0xff] %vm788, 0.0
      %851 = vst.msk [vmem:[#allocation3 + $0xc8] sm:$0x1] %vm790, 0.0
      %852 = vst.msk [vmem:[#allocation3 + $0xd0] sm:$0xff] %vm788, 0.0
      %853 = vst.msk [vmem:[#allocation3 + $0xd8] sm:$0x1] %vm790, 0.0
      %854 = vst.msk [vmem:[#allocation3 + $0xe0] sm:$0xff] %vm788, 0.0
      %855 = vst.msk [vmem:[#allocation3 + $0xe8] sm:$0x1] %vm790, 0.0
      %856 = vst.msk [vmem:[#allocation3 + $0xf0] sm:$0xff] %vm788, 0.0
      %857 = vst.msk [vmem:[#allocation3 + $0xf8] sm:$0x1] %vm790, 0.0
      %858 = vst.msk [vmem:[#allocation3 + $0x100] sm:$0xff] %vm788, 0.0
      %859 = vst.msk [vmem:[#allocation3 + $0x108] sm:$0x1] %vm790, 0.0
      %860 = vst.msk [vmem:[#allocation3 + $0x110] sm:$0xff] %vm788, 0.0
      %861 = vst.msk [vmem:[#allocation3 + $0x118] sm:$0x1] %vm790, 0.0
      %s862 = scalar_lea.vmem [#allocation3], 16
      %863 = vst.msk [vmem:[%s862] sm:$0xff] %vm788, %v756
      %864 = vst.msk [vmem:[%s862 + $0x10] sm:$0xff] %vm788, %v757
      %865 = vst.msk [vmem:[%s862 + $0x20] sm:$0xff] %vm788, %v758
      %866 = vst.msk [vmem:[%s862 + $0x30] sm:$0xff] %vm788, %v759
      %867 = vst.msk [vmem:[%s862 + $0x40] sm:$0xff] %vm788, %v760
      %868 = vst.msk [vmem:[%s862 + $0x50] sm:$0xff] %vm788, %v761
      %869 = vst.msk [vmem:[%s862 + $0x60] sm:$0xff] %vm788, %v762
      %870 = vst.msk [vmem:[%s862 + $0x70] sm:$0xff] %vm788, %v763
      %871 = vst.msk [vmem:[%s862 + $0x80] sm:$0xff] %vm788, %v764
      %872 = vst.msk [vmem:[%s862 + $0x90] sm:$0xff] %vm788, %v765
      %873 = vst.msk [vmem:[%s862 + $0xa0] sm:$0xff] %vm788, %v766
      %874 = vst.msk [vmem:[%s862 + $0xb0] sm:$0xff] %vm788, %v767
      %875 = vst.msk [vmem:[%s862 + $0xc0] sm:$0xff] %vm788, %v768
      %876 = vst.msk [vmem:[%s862 + $0xd0] sm:$0xff] %vm788, %v769
      %877 = vst.msk [vmem:[%s862 + $0xe0] sm:$0xff] %vm788, %v770
      %878 = vst.msk [vmem:[%s862 + $0xf0] sm:$0xff] %vm788, %v771
      %s879 = scalar_lea.vmem [#allocation2], 16
      %880 = vst.msk [vmem:[%s879 + $0x1] sm:$0xff] %vm788, %v772
      %881 = vst.msk [vmem:[%s879 + $0x11] sm:$0xff] %vm788, %v773
      %882 = vst.msk [vmem:[%s879 + $0x21] sm:$0xff] %vm788, %v774
      %883 = vst.msk [vmem:[%s879 + $0x31] sm:$0xff] %vm788, %v775
      %884 = vst.msk [vmem:[%s879 + $0x41] sm:$0xff] %vm788, %v776
      %885 = vst.msk [vmem:[%s879 + $0x51] sm:$0xff] %vm788, %v777
      %886 = vst.msk [vmem:[%s879 + $0x61] sm:$0xff] %vm788, %v778
      %887 = vst.msk [vmem:[%s879 + $0x71] sm:$0xff] %vm788, %v779
      %888 = vst.msk [vmem:[%s879 + $0x81] sm:$0xff] %vm788, %v780
      %889 = vst.msk [vmem:[%s879 + $0x91] sm:$0xff] %vm788, %v781
      %890 = vst.msk [vmem:[%s879 + $0xa1] sm:$0xff] %vm788, %v782
      %891 = vst.msk [vmem:[%s879 + $0xb1] sm:$0xff] %vm788, %v783
      %892 = vst.msk [vmem:[%s879 + $0xc1] sm:$0xff] %vm788, %v784
      %893 = vst.msk [vmem:[%s879 + $0xd1] sm:$0xff] %vm788, %v785
      %894 = vst.msk [vmem:[%s879 + $0xe1] sm:$0xff] %vm788, %v786
      %895 = vst.msk [vmem:[%s879 + $0xf1] sm:$0xff] %vm788, %v787
      %v896 = vld [vmem:[#allocation2] sm:$0xff]
      %v897 = vld [vmem:[#allocation2 + $0x10] sm:$0xff]
      %v898 = vld [vmem:[#allocation2 + $0x20] sm:$0xff]
      %v899 = vld [vmem:[#allocation2 + $0x30] sm:$0xff]
      %v900 = vld [vmem:[#allocation2 + $0x40] sm:$0xff]
      %v901 = vld [vmem:[#allocation2 + $0x50] sm:$0xff]
      %v902 = vld [vmem:[#allocation2 + $0x60] sm:$0xff]
      %v903 = vld [vmem:[#allocation2 + $0x70] sm:$0xff]
      %v904 = vld [vmem:[#allocation2 + $0x80] sm:$0xff]
      %v905 = vld [vmem:[#allocation2 + $0x90] sm:$0xff]
      %v906 = vld [vmem:[#allocation2 + $0xa0] sm:$0xff]
      %v907 = vld [vmem:[#allocation2 + $0xb0] sm:$0xff]
      %v908 = vld [vmem:[#allocation2 + $0xc0] sm:$0xff]
      %v909 = vld [vmem:[#allocation2 + $0xd0] sm:$0xff]
      %v910 = vld [vmem:[#allocation2 + $0xe0] sm:$0xff]
      %v911 = vld [vmem:[#allocation2 + $0xf0] sm:$0xff]
      %v912 = vld [vmem:[%s3] sm:$0xff]
      %v913 = vld [vmem:[%s3 + $0x8] sm:$0xff]
      %v914 = vld [vmem:[%s3 + $0x10] sm:$0xff]
      %v915 = vld [vmem:[%s3 + $0x18] sm:$0xff]
      %v916 = vld [vmem:[%s3 + $0x20] sm:$0xff]
      %v917 = vld [vmem:[%s3 + $0x28] sm:$0xff]
      %v918 = vld [vmem:[%s3 + $0x30] sm:$0xff]
      %v919 = vld [vmem:[%s3 + $0x38] sm:$0xff]
      %v920 = vld [vmem:[#allocation3] sm:$0xff]
      %v921 = vld [vmem:[#allocation3 + $0x10] sm:$0xff]
      %v922 = vld [vmem:[#allocation3 + $0x20] sm:$0xff]
      %v923 = vld [vmem:[#allocation3 + $0x30] sm:$0xff]
      %v924 = vld [vmem:[#allocation3 + $0x40] sm:$0xff]
      %v925 = vld [vmem:[#allocation3 + $0x50] sm:$0xff]
      %v926 = vld [vmem:[#allocation3 + $0x60] sm:$0xff]
      %v927 = vld [vmem:[#allocation3 + $0x70] sm:$0xff]
      %v928 = vld [vmem:[#allocation3 + $0x80] sm:$0xff]
      %v929 = vld [vmem:[#allocation3 + $0x90] sm:$0xff]
      %v930 = vld [vmem:[#allocation3 + $0xa0] sm:$0xff]
      %v931 = vld [vmem:[#allocation3 + $0xb0] sm:$0xff]
      %v932 = vld [vmem:[#allocation3 + $0xc0] sm:$0xff]
      %v933 = vld [vmem:[#allocation3 + $0xd0] sm:$0xff]
      %v934 = vld [vmem:[#allocation3 + $0xe0] sm:$0xff]
      %v935 = vld [vmem:[#allocation3 + $0xf0] sm:$0xff]
      %s936 = scalar_lea.vmem %s3, 64
      %v937 = vld [vmem:[%s936] sm:$0xff]
      %v938 = vld [vmem:[%s936 + $0x8] sm:$0xff]
      %v939 = vld [vmem:[%s936 + $0x10] sm:$0xff]
      %v940 = vld [vmem:[%s936 + $0x18] sm:$0xff]
      %v941 = vld [vmem:[%s936 + $0x20] sm:$0xff]
      %v942 = vld [vmem:[%s936 + $0x28] sm:$0xff]
      %v943 = vld [vmem:[%s936 + $0x30] sm:$0xff]
      %v944 = vld [vmem:[%s936 + $0x38] sm:$0xff]
      %v946 = vsel %vm788, %v920, 0
      %v949 = vsel %vm788, %v921, 0
      %v952 = vsel %vm788, %v922, 0
      %v955 = vsel %vm788, %v923, 0
      %v958 = vsel %vm788, %v924, 0
      %v961 = vsel %vm788, %v925, 0
      %v964 = vsel %vm788, %v926, 0
      %v967 = vsel %vm788, %v927, 0
      %v970 = vsel %vm788, %v928, 0
      %v973 = vsel %vm788, %v929, 0
      %v976 = vsel %vm788, %v930, 0
      %v979 = vsel %vm788, %v931, 0
      %v982 = vsel %vm788, %v932, 0
      %v985 = vsel %vm788, %v933, 0
      %v988 = vsel %vm788, %v934, 0
      %v991 = vsel %vm788, %v935, 0
      %993 = vmatprep.subr.mxu0 0.0
      %994 = vmatpush1.msra.mxu0 %v937
      %995 = vmatprep.subr.mxu0 0.0
      %996 = vmatpush1.msra.mxu0 %v938
      %997 = vmatprep.subr.mxu0 0.0
      %998 = vmatpush1.msra.mxu0 %v939
      %999 = vmatprep.subr.mxu0 0.0
      %1000 = vmatpush1.msra.mxu0 %v940
      %1001 = vmatprep.subr.mxu0 0.0
      %1002 = vmatpush1.msra.mxu0 %v941
      %1003 = vmatprep.subr.mxu0 0.0
      %1004 = vmatpush1.msra.mxu0 %v942
      %1005 = vmatprep.subr.mxu0 0.0
      %1006 = vmatpush1.msra.mxu0 %v943
      %1007 = vmatprep.subr.mxu0 0.0
      %1008 = vmatpush1.msra.mxu0 %v944
      %1009 = vmatprep.subr.mxu0 0.0
      %1010 = vmatpush1.msra.mxu0 0.0
      %1011 = vmatprep.subr.mxu0 0.0
      %1012 = vmatpush1.msra.mxu0 0.0
      %1013 = vmatprep.subr.mxu0 0.0
      %1014 = vmatpush1.msra.mxu0 0.0
      %1015 = vmatprep.subr.mxu0 0.0
      %1016 = vmatpush1.msra.mxu0 0.0
      %1017 = vmatprep.subr.mxu0 0.0
      %1018 = vmatpush1.msra.mxu0 0.0
      %1019 = vmatprep.subr.mxu0 0.0
      %1020 = vmatpush1.msra.mxu0 0.0
      %1021 = vmatprep.subr.mxu0 0.0
      %1022 = vmatpush1.msra.mxu0 0.0
      %1023 = vmatprep.subr.mxu0 0.0
      %1024 = vmatpush1.msra.mxu0 0.0
      %1025 = vmatprep.subr.mxu0 0.0
      %1026 = vmatpush1.msra.mxu0 0.0
      %1027 = vmatprep.subr.mxu0 0.0
      %1028 = vmatpush1.msra.mxu0 0.0
      %1029 = vmatprep.subr.mxu0 0.0
      %1030 = vmatpush1.msra.mxu0 0.0
      %1031 = vmatprep.subr.mxu0 0.0
      %1032 = vmatpush1.msra.mxu0 0.0
      %1033 = vmatprep.subr.mxu0 0.0
      %1034 = vmatpush1.msra.mxu0 0.0
      %1035 = vmatprep.subr.mxu0 0.0
      %1036 = vmatpush1.msra.mxu0 0.0
      %1037 = vmatprep.subr.mxu0 0.0
      %1038 = vmatpush1.msra.mxu0 0.0
      %1039 = vmatprep.subr.mxu0 0.0
      %1040 = vmatpush1.msra.mxu0 0.0
      %1041 = vmatprep.subr.mxu0 0.0
      %1042 = vmatpush1.msra.mxu0 0.0
      %1043 = vmatprep.subr.mxu0 0.0
      %1044 = vmatpush1.msra.mxu0 0.0
      %1045 = vmatprep.subr.mxu0 0.0
      %1046 = vmatpush1.msra.mxu0 0.0
      %1047 = vmatprep.subr.mxu0 0.0
      %1048 = vmatpush1.msra.mxu0 0.0
      %1049 = vmatprep.subr.mxu0 0.0
      %1050 = vmatpush1.msra.mxu0 0.0
      %1051 = vmatprep.subr.mxu0 0.0
      %1052 = vmatpush1.msra.mxu0 0.0
      %1053 = vmatprep.subr.mxu0 0.0
      %1054 = vmatpush1.msra.mxu0 0.0
      %1055 = vmatprep.subr.mxu0 0.0
      %1056 = vmatpush1.msra.mxu0 0.0
      %1057 = vmatprep.mubr.f32.mxu0 0.0
      %1058 = vmatmul.mubr.f32.gmra.mrb[0].mxu0 %v946
      %v1059 = vpop.f32.mrb[0].mxu0
      %v1060 = vadd.f32 0.0, %v1059
      %v1061 = vpop.f32.mrb[0].mxu0
      %1062 = vmatprep.mubr.f32.mxu0 0.0
      %1063 = vmatmul.mubr.f32.gmra.mrb[0].mxu0 %v949
      %v1064 = vpop.f32.mrb[0].mxu0
      %v1065 = vadd.f32 0.0, %v1064
      %v1066 = vpop.f32.mrb[0].mxu0
      %1067 = vmatprep.mubr.f32.mxu0 0.0
      %1068 = vmatmul.mubr.f32.gmra.mrb[0].mxu0 %v952
      %v1069 = vpop.f32.mrb[0].mxu0
      %v1070 = vadd.f32 0.0, %v1069
      %v1071 = vpop.f32.mrb[0].mxu0
      %1072 = vmatprep.mubr.f32.mxu0 0.0
      %1073 = vmatmul.mubr.f32.gmra.mrb[0].mxu0 %v955
      %v1074 = vpop.f32.mrb[0].mxu0
      %v1075 = vadd.f32 0.0, %v1074
      %v1076 = vpop.f32.mrb[0].mxu0
      %1077 = vmatprep.mubr.f32.mxu0 0.0
      %1078 = vmatmul.mubr.f32.gmra.mrb[0].mxu0 %v958
      %v1079 = vpop.f32.mrb[0].mxu0
      %v1080 = vadd.f32 0.0, %v1079
      %v1081 = vpop.f32.mrb[0].mxu0
      %1082 = vmatprep.mubr.f32.mxu0 0.0
      %1083 = vmatmul.mubr.f32.gmra.mrb[0].mxu0 %v961
      %v1084 = vpop.f32.mrb[0].mxu0
      %v1085 = vadd.f32 0.0, %v1084
      %v1086 = vpop.f32.mrb[0].mxu0
      %1087 = vmatprep.mubr.f32.mxu0 0.0
      %1088 = vmatmul.mubr.f32.gmra.mrb[0].mxu0 %v964
      %v1089 = vpop.f32.mrb[0].mxu0
      %v1090 = vadd.f32 0.0, %v1089
      %v1091 = vpop.f32.mrb[0].mxu0
      %1092 = vmatprep.mubr.f32.mxu0 0.0
      %1093 = vmatmul.mubr.f32.gmra.mrb[0].mxu0 %v967
      %v1094 = vpop.f32.mrb[0].mxu0
      %v1095 = vadd.f32 0.0, %v1094
      %v1096 = vpop.f32.mrb[0].mxu0
      %1097 = vmatprep.mubr.f32.mxu0 0.0
      %1098 = vmatmul.mubr.f32.gmra.mrb[0].mxu0 %v970
      %v1099 = vpop.f32.mrb[0].mxu0
      %v1100 = vadd.f32 0.0, %v1099
      %v1101 = vpop.f32.mrb[0].mxu0
      %1102 = vmatprep.mubr.f32.mxu0 0.0
      %1103 = vmatmul.mubr.f32.gmra.mrb[0].mxu0 %v973
      %v1104 = vpop.f32.mrb[0].mxu0
      %v1105 = vadd.f32 0.0, %v1104
      %v1106 = vpop.f32.mrb[0].mxu0
      %1107 = vmatprep.mubr.f32.mxu0 0.0
      %1108 = vmatmul.mubr.f32.gmra.mrb[0].mxu0 %v976
      %v1109 = vpop.f32.mrb[0].mxu0
      %v1110 = vadd.f32 0.0, %v1109
      %v1111 = vpop.f32.mrb[0].mxu0
      %1112 = vmatprep.mubr.f32.mxu0 0.0
      %1113 = vmatmul.mubr.f32.gmra.mrb[0].mxu0 %v979
      %v1114 = vpop.f32.mrb[0].mxu0
      %v1115 = vadd.f32 0.0, %v1114
      %v1116 = vpop.f32.mrb[0].mxu0
      %1117 = vmatprep.mubr.f32.mxu0 0.0
      %1118 = vmatmul.mubr.f32.gmra.mrb[0].mxu0 %v982
      %v1119 = vpop.f32.mrb[0].mxu0
      %v1120 = vadd.f32 0.0, %v1119
      %v1121 = vpop.f32.mrb[0].mxu0
      %1122 = vmatprep.mubr.f32.mxu0 0.0
      %1123 = vmatmul.mubr.f32.gmra.mrb[0].mxu0 %v985
      %v1124 = vpop.f32.mrb[0].mxu0
      %v1125 = vadd.f32 0.0, %v1124
      %v1126 = vpop.f32.mrb[0].mxu0
      %1127 = vmatprep.mubr.f32.mxu0 0.0
      %1128 = vmatmul.mubr.f32.gmra.mrb[0].mxu0 %v988
      %v1129 = vpop.f32.mrb[0].mxu0
      %v1130 = vadd.f32 0.0, %v1129
      %v1131 = vpop.f32.mrb[0].mxu0
      %1132 = vmatprep.mubr.f32.mxu0 0.0
      %1133 = vmatmul.mubr.f32.gmra.mrb[0].mxu0 %v991
      %v1134 = vpop.f32.mrb[0].mxu0
      %v1135 = vadd.f32 0.0, %v1134
      %v1136 = vpop.f32.mrb[0].mxu0
      %1137 = vdwg.mxu0
      %v1139 = vsel %vm788, %v896, 0
      %v1142 = vsel %vm788, %v897, 0
      %v1145 = vsel %vm788, %v898, 0
      %v1148 = vsel %vm788, %v899, 0
      %v1151 = vsel %vm788, %v900, 0
      %v1154 = vsel %vm788, %v901, 0
      %v1157 = vsel %vm788, %v902, 0
      %v1160 = vsel %vm788, %v903, 0
      %v1163 = vsel %vm788, %v904, 0
      %v1166 = vsel %vm788, %v905, 0
      %v1169 = vsel %vm788, %v906, 0
      %v1172 = vsel %vm788, %v907, 0
      %v1175 = vsel %vm788, %v908, 0
      %v1178 = vsel %vm788, %v909, 0
      %v1181 = vsel %vm788, %v910, 0
      %v1184 = vsel %vm788, %v911, 0
      %1186 = vmatprep.subr.mxu0 0.0
      %1187 = vmatpush1.msra.mxu0 %v912
      %1188 = vmatprep.subr.mxu0 0.0
      %1189 = vmatpush1.msra.mxu0 %v913
      %1190 = vmatprep.subr.mxu0 0.0
      %1191 = vmatpush1.msra.mxu0 %v914
      %1192 = vmatprep.subr.mxu0 0.0
      %1193 = vmatpush1.msra.mxu0 %v915
      %1194 = vmatprep.subr.mxu0 0.0
      %1195 = vmatpush1.msra.mxu0 %v916
      %1196 = vmatprep.subr.mxu0 0.0
      %1197 = vmatpush1.msra.mxu0 %v917
      %1198 = vmatprep.subr.mxu0 0.0
      %1199 = vmatpush1.msra.mxu0 %v918
      %1200 = vmatprep.subr.mxu0 0.0
      %1201 = vmatpush1.msra.mxu0 %v919
      %1202 = vmatprep.subr.mxu0 0.0
      %1203 = vmatpush1.msra.mxu0 0.0
      %1204 = vmatprep.subr.mxu0 0.0
      %1205 = vmatpush1.msra.mxu0 0.0
      %1206 = vmatprep.subr.mxu0 0.0
      %1207 = vmatpush1.msra.mxu0 0.0
      %1208 = vmatprep.subr.mxu0 0.0
      %1209 = vmatpush1.msra.mxu0 0.0
      %1210 = vmatprep.subr.mxu0 0.0
      %1211 = vmatpush1.msra.mxu0 0.0
      %1212 = vmatprep.subr.mxu0 0.0
      %1213 = vmatpush1.msra.mxu0 0.0
      %1214 = vmatprep.subr.mxu0 0.0
      %1215 = vmatpush1.msra.mxu0 0.0
      %1216 = vmatprep.subr.mxu0 0.0
      %1217 = vmatpush1.msra.mxu0 0.0
      %1218 = vmatprep.subr.mxu0 0.0
      %1219 = vmatpush1.msra.mxu0 0.0
      %1220 = vmatprep.subr.mxu0 0.0
      %1221 = vmatpush1.msra.mxu0 0.0
      %1222 = vmatprep.subr.mxu0 0.0
      %1223 = vmatpush1.msra.mxu0 0.0
      %1224 = vmatprep.subr.mxu0 0.0
      %1225 = vmatpush1.msra.mxu0 0.0
      %1226 = vmatprep.subr.mxu0 0.0
      %1227 = vmatpush1.msra.mxu0 0.0
      %1228 = vmatprep.subr.mxu0 0.0
      %1229 = vmatpush1.msra.mxu0 0.0
      %1230 = vmatprep.subr.mxu0 0.0
      %1231 = vmatpush1.msra.mxu0 0.0
      %1232 = vmatprep.subr.mxu0 0.0
      %1233 = vmatpush1.msra.mxu0 0.0
      %1234 = vmatprep.subr.mxu0 0.0
      %1235 = vmatpush1.msra.mxu0 0.0
      %1236 = vmatprep.subr.mxu0 0.0
      %1237 = vmatpush1.msra.mxu0 0.0
      %1238 = vmatprep.subr.mxu0 0.0
      %1239 = vmatpush1.msra.mxu0 0.0
      %1240 = vmatprep.subr.mxu0 0.0
      %1241 = vmatpush1.msra.mxu0 0.0
      %1242 = vmatprep.subr.mxu0 0.0
      %1243 = vmatpush1.msra.mxu0 0.0
      %1244 = vmatprep.subr.mxu0 0.0
      %1245 = vmatpush1.msra.mxu0 0.0
      %1246 = vmatprep.subr.mxu0 0.0
      %1247 = vmatpush1.msra.mxu0 0.0
      %1248 = vmatprep.subr.mxu0 0.0
      %1249 = vmatpush1.msra.mxu0 0.0
      %1250 = vmatprep.mubr.f32.mxu0 0.0
      %1251 = vmatmul.mubr.f32.gmra.mrb[0].mxu0 %v1139
      %v1252 = vpop.f32.mrb[0].mxu0
      %v1253 = vadd.f32 %v1060, %v1252
      %v1254 = vpop.f32.mrb[0].mxu0
      %1255 = vmatprep.mubr.f32.mxu0 0.0
      %1256 = vmatmul.mubr.f32.gmra.mrb[0].mxu0 %v1142
      %v1257 = vpop.f32.mrb[0].mxu0
      %v1258 = vadd.f32 %v1065, %v1257
      %v1259 = vpop.f32.mrb[0].mxu0
      %1260 = vmatprep.mubr.f32.mxu0 0.0
      %1261 = vmatmul.mubr.f32.gmra.mrb[0].mxu0 %v1145
      %v1262 = vpop.f32.mrb[0].mxu0
      %v1263 = vadd.f32 %v1070, %v1262
      %v1264 = vpop.f32.mrb[0].mxu0
      %1265 = vmatprep.mubr.f32.mxu0 0.0
      %1266 = vmatmul.mubr.f32.gmra.mrb[0].mxu0 %v1148
      %v1267 = vpop.f32.mrb[0].mxu0
      %v1268 = vadd.f32 %v1075, %v1267
      %v1269 = vpop.f32.mrb[0].mxu0
      %1270 = vmatprep.mubr.f32.mxu0 0.0
      %1271 = vmatmul.mubr.f32.gmra.mrb[0].mxu0 %v1151
      %v1272 = vpop.f32.mrb[0].mxu0
      %v1273 = vadd.f32 %v1080, %v1272
      %v1274 = vpop.f32.mrb[0].mxu0
      %1275 = vmatprep.mubr.f32.mxu0 0.0
      %1276 = vmatmul.mubr.f32.gmra.mrb[0].mxu0 %v1154
      %v1277 = vpop.f32.mrb[0].mxu0
      %v1278 = vadd.f32 %v1085, %v1277
      %v1279 = vpop.f32.mrb[0].mxu0
      %1280 = vmatprep.mubr.f32.mxu0 0.0
      %1281 = vmatmul.mubr.f32.gmra.mrb[0].mxu0 %v1157
      %v1282 = vpop.f32.mrb[0].mxu0
      %v1283 = vadd.f32 %v1090, %v1282
      %v1284 = vpop.f32.mrb[0].mxu0
      %1285 = vmatprep.mubr.f32.mxu0 0.0
      %1286 = vmatmul.mubr.f32.gmra.mrb[0].mxu0 %v1160
      %v1287 = vpop.f32.mrb[0].mxu0
      %v1288 = vadd.f32 %v1095, %v1287
      %v1289 = vpop.f32.mrb[0].mxu0
      %1290 = vmatprep.mubr.f32.mxu0 0.0
      %1291 = vmatmul.mubr.f32.gmra.mrb[0].mxu0 %v1163
      %v1292 = vpop.f32.mrb[0].mxu0
      %v1293 = vadd.f32 %v1100, %v1292
      %v1294 = vpop.f32.mrb[0].mxu0
      %1295 = vmatprep.mubr.f32.mxu0 0.0
      %1296 = vmatmul.mubr.f32.gmra.mrb[0].mxu0 %v1166
      %v1297 = vpop.f32.mrb[0].mxu0
      %v1298 = vadd.f32 %v1105, %v1297
      %v1299 = vpop.f32.mrb[0].mxu0
      %1300 = vmatprep.mubr.f32.mxu0 0.0
      %1301 = vmatmul.mubr.f32.gmra.mrb[0].mxu0 %v1169
      %v1302 = vpop.f32.mrb[0].mxu0
      %v1303 = vadd.f32 %v1110, %v1302
      %v1304 = vpop.f32.mrb[0].mxu0
      %1305 = vmatprep.mubr.f32.mxu0 0.0
      %1306 = vmatmul.mubr.f32.gmra.mrb[0].mxu0 %v1172
      %v1307 = vpop.f32.mrb[0].mxu0
      %v1308 = vadd.f32 %v1115, %v1307
      %v1309 = vpop.f32.mrb[0].mxu0
      %1310 = vmatprep.mubr.f32.mxu0 0.0
      %1311 = vmatmul.mubr.f32.gmra.mrb[0].mxu0 %v1175
      %v1312 = vpop.f32.mrb[0].mxu0
      %v1313 = vadd.f32 %v1120, %v1312
      %v1314 = vpop.f32.mrb[0].mxu0
      %1315 = vmatprep.mubr.f32.mxu0 0.0
      %1316 = vmatmul.mubr.f32.gmra.mrb[0].mxu0 %v1178
      %v1317 = vpop.f32.mrb[0].mxu0
      %v1318 = vadd.f32 %v1125, %v1317
      %v1319 = vpop.f32.mrb[0].mxu0
      %1320 = vmatprep.mubr.f32.mxu0 0.0
      %1321 = vmatmul.mubr.f32.gmra.mrb[0].mxu0 %v1181
      %v1322 = vpop.f32.mrb[0].mxu0
      %v1323 = vadd.f32 %v1130, %v1322
      %v1324 = vpop.f32.mrb[0].mxu0
      %1325 = vmatprep.mubr.f32.mxu0 0.0
      %1326 = vmatmul.mubr.f32.gmra.mrb[0].mxu0 %v1184
      %v1327 = vpop.f32.mrb[0].mxu0
      %v1328 = vadd.f32 %v1135, %v1327
      %v1329 = vpop.f32.mrb[0].mxu0
      %1330 = vdwg.mxu0
      %v1331 = vld [vmem:[#allocation2 + $0x1] sm:$0xff]
      %v1332 = vld [vmem:[#allocation2 + $0x11] sm:$0xff]
      %v1333 = vld [vmem:[#allocation2 + $0x21] sm:$0xff]
      %v1334 = vld [vmem:[#allocation2 + $0x31] sm:$0xff]
      %v1335 = vld [vmem:[#allocation2 + $0x41] sm:$0xff]
      %v1336 = vld [vmem:[#allocation2 + $0x51] sm:$0xff]
      %v1337 = vld [vmem:[#allocation2 + $0x61] sm:$0xff]
      %v1338 = vld [vmem:[#allocation2 + $0x71] sm:$0xff]
      %v1339 = vld [vmem:[#allocation2 + $0x81] sm:$0xff]
      %v1340 = vld [vmem:[#allocation2 + $0x91] sm:$0xff]
      %v1341 = vld [vmem:[#allocation2 + $0xa1] sm:$0xff]
      %v1342 = vld [vmem:[#allocation2 + $0xb1] sm:$0xff]
      %v1343 = vld [vmem:[#allocation2 + $0xc1] sm:$0xff]
      %v1344 = vld [vmem:[#allocation2 + $0xd1] sm:$0xff]
      %v1345 = vld [vmem:[#allocation2 + $0xe1] sm:$0xff]
      %v1346 = vld [vmem:[#allocation2 + $0xf1] sm:$0xff]
      %s1347 = scalar_lea.vmem %s3, 128
      %v1348 = vld [vmem:[%s1347] sm:$0xff]
      %v1349 = vld [vmem:[%s1347 + $0x8] sm:$0xff]
      %v1350 = vld [vmem:[%s1347 + $0x10] sm:$0xff]
      %v1351 = vld [vmem:[%s1347 + $0x18] sm:$0xff]
      %v1352 = vld [vmem:[%s1347 + $0x20] sm:$0xff]
      %v1353 = vld [vmem:[%s1347 + $0x28] sm:$0xff]
      %v1354 = vld [vmem:[%s1347 + $0x30] sm:$0xff]
      %v1355 = vld [vmem:[%s1347 + $0x38] sm:$0xff]
      %v1357 = vsel %vm788, %v1331, 0
      %v1360 = vsel %vm788, %v1332, 0
      %v1363 = vsel %vm788, %v1333, 0
      %v1366 = vsel %vm788, %v1334, 0
      %v1369 = vsel %vm788, %v1335, 0
      %v1372 = vsel %vm788, %v1336, 0
      %v1375 = vsel %vm788, %v1337, 0
      %v1378 = vsel %vm788, %v1338, 0
      %v1381 = vsel %vm788, %v1339, 0
      %v1384 = vsel %vm788, %v1340, 0
      %v1387 = vsel %vm788, %v1341, 0
      %v1390 = vsel %vm788, %v1342, 0
      %v1393 = vsel %vm788, %v1343, 0
      %v1396 = vsel %vm788, %v1344, 0
      %v1399 = vsel %vm788, %v1345, 0
      %v1402 = vsel %vm788, %v1346, 0
      %1404 = vmatprep.subr.mxu0 0.0
      %1405 = vmatpush1.msra.mxu0 %v1348
      %1406 = vmatprep.subr.mxu0 0.0
      %1407 = vmatpush1.msra.mxu0 %v1349
      %1408 = vmatprep.subr.mxu0 0.0
      %1409 = vmatpush1.msra.mxu0 %v1350
      %1410 = vmatprep.subr.mxu0 0.0
      %1411 = vmatpush1.msra.mxu0 %v1351
      %1412 = vmatprep.subr.mxu0 0.0
      %1413 = vmatpush1.msra.mxu0 %v1352
      %1414 = vmatprep.subr.mxu0 0.0
      %1415 = vmatpush1.msra.mxu0 %v1353
      %1416 = vmatprep.subr.mxu0 0.0
      %1417 = vmatpush1.msra.mxu0 %v1354
      %1418 = vmatprep.subr.mxu0 0.0
      %1419 = vmatpush1.msra.mxu0 %v1355
      %1420 = vmatprep.subr.mxu0 0.0
      %1421 = vmatpush1.msra.mxu0 0.0
      %1422 = vmatprep.subr.mxu0 0.0
      %1423 = vmatpush1.msra.mxu0 0.0
      %1424 = vmatprep.subr.mxu0 0.0
      %1425 = vmatpush1.msra.mxu0 0.0
      %1426 = vmatprep.subr.mxu0 0.0
      %1427 = vmatpush1.msra.mxu0 0.0
      %1428 = vmatprep.subr.mxu0 0.0
      %1429 = vmatpush1.msra.mxu0 0.0
      %1430 = vmatprep.subr.mxu0 0.0
      %1431 = vmatpush1.msra.mxu0 0.0
      %1432 = vmatprep.subr.mxu0 0.0
      %1433 = vmatpush1.msra.mxu0 0.0
      %1434 = vmatprep.subr.mxu0 0.0
      %1435 = vmatpush1.msra.mxu0 0.0
      %1436 = vmatprep.subr.mxu0 0.0
      %1437 = vmatpush1.msra.mxu0 0.0
      %1438 = vmatprep.subr.mxu0 0.0
      %1439 = vmatpush1.msra.mxu0 0.0
      %1440 = vmatprep.subr.mxu0 0.0
      %1441 = vmatpush1.msra.mxu0 0.0
      %1442 = vmatprep.subr.mxu0 0.0
      %1443 = vmatpush1.msra.mxu0 0.0
      %1444 = vmatprep.subr.mxu0 0.0
      %1445 = vmatpush1.msra.mxu0 0.0
      %1446 = vmatprep.subr.mxu0 0.0
      %1447 = vmatpush1.msra.mxu0 0.0
      %1448 = vmatprep.subr.mxu0 0.0
      %1449 = vmatpush1.msra.mxu0 0.0
      %1450 = vmatprep.subr.mxu0 0.0
      %1451 = vmatpush1.msra.mxu0 0.0
      %1452 = vmatprep.subr.mxu0 0.0
      %1453 = vmatpush1.msra.mxu0 0.0
      %1454 = vmatprep.subr.mxu0 0.0
      %1455 = vmatpush1.msra.mxu0 0.0
      %1456 = vmatprep.subr.mxu0 0.0
      %1457 = vmatpush1.msra.mxu0 0.0
      %1458 = vmatprep.subr.mxu0 0.0
      %1459 = vmatpush1.msra.mxu0 0.0
      %1460 = vmatprep.subr.mxu0 0.0
      %1461 = vmatpush1.msra.mxu0 0.0
      %1462 = vmatprep.subr.mxu0 0.0
      %1463 = vmatpush1.msra.mxu0 0.0
      %1464 = vmatprep.subr.mxu0 0.0
      %1465 = vmatpush1.msra.mxu0 0.0
      %1466 = vmatprep.subr.mxu0 0.0
      %1467 = vmatpush1.msra.mxu0 0.0
      %1468 = vmatprep.mubr.f32.mxu0 0.0
      %1469 = vmatmul.mubr.f32.gmra.mrb[0].mxu0 %v1357
      %v1470 = vpop.f32.mrb[0].mxu0
      %v1471 = vadd.f32 0.0, %v1470
      %v1472 = vpop.f32.mrb[0].mxu0
      %1473 = vmatprep.mubr.f32.mxu0 0.0
      %1474 = vmatmul.mubr.f32.gmra.mrb[0].mxu0 %v1360
      %v1475 = vpop.f32.mrb[0].mxu0
      %v1476 = vadd.f32 0.0, %v1475
      %v1477 = vpop.f32.mrb[0].mxu0
      %1478 = vmatprep.mubr.f32.mxu0 0.0
      %1479 = vmatmul.mubr.f32.gmra.mrb[0].mxu0 %v1363
      %v1480 = vpop.f32.mrb[0].mxu0
      %v1481 = vadd.f32 0.0, %v1480
      %v1482 = vpop.f32.mrb[0].mxu0
      %1483 = vmatprep.mubr.f32.mxu0 0.0
      %1484 = vmatmul.mubr.f32.gmra.mrb[0].mxu0 %v1366
      %v1485 = vpop.f32.mrb[0].mxu0
      %v1486 = vadd.f32 0.0, %v1485
      %v1487 = vpop.f32.mrb[0].mxu0
      %1488 = vmatprep.mubr.f32.mxu0 0.0
      %1489 = vmatmul.mubr.f32.gmra.mrb[0].mxu0 %v1369
      %v1490 = vpop.f32.mrb[0].mxu0
      %v1491 = vadd.f32 0.0, %v1490
      %v1492 = vpop.f32.mrb[0].mxu0
      %1493 = vmatprep.mubr.f32.mxu0 0.0
      %1494 = vmatmul.mubr.f32.gmra.mrb[0].mxu0 %v1372
      %v1495 = vpop.f32.mrb[0].mxu0
      %v1496 = vadd.f32 0.0, %v1495
      %v1497 = vpop.f32.mrb[0].mxu0
      %1498 = vmatprep.mubr.f32.mxu0 0.0
      %1499 = vmatmul.mubr.f32.gmra.mrb[0].mxu0 %v1375
      %v1500 = vpop.f32.mrb[0].mxu0
      %v1501 = vadd.f32 0.0, %v1500
      %v1502 = vpop.f32.mrb[0].mxu0
      %1503 = vmatprep.mubr.f32.mxu0 0.0
      %1504 = vmatmul.mubr.f32.gmra.mrb[0].mxu0 %v1378
      %v1505 = vpop.f32.mrb[0].mxu0
      %v1506 = vadd.f32 0.0, %v1505
      %v1507 = vpop.f32.mrb[0].mxu0
      %1508 = vmatprep.mubr.f32.mxu0 0.0
      %1509 = vmatmul.mubr.f32.gmra.mrb[0].mxu0 %v1381
      %v1510 = vpop.f32.mrb[0].mxu0
      %v1511 = vadd.f32 0.0, %v1510
      %v1512 = vpop.f32.mrb[0].mxu0
      %1513 = vmatprep.mubr.f32.mxu0 0.0
      %1514 = vmatmul.mubr.f32.gmra.mrb[0].mxu0 %v1384
      %v1515 = vpop.f32.mrb[0].mxu0
      %v1516 = vadd.f32 0.0, %v1515
      %v1517 = vpop.f32.mrb[0].mxu0
      %1518 = vmatprep.mubr.f32.mxu0 0.0
      %1519 = vmatmul.mubr.f32.gmra.mrb[0].mxu0 %v1387
      %v1520 = vpop.f32.mrb[0].mxu0
      %v1521 = vadd.f32 0.0, %v1520
      %v1522 = vpop.f32.mrb[0].mxu0
      %1523 = vmatprep.mubr.f32.mxu0 0.0
      %1524 = vmatmul.mubr.f32.gmra.mrb[0].mxu0 %v1390
      %v1525 = vpop.f32.mrb[0].mxu0
      %v1526 = vadd.f32 0.0, %v1525
      %v1527 = vpop.f32.mrb[0].mxu0
      %1528 = vmatprep.mubr.f32.mxu0 0.0
      %1529 = vmatmul.mubr.f32.gmra.mrb[0].mxu0 %v1393
      %v1530 = vpop.f32.mrb[0].mxu0
      %v1531 = vadd.f32 0.0, %v1530
      %v1532 = vpop.f32.mrb[0].mxu0
      %1533 = vmatprep.mubr.f32.mxu0 0.0
      %1534 = vmatmul.mubr.f32.gmra.mrb[0].mxu0 %v1396
      %v1535 = vpop.f32.mrb[0].mxu0
      %v1536 = vadd.f32 0.0, %v1535
      %v1537 = vpop.f32.mrb[0].mxu0
      %1538 = vmatprep.mubr.f32.mxu0 0.0
      %1539 = vmatmul.mubr.f32.gmra.mrb[0].mxu0 %v1399
      %v1540 = vpop.f32.mrb[0].mxu0
      %v1541 = vadd.f32 0.0, %v1540
      %v1542 = vpop.f32.mrb[0].mxu0
      %1543 = vmatprep.mubr.f32.mxu0 0.0
      %1544 = vmatmul.mubr.f32.gmra.mrb[0].mxu0 %v1402
      %v1545 = vpop.f32.mrb[0].mxu0
      %v1546 = vadd.f32 0.0, %v1545
      %v1547 = vpop.f32.mrb[0].mxu0
      %1548 = vdwg.mxu0
      %v1549 = vadd.f32 %v1253, %v1471
      %v1550 = vadd.f32 %v1258, %v1476
      %v1551 = vadd.f32 %v1263, %v1481
      %v1552 = vadd.f32 %v1268, %v1486
      %v1553 = vadd.f32 %v1273, %v1491
      %v1554 = vadd.f32 %v1278, %v1496
      %v1555 = vadd.f32 %v1283, %v1501
      %v1556 = vadd.f32 %v1288, %v1506
      %v1557 = vadd.f32 %v1293, %v1511
      %v1558 = vadd.f32 %v1298, %v1516
      %v1559 = vadd.f32 %v1303, %v1521
      %v1560 = vadd.f32 %v1308, %v1526
      %v1561 = vadd.f32 %v1313, %v1531
      %v1562 = vadd.f32 %v1318, %v1536
      %v1563 = vadd.f32 %v1323, %v1541
      %v1564 = vadd.f32 %v1328, %v1546
      %v1565 = vld [vmem:[%s879] sm:$0xff]
      %v1566 = vld [vmem:[%s879 + $0x10] sm:$0xff]
      %v1567 = vld [vmem:[%s879 + $0x20] sm:$0xff]
      %v1568 = vld [vmem:[%s879 + $0x30] sm:$0xff]
      %v1569 = vld [vmem:[%s879 + $0x40] sm:$0xff]
      %v1570 = vld [vmem:[%s879 + $0x50] sm:$0xff]
      %v1571 = vld [vmem:[%s879 + $0x60] sm:$0xff]
      %v1572 = vld [vmem:[%s879 + $0x70] sm:$0xff]
      %v1573 = vld [vmem:[%s879 + $0x80] sm:$0xff]
      %v1574 = vld [vmem:[%s879 + $0x90] sm:$0xff]
      %v1575 = vld [vmem:[%s879 + $0xa0] sm:$0xff]
      %v1576 = vld [vmem:[%s879 + $0xb0] sm:$0xff]
      %v1577 = vld [vmem:[%s879 + $0xc0] sm:$0xff]
      %v1578 = vld [vmem:[%s879 + $0xd0] sm:$0xff]
      %v1579 = vld [vmem:[%s879 + $0xe0] sm:$0xff]
      %v1580 = vld [vmem:[%s879 + $0xf0] sm:$0xff]
      %s1581 = scalar_lea.vmem %s3, 192
      %v1582 = vld [vmem:[%s1581] sm:$0xff]
      %v1583 = vld [vmem:[%s1581 + $0x8] sm:$0xff]
      %v1584 = vld [vmem:[%s1581 + $0x10] sm:$0xff]
      %v1585 = vld [vmem:[%s1581 + $0x18] sm:$0xff]
      %v1586 = vld [vmem:[%s1581 + $0x20] sm:$0xff]
      %v1587 = vld [vmem:[%s1581 + $0x28] sm:$0xff]
      %v1588 = vld [vmem:[%s1581 + $0x30] sm:$0xff]
      %v1589 = vld [vmem:[%s1581 + $0x38] sm:$0xff]
      %v1591 = vsel %vm788, %v1565, 0
      %v1594 = vsel %vm788, %v1566, 0
      %v1597 = vsel %vm788, %v1567, 0
      %v1600 = vsel %vm788, %v1568, 0
      %v1603 = vsel %vm788, %v1569, 0
      %v1606 = vsel %vm788, %v1570, 0
      %v1609 = vsel %vm788, %v1571, 0
      %v1612 = vsel %vm788, %v1572, 0
      %v1615 = vsel %vm788, %v1573, 0
      %v1618 = vsel %vm788, %v1574, 0
      %v1621 = vsel %vm788, %v1575, 0
      %v1624 = vsel %vm788, %v1576, 0
      %v1627 = vsel %vm788, %v1577, 0
      %v1630 = vsel %vm788, %v1578, 0
      %v1633 = vsel %vm788, %v1579, 0
      %v1636 = vsel %vm788, %v1580, 0
      %1638 = vmatprep.subr.mxu0 0.0
      %1639 = vmatpush1.msra.mxu0 %v1582
      %1640 = vmatprep.subr.mxu0 0.0
      %1641 = vmatpush1.msra.mxu0 %v1583
      %1642 = vmatprep.subr.mxu0 0.0
      %1643 = vmatpush1.msra.mxu0 %v1584
      %1644 = vmatprep.subr.mxu0 0.0
      %1645 = vmatpush1.msra.mxu0 %v1585
      %1646 = vmatprep.subr.mxu0 0.0
      %1647 = vmatpush1.msra.mxu0 %v1586
      %1648 = vmatprep.subr.mxu0 0.0
      %1649 = vmatpush1.msra.mxu0 %v1587
      %1650 = vmatprep.subr.mxu0 0.0
      %1651 = vmatpush1.msra.mxu0 %v1588
      %1652 = vmatprep.subr.mxu0 0.0
      %1653 = vmatpush1.msra.mxu0 %v1589
      %1654 = vmatprep.subr.mxu0 0.0
      %1655 = vmatpush1.msra.mxu0 0.0
      %1656 = vmatprep.subr.mxu0 0.0
      %1657 = vmatpush1.msra.mxu0 0.0
      %1658 = vmatprep.subr.mxu0 0.0
      %1659 = vmatpush1.msra.mxu0 0.0
      %1660 = vmatprep.subr.mxu0 0.0
      %1661 = vmatpush1.msra.mxu0 0.0
      %1662 = vmatprep.subr.mxu0 0.0
      %1663 = vmatpush1.msra.mxu0 0.0
      %1664 = vmatprep.subr.mxu0 0.0
      %1665 = vmatpush1.msra.mxu0 0.0
      %1666 = vmatprep.subr.mxu0 0.0
      %1667 = vmatpush1.msra.mxu0 0.0
      %1668 = vmatprep.subr.mxu0 0.0
      %1669 = vmatpush1.msra.mxu0 0.0
      %1670 = vmatprep.subr.mxu0 0.0
      %1671 = vmatpush1.msra.mxu0 0.0
      %1672 = vmatprep.subr.mxu0 0.0
      %1673 = vmatpush1.msra.mxu0 0.0
      %1674 = vmatprep.subr.mxu0 0.0
      %1675 = vmatpush1.msra.mxu0 0.0
      %1676 = vmatprep.subr.mxu0 0.0
      %1677 = vmatpush1.msra.mxu0 0.0
      %1678 = vmatprep.subr.mxu0 0.0
      %1679 = vmatpush1.msra.mxu0 0.0
      %1680 = vmatprep.subr.mxu0 0.0
      %1681 = vmatpush1.msra.mxu0 0.0
      %1682 = vmatprep.subr.mxu0 0.0
      %1683 = vmatpush1.msra.mxu0 0.0
      %1684 = vmatprep.subr.mxu0 0.0
      %1685 = vmatpush1.msra.mxu0 0.0
      %1686 = vmatprep.subr.mxu0 0.0
      %1687 = vmatpush1.msra.mxu0 0.0
      %1688 = vmatprep.subr.mxu0 0.0
      %1689 = vmatpush1.msra.mxu0 0.0
      %1690 = vmatprep.subr.mxu0 0.0
      %1691 = vmatpush1.msra.mxu0 0.0
      %1692 = vmatprep.subr.mxu0 0.0
      %1693 = vmatpush1.msra.mxu0 0.0
      %1694 = vmatprep.subr.mxu0 0.0
      %1695 = vmatpush1.msra.mxu0 0.0
      %1696 = vmatprep.subr.mxu0 0.0
      %1697 = vmatpush1.msra.mxu0 0.0
      %1698 = vmatprep.subr.mxu0 0.0
      %1699 = vmatpush1.msra.mxu0 0.0
      %1700 = vmatprep.subr.mxu0 0.0
      %1701 = vmatpush1.msra.mxu0 0.0
      %1702 = vmatprep.mubr.f32.mxu0 0.0
      %1703 = vmatmul.mubr.f32.gmra.mrb[0].mxu0 %v1591
      %v1704 = vpop.f32.mrb[0].mxu0
      %v1705 = vadd.f32 0.0, %v1704
      %v1706 = vpop.f32.mrb[0].mxu0
      %1707 = vmatprep.mubr.f32.mxu0 0.0
      %1708 = vmatmul.mubr.f32.gmra.mrb[0].mxu0 %v1594
      %v1709 = vpop.f32.mrb[0].mxu0
      %v1710 = vadd.f32 0.0, %v1709
      %v1711 = vpop.f32.mrb[0].mxu0
      %1712 = vmatprep.mubr.f32.mxu0 0.0
      %1713 = vmatmul.mubr.f32.gmra.mrb[0].mxu0 %v1597
      %v1714 = vpop.f32.mrb[0].mxu0
      %v1715 = vadd.f32 0.0, %v1714
      %v1716 = vpop.f32.mrb[0].mxu0
      %1717 = vmatprep.mubr.f32.mxu0 0.0
      %1718 = vmatmul.mubr.f32.gmra.mrb[0].mxu0 %v1600
      %v1719 = vpop.f32.mrb[0].mxu0
      %v1720 = vadd.f32 0.0, %v1719
      %v1721 = vpop.f32.mrb[0].mxu0
      %1722 = vmatprep.mubr.f32.mxu0 0.0
      %1723 = vmatmul.mubr.f32.gmra.mrb[0].mxu0 %v1603
      %v1724 = vpop.f32.mrb[0].mxu0
      %v1725 = vadd.f32 0.0, %v1724
      %v1726 = vpop.f32.mrb[0].mxu0
      %1727 = vmatprep.mubr.f32.mxu0 0.0
      %1728 = vmatmul.mubr.f32.gmra.mrb[0].mxu0 %v1606
      %v1729 = vpop.f32.mrb[0].mxu0
      %v1730 = vadd.f32 0.0, %v1729
      %v1731 = vpop.f32.mrb[0].mxu0
      %1732 = vmatprep.mubr.f32.mxu0 0.0
      %1733 = vmatmul.mubr.f32.gmra.mrb[0].mxu0 %v1609
      %v1734 = vpop.f32.mrb[0].mxu0
      %v1735 = vadd.f32 0.0, %v1734
      %v1736 = vpop.f32.mrb[0].mxu0
      %1737 = vmatprep.mubr.f32.mxu0 0.0
      %1738 = vmatmul.mubr.f32.gmra.mrb[0].mxu0 %v1612
      %v1739 = vpop.f32.mrb[0].mxu0
      %v1740 = vadd.f32 0.0, %v1739
      %v1741 = vpop.f32.mrb[0].mxu0
      %1742 = vmatprep.mubr.f32.mxu0 0.0
      %1743 = vmatmul.mubr.f32.gmra.mrb[0].mxu0 %v1615
      %v1744 = vpop.f32.mrb[0].mxu0
      %v1745 = vadd.f32 0.0, %v1744
      %v1746 = vpop.f32.mrb[0].mxu0
      %1747 = vmatprep.mubr.f32.mxu0 0.0
      %1748 = vmatmul.mubr.f32.gmra.mrb[0].mxu0 %v1618
      %v1749 = vpop.f32.mrb[0].mxu0
      %v1750 = vadd.f32 0.0, %v1749
      %v1751 = vpop.f32.mrb[0].mxu0
      %1752 = vmatprep.mubr.f32.mxu0 0.0
      %1753 = vmatmul.mubr.f32.gmra.mrb[0].mxu0 %v1621
      %v1754 = vpop.f32.mrb[0].mxu0
      %v1755 = vadd.f32 0.0, %v1754
      %v1756 = vpop.f32.mrb[0].mxu0
      %1757 = vmatprep.mubr.f32.mxu0 0.0
      %1758 = vmatmul.mubr.f32.gmra.mrb[0].mxu0 %v1624
      %v1759 = vpop.f32.mrb[0].mxu0
      %v1760 = vadd.f32 0.0, %v1759
      %v1761 = vpop.f32.mrb[0].mxu0
      %1762 = vmatprep.mubr.f32.mxu0 0.0
      %1763 = vmatmul.mubr.f32.gmra.mrb[0].mxu0 %v1627
      %v1764 = vpop.f32.mrb[0].mxu0
      %v1765 = vadd.f32 0.0, %v1764
      %v1766 = vpop.f32.mrb[0].mxu0
      %1767 = vmatprep.mubr.f32.mxu0 0.0
      %1768 = vmatmul.mubr.f32.gmra.mrb[0].mxu0 %v1630
      %v1769 = vpop.f32.mrb[0].mxu0
      %v1770 = vadd.f32 0.0, %v1769
      %v1771 = vpop.f32.mrb[0].mxu0
      %1772 = vmatprep.mubr.f32.mxu0 0.0
      %1773 = vmatmul.mubr.f32.gmra.mrb[0].mxu0 %v1633
      %v1774 = vpop.f32.mrb[0].mxu0
      %v1775 = vadd.f32 0.0, %v1774
      %v1776 = vpop.f32.mrb[0].mxu0
      %1777 = vmatprep.mubr.f32.mxu0 0.0
      %1778 = vmatmul.mubr.f32.gmra.mrb[0].mxu0 %v1636
      %v1779 = vpop.f32.mrb[0].mxu0
      %v1780 = vadd.f32 0.0, %v1779
      %v1781 = vpop.f32.mrb[0].mxu0
      %1782 = vdwg.mxu0
      %v1783 = vadd.f32 %v1549, %v1705
      %v1784 = vadd.f32 %v1550, %v1710
      %v1785 = vadd.f32 %v1551, %v1715
      %v1786 = vadd.f32 %v1552, %v1720
      %v1787 = vadd.f32 %v1553, %v1725
      %v1788 = vadd.f32 %v1554, %v1730
      %v1789 = vadd.f32 %v1555, %v1735
      %v1790 = vadd.f32 %v1556, %v1740
      %v1791 = vadd.f32 %v1557, %v1745
      %v1792 = vadd.f32 %v1558, %v1750
      %v1793 = vadd.f32 %v1559, %v1755
      %v1794 = vadd.f32 %v1560, %v1760
      %v1795 = vadd.f32 %v1561, %v1765
      %v1796 = vadd.f32 %v1562, %v1770
      %v1797 = vadd.f32 %v1563, %v1775
      %v1798 = vadd.f32 %v1564, %v1780
      %v1799 = vld [vmem:[%s862] sm:$0xff]
      %v1800 = vld [vmem:[%s862 + $0x10] sm:$0xff]
      %v1801 = vld [vmem:[%s862 + $0x20] sm:$0xff]
      %v1802 = vld [vmem:[%s862 + $0x30] sm:$0xff]
      %v1803 = vld [vmem:[%s862 + $0x40] sm:$0xff]
      %v1804 = vld [vmem:[%s862 + $0x50] sm:$0xff]
      %v1805 = vld [vmem:[%s862 + $0x60] sm:$0xff]
      %v1806 = vld [vmem:[%s862 + $0x70] sm:$0xff]
      %v1807 = vld [vmem:[%s862 + $0x80] sm:$0xff]
      %v1808 = vld [vmem:[%s862 + $0x90] sm:$0xff]
      %v1809 = vld [vmem:[%s862 + $0xa0] sm:$0xff]
      %v1810 = vld [vmem:[%s862 + $0xb0] sm:$0xff]
      %v1811 = vld [vmem:[%s862 + $0xc0] sm:$0xff]
      %v1812 = vld [vmem:[%s862 + $0xd0] sm:$0xff]
      %v1813 = vld [vmem:[%s862 + $0xe0] sm:$0xff]
      %v1814 = vld [vmem:[%s862 + $0xf0] sm:$0xff]
      %s1815 = scalar_lea.vmem %s3, 256
      %v1816 = vld [vmem:[%s1815] sm:$0xff]
      %v1817 = vld [vmem:[%s1815 + $0x8] sm:$0xff]
      %v1818 = vld [vmem:[%s1815 + $0x10] sm:$0xff]
      %v1819 = vld [vmem:[%s1815 + $0x18] sm:$0xff]
      %v1820 = vld [vmem:[%s1815 + $0x20] sm:$0xff]
      %v1821 = vld [vmem:[%s1815 + $0x28] sm:$0xff]
      %v1822 = vld [vmem:[%s1815 + $0x30] sm:$0xff]
      %v1823 = vld [vmem:[%s1815 + $0x38] sm:$0xff]
      %v1825 = vsel %vm788, %v1799, 0
      %v1828 = vsel %vm788, %v1800, 0
      %v1831 = vsel %vm788, %v1801, 0
      %v1834 = vsel %vm788, %v1802, 0
      %v1837 = vsel %vm788, %v1803, 0
      %v1840 = vsel %vm788, %v1804, 0
      %v1843 = vsel %vm788, %v1805, 0
      %v1846 = vsel %vm788, %v1806, 0
      %v1849 = vsel %vm788, %v1807, 0
      %v1852 = vsel %vm788, %v1808, 0
      %v1855 = vsel %vm788, %v1809, 0
      %v1858 = vsel %vm788, %v1810, 0
      %v1861 = vsel %vm788, %v1811, 0
      %v1864 = vsel %vm788, %v1812, 0
      %v1867 = vsel %vm788, %v1813, 0
      %v1870 = vsel %vm788, %v1814, 0
      %1872 = vmatprep.subr.mxu0 0.0
      %1873 = vmatpush1.msra.mxu0 %v1816
      %1874 = vmatprep.subr.mxu0 0.0
      %1875 = vmatpush1.msra.mxu0 %v1817
      %1876 = vmatprep.subr.mxu0 0.0
      %1877 = vmatpush1.msra.mxu0 %v1818
      %1878 = vmatprep.subr.mxu0 0.0
      %1879 = vmatpush1.msra.mxu0 %v1819
      %1880 = vmatprep.subr.mxu0 0.0
      %1881 = vmatpush1.msra.mxu0 %v1820
      %1882 = vmatprep.subr.mxu0 0.0
      %1883 = vmatpush1.msra.mxu0 %v1821
      %1884 = vmatprep.subr.mxu0 0.0
      %1885 = vmatpush1.msra.mxu0 %v1822
      %1886 = vmatprep.subr.mxu0 0.0
      %1887 = vmatpush1.msra.mxu0 %v1823
      %1888 = vmatprep.subr.mxu0 0.0
      %1889 = vmatpush1.msra.mxu0 0.0
      %1890 = vmatprep.subr.mxu0 0.0
      %1891 = vmatpush1.msra.mxu0 0.0
      %1892 = vmatprep.subr.mxu0 0.0
      %1893 = vmatpush1.msra.mxu0 0.0
      %1894 = vmatprep.subr.mxu0 0.0
      %1895 = vmatpush1.msra.mxu0 0.0
      %1896 = vmatprep.subr.mxu0 0.0
      %1897 = vmatpush1.msra.mxu0 0.0
      %1898 = vmatprep.subr.mxu0 0.0
      %1899 = vmatpush1.msra.mxu0 0.0
      %1900 = vmatprep.subr.mxu0 0.0
      %1901 = vmatpush1.msra.mxu0 0.0
      %1902 = vmatprep.subr.mxu0 0.0
      %1903 = vmatpush1.msra.mxu0 0.0
      %1904 = vmatprep.subr.mxu0 0.0
      %1905 = vmatpush1.msra.mxu0 0.0
      %1906 = vmatprep.subr.mxu0 0.0
      %1907 = vmatpush1.msra.mxu0 0.0
      %1908 = vmatprep.subr.mxu0 0.0
      %1909 = vmatpush1.msra.mxu0 0.0
      %1910 = vmatprep.subr.mxu0 0.0
      %1911 = vmatpush1.msra.mxu0 0.0
      %1912 = vmatprep.subr.mxu0 0.0
      %1913 = vmatpush1.msra.mxu0 0.0
      %1914 = vmatprep.subr.mxu0 0.0
      %1915 = vmatpush1.msra.mxu0 0.0
      %1916 = vmatprep.subr.mxu0 0.0
      %1917 = vmatpush1.msra.mxu0 0.0
      %1918 = vmatprep.subr.mxu0 0.0
      %1919 = vmatpush1.msra.mxu0 0.0
      %1920 = vmatprep.subr.mxu0 0.0
      %1921 = vmatpush1.msra.mxu0 0.0
      %1922 = vmatprep.subr.mxu0 0.0
      %1923 = vmatpush1.msra.mxu0 0.0
      %1924 = vmatprep.subr.mxu0 0.0
      %1925 = vmatpush1.msra.mxu0 0.0
      %1926 = vmatprep.subr.mxu0 0.0
      %1927 = vmatpush1.msra.mxu0 0.0
      %1928 = vmatprep.subr.mxu0 0.0
      %1929 = vmatpush1.msra.mxu0 0.0
      %1930 = vmatprep.subr.mxu0 0.0
      %1931 = vmatpush1.msra.mxu0 0.0
      %1932 = vmatprep.subr.mxu0 0.0
      %1933 = vmatpush1.msra.mxu0 0.0
      %1934 = vmatprep.subr.mxu0 0.0
      %1935 = vmatpush1.msra.mxu0 0.0
      %1936 = vmatprep.mubr.f32.mxu0 0.0
      %1937 = vmatmul.mubr.f32.gmra.mrb[0].mxu0 %v1825
      %v1938 = vpop.f32.mrb[0].mxu0
      %v1939 = vadd.f32 0.0, %v1938
      %v1940 = vpop.f32.mrb[0].mxu0
      %1941 = vmatprep.mubr.f32.mxu0 0.0
      %1942 = vmatmul.mubr.f32.gmra.mrb[0].mxu0 %v1828
      %v1943 = vpop.f32.mrb[0].mxu0
      %v1944 = vadd.f32 0.0, %v1943
      %v1945 = vpop.f32.mrb[0].mxu0
      %1946 = vmatprep.mubr.f32.mxu0 0.0
      %1947 = vmatmul.mubr.f32.gmra.mrb[0].mxu0 %v1831
      %v1948 = vpop.f32.mrb[0].mxu0
      %v1949 = vadd.f32 0.0, %v1948
      %v1950 = vpop.f32.mrb[0].mxu0
      %1951 = vmatprep.mubr.f32.mxu0 0.0
      %1952 = vmatmul.mubr.f32.gmra.mrb[0].mxu0 %v1834
      %v1953 = vpop.f32.mrb[0].mxu0
      %v1954 = vadd.f32 0.0, %v1953
      %v1955 = vpop.f32.mrb[0].mxu0
      %1956 = vmatprep.mubr.f32.mxu0 0.0
      %1957 = vmatmul.mubr.f32.gmra.mrb[0].mxu0 %v1837
      %v1958 = vpop.f32.mrb[0].mxu0
      %v1959 = vadd.f32 0.0, %v1958
      %v1960 = vpop.f32.mrb[0].mxu0
      %1961 = vmatprep.mubr.f32.mxu0 0.0
      %1962 = vmatmul.mubr.f32.gmra.mrb[0].mxu0 %v1840
      %v1963 = vpop.f32.mrb[0].mxu0
      %v1964 = vadd.f32 0.0, %v1963
      %v1965 = vpop.f32.mrb[0].mxu0
      %1966 = vmatprep.mubr.f32.mxu0 0.0
      %1967 = vmatmul.mubr.f32.gmra.mrb[0].mxu0 %v1843
      %v1968 = vpop.f32.mrb[0].mxu0
      %v1969 = vadd.f32 0.0, %v1968
      %v1970 = vpop.f32.mrb[0].mxu0
      %1971 = vmatprep.mubr.f32.mxu0 0.0
      %1972 = vmatmul.mubr.f32.gmra.mrb[0].mxu0 %v1846
      %v1973 = vpop.f32.mrb[0].mxu0
      %v1974 = vadd.f32 0.0, %v1973
      %v1975 = vpop.f32.mrb[0].mxu0
      %1976 = vmatprep.mubr.f32.mxu0 0.0
      %1977 = vmatmul.mubr.f32.gmra.mrb[0].mxu0 %v1849
      %v1978 = vpop.f32.mrb[0].mxu0
      %v1979 = vadd.f32 0.0, %v1978
      %v1980 = vpop.f32.mrb[0].mxu0
      %1981 = vmatprep.mubr.f32.mxu0 0.0
      %1982 = vmatmul.mubr.f32.gmra.mrb[0].mxu0 %v1852
      %v1983 = vpop.f32.mrb[0].mxu0
      %v1984 = vadd.f32 0.0, %v1983
      %v1985 = vpop.f32.mrb[0].mxu0
      %1986 = vmatprep.mubr.f32.mxu0 0.0
      %1987 = vmatmul.mubr.f32.gmra.mrb[0].mxu0 %v1855
      %v1988 = vpop.f32.mrb[0].mxu0
      %v1989 = vadd.f32 0.0, %v1988
      %v1990 = vpop.f32.mrb[0].mxu0
      %1991 = vmatprep.mubr.f32.mxu0 0.0
      %1992 = vmatmul.mubr.f32.gmra.mrb[0].mxu0 %v1858
      %v1993 = vpop.f32.mrb[0].mxu0
      %v1994 = vadd.f32 0.0, %v1993
      %v1995 = vpop.f32.mrb[0].mxu0
      %1996 = vmatprep.mubr.f32.mxu0 0.0
      %1997 = vmatmul.mubr.f32.gmra.mrb[0].mxu0 %v1861
      %v1998 = vpop.f32.mrb[0].mxu0
      %v1999 = vadd.f32 0.0, %v1998
      %v2000 = vpop.f32.mrb[0].mxu0
      %2001 = vmatprep.mubr.f32.mxu0 0.0
      %2002 = vmatmul.mubr.f32.gmra.mrb[0].mxu0 %v1864
      %v2003 = vpop.f32.mrb[0].mxu0
      %v2004 = vadd.f32 0.0, %v2003
      %v2005 = vpop.f32.mrb[0].mxu0
      %2006 = vmatprep.mubr.f32.mxu0 0.0
      %2007 = vmatmul.mubr.f32.gmra.mrb[0].mxu0 %v1867
      %v2008 = vpop.f32.mrb[0].mxu0
      %v2009 = vadd.f32 0.0, %v2008
      %v2010 = vpop.f32.mrb[0].mxu0
      %2011 = vmatprep.mubr.f32.mxu0 0.0
      %2012 = vmatmul.mubr.f32.gmra.mrb[0].mxu0 %v1870
      %v2013 = vpop.f32.mrb[0].mxu0
      %v2014 = vadd.f32 0.0, %v2013
      %v2015 = vpop.f32.mrb[0].mxu0
      %2016 = vdwg.mxu0
      %v2017 = vadd.f32 %v1783, %v1939
      %v2018 = vadd.f32 %v1784, %v1944
      %v2019 = vadd.f32 %v1785, %v1949
      %v2020 = vadd.f32 %v1786, %v1954
      %v2021 = vadd.f32 %v1787, %v1959
      %v2022 = vadd.f32 %v1788, %v1964
      %v2023 = vadd.f32 %v1789, %v1969
      %v2024 = vadd.f32 %v1790, %v1974
      %v2025 = vadd.f32 %v1791, %v1979
      %v2026 = vadd.f32 %v1792, %v1984
      %v2027 = vadd.f32 %v1793, %v1989
      %v2028 = vadd.f32 %v1794, %v1994
      %v2029 = vadd.f32 %v1795, %v1999
      %v2030 = vadd.f32 %v1796, %v2004
      %v2031 = vadd.f32 %v1797, %v2009
      %v2032 = vadd.f32 %v1798, %v2014
      %v2033 = vld [vmem:[%s879 + $0x1] sm:$0xff]
      %v2034 = vld [vmem:[%s879 + $0x11] sm:$0xff]
      %v2035 = vld [vmem:[%s879 + $0x21] sm:$0xff]
      %v2036 = vld [vmem:[%s879 + $0x31] sm:$0xff]
      %v2037 = vld [vmem:[%s879 + $0x41] sm:$0xff]
      %v2038 = vld [vmem:[%s879 + $0x51] sm:$0xff]
      %v2039 = vld [vmem:[%s879 + $0x61] sm:$0xff]
      %v2040 = vld [vmem:[%s879 + $0x71] sm:$0xff]
      %v2041 = vld [vmem:[%s879 + $0x81] sm:$0xff]
      %v2042 = vld [vmem:[%s879 + $0x91] sm:$0xff]
      %v2043 = vld [vmem:[%s879 + $0xa1] sm:$0xff]
      %v2044 = vld [vmem:[%s879 + $0xb1] sm:$0xff]
      %v2045 = vld [vmem:[%s879 + $0xc1] sm:$0xff]
      %v2046 = vld [vmem:[%s879 + $0xd1] sm:$0xff]
      %v2047 = vld [vmem:[%s879 + $0xe1] sm:$0xff]
      %v2048 = vld [vmem:[%s879 + $0xf1] sm:$0xff]
      %s2049 = scalar_lea.vmem %s3, 320
      %v2050 = vld [vmem:[%s2049] sm:$0xff]
      %v2051 = vld [vmem:[%s2049 + $0x8] sm:$0xff]
      %v2052 = vld [vmem:[%s2049 + $0x10] sm:$0xff]
      %v2053 = vld [vmem:[%s2049 + $0x18] sm:$0xff]
      %v2054 = vld [vmem:[%s2049 + $0x20] sm:$0xff]
      %v2055 = vld [vmem:[%s2049 + $0x28] sm:$0xff]
      %v2056 = vld [vmem:[%s2049 + $0x30] sm:$0xff]
      %v2057 = vld [vmem:[%s2049 + $0x38] sm:$0xff]
      %v2059 = vsel %vm788, %v2033, 0
      %v2062 = vsel %vm788, %v2034, 0
      %v2065 = vsel %vm788, %v2035, 0
      %v2068 = vsel %vm788, %v2036, 0
      %v2071 = vsel %vm788, %v2037, 0
      %v2074 = vsel %vm788, %v2038, 0
      %v2077 = vsel %vm788, %v2039, 0
      %v2080 = vsel %vm788, %v2040, 0
      %v2083 = vsel %vm788, %v2041, 0
      %v2086 = vsel %vm788, %v2042, 0
      %v2089 = vsel %vm788, %v2043, 0
      %v2092 = vsel %vm788, %v2044, 0
      %v2095 = vsel %vm788, %v2045, 0
      %v2098 = vsel %vm788, %v2046, 0
      %v2101 = vsel %vm788, %v2047, 0
      %v2104 = vsel %vm788, %v2048, 0
      %2106 = vmatprep.subr.mxu0 0.0
      %2107 = vmatpush1.msra.mxu0 %v2050
      %2108 = vmatprep.subr.mxu0 0.0
      %2109 = vmatpush1.msra.mxu0 %v2051
      %2110 = vmatprep.subr.mxu0 0.0
      %2111 = vmatpush1.msra.mxu0 %v2052
      %2112 = vmatprep.subr.mxu0 0.0
      %2113 = vmatpush1.msra.mxu0 %v2053
      %2114 = vmatprep.subr.mxu0 0.0
      %2115 = vmatpush1.msra.mxu0 %v2054
      %2116 = vmatprep.subr.mxu0 0.0
      %2117 = vmatpush1.msra.mxu0 %v2055
      %2118 = vmatprep.subr.mxu0 0.0
      %2119 = vmatpush1.msra.mxu0 %v2056
      %2120 = vmatprep.subr.mxu0 0.0
      %2121 = vmatpush1.msra.mxu0 %v2057
      %2122 = vmatprep.subr.mxu0 0.0
      %2123 = vmatpush1.msra.mxu0 0.0
      %2124 = vmatprep.subr.mxu0 0.0
      %2125 = vmatpush1.msra.mxu0 0.0
      %2126 = vmatprep.subr.mxu0 0.0
      %2127 = vmatpush1.msra.mxu0 0.0
      %2128 = vmatprep.subr.mxu0 0.0
      %2129 = vmatpush1.msra.mxu0 0.0
      %2130 = vmatprep.subr.mxu0 0.0
      %2131 = vmatpush1.msra.mxu0 0.0
      %2132 = vmatprep.subr.mxu0 0.0
      %2133 = vmatpush1.msra.mxu0 0.0
      %2134 = vmatprep.subr.mxu0 0.0
      %2135 = vmatpush1.msra.mxu0 0.0
      %2136 = vmatprep.subr.mxu0 0.0
      %2137 = vmatpush1.msra.mxu0 0.0
      %2138 = vmatprep.subr.mxu0 0.0
      %2139 = vmatpush1.msra.mxu0 0.0
      %2140 = vmatprep.subr.mxu0 0.0
      %2141 = vmatpush1.msra.mxu0 0.0
      %2142 = vmatprep.subr.mxu0 0.0
      %2143 = vmatpush1.msra.mxu0 0.0
      %2144 = vmatprep.subr.mxu0 0.0
      %2145 = vmatpush1.msra.mxu0 0.0
      %2146 = vmatprep.subr.mxu0 0.0
      %2147 = vmatpush1.msra.mxu0 0.0
      %2148 = vmatprep.subr.mxu0 0.0
      %2149 = vmatpush1.msra.mxu0 0.0
      %2150 = vmatprep.subr.mxu0 0.0
      %2151 = vmatpush1.msra.mxu0 0.0
      %2152 = vmatprep.subr.mxu0 0.0
      %2153 = vmatpush1.msra.mxu0 0.0
      %2154 = vmatprep.subr.mxu0 0.0
      %2155 = vmatpush1.msra.mxu0 0.0
      %2156 = vmatprep.subr.mxu0 0.0
      %2157 = vmatpush1.msra.mxu0 0.0
      %2158 = vmatprep.subr.mxu0 0.0
      %2159 = vmatpush1.msra.mxu0 0.0
      %2160 = vmatprep.subr.mxu0 0.0
      %2161 = vmatpush1.msra.mxu0 0.0
      %2162 = vmatprep.subr.mxu0 0.0
      %2163 = vmatpush1.msra.mxu0 0.0
      %2164 = vmatprep.subr.mxu0 0.0
      %2165 = vmatpush1.msra.mxu0 0.0
      %2166 = vmatprep.subr.mxu0 0.0
      %2167 = vmatpush1.msra.mxu0 0.0
      %2168 = vmatprep.subr.mxu0 0.0
      %2169 = vmatpush1.msra.mxu0 0.0
      %2170 = vmatprep.mubr.f32.mxu0 0.0
      %2171 = vmatmul.mubr.f32.gmra.mrb[0].mxu0 %v2059
      %v2172 = vpop.f32.mrb[0].mxu0
      %v2173 = vadd.f32 0.0, %v2172
      %v2174 = vpop.f32.mrb[0].mxu0
      %2175 = vmatprep.mubr.f32.mxu0 0.0
      %2176 = vmatmul.mubr.f32.gmra.mrb[0].mxu0 %v2062
      %v2177 = vpop.f32.mrb[0].mxu0
      %v2178 = vadd.f32 0.0, %v2177
      %v2179 = vpop.f32.mrb[0].mxu0
      %2180 = vmatprep.mubr.f32.mxu0 0.0
      %2181 = vmatmul.mubr.f32.gmra.mrb[0].mxu0 %v2065
      %v2182 = vpop.f32.mrb[0].mxu0
      %v2183 = vadd.f32 0.0, %v2182
      %v2184 = vpop.f32.mrb[0].mxu0
      %2185 = vmatprep.mubr.f32.mxu0 0.0
      %2186 = vmatmul.mubr.f32.gmra.mrb[0].mxu0 %v2068
      %v2187 = vpop.f32.mrb[0].mxu0
      %v2188 = vadd.f32 0.0, %v2187
      %v2189 = vpop.f32.mrb[0].mxu0
      %2190 = vmatprep.mubr.f32.mxu0 0.0
      %2191 = vmatmul.mubr.f32.gmra.mrb[0].mxu0 %v2071
      %v2192 = vpop.f32.mrb[0].mxu0
      %v2193 = vadd.f32 0.0, %v2192
      %v2194 = vpop.f32.mrb[0].mxu0
      %2195 = vmatprep.mubr.f32.mxu0 0.0
      %2196 = vmatmul.mubr.f32.gmra.mrb[0].mxu0 %v2074
      %v2197 = vpop.f32.mrb[0].mxu0
      %v2198 = vadd.f32 0.0, %v2197
      %v2199 = vpop.f32.mrb[0].mxu0
      %2200 = vmatprep.mubr.f32.mxu0 0.0
      %2201 = vmatmul.mubr.f32.gmra.mrb[0].mxu0 %v2077
      %v2202 = vpop.f32.mrb[0].mxu0
      %v2203 = vadd.f32 0.0, %v2202
      %v2204 = vpop.f32.mrb[0].mxu0
      %2205 = vmatprep.mubr.f32.mxu0 0.0
      %2206 = vmatmul.mubr.f32.gmra.mrb[0].mxu0 %v2080
      %v2207 = vpop.f32.mrb[0].mxu0
      %v2208 = vadd.f32 0.0, %v2207
      %v2209 = vpop.f32.mrb[0].mxu0
      %2210 = vmatprep.mubr.f32.mxu0 0.0
      %2211 = vmatmul.mubr.f32.gmra.mrb[0].mxu0 %v2083
      %v2212 = vpop.f32.mrb[0].mxu0
      %v2213 = vadd.f32 0.0, %v2212
      %v2214 = vpop.f32.mrb[0].mxu0
      %2215 = vmatprep.mubr.f32.mxu0 0.0
      %2216 = vmatmul.mubr.f32.gmra.mrb[0].mxu0 %v2086
      %v2217 = vpop.f32.mrb[0].mxu0
      %v2218 = vadd.f32 0.0, %v2217
      %v2219 = vpop.f32.mrb[0].mxu0
      %2220 = vmatprep.mubr.f32.mxu0 0.0
      %2221 = vmatmul.mubr.f32.gmra.mrb[0].mxu0 %v2089
      %v2222 = vpop.f32.mrb[0].mxu0
      %v2223 = vadd.f32 0.0, %v2222
      %v2224 = vpop.f32.mrb[0].mxu0
      %2225 = vmatprep.mubr.f32.mxu0 0.0
      %2226 = vmatmul.mubr.f32.gmra.mrb[0].mxu0 %v2092
      %v2227 = vpop.f32.mrb[0].mxu0
      %v2228 = vadd.f32 0.0, %v2227
      %v2229 = vpop.f32.mrb[0].mxu0
      %2230 = vmatprep.mubr.f32.mxu0 0.0
      %2231 = vmatmul.mubr.f32.gmra.mrb[0].mxu0 %v2095
      %v2232 = vpop.f32.mrb[0].mxu0
      %v2233 = vadd.f32 0.0, %v2232
      %v2234 = vpop.f32.mrb[0].mxu0
      %2235 = vmatprep.mubr.f32.mxu0 0.0
      %2236 = vmatmul.mubr.f32.gmra.mrb[0].mxu0 %v2098
      %v2237 = vpop.f32.mrb[0].mxu0
      %v2238 = vadd.f32 0.0, %v2237
      %v2239 = vpop.f32.mrb[0].mxu0
      %2240 = vmatprep.mubr.f32.mxu0 0.0
      %2241 = vmatmul.mubr.f32.gmra.mrb[0].mxu0 %v2101
      %v2242 = vpop.f32.mrb[0].mxu0
      %v2243 = vadd.f32 0.0, %v2242
      %v2244 = vpop.f32.mrb[0].mxu0
      %2245 = vmatprep.mubr.f32.mxu0 0.0
      %2246 = vmatmul.mubr.f32.gmra.mrb[0].mxu0 %v2104
      %v2247 = vpop.f32.mrb[0].mxu0
      %v2248 = vadd.f32 0.0, %v2247
      %v2249 = vpop.f32.mrb[0].mxu0
      %2250 = vdwg.mxu0
      %v2251 = vadd.f32 %v2017, %v2173
      %v2252 = vadd.f32 %v2018, %v2178
      %v2253 = vadd.f32 %v2019, %v2183
      %v2254 = vadd.f32 %v2020, %v2188
      %v2255 = vadd.f32 %v2021, %v2193
      %v2256 = vadd.f32 %v2022, %v2198
      %v2257 = vadd.f32 %v2023, %v2203
      %v2258 = vadd.f32 %v2024, %v2208
      %v2259 = vadd.f32 %v2025, %v2213
      %v2260 = vadd.f32 %v2026, %v2218
      %v2261 = vadd.f32 %v2027, %v2223
      %v2262 = vadd.f32 %v2028, %v2228
      %v2263 = vadd.f32 %v2029, %v2233
      %v2264 = vadd.f32 %v2030, %v2238
      %v2265 = vadd.f32 %v2031, %v2243
      %v2266 = vadd.f32 %v2032, %v2248
      %s2267 = scalar_lea.vmem [#allocation2], 32
      %v2268 = vld [vmem:[%s2267] sm:$0xff]
      %v2269 = vld [vmem:[%s2267 + $0x10] sm:$0xff]
      %v2270 = vld [vmem:[%s2267 + $0x20] sm:$0xff]
      %v2271 = vld [vmem:[%s2267 + $0x30] sm:$0xff]
      %v2272 = vld [vmem:[%s2267 + $0x40] sm:$0xff]
      %v2273 = vld [vmem:[%s2267 + $0x50] sm:$0xff]
      %v2274 = vld [vmem:[%s2267 + $0x60] sm:$0xff]
      %v2275 = vld [vmem:[%s2267 + $0x70] sm:$0xff]
      %v2276 = vld [vmem:[%s2267 + $0x80] sm:$0xff]
      %v2277 = vld [vmem:[%s2267 + $0x90] sm:$0xff]
      %v2278 = vld [vmem:[%s2267 + $0xa0] sm:$0xff]
      %v2279 = vld [vmem:[%s2267 + $0xb0] sm:$0xff]
      %v2280 = vld [vmem:[%s2267 + $0xc0] sm:$0xff]
      %v2281 = vld [vmem:[%s2267 + $0xd0] sm:$0xff]
      %v2282 = vld [vmem:[%s2267 + $0xe0] sm:$0xff]
      %v2283 = vld [vmem:[%s2267 + $0xf0] sm:$0xff]
      %s2284 = scalar_lea.vmem %s3, 384
      %v2285 = vld [vmem:[%s2284] sm:$0xff]
      %v2286 = vld [vmem:[%s2284 + $0x8] sm:$0xff]
      %v2287 = vld [vmem:[%s2284 + $0x10] sm:$0xff]
      %v2288 = vld [vmem:[%s2284 + $0x18] sm:$0xff]
      %v2289 = vld [vmem:[%s2284 + $0x20] sm:$0xff]
      %v2290 = vld [vmem:[%s2284 + $0x28] sm:$0xff]
      %v2291 = vld [vmem:[%s2284 + $0x30] sm:$0xff]
      %v2292 = vld [vmem:[%s2284 + $0x38] sm:$0xff]
      %v2294 = vsel %vm788, %v2268, 0
      %v2297 = vsel %vm788, %v2269, 0
      %v2300 = vsel %vm788, %v2270, 0
      %v2303 = vsel %vm788, %v2271, 0
      %v2306 = vsel %vm788, %v2272, 0
      %v2309 = vsel %vm788, %v2273, 0
      %v2312 = vsel %vm788, %v2274, 0
      %v2315 = vsel %vm788, %v2275, 0
      %v2318 = vsel %vm788, %v2276, 0
      %v2321 = vsel %vm788, %v2277, 0
      %v2324 = vsel %vm788, %v2278, 0
      %v2327 = vsel %vm788, %v2279, 0
      %v2330 = vsel %vm788, %v2280, 0
      %v2333 = vsel %vm788, %v2281, 0
      %v2336 = vsel %vm788, %v2282, 0
      %v2339 = vsel %vm788, %v2283, 0
      %2341 = vmatprep.subr.mxu0 0.0
      %2342 = vmatpush1.msra.mxu0 %v2285
      %2343 = vmatprep.subr.mxu0 0.0
      %2344 = vmatpush1.msra.mxu0 %v2286
      %2345 = vmatprep.subr.mxu0 0.0
      %2346 = vmatpush1.msra.mxu0 %v2287
      %2347 = vmatprep.subr.mxu0 0.0
      %2348 = vmatpush1.msra.mxu0 %v2288
      %2349 = vmatprep.subr.mxu0 0.0
      %2350 = vmatpush1.msra.mxu0 %v2289
      %2351 = vmatprep.subr.mxu0 0.0
      %2352 = vmatpush1.msra.mxu0 %v2290
      %2353 = vmatprep.subr.mxu0 0.0
      %2354 = vmatpush1.msra.mxu0 %v2291
      %2355 = vmatprep.subr.mxu0 0.0
      %2356 = vmatpush1.msra.mxu0 %v2292
      %2357 = vmatprep.subr.mxu0 0.0
      %2358 = vmatpush1.msra.mxu0 0.0
      %2359 = vmatprep.subr.mxu0 0.0
      %2360 = vmatpush1.msra.mxu0 0.0
      %2361 = vmatprep.subr.mxu0 0.0
      %2362 = vmatpush1.msra.mxu0 0.0
      %2363 = vmatprep.subr.mxu0 0.0
      %2364 = vmatpush1.msra.mxu0 0.0
      %2365 = vmatprep.subr.mxu0 0.0
      %2366 = vmatpush1.msra.mxu0 0.0
      %2367 = vmatprep.subr.mxu0 0.0
      %2368 = vmatpush1.msra.mxu0 0.0
      %2369 = vmatprep.subr.mxu0 0.0
      %2370 = vmatpush1.msra.mxu0 0.0
      %2371 = vmatprep.subr.mxu0 0.0
      %2372 = vmatpush1.msra.mxu0 0.0
      %2373 = vmatprep.subr.mxu0 0.0
      %2374 = vmatpush1.msra.mxu0 0.0
      %2375 = vmatprep.subr.mxu0 0.0
      %2376 = vmatpush1.msra.mxu0 0.0
      %2377 = vmatprep.subr.mxu0 0.0
      %2378 = vmatpush1.msra.mxu0 0.0
      %2379 = vmatprep.subr.mxu0 0.0
      %2380 = vmatpush1.msra.mxu0 0.0
      %2381 = vmatprep.subr.mxu0 0.0
      %2382 = vmatpush1.msra.mxu0 0.0
      %2383 = vmatprep.subr.mxu0 0.0
      %2384 = vmatpush1.msra.mxu0 0.0
      %2385 = vmatprep.subr.mxu0 0.0
      %2386 = vmatpush1.msra.mxu0 0.0
      %2387 = vmatprep.subr.mxu0 0.0
      %2388 = vmatpush1.msra.mxu0 0.0
      %2389 = vmatprep.subr.mxu0 0.0
      %2390 = vmatpush1.msra.mxu0 0.0
      %2391 = vmatprep.subr.mxu0 0.0
      %2392 = vmatpush1.msra.mxu0 0.0
      %2393 = vmatprep.subr.mxu0 0.0
      %2394 = vmatpush1.msra.mxu0 0.0
      %2395 = vmatprep.subr.mxu0 0.0
      %2396 = vmatpush1.msra.mxu0 0.0
      %2397 = vmatprep.subr.mxu0 0.0
      %2398 = vmatpush1.msra.mxu0 0.0
      %2399 = vmatprep.subr.mxu0 0.0
      %2400 = vmatpush1.msra.mxu0 0.0
      %2401 = vmatprep.subr.mxu0 0.0
      %2402 = vmatpush1.msra.mxu0 0.0
      %2403 = vmatprep.subr.mxu0 0.0
      %2404 = vmatpush1.msra.mxu0 0.0
      %2405 = vmatprep.mubr.f32.mxu0 0.0
      %2406 = vmatmul.mubr.f32.gmra.mrb[0].mxu0 %v2294
      %v2407 = vpop.f32.mrb[0].mxu0
      %v2408 = vadd.f32 0.0, %v2407
      %v2409 = vpop.f32.mrb[0].mxu0
      %2410 = vmatprep.mubr.f32.mxu0 0.0
      %2411 = vmatmul.mubr.f32.gmra.mrb[0].mxu0 %v2297
      %v2412 = vpop.f32.mrb[0].mxu0
      %v2413 = vadd.f32 0.0, %v2412
      %v2414 = vpop.f32.mrb[0].mxu0
      %2415 = vmatprep.mubr.f32.mxu0 0.0
      %2416 = vmatmul.mubr.f32.gmra.mrb[0].mxu0 %v2300
      %v2417 = vpop.f32.mrb[0].mxu0
      %v2418 = vadd.f32 0.0, %v2417
      %v2419 = vpop.f32.mrb[0].mxu0
      %2420 = vmatprep.mubr.f32.mxu0 0.0
      %2421 = vmatmul.mubr.f32.gmra.mrb[0].mxu0 %v2303
      %v2422 = vpop.f32.mrb[0].mxu0
      %v2423 = vadd.f32 0.0, %v2422
      %v2424 = vpop.f32.mrb[0].mxu0
      %2425 = vmatprep.mubr.f32.mxu0 0.0
      %2426 = vmatmul.mubr.f32.gmra.mrb[0].mxu0 %v2306
      %v2427 = vpop.f32.mrb[0].mxu0
      %v2428 = vadd.f32 0.0, %v2427
      %v2429 = vpop.f32.mrb[0].mxu0
      %2430 = vmatprep.mubr.f32.mxu0 0.0
      %2431 = vmatmul.mubr.f32.gmra.mrb[0].mxu0 %v2309
      %v2432 = vpop.f32.mrb[0].mxu0
      %v2433 = vadd.f32 0.0, %v2432
      %v2434 = vpop.f32.mrb[0].mxu0
      %2435 = vmatprep.mubr.f32.mxu0 0.0
      %2436 = vmatmul.mubr.f32.gmra.mrb[0].mxu0 %v2312
      %v2437 = vpop.f32.mrb[0].mxu0
      %v2438 = vadd.f32 0.0, %v2437
      %v2439 = vpop.f32.mrb[0].mxu0
      %2440 = vmatprep.mubr.f32.mxu0 0.0
      %2441 = vmatmul.mubr.f32.gmra.mrb[0].mxu0 %v2315
      %v2442 = vpop.f32.mrb[0].mxu0
      %v2443 = vadd.f32 0.0, %v2442
      %v2444 = vpop.f32.mrb[0].mxu0
      %2445 = vmatprep.mubr.f32.mxu0 0.0
      %2446 = vmatmul.mubr.f32.gmra.mrb[0].mxu0 %v2318
      %v2447 = vpop.f32.mrb[0].mxu0
      %v2448 = vadd.f32 0.0, %v2447
      %v2449 = vpop.f32.mrb[0].mxu0
      %2450 = vmatprep.mubr.f32.mxu0 0.0
      %2451 = vmatmul.mubr.f32.gmra.mrb[0].mxu0 %v2321
      %v2452 = vpop.f32.mrb[0].mxu0
      %v2453 = vadd.f32 0.0, %v2452
      %v2454 = vpop.f32.mrb[0].mxu0
      %2455 = vmatprep.mubr.f32.mxu0 0.0
      %2456 = vmatmul.mubr.f32.gmra.mrb[0].mxu0 %v2324
      %v2457 = vpop.f32.mrb[0].mxu0
      %v2458 = vadd.f32 0.0, %v2457
      %v2459 = vpop.f32.mrb[0].mxu0
      %2460 = vmatprep.mubr.f32.mxu0 0.0
      %2461 = vmatmul.mubr.f32.gmra.mrb[0].mxu0 %v2327
      %v2462 = vpop.f32.mrb[0].mxu0
      %v2463 = vadd.f32 0.0, %v2462
      %v2464 = vpop.f32.mrb[0].mxu0
      %2465 = vmatprep.mubr.f32.mxu0 0.0
      %2466 = vmatmul.mubr.f32.gmra.mrb[0].mxu0 %v2330
      %v2467 = vpop.f32.mrb[0].mxu0
      %v2468 = vadd.f32 0.0, %v2467
      %v2469 = vpop.f32.mrb[0].mxu0
      %2470 = vmatprep.mubr.f32.mxu0 0.0
      %2471 = vmatmul.mubr.f32.gmra.mrb[0].mxu0 %v2333
      %v2472 = vpop.f32.mrb[0].mxu0
      %v2473 = vadd.f32 0.0, %v2472
      %v2474 = vpop.f32.mrb[0].mxu0
      %2475 = vmatprep.mubr.f32.mxu0 0.0
      %2476 = vmatmul.mubr.f32.gmra.mrb[0].mxu0 %v2336
      %v2477 = vpop.f32.mrb[0].mxu0
      %v2478 = vadd.f32 0.0, %v2477
      %v2479 = vpop.f32.mrb[0].mxu0
      %2480 = vmatprep.mubr.f32.mxu0 0.0
      %2481 = vmatmul.mubr.f32.gmra.mrb[0].mxu0 %v2339
      %v2482 = vpop.f32.mrb[0].mxu0
      %v2483 = vadd.f32 0.0, %v2482
      %v2484 = vpop.f32.mrb[0].mxu0
      %2485 = vdwg.mxu0
      %v2486 = vadd.f32 %v2251, %v2408
      %v2487 = vadd.f32 %v2252, %v2413
      %v2488 = vadd.f32 %v2253, %v2418
      %v2489 = vadd.f32 %v2254, %v2423
      %v2490 = vadd.f32 %v2255, %v2428
      %v2491 = vadd.f32 %v2256, %v2433
      %v2492 = vadd.f32 %v2257, %v2438
      %v2493 = vadd.f32 %v2258, %v2443
      %v2494 = vadd.f32 %v2259, %v2448
      %v2495 = vadd.f32 %v2260, %v2453
      %v2496 = vadd.f32 %v2261, %v2458
      %v2497 = vadd.f32 %v2262, %v2463
      %v2498 = vadd.f32 %v2263, %v2468
      %v2499 = vadd.f32 %v2264, %v2473
      %v2500 = vadd.f32 %v2265, %v2478
      %v2501 = vadd.f32 %v2266, %v2483
      %s2502 = scalar_lea.vmem [#allocation3], 32
      %v2503 = vld [vmem:[%s2502] sm:$0xff]
      %v2504 = vld [vmem:[%s2502 + $0x10] sm:$0xff]
      %v2505 = vld [vmem:[%s2502 + $0x20] sm:$0xff]
      %v2506 = vld [vmem:[%s2502 + $0x30] sm:$0xff]
      %v2507 = vld [vmem:[%s2502 + $0x40] sm:$0xff]
      %v2508 = vld [vmem:[%s2502 + $0x50] sm:$0xff]
      %v2509 = vld [vmem:[%s2502 + $0x60] sm:$0xff]
      %v2510 = vld [vmem:[%s2502 + $0x70] sm:$0xff]
      %v2511 = vld [vmem:[%s2502 + $0x80] sm:$0xff]
      %v2512 = vld [vmem:[%s2502 + $0x90] sm:$0xff]
      %v2513 = vld [vmem:[%s2502 + $0xa0] sm:$0xff]
      %v2514 = vld [vmem:[%s2502 + $0xb0] sm:$0xff]
      %v2515 = vld [vmem:[%s2502 + $0xc0] sm:$0xff]
      %v2516 = vld [vmem:[%s2502 + $0xd0] sm:$0xff]
      %v2517 = vld [vmem:[%s2502 + $0xe0] sm:$0xff]
      %v2518 = vld [vmem:[%s2502 + $0xf0] sm:$0xff]
      %s2519 = scalar_lea.vmem %s3, 448
      %v2520 = vld [vmem:[%s2519] sm:$0xff]
      %v2521 = vld [vmem:[%s2519 + $0x8] sm:$0xff]
      %v2522 = vld [vmem:[%s2519 + $0x10] sm:$0xff]
      %v2523 = vld [vmem:[%s2519 + $0x18] sm:$0xff]
      %v2524 = vld [vmem:[%s2519 + $0x20] sm:$0xff]
      %v2525 = vld [vmem:[%s2519 + $0x28] sm:$0xff]
      %v2526 = vld [vmem:[%s2519 + $0x30] sm:$0xff]
      %v2527 = vld [vmem:[%s2519 + $0x38] sm:$0xff]
      %v2529 = vsel %vm788, %v2503, 0
      %v2532 = vsel %vm788, %v2504, 0
      %v2535 = vsel %vm788, %v2505, 0
      %v2538 = vsel %vm788, %v2506, 0
      %v2541 = vsel %vm788, %v2507, 0
      %v2544 = vsel %vm788, %v2508, 0
      %v2547 = vsel %vm788, %v2509, 0
      %v2550 = vsel %vm788, %v2510, 0
      %v2553 = vsel %vm788, %v2511, 0
      %v2556 = vsel %vm788, %v2512, 0
      %v2559 = vsel %vm788, %v2513, 0
      %v2562 = vsel %vm788, %v2514, 0
      %v2565 = vsel %vm788, %v2515, 0
      %v2568 = vsel %vm788, %v2516, 0
      %v2571 = vsel %vm788, %v2517, 0
      %v2574 = vsel %vm788, %v2518, 0
      %2576 = vmatprep.subr.mxu0 0.0
      %2577 = vmatpush1.msra.mxu0 %v2520
      %2578 = vmatprep.subr.mxu0 0.0
      %2579 = vmatpush1.msra.mxu0 %v2521
      %2580 = vmatprep.subr.mxu0 0.0
      %2581 = vmatpush1.msra.mxu0 %v2522
      %2582 = vmatprep.subr.mxu0 0.0
      %2583 = vmatpush1.msra.mxu0 %v2523
      %2584 = vmatprep.subr.mxu0 0.0
      %2585 = vmatpush1.msra.mxu0 %v2524
      %2586 = vmatprep.subr.mxu0 0.0
      %2587 = vmatpush1.msra.mxu0 %v2525
      %2588 = vmatprep.subr.mxu0 0.0
      %2589 = vmatpush1.msra.mxu0 %v2526
      %2590 = vmatprep.subr.mxu0 0.0
      %2591 = vmatpush1.msra.mxu0 %v2527
      %2592 = vmatprep.subr.mxu0 0.0
      %2593 = vmatpush1.msra.mxu0 0.0
      %2594 = vmatprep.subr.mxu0 0.0
      %2595 = vmatpush1.msra.mxu0 0.0
      %2596 = vmatprep.subr.mxu0 0.0
      %2597 = vmatpush1.msra.mxu0 0.0
      %2598 = vmatprep.subr.mxu0 0.0
      %2599 = vmatpush1.msra.mxu0 0.0
      %2600 = vmatprep.subr.mxu0 0.0
      %2601 = vmatpush1.msra.mxu0 0.0
      %2602 = vmatprep.subr.mxu0 0.0
      %2603 = vmatpush1.msra.mxu0 0.0
      %2604 = vmatprep.subr.mxu0 0.0
      %2605 = vmatpush1.msra.mxu0 0.0
      %2606 = vmatprep.subr.mxu0 0.0
      %2607 = vmatpush1.msra.mxu0 0.0
      %2608 = vmatprep.subr.mxu0 0.0
      %2609 = vmatpush1.msra.mxu0 0.0
      %2610 = vmatprep.subr.mxu0 0.0
      %2611 = vmatpush1.msra.mxu0 0.0
      %2612 = vmatprep.subr.mxu0 0.0
      %2613 = vmatpush1.msra.mxu0 0.0
      %2614 = vmatprep.subr.mxu0 0.0
      %2615 = vmatpush1.msra.mxu0 0.0
      %2616 = vmatprep.subr.mxu0 0.0
      %2617 = vmatpush1.msra.mxu0 0.0
      %2618 = vmatprep.subr.mxu0 0.0
      %2619 = vmatpush1.msra.mxu0 0.0
      %2620 = vmatprep.subr.mxu0 0.0
      %2621 = vmatpush1.msra.mxu0 0.0
      %2622 = vmatprep.subr.mxu0 0.0
      %2623 = vmatpush1.msra.mxu0 0.0
      %2624 = vmatprep.subr.mxu0 0.0
      %2625 = vmatpush1.msra.mxu0 0.0
      %2626 = vmatprep.subr.mxu0 0.0
      %2627 = vmatpush1.msra.mxu0 0.0
      %2628 = vmatprep.subr.mxu0 0.0
      %2629 = vmatpush1.msra.mxu0 0.0
      %2630 = vmatprep.subr.mxu0 0.0
      %2631 = vmatpush1.msra.mxu0 0.0
      %2632 = vmatprep.subr.mxu0 0.0
      %2633 = vmatpush1.msra.mxu0 0.0
      %2634 = vmatprep.subr.mxu0 0.0
      %2635 = vmatpush1.msra.mxu0 0.0
      %2636 = vmatprep.subr.mxu0 0.0
      %2637 = vmatpush1.msra.mxu0 0.0
      %2638 = vmatprep.subr.mxu0 0.0
      %2639 = vmatpush1.msra.mxu0 0.0
      %2640 = vmatprep.mubr.f32.mxu0 0.0
      %2641 = vmatmul.mubr.f32.gmra.mrb[0].mxu0 %v2529
      %v2642 = vpop.f32.mrb[0].mxu0
      %v2643 = vadd.f32 0.0, %v2642
      %v2644 = vpop.f32.mrb[0].mxu0
      %2645 = vmatprep.mubr.f32.mxu0 0.0
      %2646 = vmatmul.mubr.f32.gmra.mrb[0].mxu0 %v2532
      %v2647 = vpop.f32.mrb[0].mxu0
      %v2648 = vadd.f32 0.0, %v2647
      %v2649 = vpop.f32.mrb[0].mxu0
      %2650 = vmatprep.mubr.f32.mxu0 0.0
      %2651 = vmatmul.mubr.f32.gmra.mrb[0].mxu0 %v2535
      %v2652 = vpop.f32.mrb[0].mxu0
      %v2653 = vadd.f32 0.0, %v2652
      %v2654 = vpop.f32.mrb[0].mxu0
      %2655 = vmatprep.mubr.f32.mxu0 0.0
      %2656 = vmatmul.mubr.f32.gmra.mrb[0].mxu0 %v2538
      %v2657 = vpop.f32.mrb[0].mxu0
      %v2658 = vadd.f32 0.0, %v2657
      %v2659 = vpop.f32.mrb[0].mxu0
      %2660 = vmatprep.mubr.f32.mxu0 0.0
      %2661 = vmatmul.mubr.f32.gmra.mrb[0].mxu0 %v2541
      %v2662 = vpop.f32.mrb[0].mxu0
      %v2663 = vadd.f32 0.0, %v2662
      %v2664 = vpop.f32.mrb[0].mxu0
      %2665 = vmatprep.mubr.f32.mxu0 0.0
      %2666 = vmatmul.mubr.f32.gmra.mrb[0].mxu0 %v2544
      %v2667 = vpop.f32.mrb[0].mxu0
      %v2668 = vadd.f32 0.0, %v2667
      %v2669 = vpop.f32.mrb[0].mxu0
      %2670 = vmatprep.mubr.f32.mxu0 0.0
      %2671 = vmatmul.mubr.f32.gmra.mrb[0].mxu0 %v2547
      %v2672 = vpop.f32.mrb[0].mxu0
      %v2673 = vadd.f32 0.0, %v2672
      %v2674 = vpop.f32.mrb[0].mxu0
      %2675 = vmatprep.mubr.f32.mxu0 0.0
      %2676 = vmatmul.mubr.f32.gmra.mrb[0].mxu0 %v2550
      %v2677 = vpop.f32.mrb[0].mxu0
      %v2678 = vadd.f32 0.0, %v2677
      %v2679 = vpop.f32.mrb[0].mxu0
      %2680 = vmatprep.mubr.f32.mxu0 0.0
      %2681 = vmatmul.mubr.f32.gmra.mrb[0].mxu0 %v2553
      %v2682 = vpop.f32.mrb[0].mxu0
      %v2683 = vadd.f32 0.0, %v2682
      %v2684 = vpop.f32.mrb[0].mxu0
      %2685 = vmatprep.mubr.f32.mxu0 0.0
      %2686 = vmatmul.mubr.f32.gmra.mrb[0].mxu0 %v2556
      %v2687 = vpop.f32.mrb[0].mxu0
      %v2688 = vadd.f32 0.0, %v2687
      %v2689 = vpop.f32.mrb[0].mxu0
      %2690 = vmatprep.mubr.f32.mxu0 0.0
      %2691 = vmatmul.mubr.f32.gmra.mrb[0].mxu0 %v2559
      %v2692 = vpop.f32.mrb[0].mxu0
      %v2693 = vadd.f32 0.0, %v2692
      %v2694 = vpop.f32.mrb[0].mxu0
      %2695 = vmatprep.mubr.f32.mxu0 0.0
      %2696 = vmatmul.mubr.f32.gmra.mrb[0].mxu0 %v2562
      %v2697 = vpop.f32.mrb[0].mxu0
      %v2698 = vadd.f32 0.0, %v2697
      %v2699 = vpop.f32.mrb[0].mxu0
      %2700 = vmatprep.mubr.f32.mxu0 0.0
      %2701 = vmatmul.mubr.f32.gmra.mrb[0].mxu0 %v2565
      %v2702 = vpop.f32.mrb[0].mxu0
      %v2703 = vadd.f32 0.0, %v2702
      %v2704 = vpop.f32.mrb[0].mxu0
      %2705 = vmatprep.mubr.f32.mxu0 0.0
      %2706 = vmatmul.mubr.f32.gmra.mrb[0].mxu0 %v2568
      %v2707 = vpop.f32.mrb[0].mxu0
      %v2708 = vadd.f32 0.0, %v2707
      %v2709 = vpop.f32.mrb[0].mxu0
      %2710 = vmatprep.mubr.f32.mxu0 0.0
      %2711 = vmatmul.mubr.f32.gmra.mrb[0].mxu0 %v2571
      %v2712 = vpop.f32.mrb[0].mxu0
      %v2713 = vadd.f32 0.0, %v2712
      %v2714 = vpop.f32.mrb[0].mxu0
      %2715 = vmatprep.mubr.f32.mxu0 0.0
      %2716 = vmatmul.mubr.f32.gmra.mrb[0].mxu0 %v2574
      %v2717 = vpop.f32.mrb[0].mxu0
      %v2718 = vadd.f32 0.0, %v2717
      %v2719 = vpop.f32.mrb[0].mxu0
      %2720 = vdwg.mxu0
      %v2721 = vadd.f32 %v2486, %v2643
      %v2722 = vadd.f32 %v2487, %v2648
      %v2723 = vadd.f32 %v2488, %v2653
      %v2724 = vadd.f32 %v2489, %v2658
      %v2725 = vadd.f32 %v2490, %v2663
      %v2726 = vadd.f32 %v2491, %v2668
      %v2727 = vadd.f32 %v2492, %v2673
      %v2728 = vadd.f32 %v2493, %v2678
      %v2729 = vadd.f32 %v2494, %v2683
      %v2730 = vadd.f32 %v2495, %v2688
      %v2731 = vadd.f32 %v2496, %v2693
      %v2732 = vadd.f32 %v2497, %v2698
      %v2733 = vadd.f32 %v2498, %v2703
      %v2734 = vadd.f32 %v2499, %v2708
      %v2735 = vadd.f32 %v2500, %v2713
      %v2736 = vadd.f32 %v2501, %v2718
      %v2737 = vld [vmem:[%s2267 + $0x1] sm:$0xff]
      %v2738 = vld [vmem:[%s2267 + $0x11] sm:$0xff]
      %v2739 = vld [vmem:[%s2267 + $0x21] sm:$0xff]
      %v2740 = vld [vmem:[%s2267 + $0x31] sm:$0xff]
      %v2741 = vld [vmem:[%s2267 + $0x41] sm:$0xff]
      %v2742 = vld [vmem:[%s2267 + $0x51] sm:$0xff]
      %v2743 = vld [vmem:[%s2267 + $0x61] sm:$0xff]
      %v2744 = vld [vmem:[%s2267 + $0x71] sm:$0xff]
      %v2745 = vld [vmem:[%s2267 + $0x81] sm:$0xff]
      %v2746 = vld [vmem:[%s2267 + $0x91] sm:$0xff]
      %v2747 = vld [vmem:[%s2267 + $0xa1] sm:$0xff]
      %v2748 = vld [vmem:[%s2267 + $0xb1] sm:$0xff]
      %v2749 = vld [vmem:[%s2267 + $0xc1] sm:$0xff]
      %v2750 = vld [vmem:[%s2267 + $0xd1] sm:$0xff]
      %v2751 = vld [vmem:[%s2267 + $0xe1] sm:$0xff]
      %v2752 = vld [vmem:[%s2267 + $0xf1] sm:$0xff]
      %s2753 = scalar_lea.vmem %s3, 512
      %v2754 = vld [vmem:[%s2753] sm:$0xff]
      %v2755 = vld [vmem:[%s2753 + $0x8] sm:$0xff]
      %v2756 = vld [vmem:[%s2753 + $0x10] sm:$0xff]
      %v2757 = vld [vmem:[%s2753 + $0x18] sm:$0xff]
      %v2758 = vld [vmem:[%s2753 + $0x20] sm:$0xff]
      %v2759 = vld [vmem:[%s2753 + $0x28] sm:$0xff]
      %v2760 = vld [vmem:[%s2753 + $0x30] sm:$0xff]
      %v2761 = vld [vmem:[%s2753 + $0x38] sm:$0xff]
      %v2763 = vsel %vm788, %v2737, 0
      %v2766 = vsel %vm788, %v2738, 0
      %v2769 = vsel %vm788, %v2739, 0
      %v2772 = vsel %vm788, %v2740, 0
      %v2775 = vsel %vm788, %v2741, 0
      %v2778 = vsel %vm788, %v2742, 0
      %v2781 = vsel %vm788, %v2743, 0
      %v2784 = vsel %vm788, %v2744, 0
      %v2787 = vsel %vm788, %v2745, 0
      %v2790 = vsel %vm788, %v2746, 0
      %v2793 = vsel %vm788, %v2747, 0
      %v2796 = vsel %vm788, %v2748, 0
      %v2799 = vsel %vm788, %v2749, 0
      %v2802 = vsel %vm788, %v2750, 0
      %v2805 = vsel %vm788, %v2751, 0
      %v2808 = vsel %vm788, %v2752, 0
      %2810 = vmatprep.subr.mxu0 0.0
      %2811 = vmatpush1.msra.mxu0 %v2754
      %2812 = vmatprep.subr.mxu0 0.0
      %2813 = vmatpush1.msra.mxu0 %v2755
      %2814 = vmatprep.subr.mxu0 0.0
      %2815 = vmatpush1.msra.mxu0 %v2756
      %2816 = vmatprep.subr.mxu0 0.0
      %2817 = vmatpush1.msra.mxu0 %v2757
      %2818 = vmatprep.subr.mxu0 0.0
      %2819 = vmatpush1.msra.mxu0 %v2758
      %2820 = vmatprep.subr.mxu0 0.0
      %2821 = vmatpush1.msra.mxu0 %v2759
      %2822 = vmatprep.subr.mxu0 0.0
      %2823 = vmatpush1.msra.mxu0 %v2760
      %2824 = vmatprep.subr.mxu0 0.0
      %2825 = vmatpush1.msra.mxu0 %v2761
      %2826 = vmatprep.subr.mxu0 0.0
      %2827 = vmatpush1.msra.mxu0 0.0
      %2828 = vmatprep.subr.mxu0 0.0
      %2829 = vmatpush1.msra.mxu0 0.0
      %2830 = vmatprep.subr.mxu0 0.0
      %2831 = vmatpush1.msra.mxu0 0.0
      %2832 = vmatprep.subr.mxu0 0.0
      %2833 = vmatpush1.msra.mxu0 0.0
      %2834 = vmatprep.subr.mxu0 0.0
      %2835 = vmatpush1.msra.mxu0 0.0
      %2836 = vmatprep.subr.mxu0 0.0
      %2837 = vmatpush1.msra.mxu0 0.0
      %2838 = vmatprep.subr.mxu0 0.0
      %2839 = vmatpush1.msra.mxu0 0.0
      %2840 = vmatprep.subr.mxu0 0.0
      %2841 = vmatpush1.msra.mxu0 0.0
      %2842 = vmatprep.subr.mxu0 0.0
      %2843 = vmatpush1.msra.mxu0 0.0
      %2844 = vmatprep.subr.mxu0 0.0
      %2845 = vmatpush1.msra.mxu0 0.0
      %2846 = vmatprep.subr.mxu0 0.0
      %2847 = vmatpush1.msra.mxu0 0.0
      %2848 = vmatprep.subr.mxu0 0.0
      %2849 = vmatpush1.msra.mxu0 0.0
      %2850 = vmatprep.subr.mxu0 0.0
      %2851 = vmatpush1.msra.mxu0 0.0
      %2852 = vmatprep.subr.mxu0 0.0
      %2853 = vmatpush1.msra.mxu0 0.0
      %2854 = vmatprep.subr.mxu0 0.0
      %2855 = vmatpush1.msra.mxu0 0.0
      %2856 = vmatprep.subr.mxu0 0.0
      %2857 = vmatpush1.msra.mxu0 0.0
      %2858 = vmatprep.subr.mxu0 0.0
      %2859 = vmatpush1.msra.mxu0 0.0
      %2860 = vmatprep.subr.mxu0 0.0
      %2861 = vmatpush1.msra.mxu0 0.0
      %2862 = vmatprep.subr.mxu0 0.0
      %2863 = vmatpush1.msra.mxu0 0.0
      %2864 = vmatprep.subr.mxu0 0.0
      %2865 = vmatpush1.msra.mxu0 0.0
      %2866 = vmatprep.subr.mxu0 0.0
      %2867 = vmatpush1.msra.mxu0 0.0
      %2868 = vmatprep.subr.mxu0 0.0
      %2869 = vmatpush1.msra.mxu0 0.0
      %2870 = vmatprep.subr.mxu0 0.0
      %2871 = vmatpush1.msra.mxu0 0.0
      %2872 = vmatprep.subr.mxu0 0.0
      %2873 = vmatpush1.msra.mxu0 0.0
      %2874 = vmatprep.mubr.f32.mxu0 0.0
      %2875 = vmatmul.mubr.f32.gmra.mrb[0].mxu0 %v2763
      %v2876 = vpop.f32.mrb[0].mxu0
      %v2877 = vadd.f32 0.0, %v2876
      %v2878 = vpop.f32.mrb[0].mxu0
      %2879 = vmatprep.mubr.f32.mxu0 0.0
      %2880 = vmatmul.mubr.f32.gmra.mrb[0].mxu0 %v2766
      %v2881 = vpop.f32.mrb[0].mxu0
      %v2882 = vadd.f32 0.0, %v2881
      %v2883 = vpop.f32.mrb[0].mxu0
      %2884 = vmatprep.mubr.f32.mxu0 0.0
      %2885 = vmatmul.mubr.f32.gmra.mrb[0].mxu0 %v2769
      %v2886 = vpop.f32.mrb[0].mxu0
      %v2887 = vadd.f32 0.0, %v2886
      %v2888 = vpop.f32.mrb[0].mxu0
      %2889 = vmatprep.mubr.f32.mxu0 0.0
      %2890 = vmatmul.mubr.f32.gmra.mrb[0].mxu0 %v2772
      %v2891 = vpop.f32.mrb[0].mxu0
      %v2892 = vadd.f32 0.0, %v2891
      %v2893 = vpop.f32.mrb[0].mxu0
      %2894 = vmatprep.mubr.f32.mxu0 0.0
      %2895 = vmatmul.mubr.f32.gmra.mrb[0].mxu0 %v2775
      %v2896 = vpop.f32.mrb[0].mxu0
      %v2897 = vadd.f32 0.0, %v2896
      %v2898 = vpop.f32.mrb[0].mxu0
      %2899 = vmatprep.mubr.f32.mxu0 0.0
      %2900 = vmatmul.mubr.f32.gmra.mrb[0].mxu0 %v2778
      %v2901 = vpop.f32.mrb[0].mxu0
      %v2902 = vadd.f32 0.0, %v2901
      %v2903 = vpop.f32.mrb[0].mxu0
      %2904 = vmatprep.mubr.f32.mxu0 0.0
      %2905 = vmatmul.mubr.f32.gmra.mrb[0].mxu0 %v2781
      %v2906 = vpop.f32.mrb[0].mxu0
      %v2907 = vadd.f32 0.0, %v2906
      %v2908 = vpop.f32.mrb[0].mxu0
      %2909 = vmatprep.mubr.f32.mxu0 0.0
      %2910 = vmatmul.mubr.f32.gmra.mrb[0].mxu0 %v2784
      %v2911 = vpop.f32.mrb[0].mxu0
      %v2912 = vadd.f32 0.0, %v2911
      %v2913 = vpop.f32.mrb[0].mxu0
      %2914 = vmatprep.mubr.f32.mxu0 0.0
      %2915 = vmatmul.mubr.f32.gmra.mrb[0].mxu0 %v2787
      %v2916 = vpop.f32.mrb[0].mxu0
      %v2917 = vadd.f32 0.0, %v2916
      %v2918 = vpop.f32.mrb[0].mxu0
      %2919 = vmatprep.mubr.f32.mxu0 0.0
      %2920 = vmatmul.mubr.f32.gmra.mrb[0].mxu0 %v2790
      %v2921 = vpop.f32.mrb[0].mxu0
      %v2922 = vadd.f32 0.0, %v2921
      %v2923 = vpop.f32.mrb[0].mxu0
      %2924 = vmatprep.mubr.f32.mxu0 0.0
      %2925 = vmatmul.mubr.f32.gmra.mrb[0].mxu0 %v2793
      %v2926 = vpop.f32.mrb[0].mxu0
      %v2927 = vadd.f32 0.0, %v2926
      %v2928 = vpop.f32.mrb[0].mxu0
      %2929 = vmatprep.mubr.f32.mxu0 0.0
      %2930 = vmatmul.mubr.f32.gmra.mrb[0].mxu0 %v2796
      %v2931 = vpop.f32.mrb[0].mxu0
      %v2932 = vadd.f32 0.0, %v2931
      %v2933 = vpop.f32.mrb[0].mxu0
      %2934 = vmatprep.mubr.f32.mxu0 0.0
      %2935 = vmatmul.mubr.f32.gmra.mrb[0].mxu0 %v2799
      %v2936 = vpop.f32.mrb[0].mxu0
      %v2937 = vadd.f32 0.0, %v2936
      %v2938 = vpop.f32.mrb[0].mxu0
      %2939 = vmatprep.mubr.f32.mxu0 0.0
      %2940 = vmatmul.mubr.f32.gmra.mrb[0].mxu0 %v2802
      %v2941 = vpop.f32.mrb[0].mxu0
      %v2942 = vadd.f32 0.0, %v2941
      %v2943 = vpop.f32.mrb[0].mxu0
      %2944 = vmatprep.mubr.f32.mxu0 0.0
      %2945 = vmatmul.mubr.f32.gmra.mrb[0].mxu0 %v2805
      %v2946 = vpop.f32.mrb[0].mxu0
      %v2947 = vadd.f32 0.0, %v2946
      %v2948 = vpop.f32.mrb[0].mxu0
      %2949 = vmatprep.mubr.f32.mxu0 0.0
      %2950 = vmatmul.mubr.f32.gmra.mrb[0].mxu0 %v2808
      %v2951 = vpop.f32.mrb[0].mxu0
      %v2952 = vadd.f32 0.0, %v2951
      %v2953 = vpop.f32.mrb[0].mxu0
      %2954 = vdwg.mxu0
      %v2955 = vadd.f32 %v2721, %v2877
      %v2956 = vadd.f32 %v2722, %v2882
      %v2957 = vadd.f32 %v2723, %v2887
      %v2958 = vadd.f32 %v2724, %v2892
      %v2959 = vadd.f32 %v2725, %v2897
      %v2960 = vadd.f32 %v2726, %v2902
      %v2961 = vadd.f32 %v2727, %v2907
      %v2962 = vadd.f32 %v2728, %v2912
      %v2963 = vadd.f32 %v2729, %v2917
      %v2964 = vadd.f32 %v2730, %v2922
      %v2965 = vadd.f32 %v2731, %v2927
      %v2966 = vadd.f32 %v2732, %v2932
      %v2967 = vadd.f32 %v2733, %v2937
      %v2968 = vadd.f32 %v2734, %v2942
      %v2969 = vadd.f32 %v2735, %v2947
      %v2970 = vadd.f32 %v2736, %v2952
      %v2971 = vld [vmem:[%s4] sm:$0x1]
      %v2973 = vlaneseq
      %v2974 = vshrl.u32 %v2973, 7
      %v2975 = vsub.s32 0, %v2974
      %v2976 = vrot.slane %v2971, %v2975
      %v2978 = vadd.f32 %v2955, %v2976
      %v2979 = vadd.f32 %v2956, %v2976
      %v2980 = vadd.f32 %v2957, %v2976
      %v2981 = vadd.f32 %v2958, %v2976
      %v2982 = vadd.f32 %v2959, %v2976
      %v2983 = vadd.f32 %v2960, %v2976
      %v2984 = vadd.f32 %v2961, %v2976
      %v2985 = vadd.f32 %v2962, %v2976
      %v2986 = vadd.f32 %v2963, %v2976
      %v2987 = vadd.f32 %v2964, %v2976
      %v2988 = vadd.f32 %v2965, %v2976
      %v2989 = vadd.f32 %v2966, %v2976
      %v2990 = vadd.f32 %v2967, %v2976
      %v2991 = vadd.f32 %v2968, %v2976
      %v2992 = vadd.f32 %v2969, %v2976
      %v2993 = vadd.f32 %v2970, %v2976
      %v2994 = vmax.f32 %v2978, 0.0
      %v2995 = vmax.f32 %v2979, 0.0
      %v2996 = vmax.f32 %v2980, 0.0
      %v2997 = vmax.f32 %v2981, 0.0
      %v2998 = vmax.f32 %v2982, 0.0
      %v2999 = vmax.f32 %v2983, 0.0
      %v3000 = vmax.f32 %v2984, 0.0
      %v3001 = vmax.f32 %v2985, 0.0
      %v3002 = vmax.f32 %v2986, 0.0
      %v3003 = vmax.f32 %v2987, 0.0
      %v3004 = vmax.f32 %v2988, 0.0
      %v3005 = vmax.f32 %v2989, 0.0
      %v3006 = vmax.f32 %v2990, 0.0
      %v3007 = vmax.f32 %v2991, 0.0
      %v3008 = vmax.f32 %v2992, 0.0
      %v3009 = vmax.f32 %v2993, 0.0
      %v3010 = vmax.f32 %v2994, %v2995
      %v3011 = vmax.f32 %v2996, %v2997
      %v3012 = vmax.f32 %v2998, %v2999
      %v3013 = vmax.f32 %v3000, %v3001
      %v3014 = vmax.f32 %v3002, %v3003
      %v3015 = vmax.f32 %v3004, %v3005
      %v3016 = vmax.f32 %v3006, %v3007
      %v3017 = vmax.f32 %v3008, %v3009
      %3018 = vmatprep.subr.mxu0 0.0
      %3019 = vmatpush1.msra.mxu0 %v937
      %3020 = vmatprep.subr.mxu0 0.0
      %3021 = vmatpush1.msra.mxu0 %v938
      %3022 = vmatprep.subr.mxu0 0.0
      %3023 = vmatpush1.msra.mxu0 %v939
      %3024 = vmatprep.subr.mxu0 0.0
      %3025 = vmatpush1.msra.mxu0 %v940
      %3026 = vmatprep.subr.mxu0 0.0
      %3027 = vmatpush1.msra.mxu0 %v941
      %3028 = vmatprep.subr.mxu0 0.0
      %3029 = vmatpush1.msra.mxu0 %v942
      %3030 = vmatprep.subr.mxu0 0.0
      %3031 = vmatpush1.msra.mxu0 %v943
      %3032 = vmatprep.subr.mxu0 0.0
      %3033 = vmatpush1.msra.mxu0 %v944
      %3034 = vmatprep.subr.mxu0 0.0
      %3035 = vmatpush1.msra.mxu0 0.0
      %3036 = vmatprep.subr.mxu0 0.0
      %3037 = vmatpush1.msra.mxu0 0.0
      %3038 = vmatprep.subr.mxu0 0.0
      %3039 = vmatpush1.msra.mxu0 0.0
      %3040 = vmatprep.subr.mxu0 0.0
      %3041 = vmatpush1.msra.mxu0 0.0
      %3042 = vmatprep.subr.mxu0 0.0
      %3043 = vmatpush1.msra.mxu0 0.0
      %3044 = vmatprep.subr.mxu0 0.0
      %3045 = vmatpush1.msra.mxu0 0.0
      %3046 = vmatprep.subr.mxu0 0.0
      %3047 = vmatpush1.msra.mxu0 0.0
      %3048 = vmatprep.subr.mxu0 0.0
      %3049 = vmatpush1.msra.mxu0 0.0
      %3050 = vmatprep.subr.mxu0 0.0
      %3051 = vmatpush1.msra.mxu0 0.0
      %3052 = vmatprep.subr.mxu0 0.0
      %3053 = vmatpush1.msra.mxu0 0.0
      %3054 = vmatprep.subr.mxu0 0.0
      %3055 = vmatpush1.msra.mxu0 0.0
      %3056 = vmatprep.subr.mxu0 0.0
      %3057 = vmatpush1.msra.mxu0 0.0
      %3058 = vmatprep.subr.mxu0 0.0
      %3059 = vmatpush1.msra.mxu0 0.0
      %3060 = vmatprep.subr.mxu0 0.0
      %3061 = vmatpush1.msra.mxu0 0.0
      %3062 = vmatprep.subr.mxu0 0.0
      %3063 = vmatpush1.msra.mxu0 0.0
      %3064 = vmatprep.subr.mxu0 0.0
      %3065 = vmatpush1.msra.mxu0 0.0
      %3066 = vmatprep.subr.mxu0 0.0
      %3067 = vmatpush1.msra.mxu0 0.0
      %3068 = vmatprep.subr.mxu0 0.0
      %3069 = vmatpush1.msra.mxu0 0.0
      %3070 = vmatprep.subr.mxu0 0.0
      %3071 = vmatpush1.msra.mxu0 0.0
      %3072 = vmatprep.subr.mxu0 0.0
      %3073 = vmatpush1.msra.mxu0 0.0
      %3074 = vmatprep.subr.mxu0 0.0
      %3075 = vmatpush1.msra.mxu0 0.0
      %3076 = vmatprep.subr.mxu0 0.0
      %3077 = vmatpush1.msra.mxu0 0.0
      %3078 = vmatprep.subr.mxu0 0.0
      %3079 = vmatpush1.msra.mxu0 0.0
      %3080 = vmatprep.subr.mxu0 0.0
      %3081 = vmatpush1.msra.mxu0 0.0
      %3082 = vmatprep.mubr.f32.mxu0 0.0
      %3083 = vmatmul.mubr.f32.gmra.mrb[0].mxu0 %v1357
      %v3084 = vpop.f32.mrb[0].mxu0
      %v3085 = vadd.f32 0.0, %v3084
      %v3086 = vpop.f32.mrb[0].mxu0
      %3087 = vmatprep.mubr.f32.mxu0 0.0
      %3088 = vmatmul.mubr.f32.gmra.mrb[0].mxu0 %v1360
      %v3089 = vpop.f32.mrb[0].mxu0
      %v3090 = vadd.f32 0.0, %v3089
      %v3091 = vpop.f32.mrb[0].mxu0
      %3092 = vmatprep.mubr.f32.mxu0 0.0
      %3093 = vmatmul.mubr.f32.gmra.mrb[0].mxu0 %v1363
      %v3094 = vpop.f32.mrb[0].mxu0
      %v3095 = vadd.f32 0.0, %v3094
      %v3096 = vpop.f32.mrb[0].mxu0
      %3097 = vmatprep.mubr.f32.mxu0 0.0
      %3098 = vmatmul.mubr.f32.gmra.mrb[0].mxu0 %v1366
      %v3099 = vpop.f32.mrb[0].mxu0
      %v3100 = vadd.f32 0.0, %v3099
      %v3101 = vpop.f32.mrb[0].mxu0
      %3102 = vmatprep.mubr.f32.mxu0 0.0
      %3103 = vmatmul.mubr.f32.gmra.mrb[0].mxu0 %v1369
      %v3104 = vpop.f32.mrb[0].mxu0
      %v3105 = vadd.f32 0.0, %v3104
      %v3106 = vpop.f32.mrb[0].mxu0
      %3107 = vmatprep.mubr.f32.mxu0 0.0
      %3108 = vmatmul.mubr.f32.gmra.mrb[0].mxu0 %v1372
      %v3109 = vpop.f32.mrb[0].mxu0
      %v3110 = vadd.f32 0.0, %v3109
      %v3111 = vpop.f32.mrb[0].mxu0
      %3112 = vmatprep.mubr.f32.mxu0 0.0
      %3113 = vmatmul.mubr.f32.gmra.mrb[0].mxu0 %v1375
      %v3114 = vpop.f32.mrb[0].mxu0
      %v3115 = vadd.f32 0.0, %v3114
      %v3116 = vpop.f32.mrb[0].mxu0
      %3117 = vmatprep.mubr.f32.mxu0 0.0
      %3118 = vmatmul.mubr.f32.gmra.mrb[0].mxu0 %v1378
      %v3119 = vpop.f32.mrb[0].mxu0
      %v3120 = vadd.f32 0.0, %v3119
      %v3121 = vpop.f32.mrb[0].mxu0
      %3122 = vmatprep.mubr.f32.mxu0 0.0
      %3123 = vmatmul.mubr.f32.gmra.mrb[0].mxu0 %v1381
      %v3124 = vpop.f32.mrb[0].mxu0
      %v3125 = vadd.f32 0.0, %v3124
      %v3126 = vpop.f32.mrb[0].mxu0
      %3127 = vmatprep.mubr.f32.mxu0 0.0
      %3128 = vmatmul.mubr.f32.gmra.mrb[0].mxu0 %v1384
      %v3129 = vpop.f32.mrb[0].mxu0
      %v3130 = vadd.f32 0.0, %v3129
      %v3131 = vpop.f32.mrb[0].mxu0
      %3132 = vmatprep.mubr.f32.mxu0 0.0
      %3133 = vmatmul.mubr.f32.gmra.mrb[0].mxu0 %v1387
      %v3134 = vpop.f32.mrb[0].mxu0
      %v3135 = vadd.f32 0.0, %v3134
      %v3136 = vpop.f32.mrb[0].mxu0
      %3137 = vmatprep.mubr.f32.mxu0 0.0
      %3138 = vmatmul.mubr.f32.gmra.mrb[0].mxu0 %v1390
      %v3139 = vpop.f32.mrb[0].mxu0
      %v3140 = vadd.f32 0.0, %v3139
      %v3141 = vpop.f32.mrb[0].mxu0
      %3142 = vmatprep.mubr.f32.mxu0 0.0
      %3143 = vmatmul.mubr.f32.gmra.mrb[0].mxu0 %v1393
      %v3144 = vpop.f32.mrb[0].mxu0
      %v3145 = vadd.f32 0.0, %v3144
      %v3146 = vpop.f32.mrb[0].mxu0
      %3147 = vmatprep.mubr.f32.mxu0 0.0
      %3148 = vmatmul.mubr.f32.gmra.mrb[0].mxu0 %v1396
      %v3149 = vpop.f32.mrb[0].mxu0
      %v3150 = vadd.f32 0.0, %v3149
      %v3151 = vpop.f32.mrb[0].mxu0
      %3152 = vmatprep.mubr.f32.mxu0 0.0
      %3153 = vmatmul.mubr.f32.gmra.mrb[0].mxu0 %v1399
      %v3154 = vpop.f32.mrb[0].mxu0
      %v3155 = vadd.f32 0.0, %v3154
      %v3156 = vpop.f32.mrb[0].mxu0
      %3157 = vmatprep.mubr.f32.mxu0 0.0
      %3158 = vmatmul.mubr.f32.gmra.mrb[0].mxu0 %v1402
      %v3159 = vpop.f32.mrb[0].mxu0
      %v3160 = vadd.f32 0.0, %v3159
      %v3161 = vpop.f32.mrb[0].mxu0
      %3162 = vdwg.mxu0
      %3163 = vmatprep.subr.mxu0 0.0
      %3164 = vmatpush1.msra.mxu0 %v912
      %3165 = vmatprep.subr.mxu0 0.0
      %3166 = vmatpush1.msra.mxu0 %v913
      %3167 = vmatprep.subr.mxu0 0.0
      %3168 = vmatpush1.msra.mxu0 %v914
      %3169 = vmatprep.subr.mxu0 0.0
      %3170 = vmatpush1.msra.mxu0 %v915
      %3171 = vmatprep.subr.mxu0 0.0
      %3172 = vmatpush1.msra.mxu0 %v916
      %3173 = vmatprep.subr.mxu0 0.0
      %3174 = vmatpush1.msra.mxu0 %v917
      %3175 = vmatprep.subr.mxu0 0.0
      %3176 = vmatpush1.msra.mxu0 %v918
      %3177 = vmatprep.subr.mxu0 0.0
      %3178 = vmatpush1.msra.mxu0 %v919
      %3179 = vmatprep.subr.mxu0 0.0
      %3180 = vmatpush1.msra.mxu0 0.0
      %3181 = vmatprep.subr.mxu0 0.0
      %3182 = vmatpush1.msra.mxu0 0.0
      %3183 = vmatprep.subr.mxu0 0.0
      %3184 = vmatpush1.msra.mxu0 0.0
      %3185 = vmatprep.subr.mxu0 0.0
      %3186 = vmatpush1.msra.mxu0 0.0
      %3187 = vmatprep.subr.mxu0 0.0
      %3188 = vmatpush1.msra.mxu0 0.0
      %3189 = vmatprep.subr.mxu0 0.0
      %3190 = vmatpush1.msra.mxu0 0.0
      %3191 = vmatprep.subr.mxu0 0.0
      %3192 = vmatpush1.msra.mxu0 0.0
      %3193 = vmatprep.subr.mxu0 0.0
      %3194 = vmatpush1.msra.mxu0 0.0
      %3195 = vmatprep.subr.mxu0 0.0
      %3196 = vmatpush1.msra.mxu0 0.0
      %3197 = vmatprep.subr.mxu0 0.0
      %3198 = vmatpush1.msra.mxu0 0.0
      %3199 = vmatprep.subr.mxu0 0.0
      %3200 = vmatpush1.msra.mxu0 0.0
      %3201 = vmatprep.subr.mxu0 0.0
      %3202 = vmatpush1.msra.mxu0 0.0
      %3203 = vmatprep.subr.mxu0 0.0
      %3204 = vmatpush1.msra.mxu0 0.0
      %3205 = vmatprep.subr.mxu0 0.0
      %3206 = vmatpush1.msra.mxu0 0.0
      %3207 = vmatprep.subr.mxu0 0.0
      %3208 = vmatpush1.msra.mxu0 0.0
      %3209 = vmatprep.subr.mxu0 0.0
      %3210 = vmatpush1.msra.mxu0 0.0
      %3211 = vmatprep.subr.mxu0 0.0
      %3212 = vmatpush1.msra.mxu0 0.0
      %3213 = vmatprep.subr.mxu0 0.0
      %3214 = vmatpush1.msra.mxu0 0.0
      %3215 = vmatprep.subr.mxu0 0.0
      %3216 = vmatpush1.msra.mxu0 0.0
      %3217 = vmatprep.subr.mxu0 0.0
      %3218 = vmatpush1.msra.mxu0 0.0
      %3219 = vmatprep.subr.mxu0 0.0
      %3220 = vmatpush1.msra.mxu0 0.0
      %3221 = vmatprep.subr.mxu0 0.0
      %3222 = vmatpush1.msra.mxu0 0.0
      %3223 = vmatprep.subr.mxu0 0.0
      %3224 = vmatpush1.msra.mxu0 0.0
      %3225 = vmatprep.subr.mxu0 0.0
      %3226 = vmatpush1.msra.mxu0 0.0
      %3227 = vmatprep.mubr.f32.mxu0 0.0
      %3228 = vmatmul.mubr.f32.gmra.mrb[0].mxu0 %v946
      %v3229 = vpop.f32.mrb[0].mxu0
      %v3230 = vadd.f32 %v3085, %v3229
      %v3231 = vpop.f32.mrb[0].mxu0
      %3232 = vmatprep.mubr.f32.mxu0 0.0
      %3233 = vmatmul.mubr.f32.gmra.mrb[0].mxu0 %v949
      %v3234 = vpop.f32.mrb[0].mxu0
      %v3235 = vadd.f32 %v3090, %v3234
      %v3236 = vpop.f32.mrb[0].mxu0
      %3237 = vmatprep.mubr.f32.mxu0 0.0
      %3238 = vmatmul.mubr.f32.gmra.mrb[0].mxu0 %v952
      %v3239 = vpop.f32.mrb[0].mxu0
      %v3240 = vadd.f32 %v3095, %v3239
      %v3241 = vpop.f32.mrb[0].mxu0
      %3242 = vmatprep.mubr.f32.mxu0 0.0
      %3243 = vmatmul.mubr.f32.gmra.mrb[0].mxu0 %v955
      %v3244 = vpop.f32.mrb[0].mxu0
      %v3245 = vadd.f32 %v3100, %v3244
      %v3246 = vpop.f32.mrb[0].mxu0
      %3247 = vmatprep.mubr.f32.mxu0 0.0
      %3248 = vmatmul.mubr.f32.gmra.mrb[0].mxu0 %v958
      %v3249 = vpop.f32.mrb[0].mxu0
      %v3250 = vadd.f32 %v3105, %v3249
      %v3251 = vpop.f32.mrb[0].mxu0
      %3252 = vmatprep.mubr.f32.mxu0 0.0
      %3253 = vmatmul.mubr.f32.gmra.mrb[0].mxu0 %v961
      %v3254 = vpop.f32.mrb[0].mxu0
      %v3255 = vadd.f32 %v3110, %v3254
      %v3256 = vpop.f32.mrb[0].mxu0
      %3257 = vmatprep.mubr.f32.mxu0 0.0
      %3258 = vmatmul.mubr.f32.gmra.mrb[0].mxu0 %v964
      %v3259 = vpop.f32.mrb[0].mxu0
      %v3260 = vadd.f32 %v3115, %v3259
      %v3261 = vpop.f32.mrb[0].mxu0
      %3262 = vmatprep.mubr.f32.mxu0 0.0
      %3263 = vmatmul.mubr.f32.gmra.mrb[0].mxu0 %v967
      %v3264 = vpop.f32.mrb[0].mxu0
      %v3265 = vadd.f32 %v3120, %v3264
      %v3266 = vpop.f32.mrb[0].mxu0
      %3267 = vmatprep.mubr.f32.mxu0 0.0
      %3268 = vmatmul.mubr.f32.gmra.mrb[0].mxu0 %v970
      %v3269 = vpop.f32.mrb[0].mxu0
      %v3270 = vadd.f32 %v3125, %v3269
      %v3271 = vpop.f32.mrb[0].mxu0
      %3272 = vmatprep.mubr.f32.mxu0 0.0
      %3273 = vmatmul.mubr.f32.gmra.mrb[0].mxu0 %v973
      %v3274 = vpop.f32.mrb[0].mxu0
      %v3275 = vadd.f32 %v3130, %v3274
      %v3276 = vpop.f32.mrb[0].mxu0
      %3277 = vmatprep.mubr.f32.mxu0 0.0
      %3278 = vmatmul.mubr.f32.gmra.mrb[0].mxu0 %v976
      %v3279 = vpop.f32.mrb[0].mxu0
      %v3280 = vadd.f32 %v3135, %v3279
      %v3281 = vpop.f32.mrb[0].mxu0
      %3282 = vmatprep.mubr.f32.mxu0 0.0
      %3283 = vmatmul.mubr.f32.gmra.mrb[0].mxu0 %v979
      %v3284 = vpop.f32.mrb[0].mxu0
      %v3285 = vadd.f32 %v3140, %v3284
      %v3286 = vpop.f32.mrb[0].mxu0
      %3287 = vmatprep.mubr.f32.mxu0 0.0
      %3288 = vmatmul.mubr.f32.gmra.mrb[0].mxu0 %v982
      %v3289 = vpop.f32.mrb[0].mxu0
      %v3290 = vadd.f32 %v3145, %v3289
      %v3291 = vpop.f32.mrb[0].mxu0
      %3292 = vmatprep.mubr.f32.mxu0 0.0
      %3293 = vmatmul.mubr.f32.gmra.mrb[0].mxu0 %v985
      %v3294 = vpop.f32.mrb[0].mxu0
      %v3295 = vadd.f32 %v3150, %v3294
      %v3296 = vpop.f32.mrb[0].mxu0
      %3297 = vmatprep.mubr.f32.mxu0 0.0
      %3298 = vmatmul.mubr.f32.gmra.mrb[0].mxu0 %v988
      %v3299 = vpop.f32.mrb[0].mxu0
      %v3300 = vadd.f32 %v3155, %v3299
      %v3301 = vpop.f32.mrb[0].mxu0
      %3302 = vmatprep.mubr.f32.mxu0 0.0
      %3303 = vmatmul.mubr.f32.gmra.mrb[0].mxu0 %v991
      %v3304 = vpop.f32.mrb[0].mxu0
      %v3305 = vadd.f32 %v3160, %v3304
      %v3306 = vpop.f32.mrb[0].mxu0
      %3307 = vdwg.mxu0
      %v3308 = vld [vmem:[#allocation3 + $0x1] sm:$0xff]
      %v3309 = vld [vmem:[#allocation3 + $0x11] sm:$0xff]
      %v3310 = vld [vmem:[#allocation3 + $0x21] sm:$0xff]
      %v3311 = vld [vmem:[#allocation3 + $0x31] sm:$0xff]
      %v3312 = vld [vmem:[#allocation3 + $0x41] sm:$0xff]
      %v3313 = vld [vmem:[#allocation3 + $0x51] sm:$0xff]
      %v3314 = vld [vmem:[#allocation3 + $0x61] sm:$0xff]
      %v3315 = vld [vmem:[#allocation3 + $0x71] sm:$0xff]
      %v3316 = vld [vmem:[#allocation3 + $0x81] sm:$0xff]
      %v3317 = vld [vmem:[#allocation3 + $0x91] sm:$0xff]
      %v3318 = vld [vmem:[#allocation3 + $0xa1] sm:$0xff]
      %v3319 = vld [vmem:[#allocation3 + $0xb1] sm:$0xff]
      %v3320 = vld [vmem:[#allocation3 + $0xc1] sm:$0xff]
      %v3321 = vld [vmem:[#allocation3 + $0xd1] sm:$0xff]
      %v3322 = vld [vmem:[#allocation3 + $0xe1] sm:$0xff]
      %v3323 = vld [vmem:[#allocation3 + $0xf1] sm:$0xff]
      %v3325 = vsel %vm788, %v3308, 0
      %v3328 = vsel %vm788, %v3309, 0
      %v3331 = vsel %vm788, %v3310, 0
      %v3334 = vsel %vm788, %v3311, 0
      %v3337 = vsel %vm788, %v3312, 0
      %v3340 = vsel %vm788, %v3313, 0
      %v3343 = vsel %vm788, %v3314, 0
      %v3346 = vsel %vm788, %v3315, 0
      %v3349 = vsel %vm788, %v3316, 0
      %v3352 = vsel %vm788, %v3317, 0
      %v3355 = vsel %vm788, %v3318, 0
      %v3358 = vsel %vm788, %v3319, 0
      %v3361 = vsel %vm788, %v3320, 0
      %v3364 = vsel %vm788, %v3321, 0
      %v3367 = vsel %vm788, %v3322, 0
      %v3370 = vsel %vm788, %v3323, 0
      %3372 = vmatprep.subr.mxu0 0.0
      %3373 = vmatpush1.msra.mxu0 %v1348
      %3374 = vmatprep.subr.mxu0 0.0
      %3375 = vmatpush1.msra.mxu0 %v1349
      %3376 = vmatprep.subr.mxu0 0.0
      %3377 = vmatpush1.msra.mxu0 %v1350
      %3378 = vmatprep.subr.mxu0 0.0
      %3379 = vmatpush1.msra.mxu0 %v1351
      %3380 = vmatprep.subr.mxu0 0.0
      %3381 = vmatpush1.msra.mxu0 %v1352
      %3382 = vmatprep.subr.mxu0 0.0
      %3383 = vmatpush1.msra.mxu0 %v1353
      %3384 = vmatprep.subr.mxu0 0.0
      %3385 = vmatpush1.msra.mxu0 %v1354
      %3386 = vmatprep.subr.mxu0 0.0
      %3387 = vmatpush1.msra.mxu0 %v1355
      %3388 = vmatprep.subr.mxu0 0.0
      %3389 = vmatpush1.msra.mxu0 0.0
      %3390 = vmatprep.subr.mxu0 0.0
      %3391 = vmatpush1.msra.mxu0 0.0
      %3392 = vmatprep.subr.mxu0 0.0
      %3393 = vmatpush1.msra.mxu0 0.0
      %3394 = vmatprep.subr.mxu0 0.0
      %3395 = vmatpush1.msra.mxu0 0.0
      %3396 = vmatprep.subr.mxu0 0.0
      %3397 = vmatpush1.msra.mxu0 0.0
      %3398 = vmatprep.subr.mxu0 0.0
      %3399 = vmatpush1.msra.mxu0 0.0
      %3400 = vmatprep.subr.mxu0 0.0
      %3401 = vmatpush1.msra.mxu0 0.0
      %3402 = vmatprep.subr.mxu0 0.0
      %3403 = vmatpush1.msra.mxu0 0.0
      %3404 = vmatprep.subr.mxu0 0.0
      %3405 = vmatpush1.msra.mxu0 0.0
      %3406 = vmatprep.subr.mxu0 0.0
      %3407 = vmatpush1.msra.mxu0 0.0
      %3408 = vmatprep.subr.mxu0 0.0
      %3409 = vmatpush1.msra.mxu0 0.0
      %3410 = vmatprep.subr.mxu0 0.0
      %3411 = vmatpush1.msra.mxu0 0.0
      %3412 = vmatprep.subr.mxu0 0.0
      %3413 = vmatpush1.msra.mxu0 0.0
      %3414 = vmatprep.subr.mxu0 0.0
      %3415 = vmatpush1.msra.mxu0 0.0
      %3416 = vmatprep.subr.mxu0 0.0
      %3417 = vmatpush1.msra.mxu0 0.0
      %3418 = vmatprep.subr.mxu0 0.0
      %3419 = vmatpush1.msra.mxu0 0.0
      %3420 = vmatprep.subr.mxu0 0.0
      %3421 = vmatpush1.msra.mxu0 0.0
      %3422 = vmatprep.subr.mxu0 0.0
      %3423 = vmatpush1.msra.mxu0 0.0
      %3424 = vmatprep.subr.mxu0 0.0
      %3425 = vmatpush1.msra.mxu0 0.0
      %3426 = vmatprep.subr.mxu0 0.0
      %3427 = vmatpush1.msra.mxu0 0.0
      %3428 = vmatprep.subr.mxu0 0.0
      %3429 = vmatpush1.msra.mxu0 0.0
      %3430 = vmatprep.subr.mxu0 0.0
      %3431 = vmatpush1.msra.mxu0 0.0
      %3432 = vmatprep.subr.mxu0 0.0
      %3433 = vmatpush1.msra.mxu0 0.0
      %3434 = vmatprep.subr.mxu0 0.0
      %3435 = vmatpush1.msra.mxu0 0.0
      %3436 = vmatprep.mubr.f32.mxu0 0.0
      %3437 = vmatmul.mubr.f32.gmra.mrb[0].mxu0 %v3325
      %v3438 = vpop.f32.mrb[0].mxu0
      %v3439 = vadd.f32 0.0, %v3438
      %v3440 = vpop.f32.mrb[0].mxu0
      %3441 = vmatprep.mubr.f32.mxu0 0.0
      %3442 = vmatmul.mubr.f32.gmra.mrb[0].mxu0 %v3328
      %v3443 = vpop.f32.mrb[0].mxu0
      %v3444 = vadd.f32 0.0, %v3443
      %v3445 = vpop.f32.mrb[0].mxu0
      %3446 = vmatprep.mubr.f32.mxu0 0.0
      %3447 = vmatmul.mubr.f32.gmra.mrb[0].mxu0 %v3331
      %v3448 = vpop.f32.mrb[0].mxu0
      %v3449 = vadd.f32 0.0, %v3448
      %v3450 = vpop.f32.mrb[0].mxu0
      %3451 = vmatprep.mubr.f32.mxu0 0.0
      %3452 = vmatmul.mubr.f32.gmra.mrb[0].mxu0 %v3334
      %v3453 = vpop.f32.mrb[0].mxu0
      %v3454 = vadd.f32 0.0, %v3453
      %v3455 = vpop.f32.mrb[0].mxu0
      %3456 = vmatprep.mubr.f32.mxu0 0.0
      %3457 = vmatmul.mubr.f32.gmra.mrb[0].mxu0 %v3337
      %v3458 = vpop.f32.mrb[0].mxu0
      %v3459 = vadd.f32 0.0, %v3458
      %v3460 = vpop.f32.mrb[0].mxu0
      %3461 = vmatprep.mubr.f32.mxu0 0.0
      %3462 = vmatmul.mubr.f32.gmra.mrb[0].mxu0 %v3340
      %v3463 = vpop.f32.mrb[0].mxu0
      %v3464 = vadd.f32 0.0, %v3463
      %v3465 = vpop.f32.mrb[0].mxu0
      %3466 = vmatprep.mubr.f32.mxu0 0.0
      %3467 = vmatmul.mubr.f32.gmra.mrb[0].mxu0 %v3343
      %v3468 = vpop.f32.mrb[0].mxu0
      %v3469 = vadd.f32 0.0, %v3468
      %v3470 = vpop.f32.mrb[0].mxu0
      %3471 = vmatprep.mubr.f32.mxu0 0.0
      %3472 = vmatmul.mubr.f32.gmra.mrb[0].mxu0 %v3346
      %v3473 = vpop.f32.mrb[0].mxu0
      %v3474 = vadd.f32 0.0, %v3473
      %v3475 = vpop.f32.mrb[0].mxu0
      %3476 = vmatprep.mubr.f32.mxu0 0.0
      %3477 = vmatmul.mubr.f32.gmra.mrb[0].mxu0 %v3349
      %v3478 = vpop.f32.mrb[0].mxu0
      %v3479 = vadd.f32 0.0, %v3478
      %v3480 = vpop.f32.mrb[0].mxu0
      %3481 = vmatprep.mubr.f32.mxu0 0.0
      %3482 = vmatmul.mubr.f32.gmra.mrb[0].mxu0 %v3352
      %v3483 = vpop.f32.mrb[0].mxu0
      %v3484 = vadd.f32 0.0, %v3483
      %v3485 = vpop.f32.mrb[0].mxu0
      %3486 = vmatprep.mubr.f32.mxu0 0.0
      %3487 = vmatmul.mubr.f32.gmra.mrb[0].mxu0 %v3355
      %v3488 = vpop.f32.mrb[0].mxu0
      %v3489 = vadd.f32 0.0, %v3488
      %v3490 = vpop.f32.mrb[0].mxu0
      %3491 = vmatprep.mubr.f32.mxu0 0.0
      %3492 = vmatmul.mubr.f32.gmra.mrb[0].mxu0 %v3358
      %v3493 = vpop.f32.mrb[0].mxu0
      %v3494 = vadd.f32 0.0, %v3493
      %v3495 = vpop.f32.mrb[0].mxu0
      %3496 = vmatprep.mubr.f32.mxu0 0.0
      %3497 = vmatmul.mubr.f32.gmra.mrb[0].mxu0 %v3361
      %v3498 = vpop.f32.mrb[0].mxu0
      %v3499 = vadd.f32 0.0, %v3498
      %v3500 = vpop.f32.mrb[0].mxu0
      %3501 = vmatprep.mubr.f32.mxu0 0.0
      %3502 = vmatmul.mubr.f32.gmra.mrb[0].mxu0 %v3364
      %v3503 = vpop.f32.mrb[0].mxu0
      %v3504 = vadd.f32 0.0, %v3503
      %v3505 = vpop.f32.mrb[0].mxu0
      %3506 = vmatprep.mubr.f32.mxu0 0.0
      %3507 = vmatmul.mubr.f32.gmra.mrb[0].mxu0 %v3367
      %v3508 = vpop.f32.mrb[0].mxu0
      %v3509 = vadd.f32 0.0, %v3508
      %v3510 = vpop.f32.mrb[0].mxu0
      %3511 = vmatprep.mubr.f32.mxu0 0.0
      %3512 = vmatmul.mubr.f32.gmra.mrb[0].mxu0 %v3370
      %v3513 = vpop.f32.mrb[0].mxu0
      %v3514 = vadd.f32 0.0, %v3513
      %v3515 = vpop.f32.mrb[0].mxu0
      %3516 = vdwg.mxu0
      %v3517 = vadd.f32 %v3230, %v3439
      %v3518 = vadd.f32 %v3235, %v3444
      %v3519 = vadd.f32 %v3240, %v3449
      %v3520 = vadd.f32 %v3245, %v3454
      %v3521 = vadd.f32 %v3250, %v3459
      %v3522 = vadd.f32 %v3255, %v3464
      %v3523 = vadd.f32 %v3260, %v3469
      %v3524 = vadd.f32 %v3265, %v3474
      %v3525 = vadd.f32 %v3270, %v3479
      %v3526 = vadd.f32 %v3275, %v3484
      %v3527 = vadd.f32 %v3280, %v3489
      %v3528 = vadd.f32 %v3285, %v3494
      %v3529 = vadd.f32 %v3290, %v3499
      %v3530 = vadd.f32 %v3295, %v3504
      %v3531 = vadd.f32 %v3300, %v3509
      %v3532 = vadd.f32 %v3305, %v3514
      %3533 = vmatprep.subr.mxu0 0.0
      %3534 = vmatpush1.msra.mxu0 %v1582
      %3535 = vmatprep.subr.mxu0 0.0
      %3536 = vmatpush1.msra.mxu0 %v1583
      %3537 = vmatprep.subr.mxu0 0.0
      %3538 = vmatpush1.msra.mxu0 %v1584
      %3539 = vmatprep.subr.mxu0 0.0
      %3540 = vmatpush1.msra.mxu0 %v1585
      %3541 = vmatprep.subr.mxu0 0.0
      %3542 = vmatpush1.msra.mxu0 %v1586
      %3543 = vmatprep.subr.mxu0 0.0
      %3544 = vmatpush1.msra.mxu0 %v1587
      %3545 = vmatprep.subr.mxu0 0.0
      %3546 = vmatpush1.msra.mxu0 %v1588
      %3547 = vmatprep.subr.mxu0 0.0
      %3548 = vmatpush1.msra.mxu0 %v1589
      %3549 = vmatprep.subr.mxu0 0.0
      %3550 = vmatpush1.msra.mxu0 0.0
      %3551 = vmatprep.subr.mxu0 0.0
      %3552 = vmatpush1.msra.mxu0 0.0
      %3553 = vmatprep.subr.mxu0 0.0
      %3554 = vmatpush1.msra.mxu0 0.0
      %3555 = vmatprep.subr.mxu0 0.0
      %3556 = vmatpush1.msra.mxu0 0.0
      %3557 = vmatprep.subr.mxu0 0.0
      %3558 = vmatpush1.msra.mxu0 0.0
      %3559 = vmatprep.subr.mxu0 0.0
      %3560 = vmatpush1.msra.mxu0 0.0
      %3561 = vmatprep.subr.mxu0 0.0
      %3562 = vmatpush1.msra.mxu0 0.0
      %3563 = vmatprep.subr.mxu0 0.0
      %3564 = vmatpush1.msra.mxu0 0.0
      %3565 = vmatprep.subr.mxu0 0.0
      %3566 = vmatpush1.msra.mxu0 0.0
      %3567 = vmatprep.subr.mxu0 0.0
      %3568 = vmatpush1.msra.mxu0 0.0
      %3569 = vmatprep.subr.mxu0 0.0
      %3570 = vmatpush1.msra.mxu0 0.0
      %3571 = vmatprep.subr.mxu0 0.0
      %3572 = vmatpush1.msra.mxu0 0.0
      %3573 = vmatprep.subr.mxu0 0.0
      %3574 = vmatpush1.msra.mxu0 0.0
      %3575 = vmatprep.subr.mxu0 0.0
      %3576 = vmatpush1.msra.mxu0 0.0
      %3577 = vmatprep.subr.mxu0 0.0
      %3578 = vmatpush1.msra.mxu0 0.0
      %3579 = vmatprep.subr.mxu0 0.0
      %3580 = vmatpush1.msra.mxu0 0.0
      %3581 = vmatprep.subr.mxu0 0.0
      %3582 = vmatpush1.msra.mxu0 0.0
      %3583 = vmatprep.subr.mxu0 0.0
      %3584 = vmatpush1.msra.mxu0 0.0
      %3585 = vmatprep.subr.mxu0 0.0
      %3586 = vmatpush1.msra.mxu0 0.0
      %3587 = vmatprep.subr.mxu0 0.0
      %3588 = vmatpush1.msra.mxu0 0.0
      %3589 = vmatprep.subr.mxu0 0.0
      %3590 = vmatpush1.msra.mxu0 0.0
      %3591 = vmatprep.subr.mxu0 0.0
      %3592 = vmatpush1.msra.mxu0 0.0
      %3593 = vmatprep.subr.mxu0 0.0
      %3594 = vmatpush1.msra.mxu0 0.0
      %3595 = vmatprep.subr.mxu0 0.0
      %3596 = vmatpush1.msra.mxu0 0.0
      %3597 = vmatprep.mubr.f32.mxu0 0.0
      %3598 = vmatmul.mubr.f32.gmra.mrb[0].mxu0 %v1825
      %v3599 = vpop.f32.mrb[0].mxu0
      %v3600 = vadd.f32 0.0, %v3599
      %v3601 = vpop.f32.mrb[0].mxu0
      %3602 = vmatprep.mubr.f32.mxu0 0.0
      %3603 = vmatmul.mubr.f32.gmra.mrb[0].mxu0 %v1828
      %v3604 = vpop.f32.mrb[0].mxu0
      %v3605 = vadd.f32 0.0, %v3604
      %v3606 = vpop.f32.mrb[0].mxu0
      %3607 = vmatprep.mubr.f32.mxu0 0.0
      %3608 = vmatmul.mubr.f32.gmra.mrb[0].mxu0 %v1831
      %v3609 = vpop.f32.mrb[0].mxu0
      %v3610 = vadd.f32 0.0, %v3609
      %v3611 = vpop.f32.mrb[0].mxu0
      %3612 = vmatprep.mubr.f32.mxu0 0.0
      %3613 = vmatmul.mubr.f32.gmra.mrb[0].mxu0 %v1834
      %v3614 = vpop.f32.mrb[0].mxu0
      %v3615 = vadd.f32 0.0, %v3614
      %v3616 = vpop.f32.mrb[0].mxu0
      %3617 = vmatprep.mubr.f32.mxu0 0.0
      %3618 = vmatmul.mubr.f32.gmra.mrb[0].mxu0 %v1837
      %v3619 = vpop.f32.mrb[0].mxu0
      %v3620 = vadd.f32 0.0, %v3619
      %v3621 = vpop.f32.mrb[0].mxu0
      %3622 = vmatprep.mubr.f32.mxu0 0.0
      %3623 = vmatmul.mubr.f32.gmra.mrb[0].mxu0 %v1840
      %v3624 = vpop.f32.mrb[0].mxu0
      %v3625 = vadd.f32 0.0, %v3624
      %v3626 = vpop.f32.mrb[0].mxu0
      %3627 = vmatprep.mubr.f32.mxu0 0.0
      %3628 = vmatmul.mubr.f32.gmra.mrb[0].mxu0 %v1843
      %v3629 = vpop.f32.mrb[0].mxu0
      %v3630 = vadd.f32 0.0, %v3629
      %v3631 = vpop.f32.mrb[0].mxu0
      %3632 = vmatprep.mubr.f32.mxu0 0.0
      %3633 = vmatmul.mubr.f32.gmra.mrb[0].mxu0 %v1846
      %v3634 = vpop.f32.mrb[0].mxu0
      %v3635 = vadd.f32 0.0, %v3634
      %v3636 = vpop.f32.mrb[0].mxu0
      %3637 = vmatprep.mubr.f32.mxu0 0.0
      %3638 = vmatmul.mubr.f32.gmra.mrb[0].mxu0 %v1849
      %v3639 = vpop.f32.mrb[0].mxu0
      %v3640 = vadd.f32 0.0, %v3639
      %v3641 = vpop.f32.mrb[0].mxu0
      %3642 = vmatprep.mubr.f32.mxu0 0.0
      %3643 = vmatmul.mubr.f32.gmra.mrb[0].mxu0 %v1852
      %v3644 = vpop.f32.mrb[0].mxu0
      %v3645 = vadd.f32 0.0, %v3644
      %v3646 = vpop.f32.mrb[0].mxu0
      %3647 = vmatprep.mubr.f32.mxu0 0.0
      %3648 = vmatmul.mubr.f32.gmra.mrb[0].mxu0 %v1855
      %v3649 = vpop.f32.mrb[0].mxu0
      %v3650 = vadd.f32 0.0, %v3649
      %v3651 = vpop.f32.mrb[0].mxu0
      %3652 = vmatprep.mubr.f32.mxu0 0.0
      %3653 = vmatmul.mubr.f32.gmra.mrb[0].mxu0 %v1858
      %v3654 = vpop.f32.mrb[0].mxu0
      %v3655 = vadd.f32 0.0, %v3654
      %v3656 = vpop.f32.mrb[0].mxu0
      %3657 = vmatprep.mubr.f32.mxu0 0.0
      %3658 = vmatmul.mubr.f32.gmra.mrb[0].mxu0 %v1861
      %v3659 = vpop.f32.mrb[0].mxu0
      %v3660 = vadd.f32 0.0, %v3659
      %v3661 = vpop.f32.mrb[0].mxu0
      %3662 = vmatprep.mubr.f32.mxu0 0.0
      %3663 = vmatmul.mubr.f32.gmra.mrb[0].mxu0 %v1864
      %v3664 = vpop.f32.mrb[0].mxu0
      %v3665 = vadd.f32 0.0, %v3664
      %v3666 = vpop.f32.mrb[0].mxu0
      %3667 = vmatprep.mubr.f32.mxu0 0.0
      %3668 = vmatmul.mubr.f32.gmra.mrb[0].mxu0 %v1867
      %v3669 = vpop.f32.mrb[0].mxu0
      %v3670 = vadd.f32 0.0, %v3669
      %v3671 = vpop.f32.mrb[0].mxu0
      %3672 = vmatprep.mubr.f32.mxu0 0.0
      %3673 = vmatmul.mubr.f32.gmra.mrb[0].mxu0 %v1870
      %v3674 = vpop.f32.mrb[0].mxu0
      %v3675 = vadd.f32 0.0, %v3674
      %v3676 = vpop.f32.mrb[0].mxu0
      %3677 = vdwg.mxu0
      %v3678 = vadd.f32 %v3517, %v3600
      %v3679 = vadd.f32 %v3518, %v3605
      %v3680 = vadd.f32 %v3519, %v3610
      %v3681 = vadd.f32 %v3520, %v3615
      %v3682 = vadd.f32 %v3521, %v3620
      %v3683 = vadd.f32 %v3522, %v3625
      %v3684 = vadd.f32 %v3523, %v3630
      %v3685 = vadd.f32 %v3524, %v3635
      %v3686 = vadd.f32 %v3525, %v3640
      %v3687 = vadd.f32 %v3526, %v3645
      %v3688 = vadd.f32 %v3527, %v3650
      %v3689 = vadd.f32 %v3528, %v3655
      %v3690 = vadd.f32 %v3529, %v3660
      %v3691 = vadd.f32 %v3530, %v3665
      %v3692 = vadd.f32 %v3531, %v3670
      %v3693 = vadd.f32 %v3532, %v3675
      %3694 = vmatprep.subr.mxu0 0.0
      %3695 = vmatpush1.msra.mxu0 %v1816
      %3696 = vmatprep.subr.mxu0 0.0
      %3697 = vmatpush1.msra.mxu0 %v1817
      %3698 = vmatprep.subr.mxu0 0.0
      %3699 = vmatpush1.msra.mxu0 %v1818
      %3700 = vmatprep.subr.mxu0 0.0
      %3701 = vmatpush1.msra.mxu0 %v1819
      %3702 = vmatprep.subr.mxu0 0.0
      %3703 = vmatpush1.msra.mxu0 %v1820
      %3704 = vmatprep.subr.mxu0 0.0
      %3705 = vmatpush1.msra.mxu0 %v1821
      %3706 = vmatprep.subr.mxu0 0.0
      %3707 = vmatpush1.msra.mxu0 %v1822
      %3708 = vmatprep.subr.mxu0 0.0
      %3709 = vmatpush1.msra.mxu0 %v1823
      %3710 = vmatprep.subr.mxu0 0.0
      %3711 = vmatpush1.msra.mxu0 0.0
      %3712 = vmatprep.subr.mxu0 0.0
      %3713 = vmatpush1.msra.mxu0 0.0
      %3714 = vmatprep.subr.mxu0 0.0
      %3715 = vmatpush1.msra.mxu0 0.0
      %3716 = vmatprep.subr.mxu0 0.0
      %3717 = vmatpush1.msra.mxu0 0.0
      %3718 = vmatprep.subr.mxu0 0.0
      %3719 = vmatpush1.msra.mxu0 0.0
      %3720 = vmatprep.subr.mxu0 0.0
      %3721 = vmatpush1.msra.mxu0 0.0
      %3722 = vmatprep.subr.mxu0 0.0
      %3723 = vmatpush1.msra.mxu0 0.0
      %3724 = vmatprep.subr.mxu0 0.0
      %3725 = vmatpush1.msra.mxu0 0.0
      %3726 = vmatprep.subr.mxu0 0.0
      %3727 = vmatpush1.msra.mxu0 0.0
      %3728 = vmatprep.subr.mxu0 0.0
      %3729 = vmatpush1.msra.mxu0 0.0
      %3730 = vmatprep.subr.mxu0 0.0
      %3731 = vmatpush1.msra.mxu0 0.0
      %3732 = vmatprep.subr.mxu0 0.0
      %3733 = vmatpush1.msra.mxu0 0.0
      %3734 = vmatprep.subr.mxu0 0.0
      %3735 = vmatpush1.msra.mxu0 0.0
      %3736 = vmatprep.subr.mxu0 0.0
      %3737 = vmatpush1.msra.mxu0 0.0
      %3738 = vmatprep.subr.mxu0 0.0
      %3739 = vmatpush1.msra.mxu0 0.0
      %3740 = vmatprep.subr.mxu0 0.0
      %3741 = vmatpush1.msra.mxu0 0.0
      %3742 = vmatprep.subr.mxu0 0.0
      %3743 = vmatpush1.msra.mxu0 0.0
      %3744 = vmatprep.subr.mxu0 0.0
      %3745 = vmatpush1.msra.mxu0 0.0
      %3746 = vmatprep.subr.mxu0 0.0
      %3747 = vmatpush1.msra.mxu0 0.0
      %3748 = vmatprep.subr.mxu0 0.0
      %3749 = vmatpush1.msra.mxu0 0.0
      %3750 = vmatprep.subr.mxu0 0.0
      %3751 = vmatpush1.msra.mxu0 0.0
      %3752 = vmatprep.subr.mxu0 0.0
      %3753 = vmatpush1.msra.mxu0 0.0
      %3754 = vmatprep.subr.mxu0 0.0
      %3755 = vmatpush1.msra.mxu0 0.0
      %3756 = vmatprep.subr.mxu0 0.0
      %3757 = vmatpush1.msra.mxu0 0.0
      %3758 = vmatprep.mubr.f32.mxu0 0.0
      %3759 = vmatmul.mubr.f32.gmra.mrb[0].mxu0 %v2059
      %v3760 = vpop.f32.mrb[0].mxu0
      %v3761 = vadd.f32 0.0, %v3760
      %v3762 = vpop.f32.mrb[0].mxu0
      %3763 = vmatprep.mubr.f32.mxu0 0.0
      %3764 = vmatmul.mubr.f32.gmra.mrb[0].mxu0 %v2062
      %v3765 = vpop.f32.mrb[0].mxu0
      %v3766 = vadd.f32 0.0, %v3765
      %v3767 = vpop.f32.mrb[0].mxu0
      %3768 = vmatprep.mubr.f32.mxu0 0.0
      %3769 = vmatmul.mubr.f32.gmra.mrb[0].mxu0 %v2065
      %v3770 = vpop.f32.mrb[0].mxu0
      %v3771 = vadd.f32 0.0, %v3770
      %v3772 = vpop.f32.mrb[0].mxu0
      %3773 = vmatprep.mubr.f32.mxu0 0.0
      %3774 = vmatmul.mubr.f32.gmra.mrb[0].mxu0 %v2068
      %v3775 = vpop.f32.mrb[0].mxu0
      %v3776 = vadd.f32 0.0, %v3775
      %v3777 = vpop.f32.mrb[0].mxu0
      %3778 = vmatprep.mubr.f32.mxu0 0.0
      %3779 = vmatmul.mubr.f32.gmra.mrb[0].mxu0 %v2071
      %v3780 = vpop.f32.mrb[0].mxu0
      %v3781 = vadd.f32 0.0, %v3780
      %v3782 = vpop.f32.mrb[0].mxu0
      %3783 = vmatprep.mubr.f32.mxu0 0.0
      %3784 = vmatmul.mubr.f32.gmra.mrb[0].mxu0 %v2074
      %v3785 = vpop.f32.mrb[0].mxu0
      %v3786 = vadd.f32 0.0, %v3785
      %v3787 = vpop.f32.mrb[0].mxu0
      %3788 = vmatprep.mubr.f32.mxu0 0.0
      %3789 = vmatmul.mubr.f32.gmra.mrb[0].mxu0 %v2077
      %v3790 = vpop.f32.mrb[0].mxu0
      %v3791 = vadd.f32 0.0, %v3790
      %v3792 = vpop.f32.mrb[0].mxu0
      %3793 = vmatprep.mubr.f32.mxu0 0.0
      %3794 = vmatmul.mubr.f32.gmra.mrb[0].mxu0 %v2080
      %v3795 = vpop.f32.mrb[0].mxu0
      %v3796 = vadd.f32 0.0, %v3795
      %v3797 = vpop.f32.mrb[0].mxu0
      %3798 = vmatprep.mubr.f32.mxu0 0.0
      %3799 = vmatmul.mubr.f32.gmra.mrb[0].mxu0 %v2083
      %v3800 = vpop.f32.mrb[0].mxu0
      %v3801 = vadd.f32 0.0, %v3800
      %v3802 = vpop.f32.mrb[0].mxu0
      %3803 = vmatprep.mubr.f32.mxu0 0.0
      %3804 = vmatmul.mubr.f32.gmra.mrb[0].mxu0 %v2086
      %v3805 = vpop.f32.mrb[0].mxu0
      %v3806 = vadd.f32 0.0, %v3805
      %v3807 = vpop.f32.mrb[0].mxu0
      %3808 = vmatprep.mubr.f32.mxu0 0.0
      %3809 = vmatmul.mubr.f32.gmra.mrb[0].mxu0 %v2089
      %v3810 = vpop.f32.mrb[0].mxu0
      %v3811 = vadd.f32 0.0, %v3810
      %v3812 = vpop.f32.mrb[0].mxu0
      %3813 = vmatprep.mubr.f32.mxu0 0.0
      %3814 = vmatmul.mubr.f32.gmra.mrb[0].mxu0 %v2092
      %v3815 = vpop.f32.mrb[0].mxu0
      %v3816 = vadd.f32 0.0, %v3815
      %v3817 = vpop.f32.mrb[0].mxu0
      %3818 = vmatprep.mubr.f32.mxu0 0.0
      %3819 = vmatmul.mubr.f32.gmra.mrb[0].mxu0 %v2095
      %v3820 = vpop.f32.mrb[0].mxu0
      %v3821 = vadd.f32 0.0, %v3820
      %v3822 = vpop.f32.mrb[0].mxu0
      %3823 = vmatprep.mubr.f32.mxu0 0.0
      %3824 = vmatmul.mubr.f32.gmra.mrb[0].mxu0 %v2098
      %v3825 = vpop.f32.mrb[0].mxu0
      %v3826 = vadd.f32 0.0, %v3825
      %v3827 = vpop.f32.mrb[0].mxu0
      %3828 = vmatprep.mubr.f32.mxu0 0.0
      %3829 = vmatmul.mubr.f32.gmra.mrb[0].mxu0 %v2101
      %v3830 = vpop.f32.mrb[0].mxu0
      %v3831 = vadd.f32 0.0, %v3830
      %v3832 = vpop.f32.mrb[0].mxu0
      %3833 = vmatprep.mubr.f32.mxu0 0.0
      %3834 = vmatmul.mubr.f32.gmra.mrb[0].mxu0 %v2104
      %v3835 = vpop.f32.mrb[0].mxu0
      %v3836 = vadd.f32 0.0, %v3835
      %v3837 = vpop.f32.mrb[0].mxu0
      %3838 = vdwg.mxu0
      %v3839 = vadd.f32 %v3678, %v3761
      %v3840 = vadd.f32 %v3679, %v3766
      %v3841 = vadd.f32 %v3680, %v3771
      %v3842 = vadd.f32 %v3681, %v3776
      %v3843 = vadd.f32 %v3682, %v3781
      %v3844 = vadd.f32 %v3683, %v3786
      %v3845 = vadd.f32 %v3684, %v3791
      %v3846 = vadd.f32 %v3685, %v3796
      %v3847 = vadd.f32 %v3686, %v3801
      %v3848 = vadd.f32 %v3687, %v3806
      %v3849 = vadd.f32 %v3688, %v3811
      %v3850 = vadd.f32 %v3689, %v3816
      %v3851 = vadd.f32 %v3690, %v3821
      %v3852 = vadd.f32 %v3691, %v3826
      %v3853 = vadd.f32 %v3692, %v3831
      %v3854 = vadd.f32 %v3693, %v3836
      %v3855 = vld [vmem:[%s862 + $0x1] sm:$0xff]
      %v3856 = vld [vmem:[%s862 + $0x11] sm:$0xff]
      %v3857 = vld [vmem:[%s862 + $0x21] sm:$0xff]
      %v3858 = vld [vmem:[%s862 + $0x31] sm:$0xff]
      %v3859 = vld [vmem:[%s862 + $0x41] sm:$0xff]
      %v3860 = vld [vmem:[%s862 + $0x51] sm:$0xff]
      %v3861 = vld [vmem:[%s862 + $0x61] sm:$0xff]
      %v3862 = vld [vmem:[%s862 + $0x71] sm:$0xff]
      %v3863 = vld [vmem:[%s862 + $0x81] sm:$0xff]
      %v3864 = vld [vmem:[%s862 + $0x91] sm:$0xff]
      %v3865 = vld [vmem:[%s862 + $0xa1] sm:$0xff]
      %v3866 = vld [vmem:[%s862 + $0xb1] sm:$0xff]
      %v3867 = vld [vmem:[%s862 + $0xc1] sm:$0xff]
      %v3868 = vld [vmem:[%s862 + $0xd1] sm:$0xff]
      %v3869 = vld [vmem:[%s862 + $0xe1] sm:$0xff]
      %v3870 = vld [vmem:[%s862 + $0xf1] sm:$0xff]
      %v3872 = vsel %vm788, %v3855, 0
      %v3875 = vsel %vm788, %v3856, 0
      %v3878 = vsel %vm788, %v3857, 0
      %v3881 = vsel %vm788, %v3858, 0
      %v3884 = vsel %vm788, %v3859, 0
      %v3887 = vsel %vm788, %v3860, 0
      %v3890 = vsel %vm788, %v3861, 0
      %v3893 = vsel %vm788, %v3862, 0
      %v3896 = vsel %vm788, %v3863, 0
      %v3899 = vsel %vm788, %v3864, 0
      %v3902 = vsel %vm788, %v3865, 0
      %v3905 = vsel %vm788, %v3866, 0
      %v3908 = vsel %vm788, %v3867, 0
      %v3911 = vsel %vm788, %v3868, 0
      %v3914 = vsel %vm788, %v3869, 0
      %v3917 = vsel %vm788, %v3870, 0
      %3919 = vmatprep.subr.mxu0 0.0
      %3920 = vmatpush1.msra.mxu0 %v2050
      %3921 = vmatprep.subr.mxu0 0.0
      %3922 = vmatpush1.msra.mxu0 %v2051
      %3923 = vmatprep.subr.mxu0 0.0
      %3924 = vmatpush1.msra.mxu0 %v2052
      %3925 = vmatprep.subr.mxu0 0.0
      %3926 = vmatpush1.msra.mxu0 %v2053
      %3927 = vmatprep.subr.mxu0 0.0
      %3928 = vmatpush1.msra.mxu0 %v2054
      %3929 = vmatprep.subr.mxu0 0.0
      %3930 = vmatpush1.msra.mxu0 %v2055
      %3931 = vmatprep.subr.mxu0 0.0
      %3932 = vmatpush1.msra.mxu0 %v2056
      %3933 = vmatprep.subr.mxu0 0.0
      %3934 = vmatpush1.msra.mxu0 %v2057
      %3935 = vmatprep.subr.mxu0 0.0
      %3936 = vmatpush1.msra.mxu0 0.0
      %3937 = vmatprep.subr.mxu0 0.0
      %3938 = vmatpush1.msra.mxu0 0.0
      %3939 = vmatprep.subr.mxu0 0.0
      %3940 = vmatpush1.msra.mxu0 0.0
      %3941 = vmatprep.subr.mxu0 0.0
      %3942 = vmatpush1.msra.mxu0 0.0
      %3943 = vmatprep.subr.mxu0 0.0
      %3944 = vmatpush1.msra.mxu0 0.0
      %3945 = vmatprep.subr.mxu0 0.0
      %3946 = vmatpush1.msra.mxu0 0.0
      %3947 = vmatprep.subr.mxu0 0.0
      %3948 = vmatpush1.msra.mxu0 0.0
      %3949 = vmatprep.subr.mxu0 0.0
      %3950 = vmatpush1.msra.mxu0 0.0
      %3951 = vmatprep.subr.mxu0 0.0
      %3952 = vmatpush1.msra.mxu0 0.0
      %3953 = vmatprep.subr.mxu0 0.0
      %3954 = vmatpush1.msra.mxu0 0.0
      %3955 = vmatprep.subr.mxu0 0.0
      %3956 = vmatpush1.msra.mxu0 0.0
      %3957 = vmatprep.subr.mxu0 0.0
      %3958 = vmatpush1.msra.mxu0 0.0
      %3959 = vmatprep.subr.mxu0 0.0
      %3960 = vmatpush1.msra.mxu0 0.0
      %3961 = vmatprep.subr.mxu0 0.0
      %3962 = vmatpush1.msra.mxu0 0.0
      %3963 = vmatprep.subr.mxu0 0.0
      %3964 = vmatpush1.msra.mxu0 0.0
      %3965 = vmatprep.subr.mxu0 0.0
      %3966 = vmatpush1.msra.mxu0 0.0
      %3967 = vmatprep.subr.mxu0 0.0
      %3968 = vmatpush1.msra.mxu0 0.0
      %3969 = vmatprep.subr.mxu0 0.0
      %3970 = vmatpush1.msra.mxu0 0.0
      %3971 = vmatprep.subr.mxu0 0.0
      %3972 = vmatpush1.msra.mxu0 0.0
      %3973 = vmatprep.subr.mxu0 0.0
      %3974 = vmatpush1.msra.mxu0 0.0
      %3975 = vmatprep.subr.mxu0 0.0
      %3976 = vmatpush1.msra.mxu0 0.0
      %3977 = vmatprep.subr.mxu0 0.0
      %3978 = vmatpush1.msra.mxu0 0.0
      %3979 = vmatprep.subr.mxu0 0.0
      %3980 = vmatpush1.msra.mxu0 0.0
      %3981 = vmatprep.subr.mxu0 0.0
      %3982 = vmatpush1.msra.mxu0 0.0
      %3983 = vmatprep.mubr.f32.mxu0 0.0
      %3984 = vmatmul.mubr.f32.gmra.mrb[0].mxu0 %v3872
      %v3985 = vpop.f32.mrb[0].mxu0
      %v3986 = vadd.f32 0.0, %v3985
      %v3987 = vpop.f32.mrb[0].mxu0
      %3988 = vmatprep.mubr.f32.mxu0 0.0
      %3989 = vmatmul.mubr.f32.gmra.mrb[0].mxu0 %v3875
      %v3990 = vpop.f32.mrb[0].mxu0
      %v3991 = vadd.f32 0.0, %v3990
      %v3992 = vpop.f32.mrb[0].mxu0
      %3993 = vmatprep.mubr.f32.mxu0 0.0
      %3994 = vmatmul.mubr.f32.gmra.mrb[0].mxu0 %v3878
      %v3995 = vpop.f32.mrb[0].mxu0
      %v3996 = vadd.f32 0.0, %v3995
      %v3997 = vpop.f32.mrb[0].mxu0
      %3998 = vmatprep.mubr.f32.mxu0 0.0
      %3999 = vmatmul.mubr.f32.gmra.mrb[0].mxu0 %v3881
      %v4000 = vpop.f32.mrb[0].mxu0
      %v4001 = vadd.f32 0.0, %v4000
      %v4002 = vpop.f32.mrb[0].mxu0
      %4003 = vmatprep.mubr.f32.mxu0 0.0
      %4004 = vmatmul.mubr.f32.gmra.mrb[0].mxu0 %v3884
      %v4005 = vpop.f32.mrb[0].mxu0
      %v4006 = vadd.f32 0.0, %v4005
      %v4007 = vpop.f32.mrb[0].mxu0
      %4008 = vmatprep.mubr.f32.mxu0 0.0
      %4009 = vmatmul.mubr.f32.gmra.mrb[0].mxu0 %v3887
      %v4010 = vpop.f32.mrb[0].mxu0
      %v4011 = vadd.f32 0.0, %v4010
      %v4012 = vpop.f32.mrb[0].mxu0
      %4013 = vmatprep.mubr.f32.mxu0 0.0
      %4014 = vmatmul.mubr.f32.gmra.mrb[0].mxu0 %v3890
      %v4015 = vpop.f32.mrb[0].mxu0
      %v4016 = vadd.f32 0.0, %v4015
      %v4017 = vpop.f32.mrb[0].mxu0
      %4018 = vmatprep.mubr.f32.mxu0 0.0
      %4019 = vmatmul.mubr.f32.gmra.mrb[0].mxu0 %v3893
      %v4020 = vpop.f32.mrb[0].mxu0
      %v4021 = vadd.f32 0.0, %v4020
      %v4022 = vpop.f32.mrb[0].mxu0
      %4023 = vmatprep.mubr.f32.mxu0 0.0
      %4024 = vmatmul.mubr.f32.gmra.mrb[0].mxu0 %v3896
      %v4025 = vpop.f32.mrb[0].mxu0
      %v4026 = vadd.f32 0.0, %v4025
      %v4027 = vpop.f32.mrb[0].mxu0
      %4028 = vmatprep.mubr.f32.mxu0 0.0
      %4029 = vmatmul.mubr.f32.gmra.mrb[0].mxu0 %v3899
      %v4030 = vpop.f32.mrb[0].mxu0
      %v4031 = vadd.f32 0.0, %v4030
      %v4032 = vpop.f32.mrb[0].mxu0
      %4033 = vmatprep.mubr.f32.mxu0 0.0
      %4034 = vmatmul.mubr.f32.gmra.mrb[0].mxu0 %v3902
      %v4035 = vpop.f32.mrb[0].mxu0
      %v4036 = vadd.f32 0.0, %v4035
      %v4037 = vpop.f32.mrb[0].mxu0
      %4038 = vmatprep.mubr.f32.mxu0 0.0
      %4039 = vmatmul.mubr.f32.gmra.mrb[0].mxu0 %v3905
      %v4040 = vpop.f32.mrb[0].mxu0
      %v4041 = vadd.f32 0.0, %v4040
      %v4042 = vpop.f32.mrb[0].mxu0
      %4043 = vmatprep.mubr.f32.mxu0 0.0
      %4044 = vmatmul.mubr.f32.gmra.mrb[0].mxu0 %v3908
      %v4045 = vpop.f32.mrb[0].mxu0
      %v4046 = vadd.f32 0.0, %v4045
      %v4047 = vpop.f32.mrb[0].mxu0
      %4048 = vmatprep.mubr.f32.mxu0 0.0
      %4049 = vmatmul.mubr.f32.gmra.mrb[0].mxu0 %v3911
      %v4050 = vpop.f32.mrb[0].mxu0
      %v4051 = vadd.f32 0.0, %v4050
      %v4052 = vpop.f32.mrb[0].mxu0
      %4053 = vmatprep.mubr.f32.mxu0 0.0
      %4054 = vmatmul.mubr.f32.gmra.mrb[0].mxu0 %v3914
      %v4055 = vpop.f32.mrb[0].mxu0
      %v4056 = vadd.f32 0.0, %v4055
      %v4057 = vpop.f32.mrb[0].mxu0
      %4058 = vmatprep.mubr.f32.mxu0 0.0
      %4059 = vmatmul.mubr.f32.gmra.mrb[0].mxu0 %v3917
      %v4060 = vpop.f32.mrb[0].mxu0
      %v4061 = vadd.f32 0.0, %v4060
      %v4062 = vpop.f32.mrb[0].mxu0
      %4063 = vdwg.mxu0
      %v4064 = vadd.f32 %v3839, %v3986
      %v4065 = vadd.f32 %v3840, %v3991
      %v4066 = vadd.f32 %v3841, %v3996
      %v4067 = vadd.f32 %v3842, %v4001
      %v4068 = vadd.f32 %v3843, %v4006
      %v4069 = vadd.f32 %v3844, %v4011
      %v4070 = vadd.f32 %v3845, %v4016
      %v4071 = vadd.f32 %v3846, %v4021
      %v4072 = vadd.f32 %v3847, %v4026
      %v4073 = vadd.f32 %v3848, %v4031
      %v4074 = vadd.f32 %v3849, %v4036
      %v4075 = vadd.f32 %v3850, %v4041
      %v4076 = vadd.f32 %v3851, %v4046
      %v4077 = vadd.f32 %v3852, %v4051
      %v4078 = vadd.f32 %v3853, %v4056
      %v4079 = vadd.f32 %v3854, %v4061
      %4080 = vmatprep.subr.mxu0 0.0
      %4081 = vmatpush1.msra.mxu0 %v2285
      %4082 = vmatprep.subr.mxu0 0.0
      %4083 = vmatpush1.msra.mxu0 %v2286
      %4084 = vmatprep.subr.mxu0 0.0
      %4085 = vmatpush1.msra.mxu0 %v2287
      %4086 = vmatprep.subr.mxu0 0.0
      %4087 = vmatpush1.msra.mxu0 %v2288
      %4088 = vmatprep.subr.mxu0 0.0
      %4089 = vmatpush1.msra.mxu0 %v2289
      %4090 = vmatprep.subr.mxu0 0.0
      %4091 = vmatpush1.msra.mxu0 %v2290
      %4092 = vmatprep.subr.mxu0 0.0
      %4093 = vmatpush1.msra.mxu0 %v2291
      %4094 = vmatprep.subr.mxu0 0.0
      %4095 = vmatpush1.msra.mxu0 %v2292
      %4096 = vmatprep.subr.mxu0 0.0
      %4097 = vmatpush1.msra.mxu0 0.0
      %4098 = vmatprep.subr.mxu0 0.0
      %4099 = vmatpush1.msra.mxu0 0.0
      %4100 = vmatprep.subr.mxu0 0.0
      %4101 = vmatpush1.msra.mxu0 0.0
      %4102 = vmatprep.subr.mxu0 0.0
      %4103 = vmatpush1.msra.mxu0 0.0
      %4104 = vmatprep.subr.mxu0 0.0
      %4105 = vmatpush1.msra.mxu0 0.0
      %4106 = vmatprep.subr.mxu0 0.0
      %4107 = vmatpush1.msra.mxu0 0.0
      %4108 = vmatprep.subr.mxu0 0.0
      %4109 = vmatpush1.msra.mxu0 0.0
      %4110 = vmatprep.subr.mxu0 0.0
      %4111 = vmatpush1.msra.mxu0 0.0
      %4112 = vmatprep.subr.mxu0 0.0
      %4113 = vmatpush1.msra.mxu0 0.0
      %4114 = vmatprep.subr.mxu0 0.0
      %4115 = vmatpush1.msra.mxu0 0.0
      %4116 = vmatprep.subr.mxu0 0.0
      %4117 = vmatpush1.msra.mxu0 0.0
      %4118 = vmatprep.subr.mxu0 0.0
      %4119 = vmatpush1.msra.mxu0 0.0
      %4120 = vmatprep.subr.mxu0 0.0
      %4121 = vmatpush1.msra.mxu0 0.0
      %4122 = vmatprep.subr.mxu0 0.0
      %4123 = vmatpush1.msra.mxu0 0.0
      %4124 = vmatprep.subr.mxu0 0.0
      %4125 = vmatpush1.msra.mxu0 0.0
      %4126 = vmatprep.subr.mxu0 0.0
      %4127 = vmatpush1.msra.mxu0 0.0
      %4128 = vmatprep.subr.mxu0 0.0
      %4129 = vmatpush1.msra.mxu0 0.0
      %4130 = vmatprep.subr.mxu0 0.0
      %4131 = vmatpush1.msra.mxu0 0.0
      %4132 = vmatprep.subr.mxu0 0.0
      %4133 = vmatpush1.msra.mxu0 0.0
      %4134 = vmatprep.subr.mxu0 0.0
      %4135 = vmatpush1.msra.mxu0 0.0
      %4136 = vmatprep.subr.mxu0 0.0
      %4137 = vmatpush1.msra.mxu0 0.0
      %4138 = vmatprep.subr.mxu0 0.0
      %4139 = vmatpush1.msra.mxu0 0.0
      %4140 = vmatprep.subr.mxu0 0.0
      %4141 = vmatpush1.msra.mxu0 0.0
      %4142 = vmatprep.subr.mxu0 0.0
      %4143 = vmatpush1.msra.mxu0 0.0
      %4144 = vmatprep.mubr.f32.mxu0 0.0
      %4145 = vmatmul.mubr.f32.gmra.mrb[0].mxu0 %v2529
      %v4146 = vpop.f32.mrb[0].mxu0
      %v4147 = vadd.f32 0.0, %v4146
      %v4148 = vpop.f32.mrb[0].mxu0
      %4149 = vmatprep.mubr.f32.mxu0 0.0
      %4150 = vmatmul.mubr.f32.gmra.mrb[0].mxu0 %v2532
      %v4151 = vpop.f32.mrb[0].mxu0
      %v4152 = vadd.f32 0.0, %v4151
      %v4153 = vpop.f32.mrb[0].mxu0
      %4154 = vmatprep.mubr.f32.mxu0 0.0
      %4155 = vmatmul.mubr.f32.gmra.mrb[0].mxu0 %v2535
      %v4156 = vpop.f32.mrb[0].mxu0
      %v4157 = vadd.f32 0.0, %v4156
      %v4158 = vpop.f32.mrb[0].mxu0
      %4159 = vmatprep.mubr.f32.mxu0 0.0
      %4160 = vmatmul.mubr.f32.gmra.mrb[0].mxu0 %v2538
      %v4161 = vpop.f32.mrb[0].mxu0
      %v4162 = vadd.f32 0.0, %v4161
      %v4163 = vpop.f32.mrb[0].mxu0
      %4164 = vmatprep.mubr.f32.mxu0 0.0
      %4165 = vmatmul.mubr.f32.gmra.mrb[0].mxu0 %v2541
      %v4166 = vpop.f32.mrb[0].mxu0
      %v4167 = vadd.f32 0.0, %v4166
      %v4168 = vpop.f32.mrb[0].mxu0
      %4169 = vmatprep.mubr.f32.mxu0 0.0
      %4170 = vmatmul.mubr.f32.gmra.mrb[0].mxu0 %v2544
      %v4171 = vpop.f32.mrb[0].mxu0
      %v4172 = vadd.f32 0.0, %v4171
      %v4173 = vpop.f32.mrb[0].mxu0
      %4174 = vmatprep.mubr.f32.mxu0 0.0
      %4175 = vmatmul.mubr.f32.gmra.mrb[0].mxu0 %v2547
      %v4176 = vpop.f32.mrb[0].mxu0
      %v4177 = vadd.f32 0.0, %v4176
      %v4178 = vpop.f32.mrb[0].mxu0
      %4179 = vmatprep.mubr.f32.mxu0 0.0
      %4180 = vmatmul.mubr.f32.gmra.mrb[0].mxu0 %v2550
      %v4181 = vpop.f32.mrb[0].mxu0
      %v4182 = vadd.f32 0.0, %v4181
      %v4183 = vpop.f32.mrb[0].mxu0
      %4184 = vmatprep.mubr.f32.mxu0 0.0
      %4185 = vmatmul.mubr.f32.gmra.mrb[0].mxu0 %v2553
      %v4186 = vpop.f32.mrb[0].mxu0
      %v4187 = vadd.f32 0.0, %v4186
      %v4188 = vpop.f32.mrb[0].mxu0
      %4189 = vmatprep.mubr.f32.mxu0 0.0
      %4190 = vmatmul.mubr.f32.gmra.mrb[0].mxu0 %v2556
      %v4191 = vpop.f32.mrb[0].mxu0
      %v4192 = vadd.f32 0.0, %v4191
      %v4193 = vpop.f32.mrb[0].mxu0
      %4194 = vmatprep.mubr.f32.mxu0 0.0
      %4195 = vmatmul.mubr.f32.gmra.mrb[0].mxu0 %v2559
      %v4196 = vpop.f32.mrb[0].mxu0
      %v4197 = vadd.f32 0.0, %v4196
      %v4198 = vpop.f32.mrb[0].mxu0
      %4199 = vmatprep.mubr.f32.mxu0 0.0
      %4200 = vmatmul.mubr.f32.gmra.mrb[0].mxu0 %v2562
      %v4201 = vpop.f32.mrb[0].mxu0
      %v4202 = vadd.f32 0.0, %v4201
      %v4203 = vpop.f32.mrb[0].mxu0
      %4204 = vmatprep.mubr.f32.mxu0 0.0
      %4205 = vmatmul.mubr.f32.gmra.mrb[0].mxu0 %v2565
      %v4206 = vpop.f32.mrb[0].mxu0
      %v4207 = vadd.f32 0.0, %v4206
      %v4208 = vpop.f32.mrb[0].mxu0
      %4209 = vmatprep.mubr.f32.mxu0 0.0
      %4210 = vmatmul.mubr.f32.gmra.mrb[0].mxu0 %v2568
      %v4211 = vpop.f32.mrb[0].mxu0
      %v4212 = vadd.f32 0.0, %v4211
      %v4213 = vpop.f32.mrb[0].mxu0
      %4214 = vmatprep.mubr.f32.mxu0 0.0
      %4215 = vmatmul.mubr.f32.gmra.mrb[0].mxu0 %v2571
      %v4216 = vpop.f32.mrb[0].mxu0
      %v4217 = vadd.f32 0.0, %v4216
      %v4218 = vpop.f32.mrb[0].mxu0
      %4219 = vmatprep.mubr.f32.mxu0 0.0
      %4220 = vmatmul.mubr.f32.gmra.mrb[0].mxu0 %v2574
      %v4221 = vpop.f32.mrb[0].mxu0
      %v4222 = vadd.f32 0.0, %v4221
      %v4223 = vpop.f32.mrb[0].mxu0
      %4224 = vdwg.mxu0
      %v4225 = vadd.f32 %v4064, %v4147
      %v4226 = vadd.f32 %v4065, %v4152
      %v4227 = vadd.f32 %v4066, %v4157
      %v4228 = vadd.f32 %v4067, %v4162
      %v4229 = vadd.f32 %v4068, %v4167
      %v4230 = vadd.f32 %v4069, %v4172
      %v4231 = vadd.f32 %v4070, %v4177
      %v4232 = vadd.f32 %v4071, %v4182
      %v4233 = vadd.f32 %v4072, %v4187
      %v4234 = vadd.f32 %v4073, %v4192
      %v4235 = vadd.f32 %v4074, %v4197
      %v4236 = vadd.f32 %v4075, %v4202
      %v4237 = vadd.f32 %v4076, %v4207
      %v4238 = vadd.f32 %v4077, %v4212
      %v4239 = vadd.f32 %v4078, %v4217
      %v4240 = vadd.f32 %v4079, %v4222
      %4241 = vmatprep.subr.mxu0 0.0
      %4242 = vmatpush1.msra.mxu0 %v2520
      %4243 = vmatprep.subr.mxu0 0.0
      %4244 = vmatpush1.msra.mxu0 %v2521
      %4245 = vmatprep.subr.mxu0 0.0
      %4246 = vmatpush1.msra.mxu0 %v2522
      %4247 = vmatprep.subr.mxu0 0.0
      %4248 = vmatpush1.msra.mxu0 %v2523
      %4249 = vmatprep.subr.mxu0 0.0
      %4250 = vmatpush1.msra.mxu0 %v2524
      %4251 = vmatprep.subr.mxu0 0.0
      %4252 = vmatpush1.msra.mxu0 %v2525
      %4253 = vmatprep.subr.mxu0 0.0
      %4254 = vmatpush1.msra.mxu0 %v2526
      %4255 = vmatprep.subr.mxu0 0.0
      %4256 = vmatpush1.msra.mxu0 %v2527
      %4257 = vmatprep.subr.mxu0 0.0
      %4258 = vmatpush1.msra.mxu0 0.0
      %4259 = vmatprep.subr.mxu0 0.0
      %4260 = vmatpush1.msra.mxu0 0.0
      %4261 = vmatprep.subr.mxu0 0.0
      %4262 = vmatpush1.msra.mxu0 0.0
      %4263 = vmatprep.subr.mxu0 0.0
      %4264 = vmatpush1.msra.mxu0 0.0
      %4265 = vmatprep.subr.mxu0 0.0
      %4266 = vmatpush1.msra.mxu0 0.0
      %4267 = vmatprep.subr.mxu0 0.0
      %4268 = vmatpush1.msra.mxu0 0.0
      %4269 = vmatprep.subr.mxu0 0.0
      %4270 = vmatpush1.msra.mxu0 0.0
      %4271 = vmatprep.subr.mxu0 0.0
      %4272 = vmatpush1.msra.mxu0 0.0
      %4273 = vmatprep.subr.mxu0 0.0
      %4274 = vmatpush1.msra.mxu0 0.0
      %4275 = vmatprep.subr.mxu0 0.0
      %4276 = vmatpush1.msra.mxu0 0.0
      %4277 = vmatprep.subr.mxu0 0.0
      %4278 = vmatpush1.msra.mxu0 0.0
      %4279 = vmatprep.subr.mxu0 0.0
      %4280 = vmatpush1.msra.mxu0 0.0
      %4281 = vmatprep.subr.mxu0 0.0
      %4282 = vmatpush1.msra.mxu0 0.0
      %4283 = vmatprep.subr.mxu0 0.0
      %4284 = vmatpush1.msra.mxu0 0.0
      %4285 = vmatprep.subr.mxu0 0.0
      %4286 = vmatpush1.msra.mxu0 0.0
      %4287 = vmatprep.subr.mxu0 0.0
      %4288 = vmatpush1.msra.mxu0 0.0
      %4289 = vmatprep.subr.mxu0 0.0
      %4290 = vmatpush1.msra.mxu0 0.0
      %4291 = vmatprep.subr.mxu0 0.0
      %4292 = vmatpush1.msra.mxu0 0.0
      %4293 = vmatprep.subr.mxu0 0.0
      %4294 = vmatpush1.msra.mxu0 0.0
      %4295 = vmatprep.subr.mxu0 0.0
      %4296 = vmatpush1.msra.mxu0 0.0
      %4297 = vmatprep.subr.mxu0 0.0
      %4298 = vmatpush1.msra.mxu0 0.0
      %4299 = vmatprep.subr.mxu0 0.0
      %4300 = vmatpush1.msra.mxu0 0.0
      %4301 = vmatprep.subr.mxu0 0.0
      %4302 = vmatpush1.msra.mxu0 0.0
      %4303 = vmatprep.subr.mxu0 0.0
      %4304 = vmatpush1.msra.mxu0 0.0
      %4305 = vmatprep.mubr.f32.mxu0 0.0
      %4306 = vmatmul.mubr.f32.gmra.mrb[0].mxu0 %v2763
      %v4307 = vpop.f32.mrb[0].mxu0
      %v4308 = vadd.f32 0.0, %v4307
      %v4309 = vpop.f32.mrb[0].mxu0
      %4310 = vmatprep.mubr.f32.mxu0 0.0
      %4311 = vmatmul.mubr.f32.gmra.mrb[0].mxu0 %v2766
      %v4312 = vpop.f32.mrb[0].mxu0
      %v4313 = vadd.f32 0.0, %v4312
      %v4314 = vpop.f32.mrb[0].mxu0
      %4315 = vmatprep.mubr.f32.mxu0 0.0
      %4316 = vmatmul.mubr.f32.gmra.mrb[0].mxu0 %v2769
      %v4317 = vpop.f32.mrb[0].mxu0
      %v4318 = vadd.f32 0.0, %v4317
      %v4319 = vpop.f32.mrb[0].mxu0
      %4320 = vmatprep.mubr.f32.mxu0 0.0
      %4321 = vmatmul.mubr.f32.gmra.mrb[0].mxu0 %v2772
      %v4322 = vpop.f32.mrb[0].mxu0
      %v4323 = vadd.f32 0.0, %v4322
      %v4324 = vpop.f32.mrb[0].mxu0
      %4325 = vmatprep.mubr.f32.mxu0 0.0
      %4326 = vmatmul.mubr.f32.gmra.mrb[0].mxu0 %v2775
      %v4327 = vpop.f32.mrb[0].mxu0
      %v4328 = vadd.f32 0.0, %v4327
      %v4329 = vpop.f32.mrb[0].mxu0
      %4330 = vmatprep.mubr.f32.mxu0 0.0
      %4331 = vmatmul.mubr.f32.gmra.mrb[0].mxu0 %v2778
      %v4332 = vpop.f32.mrb[0].mxu0
      %v4333 = vadd.f32 0.0, %v4332
      %v4334 = vpop.f32.mrb[0].mxu0
      %4335 = vmatprep.mubr.f32.mxu0 0.0
      %4336 = vmatmul.mubr.f32.gmra.mrb[0].mxu0 %v2781
      %v4337 = vpop.f32.mrb[0].mxu0
      %v4338 = vadd.f32 0.0, %v4337
      %v4339 = vpop.f32.mrb[0].mxu0
      %4340 = vmatprep.mubr.f32.mxu0 0.0
      %4341 = vmatmul.mubr.f32.gmra.mrb[0].mxu0 %v2784
      %v4342 = vpop.f32.mrb[0].mxu0
      %v4343 = vadd.f32 0.0, %v4342
      %v4344 = vpop.f32.mrb[0].mxu0
      %4345 = vmatprep.mubr.f32.mxu0 0.0
      %4346 = vmatmul.mubr.f32.gmra.mrb[0].mxu0 %v2787
      %v4347 = vpop.f32.mrb[0].mxu0
      %v4348 = vadd.f32 0.0, %v4347
      %v4349 = vpop.f32.mrb[0].mxu0
      %4350 = vmatprep.mubr.f32.mxu0 0.0
      %4351 = vmatmul.mubr.f32.gmra.mrb[0].mxu0 %v2790
      %v4352 = vpop.f32.mrb[0].mxu0
      %v4353 = vadd.f32 0.0, %v4352
      %v4354 = vpop.f32.mrb[0].mxu0
      %4355 = vmatprep.mubr.f32.mxu0 0.0
      %4356 = vmatmul.mubr.f32.gmra.mrb[0].mxu0 %v2793
      %v4357 = vpop.f32.mrb[0].mxu0
      %v4358 = vadd.f32 0.0, %v4357
      %v4359 = vpop.f32.mrb[0].mxu0
      %4360 = vmatprep.mubr.f32.mxu0 0.0
      %4361 = vmatmul.mubr.f32.gmra.mrb[0].mxu0 %v2796
      %v4362 = vpop.f32.mrb[0].mxu0
      %v4363 = vadd.f32 0.0, %v4362
      %v4364 = vpop.f32.mrb[0].mxu0
      %4365 = vmatprep.mubr.f32.mxu0 0.0
      %4366 = vmatmul.mubr.f32.gmra.mrb[0].mxu0 %v2799
      %v4367 = vpop.f32.mrb[0].mxu0
      %v4368 = vadd.f32 0.0, %v4367
      %v4369 = vpop.f32.mrb[0].mxu0
      %4370 = vmatprep.mubr.f32.mxu0 0.0
      %4371 = vmatmul.mubr.f32.gmra.mrb[0].mxu0 %v2802
      %v4372 = vpop.f32.mrb[0].mxu0
      %v4373 = vadd.f32 0.0, %v4372
      %v4374 = vpop.f32.mrb[0].mxu0
      %4375 = vmatprep.mubr.f32.mxu0 0.0
      %4376 = vmatmul.mubr.f32.gmra.mrb[0].mxu0 %v2805
      %v4377 = vpop.f32.mrb[0].mxu0
      %v4378 = vadd.f32 0.0, %v4377
      %v4379 = vpop.f32.mrb[0].mxu0
      %4380 = vmatprep.mubr.f32.mxu0 0.0
      %4381 = vmatmul.mubr.f32.gmra.mrb[0].mxu0 %v2808
      %v4382 = vpop.f32.mrb[0].mxu0
      %v4383 = vadd.f32 0.0, %v4382
      %v4384 = vpop.f32.mrb[0].mxu0
      %4385 = vdwg.mxu0
      %v4386 = vadd.f32 %v4225, %v4308
      %v4387 = vadd.f32 %v4226, %v4313
      %v4388 = vadd.f32 %v4227, %v4318
      %v4389 = vadd.f32 %v4228, %v4323
      %v4390 = vadd.f32 %v4229, %v4328
      %v4391 = vadd.f32 %v4230, %v4333
      %v4392 = vadd.f32 %v4231, %v4338
      %v4393 = vadd.f32 %v4232, %v4343
      %v4394 = vadd.f32 %v4233, %v4348
      %v4395 = vadd.f32 %v4234, %v4353
      %v4396 = vadd.f32 %v4235, %v4358
      %v4397 = vadd.f32 %v4236, %v4363
      %v4398 = vadd.f32 %v4237, %v4368
      %v4399 = vadd.f32 %v4238, %v4373
      %v4400 = vadd.f32 %v4239, %v4378
      %v4401 = vadd.f32 %v4240, %v4383
      %v4402 = vld [vmem:[%s2502 + $0x1] sm:$0xff]
      %v4403 = vld [vmem:[%s2502 + $0x11] sm:$0xff]
      %v4404 = vld [vmem:[%s2502 + $0x21] sm:$0xff]
      %v4405 = vld [vmem:[%s2502 + $0x31] sm:$0xff]
      %v4406 = vld [vmem:[%s2502 + $0x41] sm:$0xff]
      %v4407 = vld [vmem:[%s2502 + $0x51] sm:$0xff]
      %v4408 = vld [vmem:[%s2502 + $0x61] sm:$0xff]
      %v4409 = vld [vmem:[%s2502 + $0x71] sm:$0xff]
      %v4410 = vld [vmem:[%s2502 + $0x81] sm:$0xff]
      %v4411 = vld [vmem:[%s2502 + $0x91] sm:$0xff]
      %v4412 = vld [vmem:[%s2502 + $0xa1] sm:$0xff]
      %v4413 = vld [vmem:[%s2502 + $0xb1] sm:$0xff]
      %v4414 = vld [vmem:[%s2502 + $0xc1] sm:$0xff]
      %v4415 = vld [vmem:[%s2502 + $0xd1] sm:$0xff]
      %v4416 = vld [vmem:[%s2502 + $0xe1] sm:$0xff]
      %v4417 = vld [vmem:[%s2502 + $0xf1] sm:$0xff]
      %v4419 = vsel %vm788, %v4402, 0
      %v4422 = vsel %vm788, %v4403, 0
      %v4425 = vsel %vm788, %v4404, 0
      %v4428 = vsel %vm788, %v4405, 0
      %v4431 = vsel %vm788, %v4406, 0
      %v4434 = vsel %vm788, %v4407, 0
      %v4437 = vsel %vm788, %v4408, 0
      %v4440 = vsel %vm788, %v4409, 0
      %v4443 = vsel %vm788, %v4410, 0
      %v4446 = vsel %vm788, %v4411, 0
      %v4449 = vsel %vm788, %v4412, 0
      %v4452 = vsel %vm788, %v4413, 0
      %v4455 = vsel %vm788, %v4414, 0
      %v4458 = vsel %vm788, %v4415, 0
      %v4461 = vsel %vm788, %v4416, 0
      %v4464 = vsel %vm788, %v4417, 0
      %4466 = vmatprep.subr.mxu0 0.0
      %4467 = vmatpush1.msra.mxu0 %v2754
      %4468 = vmatprep.subr.mxu0 0.0
      %4469 = vmatpush1.msra.mxu0 %v2755
      %4470 = vmatprep.subr.mxu0 0.0
      %4471 = vmatpush1.msra.mxu0 %v2756
      %4472 = vmatprep.subr.mxu0 0.0
      %4473 = vmatpush1.msra.mxu0 %v2757
      %4474 = vmatprep.subr.mxu0 0.0
      %4475 = vmatpush1.msra.mxu0 %v2758
      %4476 = vmatprep.subr.mxu0 0.0
      %4477 = vmatpush1.msra.mxu0 %v2759
      %4478 = vmatprep.subr.mxu0 0.0
      %4479 = vmatpush1.msra.mxu0 %v2760
      %4480 = vmatprep.subr.mxu0 0.0
      %4481 = vmatpush1.msra.mxu0 %v2761
      %4482 = vmatprep.subr.mxu0 0.0
      %4483 = vmatpush1.msra.mxu0 0.0
      %4484 = vmatprep.subr.mxu0 0.0
      %4485 = vmatpush1.msra.mxu0 0.0
      %4486 = vmatprep.subr.mxu0 0.0
      %4487 = vmatpush1.msra.mxu0 0.0
      %4488 = vmatprep.subr.mxu0 0.0
      %4489 = vmatpush1.msra.mxu0 0.0
      %4490 = vmatprep.subr.mxu0 0.0
      %4491 = vmatpush1.msra.mxu0 0.0
      %4492 = vmatprep.subr.mxu0 0.0
      %4493 = vmatpush1.msra.mxu0 0.0
      %4494 = vmatprep.subr.mxu0 0.0
      %4495 = vmatpush1.msra.mxu0 0.0
      %4496 = vmatprep.subr.mxu0 0.0
      %4497 = vmatpush1.msra.mxu0 0.0
      %4498 = vmatprep.subr.mxu0 0.0
      %4499 = vmatpush1.msra.mxu0 0.0
      %4500 = vmatprep.subr.mxu0 0.0
      %4501 = vmatpush1.msra.mxu0 0.0
      %4502 = vmatprep.subr.mxu0 0.0
      %4503 = vmatpush1.msra.mxu0 0.0
      %4504 = vmatprep.subr.mxu0 0.0
      %4505 = vmatpush1.msra.mxu0 0.0
      %4506 = vmatprep.subr.mxu0 0.0
      %4507 = vmatpush1.msra.mxu0 0.0
      %4508 = vmatprep.subr.mxu0 0.0
      %4509 = vmatpush1.msra.mxu0 0.0
      %4510 = vmatprep.subr.mxu0 0.0
      %4511 = vmatpush1.msra.mxu0 0.0
      %4512 = vmatprep.subr.mxu0 0.0
      %4513 = vmatpush1.msra.mxu0 0.0
      %4514 = vmatprep.subr.mxu0 0.0
      %4515 = vmatpush1.msra.mxu0 0.0
      %4516 = vmatprep.subr.mxu0 0.0
      %4517 = vmatpush1.msra.mxu0 0.0
      %4518 = vmatprep.subr.mxu0 0.0
      %4519 = vmatpush1.msra.mxu0 0.0
      %4520 = vmatprep.subr.mxu0 0.0
      %4521 = vmatpush1.msra.mxu0 0.0
      %4522 = vmatprep.subr.mxu0 0.0
      %4523 = vmatpush1.msra.mxu0 0.0
      %4524 = vmatprep.subr.mxu0 0.0
      %4525 = vmatpush1.msra.mxu0 0.0
      %4526 = vmatprep.subr.mxu0 0.0
      %4527 = vmatpush1.msra.mxu0 0.0
      %4528 = vmatprep.subr.mxu0 0.0
      %4529 = vmatpush1.msra.mxu0 0.0
      %4530 = vmatprep.mubr.f32.mxu0 0.0
      %4531 = vmatmul.mubr.f32.gmra.mrb[0].mxu0 %v4419
      %v4532 = vpop.f32.mrb[0].mxu0
      %v4533 = vadd.f32 0.0, %v4532
      %v4534 = vpop.f32.mrb[0].mxu0
      %4535 = vmatprep.mubr.f32.mxu0 0.0
      %4536 = vmatmul.mubr.f32.gmra.mrb[0].mxu0 %v4422
      %v4537 = vpop.f32.mrb[0].mxu0
      %v4538 = vadd.f32 0.0, %v4537
      %v4539 = vpop.f32.mrb[0].mxu0
      %4540 = vmatprep.mubr.f32.mxu0 0.0
      %4541 = vmatmul.mubr.f32.gmra.mrb[0].mxu0 %v4425
      %v4542 = vpop.f32.mrb[0].mxu0
      %v4543 = vadd.f32 0.0, %v4542
      %v4544 = vpop.f32.mrb[0].mxu0
      %4545 = vmatprep.mubr.f32.mxu0 0.0
      %4546 = vmatmul.mubr.f32.gmra.mrb[0].mxu0 %v4428
      %v4547 = vpop.f32.mrb[0].mxu0
      %v4548 = vadd.f32 0.0, %v4547
      %v4549 = vpop.f32.mrb[0].mxu0
      %4550 = vmatprep.mubr.f32.mxu0 0.0
      %4551 = vmatmul.mubr.f32.gmra.mrb[0].mxu0 %v4431
      %v4552 = vpop.f32.mrb[0].mxu0
      %v4553 = vadd.f32 0.0, %v4552
      %v4554 = vpop.f32.mrb[0].mxu0
      %4555 = vmatprep.mubr.f32.mxu0 0.0
      %4556 = vmatmul.mubr.f32.gmra.mrb[0].mxu0 %v4434
      %v4557 = vpop.f32.mrb[0].mxu0
      %v4558 = vadd.f32 0.0, %v4557
      %v4559 = vpop.f32.mrb[0].mxu0
      %4560 = vmatprep.mubr.f32.mxu0 0.0
      %4561 = vmatmul.mubr.f32.gmra.mrb[0].mxu0 %v4437
      %v4562 = vpop.f32.mrb[0].mxu0
      %v4563 = vadd.f32 0.0, %v4562
      %v4564 = vpop.f32.mrb[0].mxu0
      %4565 = vmatprep.mubr.f32.mxu0 0.0
      %4566 = vmatmul.mubr.f32.gmra.mrb[0].mxu0 %v4440
      %v4567 = vpop.f32.mrb[0].mxu0
      %v4568 = vadd.f32 0.0, %v4567
      %v4569 = vpop.f32.mrb[0].mxu0
      %4570 = vmatprep.mubr.f32.mxu0 0.0
      %4571 = vmatmul.mubr.f32.gmra.mrb[0].mxu0 %v4443
      %v4572 = vpop.f32.mrb[0].mxu0
      %v4573 = vadd.f32 0.0, %v4572
      %v4574 = vpop.f32.mrb[0].mxu0
      %4575 = vmatprep.mubr.f32.mxu0 0.0
      %4576 = vmatmul.mubr.f32.gmra.mrb[0].mxu0 %v4446
      %v4577 = vpop.f32.mrb[0].mxu0
      %v4578 = vadd.f32 0.0, %v4577
      %v4579 = vpop.f32.mrb[0].mxu0
      %4580 = vmatprep.mubr.f32.mxu0 0.0
      %4581 = vmatmul.mubr.f32.gmra.mrb[0].mxu0 %v4449
      %v4582 = vpop.f32.mrb[0].mxu0
      %v4583 = vadd.f32 0.0, %v4582
      %v4584 = vpop.f32.mrb[0].mxu0
      %4585 = vmatprep.mubr.f32.mxu0 0.0
      %4586 = vmatmul.mubr.f32.gmra.mrb[0].mxu0 %v4452
      %v4587 = vpop.f32.mrb[0].mxu0
      %v4588 = vadd.f32 0.0, %v4587
      %v4589 = vpop.f32.mrb[0].mxu0
      %4590 = vmatprep.mubr.f32.mxu0 0.0
      %4591 = vmatmul.mubr.f32.gmra.mrb[0].mxu0 %v4455
      %v4592 = vpop.f32.mrb[0].mxu0
      %v4593 = vadd.f32 0.0, %v4592
      %v4594 = vpop.f32.mrb[0].mxu0
      %4595 = vmatprep.mubr.f32.mxu0 0.0
      %4596 = vmatmul.mubr.f32.gmra.mrb[0].mxu0 %v4458
      %v4597 = vpop.f32.mrb[0].mxu0
      %v4598 = vadd.f32 0.0, %v4597
      %v4599 = vpop.f32.mrb[0].mxu0
      %4600 = vmatprep.mubr.f32.mxu0 0.0
      %4601 = vmatmul.mubr.f32.gmra.mrb[0].mxu0 %v4461
      %v4602 = vpop.f32.mrb[0].mxu0
      %v4603 = vadd.f32 0.0, %v4602
      %v4604 = vpop.f32.mrb[0].mxu0
      %4605 = vmatprep.mubr.f32.mxu0 0.0
      %4606 = vmatmul.mubr.f32.gmra.mrb[0].mxu0 %v4464
      %v4607 = vpop.f32.mrb[0].mxu0
      %v4608 = vadd.f32 0.0, %v4607
      %v4609 = vpop.f32.mrb[0].mxu0
      %4610 = vdwg.mxu0
      %v4611 = vadd.f32 %v4386, %v4533
      %v4612 = vadd.f32 %v4387, %v4538
      %v4613 = vadd.f32 %v4388, %v4543
      %v4614 = vadd.f32 %v4389, %v4548
      %v4615 = vadd.f32 %v4390, %v4553
      %v4616 = vadd.f32 %v4391, %v4558
      %v4617 = vadd.f32 %v4392, %v4563
      %v4618 = vadd.f32 %v4393, %v4568
      %v4619 = vadd.f32 %v4394, %v4573
      %v4620 = vadd.f32 %v4395, %v4578
      %v4621 = vadd.f32 %v4396, %v4583
      %v4622 = vadd.f32 %v4397, %v4588
      %v4623 = vadd.f32 %v4398, %v4593
      %v4624 = vadd.f32 %v4399, %v4598
      %v4625 = vadd.f32 %v4400, %v4603
      %v4626 = vadd.f32 %v4401, %v4608
      %v4627 = vadd.f32 %v4611, %v2976
      %v4628 = vadd.f32 %v4612, %v2976
      %v4629 = vadd.f32 %v4613, %v2976
      %v4630 = vadd.f32 %v4614, %v2976
      %v4631 = vadd.f32 %v4615, %v2976
      %v4632 = vadd.f32 %v4616, %v2976
      %v4633 = vadd.f32 %v4617, %v2976
      %v4634 = vadd.f32 %v4618, %v2976
      %v4635 = vadd.f32 %v4619, %v2976
      %v4636 = vadd.f32 %v4620, %v2976
      %v4637 = vadd.f32 %v4621, %v2976
      %v4638 = vadd.f32 %v4622, %v2976
      %v4639 = vadd.f32 %v4623, %v2976
      %v4640 = vadd.f32 %v4624, %v2976
      %v4641 = vadd.f32 %v4625, %v2976
      %v4642 = vadd.f32 %v4626, %v2976
      %v4643 = vmax.f32 %v4627, 0.0
      %v4644 = vmax.f32 %v4628, 0.0
      %v4645 = vmax.f32 %v4629, 0.0
      %v4646 = vmax.f32 %v4630, 0.0
      %v4647 = vmax.f32 %v4631, 0.0
      %v4648 = vmax.f32 %v4632, 0.0
      %v4649 = vmax.f32 %v4633, 0.0
      %v4650 = vmax.f32 %v4634, 0.0
      %v4651 = vmax.f32 %v4635, 0.0
      %v4652 = vmax.f32 %v4636, 0.0
      %v4653 = vmax.f32 %v4637, 0.0
      %v4654 = vmax.f32 %v4638, 0.0
      %v4655 = vmax.f32 %v4639, 0.0
      %v4656 = vmax.f32 %v4640, 0.0
      %v4657 = vmax.f32 %v4641, 0.0
      %v4658 = vmax.f32 %v4642, 0.0
      %v4659 = vmax.f32 %v4643, %v4644
      %v4660 = vmax.f32 %v4645, %v4646
      %v4661 = vmax.f32 %v4647, %v4648
      %v4662 = vmax.f32 %v4649, %v4650
      %v4663 = vmax.f32 %v4651, %v4652
      %v4664 = vmax.f32 %v4653, %v4654
      %v4665 = vmax.f32 %v4655, %v4656
      %v4666 = vmax.f32 %v4657, %v4658
      %v4667 = vmax.f32 %v3010, %v4659
      %v4668 = vmax.f32 %v3011, %v4660
      %v4669 = vmax.f32 %v3012, %v4661
      %v4670 = vmax.f32 %v3013, %v4662
      %v4671 = vmax.f32 %v3014, %v4663
      %v4672 = vmax.f32 %v3015, %v4664
      %v4673 = vmax.f32 %v3016, %v4665
      %v4674 = vmax.f32 %v3017, %v4666
      %4675 = vst [vmem:[#allocation4] sm:$0xff] 0.0
      %4676 = vst [vmem:[#allocation4 + $0x8] sm:$0x3] 0.0
      %4677 = vst [vmem:[#allocation4 + $0x10] sm:$0xff] 0.0
      %4678 = vst [vmem:[#allocation4 + $0x18] sm:$0x3] 0.0
      %4679 = vst [vmem:[#allocation4 + $0x20] sm:$0xff] 0.0
      %4680 = vst [vmem:[#allocation4 + $0x28] sm:$0x3] 0.0
      %4681 = vst [vmem:[#allocation4 + $0x30] sm:$0xff] 0.0
      %4682 = vst [vmem:[#allocation4 + $0x38] sm:$0x3] 0.0
      %4683 = vst [vmem:[#allocation4 + $0x40] sm:$0xff] 0.0
      %4684 = vst [vmem:[#allocation4 + $0x48] sm:$0x3] 0.0
      %4685 = vst [vmem:[#allocation4 + $0x50] sm:$0xff] 0.0
      %4686 = vst [vmem:[#allocation4 + $0x58] sm:$0x3] 0.0
      %4687 = vst [vmem:[#allocation4 + $0x60] sm:$0xff] 0.0
      %4688 = vst [vmem:[#allocation4 + $0x68] sm:$0x3] 0.0
      %4689 = vst [vmem:[#allocation4 + $0x70] sm:$0xff] 0.0
      %4690 = vst [vmem:[#allocation4 + $0x78] sm:$0x3] 0.0
      %4691 = vst [vmem:[#allocation4 + $0x80] sm:$0xff] 0.0
      %4692 = vst [vmem:[#allocation4 + $0x88] sm:$0x3] 0.0
      %4693 = vst [vmem:[#allocation4 + $0x90] sm:$0xff] 0.0
      %4694 = vst [vmem:[#allocation4 + $0x98] sm:$0x3] 0.0
      %s4695 = scalar_lea.vmem [#allocation4], 16
      %4696 = vst [vmem:[%s4695 + $0x1] sm:$0xff] %v4667
      %4697 = vst [vmem:[%s4695 + $0x11] sm:$0xff] %v4668
      %4698 = vst [vmem:[%s4695 + $0x21] sm:$0xff] %v4669
      %4699 = vst [vmem:[%s4695 + $0x31] sm:$0xff] %v4670
      %4700 = vst [vmem:[%s4695 + $0x41] sm:$0xff] %v4671
      %4701 = vst [vmem:[%s4695 + $0x51] sm:$0xff] %v4672
      %4702 = vst [vmem:[%s4695 + $0x61] sm:$0xff] %v4673
      %4703 = vst [vmem:[%s4695 + $0x71] sm:$0xff] %v4674
      %v4704 = vld [vmem:[#allocation4] sm:$0xff]
      %v4705 = vld [vmem:[#allocation4 + $0x10] sm:$0xff]
      %v4706 = vld [vmem:[#allocation4 + $0x20] sm:$0xff]
      %v4707 = vld [vmem:[#allocation4 + $0x30] sm:$0xff]
      %v4708 = vld [vmem:[#allocation4 + $0x40] sm:$0xff]
      %v4709 = vld [vmem:[#allocation4 + $0x50] sm:$0xff]
      %v4710 = vld [vmem:[#allocation4 + $0x60] sm:$0xff]
      %v4711 = vld [vmem:[#allocation4 + $0x70] sm:$0xff]
      %v4712 = vld [vmem:[%s5] sm:$0xff]
      %v4713 = vld [vmem:[%s5 + $0x8] sm:$0xff]
      %v4714 = vld [vmem:[%s5 + $0x10] sm:$0xff]
      %v4715 = vld [vmem:[%s5 + $0x18] sm:$0xff]
      %v4716 = vld [vmem:[%s5 + $0x20] sm:$0xff]
      %v4717 = vld [vmem:[%s5 + $0x28] sm:$0xff]
      %v4718 = vld [vmem:[%s5 + $0x30] sm:$0xff]
      %v4719 = vld [vmem:[%s5 + $0x38] sm:$0xff]
      %v4720 = vld [vmem:[%s5 + $0x40] sm:$0xff]
      %v4721 = vld [vmem:[%s5 + $0x48] sm:$0xff]
      %v4722 = vld [vmem:[%s5 + $0x50] sm:$0xff]
      %v4723 = vld [vmem:[%s5 + $0x58] sm:$0xff]
      %v4724 = vld [vmem:[%s5 + $0x60] sm:$0xff]
      %v4725 = vld [vmem:[%s5 + $0x68] sm:$0xff]
      %v4726 = vld [vmem:[%s5 + $0x70] sm:$0xff]
      %v4727 = vld [vmem:[%s5 + $0x78] sm:$0xff]
      %v4728 = vld [vmem:[%s5 + $0x80] sm:$0xff]
      %v4729 = vld [vmem:[%s5 + $0x88] sm:$0xff]
      %v4730 = vld [vmem:[%s5 + $0x90] sm:$0xff]
      %v4731 = vld [vmem:[%s5 + $0x98] sm:$0xff]
      %v4732 = vld [vmem:[%s5 + $0xa0] sm:$0xff]
      %v4733 = vld [vmem:[%s5 + $0xa8] sm:$0xff]
      %v4734 = vld [vmem:[%s5 + $0xb0] sm:$0xff]
      %v4735 = vld [vmem:[%s5 + $0xb8] sm:$0xff]
      %v4736 = vld [vmem:[%s5 + $0xc0] sm:$0xff]
      %v4737 = vld [vmem:[%s5 + $0xc8] sm:$0xff]
      %v4738 = vld [vmem:[%s5 + $0xd0] sm:$0xff]
      %v4739 = vld [vmem:[%s5 + $0xd8] sm:$0xff]
      %v4740 = vld [vmem:[%s5 + $0xe0] sm:$0xff]
      %v4741 = vld [vmem:[%s5 + $0xe8] sm:$0xff]
      %v4742 = vld [vmem:[%s5 + $0xf0] sm:$0xff]
      %v4743 = vld [vmem:[%s5 + $0xf8] sm:$0xff]
      %v4744 = vld [vmem:[#allocation4 + $0x1] sm:$0xff]
      %v4745 = vld [vmem:[#allocation4 + $0x11] sm:$0xff]
      %v4746 = vld [vmem:[#allocation4 + $0x21] sm:$0xff]
      %v4747 = vld [vmem:[#allocation4 + $0x31] sm:$0xff]
      %v4748 = vld [vmem:[#allocation4 + $0x41] sm:$0xff]
      %v4749 = vld [vmem:[#allocation4 + $0x51] sm:$0xff]
      %v4750 = vld [vmem:[#allocation4 + $0x61] sm:$0xff]
      %v4751 = vld [vmem:[#allocation4 + $0x71] sm:$0xff]
      %s4752 = scalar_lea.vmem %s5, 256
      %v4753 = vld [vmem:[%s4752] sm:$0xff]
      %v4754 = vld [vmem:[%s4752 + $0x8] sm:$0xff]
      %v4755 = vld [vmem:[%s4752 + $0x10] sm:$0xff]
      %v4756 = vld [vmem:[%s4752 + $0x18] sm:$0xff]
      %v4757 = vld [vmem:[%s4752 + $0x20] sm:$0xff]
      %v4758 = vld [vmem:[%s4752 + $0x28] sm:$0xff]
      %v4759 = vld [vmem:[%s4752 + $0x30] sm:$0xff]
      %v4760 = vld [vmem:[%s4752 + $0x38] sm:$0xff]
      %v4761 = vld [vmem:[%s4752 + $0x40] sm:$0xff]
      %v4762 = vld [vmem:[%s4752 + $0x48] sm:$0xff]
      %v4763 = vld [vmem:[%s4752 + $0x50] sm:$0xff]
      %v4764 = vld [vmem:[%s4752 + $0x58] sm:$0xff]
      %v4765 = vld [vmem:[%s4752 + $0x60] sm:$0xff]
      %v4766 = vld [vmem:[%s4752 + $0x68] sm:$0xff]
      %v4767 = vld [vmem:[%s4752 + $0x70] sm:$0xff]
      %v4768 = vld [vmem:[%s4752 + $0x78] sm:$0xff]
      %v4769 = vld [vmem:[%s4752 + $0x80] sm:$0xff]
      %v4770 = vld [vmem:[%s4752 + $0x88] sm:$0xff]
      %v4771 = vld [vmem:[%s4752 + $0x90] sm:$0xff]
      %v4772 = vld [vmem:[%s4752 + $0x98] sm:$0xff]
      %v4773 = vld [vmem:[%s4752 + $0xa0] sm:$0xff]
      %v4774 = vld [vmem:[%s4752 + $0xa8] sm:$0xff]
      %v4775 = vld [vmem:[%s4752 + $0xb0] sm:$0xff]
      %v4776 = vld [vmem:[%s4752 + $0xb8] sm:$0xff]
      %v4777 = vld [vmem:[%s4752 + $0xc0] sm:$0xff]
      %v4778 = vld [vmem:[%s4752 + $0xc8] sm:$0xff]
      %v4779 = vld [vmem:[%s4752 + $0xd0] sm:$0xff]
      %v4780 = vld [vmem:[%s4752 + $0xd8] sm:$0xff]
      %v4781 = vld [vmem:[%s4752 + $0xe0] sm:$0xff]
      %v4782 = vld [vmem:[%s4752 + $0xe8] sm:$0xff]
      %v4783 = vld [vmem:[%s4752 + $0xf0] sm:$0xff]
      %v4784 = vld [vmem:[%s4752 + $0xf8] sm:$0xff]
      %4785 = vmatprep.subr.mxu0 %v4754
      %4786 = vmatpush1.msra.mxu0 %v4753
      %4787 = vmatprep.subr.mxu0 %v4756
      %4788 = vmatpush1.msra.mxu0 %v4755
      %4789 = vmatprep.subr.mxu0 %v4758
      %4790 = vmatpush1.msra.mxu0 %v4757
      %4791 = vmatprep.subr.mxu0 %v4760
      %4792 = vmatpush1.msra.mxu0 %v4759
      %4793 = vmatprep.subr.mxu0 %v4762
      %4794 = vmatpush1.msra.mxu0 %v4761
      %4795 = vmatprep.subr.mxu0 %v4764
      %4796 = vmatpush1.msra.mxu0 %v4763
      %4797 = vmatprep.subr.mxu0 %v4766
      %4798 = vmatpush1.msra.mxu0 %v4765
      %4799 = vmatprep.subr.mxu0 %v4768
      %4800 = vmatpush1.msra.mxu0 %v4767
      %4801 = vmatprep.subr.mxu0 %v4770
      %4802 = vmatpush1.msra.mxu0 %v4769
      %4803 = vmatprep.subr.mxu0 %v4772
      %4804 = vmatpush1.msra.mxu0 %v4771
      %4805 = vmatprep.subr.mxu0 %v4774
      %4806 = vmatpush1.msra.mxu0 %v4773
      %4807 = vmatprep.subr.mxu0 %v4776
      %4808 = vmatpush1.msra.mxu0 %v4775
      %4809 = vmatprep.subr.mxu0 %v4778
      %4810 = vmatpush1.msra.mxu0 %v4777
      %4811 = vmatprep.subr.mxu0 %v4780
      %4812 = vmatpush1.msra.mxu0 %v4779
      %4813 = vmatprep.subr.mxu0 %v4782
      %4814 = vmatpush1.msra.mxu0 %v4781
      %4815 = vmatprep.subr.mxu0 %v4784
      %4816 = vmatpush1.msra.mxu0 %v4783
      %4817 = vmatprep.subr.mxu0 0.0
      %4818 = vmatpush1.msra.mxu0 0.0
      %4819 = vmatprep.subr.mxu0 0.0
      %4820 = vmatpush1.msra.mxu0 0.0
      %4821 = vmatprep.subr.mxu0 0.0
      %4822 = vmatpush1.msra.mxu0 0.0
      %4823 = vmatprep.subr.mxu0 0.0
      %4824 = vmatpush1.msra.mxu0 0.0
      %4825 = vmatprep.subr.mxu0 0.0
      %4826 = vmatpush1.msra.mxu0 0.0
      %4827 = vmatprep.subr.mxu0 0.0
      %4828 = vmatpush1.msra.mxu0 0.0
      %4829 = vmatprep.subr.mxu0 0.0
      %4830 = vmatpush1.msra.mxu0 0.0
      %4831 = vmatprep.subr.mxu0 0.0
      %4832 = vmatpush1.msra.mxu0 0.0
      %4833 = vmatprep.subr.mxu0 0.0
      %4834 = vmatpush1.msra.mxu0 0.0
      %4835 = vmatprep.subr.mxu0 0.0
      %4836 = vmatpush1.msra.mxu0 0.0
      %4837 = vmatprep.subr.mxu0 0.0
      %4838 = vmatpush1.msra.mxu0 0.0
      %4839 = vmatprep.subr.mxu0 0.0
      %4840 = vmatpush1.msra.mxu0 0.0
      %4841 = vmatprep.subr.mxu0 0.0
      %4842 = vmatpush1.msra.mxu0 0.0
      %4843 = vmatprep.subr.mxu0 0.0
      %4844 = vmatpush1.msra.mxu0 0.0
      %4845 = vmatprep.subr.mxu0 0.0
      %4846 = vmatpush1.msra.mxu0 0.0
      %4847 = vmatprep.subr.mxu0 0.0
      %4848 = vmatpush1.msra.mxu0 0.0
      %4849 = vmatprep.mubr.f32.mxu0 0.0
      %4850 = vmatmul.mubr.f32.gmra.mrb[0].mxu0 %v4744
      %v4851 = vpop.f32.mrb[0].mxu0
      %v4852 = vadd.f32 0.0, %v4851
      %v4853 = vpop.f32.mrb[0].mxu0
      %v4854 = vadd.f32 0.0, %v4853
      %4855 = vmatprep.mubr.f32.mxu0 0.0
      %4856 = vmatmul.mubr.f32.gmra.mrb[0].mxu0 %v4745
      %v4857 = vpop.f32.mrb[0].mxu0
      %v4858 = vadd.f32 0.0, %v4857
      %v4859 = vpop.f32.mrb[0].mxu0
      %v4860 = vadd.f32 0.0, %v4859
      %4861 = vmatprep.mubr.f32.mxu0 0.0
      %4862 = vmatmul.mubr.f32.gmra.mrb[0].mxu0 %v4746
      %v4863 = vpop.f32.mrb[0].mxu0
      %v4864 = vadd.f32 0.0, %v4863
      %v4865 = vpop.f32.mrb[0].mxu0
      %v4866 = vadd.f32 0.0, %v4865
      %4867 = vmatprep.mubr.f32.mxu0 0.0
      %4868 = vmatmul.mubr.f32.gmra.mrb[0].mxu0 %v4747
      %v4869 = vpop.f32.mrb[0].mxu0
      %v4870 = vadd.f32 0.0, %v4869
      %v4871 = vpop.f32.mrb[0].mxu0
      %v4872 = vadd.f32 0.0, %v4871
      %4873 = vmatprep.mubr.f32.mxu0 0.0
      %4874 = vmatmul.mubr.f32.gmra.mrb[0].mxu0 %v4748
      %v4875 = vpop.f32.mrb[0].mxu0
      %v4876 = vadd.f32 0.0, %v4875
      %v4877 = vpop.f32.mrb[0].mxu0
      %v4878 = vadd.f32 0.0, %v4877
      %4879 = vmatprep.mubr.f32.mxu0 0.0
      %4880 = vmatmul.mubr.f32.gmra.mrb[0].mxu0 %v4749
      %v4881 = vpop.f32.mrb[0].mxu0
      %v4882 = vadd.f32 0.0, %v4881
      %v4883 = vpop.f32.mrb[0].mxu0
      %v4884 = vadd.f32 0.0, %v4883
      %4885 = vmatprep.mubr.f32.mxu0 0.0
      %4886 = vmatmul.mubr.f32.gmra.mrb[0].mxu0 %v4750
      %v4887 = vpop.f32.mrb[0].mxu0
      %v4888 = vadd.f32 0.0, %v4887
      %v4889 = vpop.f32.mrb[0].mxu0
      %v4890 = vadd.f32 0.0, %v4889
      %4891 = vmatprep.mubr.f32.mxu0 0.0
      %4892 = vmatmul.mubr.f32.gmra.mrb[0].mxu0 %v4751
      %v4893 = vpop.f32.mrb[0].mxu0
      %v4894 = vadd.f32 0.0, %v4893
      %v4895 = vpop.f32.mrb[0].mxu0
      %v4896 = vadd.f32 0.0, %v4895
      %4897 = vdwg.mxu0
      %4898 = vmatprep.subr.mxu0 %v4713
      %4899 = vmatpush1.msra.mxu0 %v4712
      %4900 = vmatprep.subr.mxu0 %v4715
      %4901 = vmatpush1.msra.mxu0 %v4714
      %4902 = vmatprep.subr.mxu0 %v4717
      %4903 = vmatpush1.msra.mxu0 %v4716
      %4904 = vmatprep.subr.mxu0 %v4719
      %4905 = vmatpush1.msra.mxu0 %v4718
      %4906 = vmatprep.subr.mxu0 %v4721
      %4907 = vmatpush1.msra.mxu0 %v4720
      %4908 = vmatprep.subr.mxu0 %v4723
      %4909 = vmatpush1.msra.mxu0 %v4722
      %4910 = vmatprep.subr.mxu0 %v4725
      %4911 = vmatpush1.msra.mxu0 %v4724
      %4912 = vmatprep.subr.mxu0 %v4727
      %4913 = vmatpush1.msra.mxu0 %v4726
      %4914 = vmatprep.subr.mxu0 %v4729
      %4915 = vmatpush1.msra.mxu0 %v4728
      %4916 = vmatprep.subr.mxu0 %v4731
      %4917 = vmatpush1.msra.mxu0 %v4730
      %4918 = vmatprep.subr.mxu0 %v4733
      %4919 = vmatpush1.msra.mxu0 %v4732
      %4920 = vmatprep.subr.mxu0 %v4735
      %4921 = vmatpush1.msra.mxu0 %v4734
      %4922 = vmatprep.subr.mxu0 %v4737
      %4923 = vmatpush1.msra.mxu0 %v4736
      %4924 = vmatprep.subr.mxu0 %v4739
      %4925 = vmatpush1.msra.mxu0 %v4738
      %4926 = vmatprep.subr.mxu0 %v4741
      %4927 = vmatpush1.msra.mxu0 %v4740
      %4928 = vmatprep.subr.mxu0 %v4743
      %4929 = vmatpush1.msra.mxu0 %v4742
      %4930 = vmatprep.subr.mxu0 0.0
      %4931 = vmatpush1.msra.mxu0 0.0
      %4932 = vmatprep.subr.mxu0 0.0
      %4933 = vmatpush1.msra.mxu0 0.0
      %4934 = vmatprep.subr.mxu0 0.0
      %4935 = vmatpush1.msra.mxu0 0.0
      %4936 = vmatprep.subr.mxu0 0.0
      %4937 = vmatpush1.msra.mxu0 0.0
      %4938 = vmatprep.subr.mxu0 0.0
      %4939 = vmatpush1.msra.mxu0 0.0
      %4940 = vmatprep.subr.mxu0 0.0
      %4941 = vmatpush1.msra.mxu0 0.0
      %4942 = vmatprep.subr.mxu0 0.0
      %4943 = vmatpush1.msra.mxu0 0.0
      %4944 = vmatprep.subr.mxu0 0.0
      %4945 = vmatpush1.msra.mxu0 0.0
      %4946 = vmatprep.subr.mxu0 0.0
      %4947 = vmatpush1.msra.mxu0 0.0
      %4948 = vmatprep.subr.mxu0 0.0
      %4949 = vmatpush1.msra.mxu0 0.0
      %4950 = vmatprep.subr.mxu0 0.0
      %4951 = vmatpush1.msra.mxu0 0.0
      %4952 = vmatprep.subr.mxu0 0.0
      %4953 = vmatpush1.msra.mxu0 0.0
      %4954 = vmatprep.subr.mxu0 0.0
      %4955 = vmatpush1.msra.mxu0 0.0
      %4956 = vmatprep.subr.mxu0 0.0
      %4957 = vmatpush1.msra.mxu0 0.0
      %4958 = vmatprep.subr.mxu0 0.0
      %4959 = vmatpush1.msra.mxu0 0.0
      %4960 = vmatprep.subr.mxu0 0.0
      %4961 = vmatpush1.msra.mxu0 0.0
      %4962 = vmatprep.mubr.f32.mxu0 0.0
      %4963 = vmatmul.mubr.f32.gmra.mrb[0].mxu0 %v4704
      %v4964 = vpop.f32.mrb[0].mxu0
      %v4965 = vadd.f32 %v4852, %v4964
      %v4966 = vpop.f32.mrb[0].mxu0
      %v4967 = vadd.f32 %v4854, %v4966
      %4968 = vmatprep.mubr.f32.mxu0 0.0
      %4969 = vmatmul.mubr.f32.gmra.mrb[0].mxu0 %v4705
      %v4970 = vpop.f32.mrb[0].mxu0
      %v4971 = vadd.f32 %v4858, %v4970
      %v4972 = vpop.f32.mrb[0].mxu0
      %v4973 = vadd.f32 %v4860, %v4972
      %4974 = vmatprep.mubr.f32.mxu0 0.0
      %4975 = vmatmul.mubr.f32.gmra.mrb[0].mxu0 %v4706
      %v4976 = vpop.f32.mrb[0].mxu0
      %v4977 = vadd.f32 %v4864, %v4976
      %v4978 = vpop.f32.mrb[0].mxu0
      %v4979 = vadd.f32 %v4866, %v4978
      %4980 = vmatprep.mubr.f32.mxu0 0.0
      %4981 = vmatmul.mubr.f32.gmra.mrb[0].mxu0 %v4707
      %v4982 = vpop.f32.mrb[0].mxu0
      %v4983 = vadd.f32 %v4870, %v4982
      %v4984 = vpop.f32.mrb[0].mxu0
      %v4985 = vadd.f32 %v4872, %v4984
      %4986 = vmatprep.mubr.f32.mxu0 0.0
      %4987 = vmatmul.mubr.f32.gmra.mrb[0].mxu0 %v4708
      %v4988 = vpop.f32.mrb[0].mxu0
      %v4989 = vadd.f32 %v4876, %v4988
      %v4990 = vpop.f32.mrb[0].mxu0
      %v4991 = vadd.f32 %v4878, %v4990
      %4992 = vmatprep.mubr.f32.mxu0 0.0
      %4993 = vmatmul.mubr.f32.gmra.mrb[0].mxu0 %v4709
      %v4994 = vpop.f32.mrb[0].mxu0
      %v4995 = vadd.f32 %v4882, %v4994
      %v4996 = vpop.f32.mrb[0].mxu0
      %v4997 = vadd.f32 %v4884, %v4996
      %4998 = vmatprep.mubr.f32.mxu0 0.0
      %4999 = vmatmul.mubr.f32.gmra.mrb[0].mxu0 %v4710
      %v5000 = vpop.f32.mrb[0].mxu0
      %v5001 = vadd.f32 %v4888, %v5000
      %v5002 = vpop.f32.mrb[0].mxu0
      %v5003 = vadd.f32 %v4890, %v5002
      %5004 = vmatprep.mubr.f32.mxu0 0.0
      %5005 = vmatmul.mubr.f32.gmra.mrb[0].mxu0 %v4711
      %v5006 = vpop.f32.mrb[0].mxu0
      %v5007 = vadd.f32 %v4894, %v5006
      %v5008 = vpop.f32.mrb[0].mxu0
      %v5009 = vadd.f32 %v4896, %v5008
      %5010 = vdwg.mxu0
      %v5011 = vld [vmem:[#allocation4 + $0x2] sm:$0xff]
      %v5012 = vld [vmem:[#allocation4 + $0x12] sm:$0xff]
      %v5013 = vld [vmem:[#allocation4 + $0x22] sm:$0xff]
      %v5014 = vld [vmem:[#allocation4 + $0x32] sm:$0xff]
      %v5015 = vld [vmem:[#allocation4 + $0x42] sm:$0xff]
      %v5016 = vld [vmem:[#allocation4 + $0x52] sm:$0xff]
      %v5017 = vld [vmem:[#allocation4 + $0x62] sm:$0xff]
      %v5018 = vld [vmem:[#allocation4 + $0x72] sm:$0xff]
      %s5019 = scalar_lea.vmem %s5, 512
      %v5020 = vld [vmem:[%s5019] sm:$0xff]
      %v5021 = vld [vmem:[%s5019 + $0x8] sm:$0xff]
      %v5022 = vld [vmem:[%s5019 + $0x10] sm:$0xff]
      %v5023 = vld [vmem:[%s5019 + $0x18] sm:$0xff]
      %v5024 = vld [vmem:[%s5019 + $0x20] sm:$0xff]
      %v5025 = vld [vmem:[%s5019 + $0x28] sm:$0xff]
      %v5026 = vld [vmem:[%s5019 + $0x30] sm:$0xff]
      %v5027 = vld [vmem:[%s5019 + $0x38] sm:$0xff]
      %v5028 = vld [vmem:[%s5019 + $0x40] sm:$0xff]
      %v5029 = vld [vmem:[%s5019 + $0x48] sm:$0xff]
      %v5030 = vld [vmem:[%s5019 + $0x50] sm:$0xff]
      %v5031 = vld [vmem:[%s5019 + $0x58] sm:$0xff]
      %v5032 = vld [vmem:[%s5019 + $0x60] sm:$0xff]
      %v5033 = vld [vmem:[%s5019 + $0x68] sm:$0xff]
      %v5034 = vld [vmem:[%s5019 + $0x70] sm:$0xff]
      %v5035 = vld [vmem:[%s5019 + $0x78] sm:$0xff]
      %v5036 = vld [vmem:[%s5019 + $0x80] sm:$0xff]
      %v5037 = vld [vmem:[%s5019 + $0x88] sm:$0xff]
      %v5038 = vld [vmem:[%s5019 + $0x90] sm:$0xff]
      %v5039 = vld [vmem:[%s5019 + $0x98] sm:$0xff]
      %v5040 = vld [vmem:[%s5019 + $0xa0] sm:$0xff]
      %v5041 = vld [vmem:[%s5019 + $0xa8] sm:$0xff]
      %v5042 = vld [vmem:[%s5019 + $0xb0] sm:$0xff]
      %v5043 = vld [vmem:[%s5019 + $0xb8] sm:$0xff]
      %v5044 = vld [vmem:[%s5019 + $0xc0] sm:$0xff]
      %v5045 = vld [vmem:[%s5019 + $0xc8] sm:$0xff]
      %v5046 = vld [vmem:[%s5019 + $0xd0] sm:$0xff]
      %v5047 = vld [vmem:[%s5019 + $0xd8] sm:$0xff]
      %v5048 = vld [vmem:[%s5019 + $0xe0] sm:$0xff]
      %v5049 = vld [vmem:[%s5019 + $0xe8] sm:$0xff]
      %v5050 = vld [vmem:[%s5019 + $0xf0] sm:$0xff]
      %v5051 = vld [vmem:[%s5019 + $0xf8] sm:$0xff]
      %5052 = vmatprep.subr.mxu0 %v5021
      %5053 = vmatpush1.msra.mxu0 %v5020
      %5054 = vmatprep.subr.mxu0 %v5023
      %5055 = vmatpush1.msra.mxu0 %v5022
      %5056 = vmatprep.subr.mxu0 %v5025
      %5057 = vmatpush1.msra.mxu0 %v5024
      %5058 = vmatprep.subr.mxu0 %v5027
      %5059 = vmatpush1.msra.mxu0 %v5026
      %5060 = vmatprep.subr.mxu0 %v5029
      %5061 = vmatpush1.msra.mxu0 %v5028
      %5062 = vmatprep.subr.mxu0 %v5031
      %5063 = vmatpush1.msra.mxu0 %v5030
      %5064 = vmatprep.subr.mxu0 %v5033
      %5065 = vmatpush1.msra.mxu0 %v5032
      %5066 = vmatprep.subr.mxu0 %v5035
      %5067 = vmatpush1.msra.mxu0 %v5034
      %5068 = vmatprep.subr.mxu0 %v5037
      %5069 = vmatpush1.msra.mxu0 %v5036
      %5070 = vmatprep.subr.mxu0 %v5039
      %5071 = vmatpush1.msra.mxu0 %v5038
      %5072 = vmatprep.subr.mxu0 %v5041
      %5073 = vmatpush1.msra.mxu0 %v5040
      %5074 = vmatprep.subr.mxu0 %v5043
      %5075 = vmatpush1.msra.mxu0 %v5042
      %5076 = vmatprep.subr.mxu0 %v5045
      %5077 = vmatpush1.msra.mxu0 %v5044
      %5078 = vmatprep.subr.mxu0 %v5047
      %5079 = vmatpush1.msra.mxu0 %v5046
      %5080 = vmatprep.subr.mxu0 %v5049
      %5081 = vmatpush1.msra.mxu0 %v5048
      %5082 = vmatprep.subr.mxu0 %v5051
      %5083 = vmatpush1.msra.mxu0 %v5050
      %5084 = vmatprep.subr.mxu0 0.0
      %5085 = vmatpush1.msra.mxu0 0.0
      %5086 = vmatprep.subr.mxu0 0.0
      %5087 = vmatpush1.msra.mxu0 0.0
      %5088 = vmatprep.subr.mxu0 0.0
      %5089 = vmatpush1.msra.mxu0 0.0
      %5090 = vmatprep.subr.mxu0 0.0
      %5091 = vmatpush1.msra.mxu0 0.0
      %5092 = vmatprep.subr.mxu0 0.0
      %5093 = vmatpush1.msra.mxu0 0.0
      %5094 = vmatprep.subr.mxu0 0.0
      %5095 = vmatpush1.msra.mxu0 0.0
      %5096 = vmatprep.subr.mxu0 0.0
      %5097 = vmatpush1.msra.mxu0 0.0
      %5098 = vmatprep.subr.mxu0 0.0
      %5099 = vmatpush1.msra.mxu0 0.0
      %5100 = vmatprep.subr.mxu0 0.0
      %5101 = vmatpush1.msra.mxu0 0.0
      %5102 = vmatprep.subr.mxu0 0.0
      %5103 = vmatpush1.msra.mxu0 0.0
      %5104 = vmatprep.subr.mxu0 0.0
      %5105 = vmatpush1.msra.mxu0 0.0
      %5106 = vmatprep.subr.mxu0 0.0
      %5107 = vmatpush1.msra.mxu0 0.0
      %5108 = vmatprep.subr.mxu0 0.0
      %5109 = vmatpush1.msra.mxu0 0.0
      %5110 = vmatprep.subr.mxu0 0.0
      %5111 = vmatpush1.msra.mxu0 0.0
      %5112 = vmatprep.subr.mxu0 0.0
      %5113 = vmatpush1.msra.mxu0 0.0
      %5114 = vmatprep.subr.mxu0 0.0
      %5115 = vmatpush1.msra.mxu0 0.0
      %5116 = vmatprep.mubr.f32.mxu0 0.0
      %5117 = vmatmul.mubr.f32.gmra.mrb[0].mxu0 %v5011
      %v5118 = vpop.f32.mrb[0].mxu0
      %v5119 = vadd.f32 0.0, %v5118
      %v5120 = vpop.f32.mrb[0].mxu0
      %v5121 = vadd.f32 0.0, %v5120
      %5122 = vmatprep.mubr.f32.mxu0 0.0
      %5123 = vmatmul.mubr.f32.gmra.mrb[0].mxu0 %v5012
      %v5124 = vpop.f32.mrb[0].mxu0
      %v5125 = vadd.f32 0.0, %v5124
      %v5126 = vpop.f32.mrb[0].mxu0
      %v5127 = vadd.f32 0.0, %v5126
      %5128 = vmatprep.mubr.f32.mxu0 0.0
      %5129 = vmatmul.mubr.f32.gmra.mrb[0].mxu0 %v5013
      %v5130 = vpop.f32.mrb[0].mxu0
      %v5131 = vadd.f32 0.0, %v5130
      %v5132 = vpop.f32.mrb[0].mxu0
      %v5133 = vadd.f32 0.0, %v5132
      %5134 = vmatprep.mubr.f32.mxu0 0.0
      %5135 = vmatmul.mubr.f32.gmra.mrb[0].mxu0 %v5014
      %v5136 = vpop.f32.mrb[0].mxu0
      %v5137 = vadd.f32 0.0, %v5136
      %v5138 = vpop.f32.mrb[0].mxu0
      %v5139 = vadd.f32 0.0, %v5138
      %5140 = vmatprep.mubr.f32.mxu0 0.0
      %5141 = vmatmul.mubr.f32.gmra.mrb[0].mxu0 %v5015
      %v5142 = vpop.f32.mrb[0].mxu0
      %v5143 = vadd.f32 0.0, %v5142
      %v5144 = vpop.f32.mrb[0].mxu0
      %v5145 = vadd.f32 0.0, %v5144
      %5146 = vmatprep.mubr.f32.mxu0 0.0
      %5147 = vmatmul.mubr.f32.gmra.mrb[0].mxu0 %v5016
      %v5148 = vpop.f32.mrb[0].mxu0
      %v5149 = vadd.f32 0.0, %v5148
      %v5150 = vpop.f32.mrb[0].mxu0
      %v5151 = vadd.f32 0.0, %v5150
      %5152 = vmatprep.mubr.f32.mxu0 0.0
      %5153 = vmatmul.mubr.f32.gmra.mrb[0].mxu0 %v5017
      %v5154 = vpop.f32.mrb[0].mxu0
      %v5155 = vadd.f32 0.0, %v5154
      %v5156 = vpop.f32.mrb[0].mxu0
      %v5157 = vadd.f32 0.0, %v5156
      %5158 = vmatprep.mubr.f32.mxu0 0.0
      %5159 = vmatmul.mubr.f32.gmra.mrb[0].mxu0 %v5018
      %v5160 = vpop.f32.mrb[0].mxu0
      %v5161 = vadd.f32 0.0, %v5160
      %v5162 = vpop.f32.mrb[0].mxu0
      %v5163 = vadd.f32 0.0, %v5162
      %5164 = vdwg.mxu0
      %v5165 = vadd.f32 %v4965, %v5119
      %v5166 = vadd.f32 %v4967, %v5121
      %v5167 = vadd.f32 %v4971, %v5125
      %v5168 = vadd.f32 %v4973, %v5127
      %v5169 = vadd.f32 %v4977, %v5131
      %v5170 = vadd.f32 %v4979, %v5133
      %v5171 = vadd.f32 %v4983, %v5137
      %v5172 = vadd.f32 %v4985, %v5139
      %v5173 = vadd.f32 %v4989, %v5143
      %v5174 = vadd.f32 %v4991, %v5145
      %v5175 = vadd.f32 %v4995, %v5149
      %v5176 = vadd.f32 %v4997, %v5151
      %v5177 = vadd.f32 %v5001, %v5155
      %v5178 = vadd.f32 %v5003, %v5157
      %v5179 = vadd.f32 %v5007, %v5161
      %v5180 = vadd.f32 %v5009, %v5163
      %v5181 = vld [vmem:[%s4695] sm:$0xff]
      %v5182 = vld [vmem:[%s4695 + $0x10] sm:$0xff]
      %v5183 = vld [vmem:[%s4695 + $0x20] sm:$0xff]
      %v5184 = vld [vmem:[%s4695 + $0x30] sm:$0xff]
      %v5185 = vld [vmem:[%s4695 + $0x40] sm:$0xff]
      %v5186 = vld [vmem:[%s4695 + $0x50] sm:$0xff]
      %v5187 = vld [vmem:[%s4695 + $0x60] sm:$0xff]
      %v5188 = vld [vmem:[%s4695 + $0x70] sm:$0xff]
      %s5189 = scalar_lea.vmem %s5, 768
      %v5190 = vld [vmem:[%s5189] sm:$0xff]
      %v5191 = vld [vmem:[%s5189 + $0x8] sm:$0xff]
      %v5192 = vld [vmem:[%s5189 + $0x10] sm:$0xff]
      %v5193 = vld [vmem:[%s5189 + $0x18] sm:$0xff]
      %v5194 = vld [vmem:[%s5189 + $0x20] sm:$0xff]
      %v5195 = vld [vmem:[%s5189 + $0x28] sm:$0xff]
      %v5196 = vld [vmem:[%s5189 + $0x30] sm:$0xff]
      %v5197 = vld [vmem:[%s5189 + $0x38] sm:$0xff]
      %v5198 = vld [vmem:[%s5189 + $0x40] sm:$0xff]
      %v5199 = vld [vmem:[%s5189 + $0x48] sm:$0xff]
      %v5200 = vld [vmem:[%s5189 + $0x50] sm:$0xff]
      %v5201 = vld [vmem:[%s5189 + $0x58] sm:$0xff]
      %v5202 = vld [vmem:[%s5189 + $0x60] sm:$0xff]
      %v5203 = vld [vmem:[%s5189 + $0x68] sm:$0xff]
      %v5204 = vld [vmem:[%s5189 + $0x70] sm:$0xff]
      %v5205 = vld [vmem:[%s5189 + $0x78] sm:$0xff]
      %v5206 = vld [vmem:[%s5189 + $0x80] sm:$0xff]
      %v5207 = vld [vmem:[%s5189 + $0x88] sm:$0xff]
      %v5208 = vld [vmem:[%s5189 + $0x90] sm:$0xff]
      %v5209 = vld [vmem:[%s5189 + $0x98] sm:$0xff]
      %v5210 = vld [vmem:[%s5189 + $0xa0] sm:$0xff]
      %v5211 = vld [vmem:[%s5189 + $0xa8] sm:$0xff]
      %v5212 = vld [vmem:[%s5189 + $0xb0] sm:$0xff]
      %v5213 = vld [vmem:[%s5189 + $0xb8] sm:$0xff]
      %v5214 = vld [vmem:[%s5189 + $0xc0] sm:$0xff]
      %v5215 = vld [vmem:[%s5189 + $0xc8] sm:$0xff]
      %v5216 = vld [vmem:[%s5189 + $0xd0] sm:$0xff]
      %v5217 = vld [vmem:[%s5189 + $0xd8] sm:$0xff]
      %v5218 = vld [vmem:[%s5189 + $0xe0] sm:$0xff]
      %v5219 = vld [vmem:[%s5189 + $0xe8] sm:$0xff]
      %v5220 = vld [vmem:[%s5189 + $0xf0] sm:$0xff]
      %v5221 = vld [vmem:[%s5189 + $0xf8] sm:$0xff]
      %5222 = vmatprep.subr.mxu0 %v5191
      %5223 = vmatpush1.msra.mxu0 %v5190
      %5224 = vmatprep.subr.mxu0 %v5193
      %5225 = vmatpush1.msra.mxu0 %v5192
      %5226 = vmatprep.subr.mxu0 %v5195
      %5227 = vmatpush1.msra.mxu0 %v5194
      %5228 = vmatprep.subr.mxu0 %v5197
      %5229 = vmatpush1.msra.mxu0 %v5196
      %5230 = vmatprep.subr.mxu0 %v5199
      %5231 = vmatpush1.msra.mxu0 %v5198
      %5232 = vmatprep.subr.mxu0 %v5201
      %5233 = vmatpush1.msra.mxu0 %v5200
      %5234 = vmatprep.subr.mxu0 %v5203
      %5235 = vmatpush1.msra.mxu0 %v5202
      %5236 = vmatprep.subr.mxu0 %v5205
      %5237 = vmatpush1.msra.mxu0 %v5204
      %5238 = vmatprep.subr.mxu0 %v5207
      %5239 = vmatpush1.msra.mxu0 %v5206
      %5240 = vmatprep.subr.mxu0 %v5209
      %5241 = vmatpush1.msra.mxu0 %v5208
      %5242 = vmatprep.subr.mxu0 %v5211
      %5243 = vmatpush1.msra.mxu0 %v5210
      %5244 = vmatprep.subr.mxu0 %v5213
      %5245 = vmatpush1.msra.mxu0 %v5212
      %5246 = vmatprep.subr.mxu0 %v5215
      %5247 = vmatpush1.msra.mxu0 %v5214
      %5248 = vmatprep.subr.mxu0 %v5217
      %5249 = vmatpush1.msra.mxu0 %v5216
      %5250 = vmatprep.subr.mxu0 %v5219
      %5251 = vmatpush1.msra.mxu0 %v5218
      %5252 = vmatprep.subr.mxu0 %v5221
      %5253 = vmatpush1.msra.mxu0 %v5220
      %5254 = vmatprep.subr.mxu0 0.0
      %5255 = vmatpush1.msra.mxu0 0.0
      %5256 = vmatprep.subr.mxu0 0.0
      %5257 = vmatpush1.msra.mxu0 0.0
      %5258 = vmatprep.subr.mxu0 0.0
      %5259 = vmatpush1.msra.mxu0 0.0
      %5260 = vmatprep.subr.mxu0 0.0
      %5261 = vmatpush1.msra.mxu0 0.0
      %5262 = vmatprep.subr.mxu0 0.0
      %5263 = vmatpush1.msra.mxu0 0.0
      %5264 = vmatprep.subr.mxu0 0.0
      %5265 = vmatpush1.msra.mxu0 0.0
      %5266 = vmatprep.subr.mxu0 0.0
      %5267 = vmatpush1.msra.mxu0 0.0
      %5268 = vmatprep.subr.mxu0 0.0
      %5269 = vmatpush1.msra.mxu0 0.0
      %5270 = vmatprep.subr.mxu0 0.0
      %5271 = vmatpush1.msra.mxu0 0.0
      %5272 = vmatprep.subr.mxu0 0.0
      %5273 = vmatpush1.msra.mxu0 0.0
      %5274 = vmatprep.subr.mxu0 0.0
      %5275 = vmatpush1.msra.mxu0 0.0
      %5276 = vmatprep.subr.mxu0 0.0
      %5277 = vmatpush1.msra.mxu0 0.0
      %5278 = vmatprep.subr.mxu0 0.0
      %5279 = vmatpush1.msra.mxu0 0.0
      %5280 = vmatprep.subr.mxu0 0.0
      %5281 = vmatpush1.msra.mxu0 0.0
      %5282 = vmatprep.subr.mxu0 0.0
      %5283 = vmatpush1.msra.mxu0 0.0
      %5284 = vmatprep.subr.mxu0 0.0
      %5285 = vmatpush1.msra.mxu0 0.0
      %5286 = vmatprep.mubr.f32.mxu0 0.0
      %5287 = vmatmul.mubr.f32.gmra.mrb[0].mxu0 %v5181
      %v5288 = vpop.f32.mrb[0].mxu0
      %v5289 = vadd.f32 0.0, %v5288
      %v5290 = vpop.f32.mrb[0].mxu0
      %v5291 = vadd.f32 0.0, %v5290
      %5292 = vmatprep.mubr.f32.mxu0 0.0
      %5293 = vmatmul.mubr.f32.gmra.mrb[0].mxu0 %v5182
      %v5294 = vpop.f32.mrb[0].mxu0
      %v5295 = vadd.f32 0.0, %v5294
      %v5296 = vpop.f32.mrb[0].mxu0
      %v5297 = vadd.f32 0.0, %v5296
      %5298 = vmatprep.mubr.f32.mxu0 0.0
      %5299 = vmatmul.mubr.f32.gmra.mrb[0].mxu0 %v5183
      %v5300 = vpop.f32.mrb[0].mxu0
      %v5301 = vadd.f32 0.0, %v5300
      %v5302 = vpop.f32.mrb[0].mxu0
      %v5303 = vadd.f32 0.0, %v5302
      %5304 = vmatprep.mubr.f32.mxu0 0.0
      %5305 = vmatmul.mubr.f32.gmra.mrb[0].mxu0 %v5184
      %v5306 = vpop.f32.mrb[0].mxu0
      %v5307 = vadd.f32 0.0, %v5306
      %v5308 = vpop.f32.mrb[0].mxu0
      %v5309 = vadd.f32 0.0, %v5308
      %5310 = vmatprep.mubr.f32.mxu0 0.0
      %5311 = vmatmul.mubr.f32.gmra.mrb[0].mxu0 %v5185
      %v5312 = vpop.f32.mrb[0].mxu0
      %v5313 = vadd.f32 0.0, %v5312
      %v5314 = vpop.f32.mrb[0].mxu0
      %v5315 = vadd.f32 0.0, %v5314
      %5316 = vmatprep.mubr.f32.mxu0 0.0
      %5317 = vmatmul.mubr.f32.gmra.mrb[0].mxu0 %v5186
      %v5318 = vpop.f32.mrb[0].mxu0
      %v5319 = vadd.f32 0.0, %v5318
      %v5320 = vpop.f32.mrb[0].mxu0
      %v5321 = vadd.f32 0.0, %v5320
      %5322 = vmatprep.mubr.f32.mxu0 0.0
      %5323 = vmatmul.mubr.f32.gmra.mrb[0].mxu0 %v5187
      %v5324 = vpop.f32.mrb[0].mxu0
      %v5325 = vadd.f32 0.0, %v5324
      %v5326 = vpop.f32.mrb[0].mxu0
      %v5327 = vadd.f32 0.0, %v5326
      %5328 = vmatprep.mubr.f32.mxu0 0.0
      %5329 = vmatmul.mubr.f32.gmra.mrb[0].mxu0 %v5188
      %v5330 = vpop.f32.mrb[0].mxu0
      %v5331 = vadd.f32 0.0, %v5330
      %v5332 = vpop.f32.mrb[0].mxu0
      %v5333 = vadd.f32 0.0, %v5332
      %5334 = vdwg.mxu0
      %v5335 = vadd.f32 %v5165, %v5289
      %v5336 = vadd.f32 %v5166, %v5291
      %v5337 = vadd.f32 %v5167, %v5295
      %v5338 = vadd.f32 %v5168, %v5297
      %v5339 = vadd.f32 %v5169, %v5301
      %v5340 = vadd.f32 %v5170, %v5303
      %v5341 = vadd.f32 %v5171, %v5307
      %v5342 = vadd.f32 %v5172, %v5309
      %v5343 = vadd.f32 %v5173, %v5313
      %v5344 = vadd.f32 %v5174, %v5315
      %v5345 = vadd.f32 %v5175, %v5319
      %v5346 = vadd.f32 %v5176, %v5321
      %v5347 = vadd.f32 %v5177, %v5325
      %v5348 = vadd.f32 %v5178, %v5327
      %v5349 = vadd.f32 %v5179, %v5331
      %v5350 = vadd.f32 %v5180, %v5333
      %v5351 = vld [vmem:[%s4695 + $0x1] sm:$0xff]
      %v5352 = vld [vmem:[%s4695 + $0x11] sm:$0xff]
      %v5353 = vld [vmem:[%s4695 + $0x21] sm:$0xff]
      %v5354 = vld [vmem:[%s4695 + $0x31] sm:$0xff]
      %v5355 = vld [vmem:[%s4695 + $0x41] sm:$0xff]
      %v5356 = vld [vmem:[%s4695 + $0x51] sm:$0xff]
      %v5357 = vld [vmem:[%s4695 + $0x61] sm:$0xff]
      %v5358 = vld [vmem:[%s4695 + $0x71] sm:$0xff]
      %s5359 = scalar_lea.vmem %s5, 1024
      %v5360 = vld [vmem:[%s5359] sm:$0xff]
      %v5361 = vld [vmem:[%s5359 + $0x8] sm:$0xff]
      %v5362 = vld [vmem:[%s5359 + $0x10] sm:$0xff]
      %v5363 = vld [vmem:[%s5359 + $0x18] sm:$0xff]
      %v5364 = vld [vmem:[%s5359 + $0x20] sm:$0xff]
      %v5365 = vld [vmem:[%s5359 + $0x28] sm:$0xff]
      %v5366 = vld [vmem:[%s5359 + $0x30] sm:$0xff]
      %v5367 = vld [vmem:[%s5359 + $0x38] sm:$0xff]
      %v5368 = vld [vmem:[%s5359 + $0x40] sm:$0xff]
      %v5369 = vld [vmem:[%s5359 + $0x48] sm:$0xff]
      %v5370 = vld [vmem:[%s5359 + $0x50] sm:$0xff]
      %v5371 = vld [vmem:[%s5359 + $0x58] sm:$0xff]
      %v5372 = vld [vmem:[%s5359 + $0x60] sm:$0xff]
      %v5373 = vld [vmem:[%s5359 + $0x68] sm:$0xff]
      %v5374 = vld [vmem:[%s5359 + $0x70] sm:$0xff]
      %v5375 = vld [vmem:[%s5359 + $0x78] sm:$0xff]
      %v5376 = vld [vmem:[%s5359 + $0x80] sm:$0xff]
      %v5377 = vld [vmem:[%s5359 + $0x88] sm:$0xff]
      %v5378 = vld [vmem:[%s5359 + $0x90] sm:$0xff]
      %v5379 = vld [vmem:[%s5359 + $0x98] sm:$0xff]
      %v5380 = vld [vmem:[%s5359 + $0xa0] sm:$0xff]
      %v5381 = vld [vmem:[%s5359 + $0xa8] sm:$0xff]
      %v5382 = vld [vmem:[%s5359 + $0xb0] sm:$0xff]
      %v5383 = vld [vmem:[%s5359 + $0xb8] sm:$0xff]
      %v5384 = vld [vmem:[%s5359 + $0xc0] sm:$0xff]
      %v5385 = vld [vmem:[%s5359 + $0xc8] sm:$0xff]
      %v5386 = vld [vmem:[%s5359 + $0xd0] sm:$0xff]
      %v5387 = vld [vmem:[%s5359 + $0xd8] sm:$0xff]
      %v5388 = vld [vmem:[%s5359 + $0xe0] sm:$0xff]
      %v5389 = vld [vmem:[%s5359 + $0xe8] sm:$0xff]
      %v5390 = vld [vmem:[%s5359 + $0xf0] sm:$0xff]
      %v5391 = vld [vmem:[%s5359 + $0xf8] sm:$0xff]
      %5392 = vmatprep.subr.mxu0 %v5361
      %5393 = vmatpush1.msra.mxu0 %v5360
      %5394 = vmatprep.subr.mxu0 %v5363
      %5395 = vmatpush1.msra.mxu0 %v5362
      %5396 = vmatprep.subr.mxu0 %v5365
      %5397 = vmatpush1.msra.mxu0 %v5364
      %5398 = vmatprep.subr.mxu0 %v5367
      %5399 = vmatpush1.msra.mxu0 %v5366
      %5400 = vmatprep.subr.mxu0 %v5369
      %5401 = vmatpush1.msra.mxu0 %v5368
      %5402 = vmatprep.subr.mxu0 %v5371
      %5403 = vmatpush1.msra.mxu0 %v5370
      %5404 = vmatprep.subr.mxu0 %v5373
      %5405 = vmatpush1.msra.mxu0 %v5372
      %5406 = vmatprep.subr.mxu0 %v5375
      %5407 = vmatpush1.msra.mxu0 %v5374
      %5408 = vmatprep.subr.mxu0 %v5377
      %5409 = vmatpush1.msra.mxu0 %v5376
      %5410 = vmatprep.subr.mxu0 %v5379
      %5411 = vmatpush1.msra.mxu0 %v5378
      %5412 = vmatprep.subr.mxu0 %v5381
      %5413 = vmatpush1.msra.mxu0 %v5380
      %5414 = vmatprep.subr.mxu0 %v5383
      %5415 = vmatpush1.msra.mxu0 %v5382
      %5416 = vmatprep.subr.mxu0 %v5385
      %5417 = vmatpush1.msra.mxu0 %v5384
      %5418 = vmatprep.subr.mxu0 %v5387
      %5419 = vmatpush1.msra.mxu0 %v5386
      %5420 = vmatprep.subr.mxu0 %v5389
      %5421 = vmatpush1.msra.mxu0 %v5388
      %5422 = vmatprep.subr.mxu0 %v5391
      %5423 = vmatpush1.msra.mxu0 %v5390
      %5424 = vmatprep.subr.mxu0 0.0
      %5425 = vmatpush1.msra.mxu0 0.0
      %5426 = vmatprep.subr.mxu0 0.0
      %5427 = vmatpush1.msra.mxu0 0.0
      %5428 = vmatprep.subr.mxu0 0.0
      %5429 = vmatpush1.msra.mxu0 0.0
      %5430 = vmatprep.subr.mxu0 0.0
      %5431 = vmatpush1.msra.mxu0 0.0
      %5432 = vmatprep.subr.mxu0 0.0
      %5433 = vmatpush1.msra.mxu0 0.0
      %5434 = vmatprep.subr.mxu0 0.0
      %5435 = vmatpush1.msra.mxu0 0.0
      %5436 = vmatprep.subr.mxu0 0.0
      %5437 = vmatpush1.msra.mxu0 0.0
      %5438 = vmatprep.subr.mxu0 0.0
      %5439 = vmatpush1.msra.mxu0 0.0
      %5440 = vmatprep.subr.mxu0 0.0
      %5441 = vmatpush1.msra.mxu0 0.0
      %5442 = vmatprep.subr.mxu0 0.0
      %5443 = vmatpush1.msra.mxu0 0.0
      %5444 = vmatprep.subr.mxu0 0.0
      %5445 = vmatpush1.msra.mxu0 0.0
      %5446 = vmatprep.subr.mxu0 0.0
      %5447 = vmatpush1.msra.mxu0 0.0
      %5448 = vmatprep.subr.mxu0 0.0
      %5449 = vmatpush1.msra.mxu0 0.0
      %5450 = vmatprep.subr.mxu0 0.0
      %5451 = vmatpush1.msra.mxu0 0.0
      %5452 = vmatprep.subr.mxu0 0.0
      %5453 = vmatpush1.msra.mxu0 0.0
      %5454 = vmatprep.subr.mxu0 0.0
      %5455 = vmatpush1.msra.mxu0 0.0
      %5456 = vmatprep.mubr.f32.mxu0 0.0
      %5457 = vmatmul.mubr.f32.gmra.mrb[0].mxu0 %v5351
      %v5458 = vpop.f32.mrb[0].mxu0
      %v5459 = vadd.f32 0.0, %v5458
      %v5460 = vpop.f32.mrb[0].mxu0
      %v5461 = vadd.f32 0.0, %v5460
      %5462 = vmatprep.mubr.f32.mxu0 0.0
      %5463 = vmatmul.mubr.f32.gmra.mrb[0].mxu0 %v5352
      %v5464 = vpop.f32.mrb[0].mxu0
      %v5465 = vadd.f32 0.0, %v5464
      %v5466 = vpop.f32.mrb[0].mxu0
      %v5467 = vadd.f32 0.0, %v5466
      %5468 = vmatprep.mubr.f32.mxu0 0.0
      %5469 = vmatmul.mubr.f32.gmra.mrb[0].mxu0 %v5353
      %v5470 = vpop.f32.mrb[0].mxu0
      %v5471 = vadd.f32 0.0, %v5470
      %v5472 = vpop.f32.mrb[0].mxu0
      %v5473 = vadd.f32 0.0, %v5472
      %5474 = vmatprep.mubr.f32.mxu0 0.0
      %5475 = vmatmul.mubr.f32.gmra.mrb[0].mxu0 %v5354
      %v5476 = vpop.f32.mrb[0].mxu0
      %v5477 = vadd.f32 0.0, %v5476
      %v5478 = vpop.f32.mrb[0].mxu0
      %v5479 = vadd.f32 0.0, %v5478
      %5480 = vmatprep.mubr.f32.mxu0 0.0
      %5481 = vmatmul.mubr.f32.gmra.mrb[0].mxu0 %v5355
      %v5482 = vpop.f32.mrb[0].mxu0
      %v5483 = vadd.f32 0.0, %v5482
      %v5484 = vpop.f32.mrb[0].mxu0
      %v5485 = vadd.f32 0.0, %v5484
      %5486 = vmatprep.mubr.f32.mxu0 0.0
      %5487 = vmatmul.mubr.f32.gmra.mrb[0].mxu0 %v5356
      %v5488 = vpop.f32.mrb[0].mxu0
      %v5489 = vadd.f32 0.0, %v5488
      %v5490 = vpop.f32.mrb[0].mxu0
      %v5491 = vadd.f32 0.0, %v5490
      %5492 = vmatprep.mubr.f32.mxu0 0.0
      %5493 = vmatmul.mubr.f32.gmra.mrb[0].mxu0 %v5357
      %v5494 = vpop.f32.mrb[0].mxu0
      %v5495 = vadd.f32 0.0, %v5494
      %v5496 = vpop.f32.mrb[0].mxu0
      %v5497 = vadd.f32 0.0, %v5496
      %5498 = vmatprep.mubr.f32.mxu0 0.0
      %5499 = vmatmul.mubr.f32.gmra.mrb[0].mxu0 %v5358
      %v5500 = vpop.f32.mrb[0].mxu0
      %v5501 = vadd.f32 0.0, %v5500
      %v5502 = vpop.f32.mrb[0].mxu0
      %v5503 = vadd.f32 0.0, %v5502
      %5504 = vdwg.mxu0
      %v5505 = vadd.f32 %v5335, %v5459
      %v5506 = vadd.f32 %v5336, %v5461
      %v5507 = vadd.f32 %v5337, %v5465
      %v5508 = vadd.f32 %v5338, %v5467
      %v5509 = vadd.f32 %v5339, %v5471
      %v5510 = vadd.f32 %v5340, %v5473
      %v5511 = vadd.f32 %v5341, %v5477
      %v5512 = vadd.f32 %v5342, %v5479
      %v5513 = vadd.f32 %v5343, %v5483
      %v5514 = vadd.f32 %v5344, %v5485
      %v5515 = vadd.f32 %v5345, %v5489
      %v5516 = vadd.f32 %v5346, %v5491
      %v5517 = vadd.f32 %v5347, %v5495
      %v5518 = vadd.f32 %v5348, %v5497
      %v5519 = vadd.f32 %v5349, %v5501
      %v5520 = vadd.f32 %v5350, %v5503
      %v5521 = vld [vmem:[%s4695 + $0x2] sm:$0xff]
      %v5522 = vld [vmem:[%s4695 + $0x12] sm:$0xff]
      %v5523 = vld [vmem:[%s4695 + $0x22] sm:$0xff]
      %v5524 = vld [vmem:[%s4695 + $0x32] sm:$0xff]
      %v5525 = vld [vmem:[%s4695 + $0x42] sm:$0xff]
      %v5526 = vld [vmem:[%s4695 + $0x52] sm:$0xff]
      %v5527 = vld [vmem:[%s4695 + $0x62] sm:$0xff]
      %v5528 = vld [vmem:[%s4695 + $0x72] sm:$0xff]
      %s5529 = scalar_lea.vmem %s5, 1280
      %v5530 = vld [vmem:[%s5529] sm:$0xff]
      %v5531 = vld [vmem:[%s5529 + $0x8] sm:$0xff]
      %v5532 = vld [vmem:[%s5529 + $0x10] sm:$0xff]
      %v5533 = vld [vmem:[%s5529 + $0x18] sm:$0xff]
      %v5534 = vld [vmem:[%s5529 + $0x20] sm:$0xff]
      %v5535 = vld [vmem:[%s5529 + $0x28] sm:$0xff]
      %v5536 = vld [vmem:[%s5529 + $0x30] sm:$0xff]
      %v5537 = vld [vmem:[%s5529 + $0x38] sm:$0xff]
      %v5538 = vld [vmem:[%s5529 + $0x40] sm:$0xff]
      %v5539 = vld [vmem:[%s5529 + $0x48] sm:$0xff]
      %v5540 = vld [vmem:[%s5529 + $0x50] sm:$0xff]
      %v5541 = vld [vmem:[%s5529 + $0x58] sm:$0xff]
      %v5542 = vld [vmem:[%s5529 + $0x60] sm:$0xff]
      %v5543 = vld [vmem:[%s5529 + $0x68] sm:$0xff]
      %v5544 = vld [vmem:[%s5529 + $0x70] sm:$0xff]
      %v5545 = vld [vmem:[%s5529 + $0x78] sm:$0xff]
      %v5546 = vld [vmem:[%s5529 + $0x80] sm:$0xff]
      %v5547 = vld [vmem:[%s5529 + $0x88] sm:$0xff]
      %v5548 = vld [vmem:[%s5529 + $0x90] sm:$0xff]
      %v5549 = vld [vmem:[%s5529 + $0x98] sm:$0xff]
      %v5550 = vld [vmem:[%s5529 + $0xa0] sm:$0xff]
      %v5551 = vld [vmem:[%s5529 + $0xa8] sm:$0xff]
      %v5552 = vld [vmem:[%s5529 + $0xb0] sm:$0xff]
      %v5553 = vld [vmem:[%s5529 + $0xb8] sm:$0xff]
      %v5554 = vld [vmem:[%s5529 + $0xc0] sm:$0xff]
      %v5555 = vld [vmem:[%s5529 + $0xc8] sm:$0xff]
      %v5556 = vld [vmem:[%s5529 + $0xd0] sm:$0xff]
      %v5557 = vld [vmem:[%s5529 + $0xd8] sm:$0xff]
      %v5558 = vld [vmem:[%s5529 + $0xe0] sm:$0xff]
      %v5559 = vld [vmem:[%s5529 + $0xe8] sm:$0xff]
      %v5560 = vld [vmem:[%s5529 + $0xf0] sm:$0xff]
      %v5561 = vld [vmem:[%s5529 + $0xf8] sm:$0xff]
      %5562 = vmatprep.subr.mxu0 %v5531
      %5563 = vmatpush1.msra.mxu0 %v5530
      %5564 = vmatprep.subr.mxu0 %v5533
      %5565 = vmatpush1.msra.mxu0 %v5532
      %5566 = vmatprep.subr.mxu0 %v5535
      %5567 = vmatpush1.msra.mxu0 %v5534
      %5568 = vmatprep.subr.mxu0 %v5537
      %5569 = vmatpush1.msra.mxu0 %v5536
      %5570 = vmatprep.subr.mxu0 %v5539
      %5571 = vmatpush1.msra.mxu0 %v5538
      %5572 = vmatprep.subr.mxu0 %v5541
      %5573 = vmatpush1.msra.mxu0 %v5540
      %5574 = vmatprep.subr.mxu0 %v5543
      %5575 = vmatpush1.msra.mxu0 %v5542
      %5576 = vmatprep.subr.mxu0 %v5545
      %5577 = vmatpush1.msra.mxu0 %v5544
      %5578 = vmatprep.subr.mxu0 %v5547
      %5579 = vmatpush1.msra.mxu0 %v5546
      %5580 = vmatprep.subr.mxu0 %v5549
      %5581 = vmatpush1.msra.mxu0 %v5548
      %5582 = vmatprep.subr.mxu0 %v5551
      %5583 = vmatpush1.msra.mxu0 %v5550
      %5584 = vmatprep.subr.mxu0 %v5553
      %5585 = vmatpush1.msra.mxu0 %v5552
      %5586 = vmatprep.subr.mxu0 %v5555
      %5587 = vmatpush1.msra.mxu0 %v5554
      %5588 = vmatprep.subr.mxu0 %v5557
      %5589 = vmatpush1.msra.mxu0 %v5556
      %5590 = vmatprep.subr.mxu0 %v5559
      %5591 = vmatpush1.msra.mxu0 %v5558
      %5592 = vmatprep.subr.mxu0 %v5561
      %5593 = vmatpush1.msra.mxu0 %v5560
      %5594 = vmatprep.subr.mxu0 0.0
      %5595 = vmatpush1.msra.mxu0 0.0
      %5596 = vmatprep.subr.mxu0 0.0
      %5597 = vmatpush1.msra.mxu0 0.0
      %5598 = vmatprep.subr.mxu0 0.0
      %5599 = vmatpush1.msra.mxu0 0.0
      %5600 = vmatprep.subr.mxu0 0.0
      %5601 = vmatpush1.msra.mxu0 0.0
      %5602 = vmatprep.subr.mxu0 0.0
      %5603 = vmatpush1.msra.mxu0 0.0
      %5604 = vmatprep.subr.mxu0 0.0
      %5605 = vmatpush1.msra.mxu0 0.0
      %5606 = vmatprep.subr.mxu0 0.0
      %5607 = vmatpush1.msra.mxu0 0.0
      %5608 = vmatprep.subr.mxu0 0.0
      %5609 = vmatpush1.msra.mxu0 0.0
      %5610 = vmatprep.subr.mxu0 0.0
      %5611 = vmatpush1.msra.mxu0 0.0
      %5612 = vmatprep.subr.mxu0 0.0
      %5613 = vmatpush1.msra.mxu0 0.0
      %5614 = vmatprep.subr.mxu0 0.0
      %5615 = vmatpush1.msra.mxu0 0.0
      %5616 = vmatprep.subr.mxu0 0.0
      %5617 = vmatpush1.msra.mxu0 0.0
      %5618 = vmatprep.subr.mxu0 0.0
      %5619 = vmatpush1.msra.mxu0 0.0
      %5620 = vmatprep.subr.mxu0 0.0
      %5621 = vmatpush1.msra.mxu0 0.0
      %5622 = vmatprep.subr.mxu0 0.0
      %5623 = vmatpush1.msra.mxu0 0.0
      %5624 = vmatprep.subr.mxu0 0.0
      %5625 = vmatpush1.msra.mxu0 0.0
      %5626 = vmatprep.mubr.f32.mxu0 0.0
      %5627 = vmatmul.mubr.f32.gmra.mrb[0].mxu0 %v5521
      %v5628 = vpop.f32.mrb[0].mxu0
      %v5629 = vadd.f32 0.0, %v5628
      %v5630 = vpop.f32.mrb[0].mxu0
      %v5631 = vadd.f32 0.0, %v5630
      %5632 = vmatprep.mubr.f32.mxu0 0.0
      %5633 = vmatmul.mubr.f32.gmra.mrb[0].mxu0 %v5522
      %v5634 = vpop.f32.mrb[0].mxu0
      %v5635 = vadd.f32 0.0, %v5634
      %v5636 = vpop.f32.mrb[0].mxu0
      %v5637 = vadd.f32 0.0, %v5636
      %5638 = vmatprep.mubr.f32.mxu0 0.0
      %5639 = vmatmul.mubr.f32.gmra.mrb[0].mxu0 %v5523
      %v5640 = vpop.f32.mrb[0].mxu0
      %v5641 = vadd.f32 0.0, %v5640
      %v5642 = vpop.f32.mrb[0].mxu0
      %v5643 = vadd.f32 0.0, %v5642
      %5644 = vmatprep.mubr.f32.mxu0 0.0
      %5645 = vmatmul.mubr.f32.gmra.mrb[0].mxu0 %v5524
      %v5646 = vpop.f32.mrb[0].mxu0
      %v5647 = vadd.f32 0.0, %v5646
      %v5648 = vpop.f32.mrb[0].mxu0
      %v5649 = vadd.f32 0.0, %v5648
      %5650 = vmatprep.mubr.f32.mxu0 0.0
      %5651 = vmatmul.mubr.f32.gmra.mrb[0].mxu0 %v5525
      %v5652 = vpop.f32.mrb[0].mxu0
      %v5653 = vadd.f32 0.0, %v5652
      %v5654 = vpop.f32.mrb[0].mxu0
      %v5655 = vadd.f32 0.0, %v5654
      %5656 = vmatprep.mubr.f32.mxu0 0.0
      %5657 = vmatmul.mubr.f32.gmra.mrb[0].mxu0 %v5526
      %v5658 = vpop.f32.mrb[0].mxu0
      %v5659 = vadd.f32 0.0, %v5658
      %v5660 = vpop.f32.mrb[0].mxu0
      %v5661 = vadd.f32 0.0, %v5660
      %5662 = vmatprep.mubr.f32.mxu0 0.0
      %5663 = vmatmul.mubr.f32.gmra.mrb[0].mxu0 %v5527
      %v5664 = vpop.f32.mrb[0].mxu0
      %v5665 = vadd.f32 0.0, %v5664
      %v5666 = vpop.f32.mrb[0].mxu0
      %v5667 = vadd.f32 0.0, %v5666
      %5668 = vmatprep.mubr.f32.mxu0 0.0
      %5669 = vmatmul.mubr.f32.gmra.mrb[0].mxu0 %v5528
      %v5670 = vpop.f32.mrb[0].mxu0
      %v5671 = vadd.f32 0.0, %v5670
      %v5672 = vpop.f32.mrb[0].mxu0
      %v5673 = vadd.f32 0.0, %v5672
      %5674 = vdwg.mxu0
      %v5675 = vadd.f32 %v5505, %v5629
      %v5676 = vadd.f32 %v5506, %v5631
      %v5677 = vadd.f32 %v5507, %v5635
      %v5678 = vadd.f32 %v5508, %v5637
      %v5679 = vadd.f32 %v5509, %v5641
      %v5680 = vadd.f32 %v5510, %v5643
      %v5681 = vadd.f32 %v5511, %v5647
      %v5682 = vadd.f32 %v5512, %v5649
      %v5683 = vadd.f32 %v5513, %v5653
      %v5684 = vadd.f32 %v5514, %v5655
      %v5685 = vadd.f32 %v5515, %v5659
      %v5686 = vadd.f32 %v5516, %v5661
      %v5687 = vadd.f32 %v5517, %v5665
      %v5688 = vadd.f32 %v5518, %v5667
      %v5689 = vadd.f32 %v5519, %v5671
      %v5690 = vadd.f32 %v5520, %v5673
      %s5691 = scalar_lea.vmem [#allocation4], 32
      %v5692 = vld [vmem:[%s5691] sm:$0xff]
      %v5693 = vld [vmem:[%s5691 + $0x10] sm:$0xff]
      %v5694 = vld [vmem:[%s5691 + $0x20] sm:$0xff]
      %v5695 = vld [vmem:[%s5691 + $0x30] sm:$0xff]
      %v5696 = vld [vmem:[%s5691 + $0x40] sm:$0xff]
      %v5697 = vld [vmem:[%s5691 + $0x50] sm:$0xff]
      %v5698 = vld [vmem:[%s5691 + $0x60] sm:$0xff]
      %v5699 = vld [vmem:[%s5691 + $0x70] sm:$0xff]
      %s5700 = scalar_lea.vmem %s5, 1536
      %v5701 = vld [vmem:[%s5700] sm:$0xff]
      %v5702 = vld [vmem:[%s5700 + $0x8] sm:$0xff]
      %v5703 = vld [vmem:[%s5700 + $0x10] sm:$0xff]
      %v5704 = vld [vmem:[%s5700 + $0x18] sm:$0xff]
      %v5705 = vld [vmem:[%s5700 + $0x20] sm:$0xff]
      %v5706 = vld [vmem:[%s5700 + $0x28] sm:$0xff]
      %v5707 = vld [vmem:[%s5700 + $0x30] sm:$0xff]
      %v5708 = vld [vmem:[%s5700 + $0x38] sm:$0xff]
      %v5709 = vld [vmem:[%s5700 + $0x40] sm:$0xff]
      %v5710 = vld [vmem:[%s5700 + $0x48] sm:$0xff]
      %v5711 = vld [vmem:[%s5700 + $0x50] sm:$0xff]
      %v5712 = vld [vmem:[%s5700 + $0x58] sm:$0xff]
      %v5713 = vld [vmem:[%s5700 + $0x60] sm:$0xff]
      %v5714 = vld [vmem:[%s5700 + $0x68] sm:$0xff]
      %v5715 = vld [vmem:[%s5700 + $0x70] sm:$0xff]
      %v5716 = vld [vmem:[%s5700 + $0x78] sm:$0xff]
      %v5717 = vld [vmem:[%s5700 + $0x80] sm:$0xff]
      %v5718 = vld [vmem:[%s5700 + $0x88] sm:$0xff]
      %v5719 = vld [vmem:[%s5700 + $0x90] sm:$0xff]
      %v5720 = vld [vmem:[%s5700 + $0x98] sm:$0xff]
      %v5721 = vld [vmem:[%s5700 + $0xa0] sm:$0xff]
      %v5722 = vld [vmem:[%s5700 + $0xa8] sm:$0xff]
      %v5723 = vld [vmem:[%s5700 + $0xb0] sm:$0xff]
      %v5724 = vld [vmem:[%s5700 + $0xb8] sm:$0xff]
      %v5725 = vld [vmem:[%s5700 + $0xc0] sm:$0xff]
      %v5726 = vld [vmem:[%s5700 + $0xc8] sm:$0xff]
      %v5727 = vld [vmem:[%s5700 + $0xd0] sm:$0xff]
      %v5728 = vld [vmem:[%s5700 + $0xd8] sm:$0xff]
      %v5729 = vld [vmem:[%s5700 + $0xe0] sm:$0xff]
      %v5730 = vld [vmem:[%s5700 + $0xe8] sm:$0xff]
      %v5731 = vld [vmem:[%s5700 + $0xf0] sm:$0xff]
      %v5732 = vld [vmem:[%s5700 + $0xf8] sm:$0xff]
      %5733 = vmatprep.subr.mxu0 %v5702
      %5734 = vmatpush1.msra.mxu0 %v5701
      %5735 = vmatprep.subr.mxu0 %v5704
      %5736 = vmatpush1.msra.mxu0 %v5703
      %5737 = vmatprep.subr.mxu0 %v5706
      %5738 = vmatpush1.msra.mxu0 %v5705
      %5739 = vmatprep.subr.mxu0 %v5708
      %5740 = vmatpush1.msra.mxu0 %v5707
      %5741 = vmatprep.subr.mxu0 %v5710
      %5742 = vmatpush1.msra.mxu0 %v5709
      %5743 = vmatprep.subr.mxu0 %v5712
      %5744 = vmatpush1.msra.mxu0 %v5711
      %5745 = vmatprep.subr.mxu0 %v5714
      %5746 = vmatpush1.msra.mxu0 %v5713
      %5747 = vmatprep.subr.mxu0 %v5716
      %5748 = vmatpush1.msra.mxu0 %v5715
      %5749 = vmatprep.subr.mxu0 %v5718
      %5750 = vmatpush1.msra.mxu0 %v5717
      %5751 = vmatprep.subr.mxu0 %v5720
      %5752 = vmatpush1.msra.mxu0 %v5719
      %5753 = vmatprep.subr.mxu0 %v5722
      %5754 = vmatpush1.msra.mxu0 %v5721
      %5755 = vmatprep.subr.mxu0 %v5724
      %5756 = vmatpush1.msra.mxu0 %v5723
      %5757 = vmatprep.subr.mxu0 %v5726
      %5758 = vmatpush1.msra.mxu0 %v5725
      %5759 = vmatprep.subr.mxu0 %v5728
      %5760 = vmatpush1.msra.mxu0 %v5727
      %5761 = vmatprep.subr.mxu0 %v5730
      %5762 = vmatpush1.msra.mxu0 %v5729
      %5763 = vmatprep.subr.mxu0 %v5732
      %5764 = vmatpush1.msra.mxu0 %v5731
      %5765 = vmatprep.subr.mxu0 0.0
      %5766 = vmatpush1.msra.mxu0 0.0
      %5767 = vmatprep.subr.mxu0 0.0
      %5768 = vmatpush1.msra.mxu0 0.0
      %5769 = vmatprep.subr.mxu0 0.0
      %5770 = vmatpush1.msra.mxu0 0.0
      %5771 = vmatprep.subr.mxu0 0.0
      %5772 = vmatpush1.msra.mxu0 0.0
      %5773 = vmatprep.subr.mxu0 0.0
      %5774 = vmatpush1.msra.mxu0 0.0
      %5775 = vmatprep.subr.mxu0 0.0
      %5776 = vmatpush1.msra.mxu0 0.0
      %5777 = vmatprep.subr.mxu0 0.0
      %5778 = vmatpush1.msra.mxu0 0.0
      %5779 = vmatprep.subr.mxu0 0.0
      %5780 = vmatpush1.msra.mxu0 0.0
      %5781 = vmatprep.subr.mxu0 0.0
      %5782 = vmatpush1.msra.mxu0 0.0
      %5783 = vmatprep.subr.mxu0 0.0
      %5784 = vmatpush1.msra.mxu0 0.0
      %5785 = vmatprep.subr.mxu0 0.0
      %5786 = vmatpush1.msra.mxu0 0.0
      %5787 = vmatprep.subr.mxu0 0.0
      %5788 = vmatpush1.msra.mxu0 0.0
      %5789 = vmatprep.subr.mxu0 0.0
      %5790 = vmatpush1.msra.mxu0 0.0
      %5791 = vmatprep.subr.mxu0 0.0
      %5792 = vmatpush1.msra.mxu0 0.0
      %5793 = vmatprep.subr.mxu0 0.0
      %5794 = vmatpush1.msra.mxu0 0.0
      %5795 = vmatprep.subr.mxu0 0.0
      %5796 = vmatpush1.msra.mxu0 0.0
      %5797 = vmatprep.mubr.f32.mxu0 0.0
      %5798 = vmatmul.mubr.f32.gmra.mrb[0].mxu0 %v5692
      %v5799 = vpop.f32.mrb[0].mxu0
      %v5800 = vadd.f32 0.0, %v5799
      %v5801 = vpop.f32.mrb[0].mxu0
      %v5802 = vadd.f32 0.0, %v5801
      %5803 = vmatprep.mubr.f32.mxu0 0.0
      %5804 = vmatmul.mubr.f32.gmra.mrb[0].mxu0 %v5693
      %v5805 = vpop.f32.mrb[0].mxu0
      %v5806 = vadd.f32 0.0, %v5805
      %v5807 = vpop.f32.mrb[0].mxu0
      %v5808 = vadd.f32 0.0, %v5807
      %5809 = vmatprep.mubr.f32.mxu0 0.0
      %5810 = vmatmul.mubr.f32.gmra.mrb[0].mxu0 %v5694
      %v5811 = vpop.f32.mrb[0].mxu0
      %v5812 = vadd.f32 0.0, %v5811
      %v5813 = vpop.f32.mrb[0].mxu0
      %v5814 = vadd.f32 0.0, %v5813
      %5815 = vmatprep.mubr.f32.mxu0 0.0
      %5816 = vmatmul.mubr.f32.gmra.mrb[0].mxu0 %v5695
      %v5817 = vpop.f32.mrb[0].mxu0
      %v5818 = vadd.f32 0.0, %v5817
      %v5819 = vpop.f32.mrb[0].mxu0
      %v5820 = vadd.f32 0.0, %v5819
      %5821 = vmatprep.mubr.f32.mxu0 0.0
      %5822 = vmatmul.mubr.f32.gmra.mrb[0].mxu0 %v5696
      %v5823 = vpop.f32.mrb[0].mxu0
      %v5824 = vadd.f32 0.0, %v5823
      %v5825 = vpop.f32.mrb[0].mxu0
      %v5826 = vadd.f32 0.0, %v5825
      %5827 = vmatprep.mubr.f32.mxu0 0.0
      %5828 = vmatmul.mubr.f32.gmra.mrb[0].mxu0 %v5697
      %v5829 = vpop.f32.mrb[0].mxu0
      %v5830 = vadd.f32 0.0, %v5829
      %v5831 = vpop.f32.mrb[0].mxu0
      %v5832 = vadd.f32 0.0, %v5831
      %5833 = vmatprep.mubr.f32.mxu0 0.0
      %5834 = vmatmul.mubr.f32.gmra.mrb[0].mxu0 %v5698
      %v5835 = vpop.f32.mrb[0].mxu0
      %v5836 = vadd.f32 0.0, %v5835
      %v5837 = vpop.f32.mrb[0].mxu0
      %v5838 = vadd.f32 0.0, %v5837
      %5839 = vmatprep.mubr.f32.mxu0 0.0
      %5840 = vmatmul.mubr.f32.gmra.mrb[0].mxu0 %v5699
      %v5841 = vpop.f32.mrb[0].mxu0
      %v5842 = vadd.f32 0.0, %v5841
      %v5843 = vpop.f32.mrb[0].mxu0
      %v5844 = vadd.f32 0.0, %v5843
      %5845 = vdwg.mxu0
      %v5846 = vadd.f32 %v5675, %v5800
      %v5847 = vadd.f32 %v5676, %v5802
      %v5848 = vadd.f32 %v5677, %v5806
      %v5849 = vadd.f32 %v5678, %v5808
      %v5850 = vadd.f32 %v5679, %v5812
      %v5851 = vadd.f32 %v5680, %v5814
      %v5852 = vadd.f32 %v5681, %v5818
      %v5853 = vadd.f32 %v5682, %v5820
      %v5854 = vadd.f32 %v5683, %v5824
      %v5855 = vadd.f32 %v5684, %v5826
      %v5856 = vadd.f32 %v5685, %v5830
      %v5857 = vadd.f32 %v5686, %v5832
      %v5858 = vadd.f32 %v5687, %v5836
      %v5859 = vadd.f32 %v5688, %v5838
      %v5860 = vadd.f32 %v5689, %v5842
      %v5861 = vadd.f32 %v5690, %v5844
      %v5862 = vld [vmem:[%s5691 + $0x1] sm:$0xff]
      %v5863 = vld [vmem:[%s5691 + $0x11] sm:$0xff]
      %v5864 = vld [vmem:[%s5691 + $0x21] sm:$0xff]
      %v5865 = vld [vmem:[%s5691 + $0x31] sm:$0xff]
      %v5866 = vld [vmem:[%s5691 + $0x41] sm:$0xff]
      %v5867 = vld [vmem:[%s5691 + $0x51] sm:$0xff]
      %v5868 = vld [vmem:[%s5691 + $0x61] sm:$0xff]
      %v5869 = vld [vmem:[%s5691 + $0x71] sm:$0xff]
      %s5870 = scalar_lea.vmem %s5, 1792
      %v5871 = vld [vmem:[%s5870] sm:$0xff]
      %v5872 = vld [vmem:[%s5870 + $0x8] sm:$0xff]
      %v5873 = vld [vmem:[%s5870 + $0x10] sm:$0xff]
      %v5874 = vld [vmem:[%s5870 + $0x18] sm:$0xff]
      %v5875 = vld [vmem:[%s5870 + $0x20] sm:$0xff]
      %v5876 = vld [vmem:[%s5870 + $0x28] sm:$0xff]
      %v5877 = vld [vmem:[%s5870 + $0x30] sm:$0xff]
      %v5878 = vld [vmem:[%s5870 + $0x38] sm:$0xff]
      %v5879 = vld [vmem:[%s5870 + $0x40] sm:$0xff]
      %v5880 = vld [vmem:[%s5870 + $0x48] sm:$0xff]
      %v5881 = vld [vmem:[%s5870 + $0x50] sm:$0xff]
      %v5882 = vld [vmem:[%s5870 + $0x58] sm:$0xff]
      %v5883 = vld [vmem:[%s5870 + $0x60] sm:$0xff]
      %v5884 = vld [vmem:[%s5870 + $0x68] sm:$0xff]
      %v5885 = vld [vmem:[%s5870 + $0x70] sm:$0xff]
      %v5886 = vld [vmem:[%s5870 + $0x78] sm:$0xff]
      %v5887 = vld [vmem:[%s5870 + $0x80] sm:$0xff]
      %v5888 = vld [vmem:[%s5870 + $0x88] sm:$0xff]
      %v5889 = vld [vmem:[%s5870 + $0x90] sm:$0xff]
      %v5890 = vld [vmem:[%s5870 + $0x98] sm:$0xff]
      %v5891 = vld [vmem:[%s5870 + $0xa0] sm:$0xff]
      %v5892 = vld [vmem:[%s5870 + $0xa8] sm:$0xff]
      %v5893 = vld [vmem:[%s5870 + $0xb0] sm:$0xff]
      %v5894 = vld [vmem:[%s5870 + $0xb8] sm:$0xff]
      %v5895 = vld [vmem:[%s5870 + $0xc0] sm:$0xff]
      %v5896 = vld [vmem:[%s5870 + $0xc8] sm:$0xff]
      %v5897 = vld [vmem:[%s5870 + $0xd0] sm:$0xff]
      %v5898 = vld [vmem:[%s5870 + $0xd8] sm:$0xff]
      %v5899 = vld [vmem:[%s5870 + $0xe0] sm:$0xff]
      %v5900 = vld [vmem:[%s5870 + $0xe8] sm:$0xff]
      %v5901 = vld [vmem:[%s5870 + $0xf0] sm:$0xff]
      %v5902 = vld [vmem:[%s5870 + $0xf8] sm:$0xff]
      %5903 = vmatprep.subr.mxu0 %v5872
      %5904 = vmatpush1.msra.mxu0 %v5871
      %5905 = vmatprep.subr.mxu0 %v5874
      %5906 = vmatpush1.msra.mxu0 %v5873
      %5907 = vmatprep.subr.mxu0 %v5876
      %5908 = vmatpush1.msra.mxu0 %v5875
      %5909 = vmatprep.subr.mxu0 %v5878
      %5910 = vmatpush1.msra.mxu0 %v5877
      %5911 = vmatprep.subr.mxu0 %v5880
      %5912 = vmatpush1.msra.mxu0 %v5879
      %5913 = vmatprep.subr.mxu0 %v5882
      %5914 = vmatpush1.msra.mxu0 %v5881
      %5915 = vmatprep.subr.mxu0 %v5884
      %5916 = vmatpush1.msra.mxu0 %v5883
      %5917 = vmatprep.subr.mxu0 %v5886
      %5918 = vmatpush1.msra.mxu0 %v5885
      %5919 = vmatprep.subr.mxu0 %v5888
      %5920 = vmatpush1.msra.mxu0 %v5887
      %5921 = vmatprep.subr.mxu0 %v5890
      %5922 = vmatpush1.msra.mxu0 %v5889
      %5923 = vmatprep.subr.mxu0 %v5892
      %5924 = vmatpush1.msra.mxu0 %v5891
      %5925 = vmatprep.subr.mxu0 %v5894
      %5926 = vmatpush1.msra.mxu0 %v5893
      %5927 = vmatprep.subr.mxu0 %v5896
      %5928 = vmatpush1.msra.mxu0 %v5895
      %5929 = vmatprep.subr.mxu0 %v5898
      %5930 = vmatpush1.msra.mxu0 %v5897
      %5931 = vmatprep.subr.mxu0 %v5900
      %5932 = vmatpush1.msra.mxu0 %v5899
      %5933 = vmatprep.subr.mxu0 %v5902
      %5934 = vmatpush1.msra.mxu0 %v5901
      %5935 = vmatprep.subr.mxu0 0.0
      %5936 = vmatpush1.msra.mxu0 0.0
      %5937 = vmatprep.subr.mxu0 0.0
      %5938 = vmatpush1.msra.mxu0 0.0
      %5939 = vmatprep.subr.mxu0 0.0
      %5940 = vmatpush1.msra.mxu0 0.0
      %5941 = vmatprep.subr.mxu0 0.0
      %5942 = vmatpush1.msra.mxu0 0.0
      %5943 = vmatprep.subr.mxu0 0.0
      %5944 = vmatpush1.msra.mxu0 0.0
      %5945 = vmatprep.subr.mxu0 0.0
      %5946 = vmatpush1.msra.mxu0 0.0
      %5947 = vmatprep.subr.mxu0 0.0
      %5948 = vmatpush1.msra.mxu0 0.0
      %5949 = vmatprep.subr.mxu0 0.0
      %5950 = vmatpush1.msra.mxu0 0.0
      %5951 = vmatprep.subr.mxu0 0.0
      %5952 = vmatpush1.msra.mxu0 0.0
      %5953 = vmatprep.subr.mxu0 0.0
      %5954 = vmatpush1.msra.mxu0 0.0
      %5955 = vmatprep.subr.mxu0 0.0
      %5956 = vmatpush1.msra.mxu0 0.0
      %5957 = vmatprep.subr.mxu0 0.0
      %5958 = vmatpush1.msra.mxu0 0.0
      %5959 = vmatprep.subr.mxu0 0.0
      %5960 = vmatpush1.msra.mxu0 0.0
      %5961 = vmatprep.subr.mxu0 0.0
      %5962 = vmatpush1.msra.mxu0 0.0
      %5963 = vmatprep.subr.mxu0 0.0
      %5964 = vmatpush1.msra.mxu0 0.0
      %5965 = vmatprep.subr.mxu0 0.0
      %5966 = vmatpush1.msra.mxu0 0.0
      %5967 = vmatprep.mubr.f32.mxu0 0.0
      %5968 = vmatmul.mubr.f32.gmra.mrb[0].mxu0 %v5862
      %v5969 = vpop.f32.mrb[0].mxu0
      %v5970 = vadd.f32 0.0, %v5969
      %v5971 = vpop.f32.mrb[0].mxu0
      %v5972 = vadd.f32 0.0, %v5971
      %5973 = vmatprep.mubr.f32.mxu0 0.0
      %5974 = vmatmul.mubr.f32.gmra.mrb[0].mxu0 %v5863
      %v5975 = vpop.f32.mrb[0].mxu0
      %v5976 = vadd.f32 0.0, %v5975
      %v5977 = vpop.f32.mrb[0].mxu0
      %v5978 = vadd.f32 0.0, %v5977
      %5979 = vmatprep.mubr.f32.mxu0 0.0
      %5980 = vmatmul.mubr.f32.gmra.mrb[0].mxu0 %v5864
      %v5981 = vpop.f32.mrb[0].mxu0
      %v5982 = vadd.f32 0.0, %v5981
      %v5983 = vpop.f32.mrb[0].mxu0
      %v5984 = vadd.f32 0.0, %v5983
      %5985 = vmatprep.mubr.f32.mxu0 0.0
      %5986 = vmatmul.mubr.f32.gmra.mrb[0].mxu0 %v5865
      %v5987 = vpop.f32.mrb[0].mxu0
      %v5988 = vadd.f32 0.0, %v5987
      %v5989 = vpop.f32.mrb[0].mxu0
      %v5990 = vadd.f32 0.0, %v5989
      %5991 = vmatprep.mubr.f32.mxu0 0.0
      %5992 = vmatmul.mubr.f32.gmra.mrb[0].mxu0 %v5866
      %v5993 = vpop.f32.mrb[0].mxu0
      %v5994 = vadd.f32 0.0, %v5993
      %v5995 = vpop.f32.mrb[0].mxu0
      %v5996 = vadd.f32 0.0, %v5995
      %5997 = vmatprep.mubr.f32.mxu0 0.0
      %5998 = vmatmul.mubr.f32.gmra.mrb[0].mxu0 %v5867
      %v5999 = vpop.f32.mrb[0].mxu0
      %v6000 = vadd.f32 0.0, %v5999
      %v6001 = vpop.f32.mrb[0].mxu0
      %v6002 = vadd.f32 0.0, %v6001
      %6003 = vmatprep.mubr.f32.mxu0 0.0
      %6004 = vmatmul.mubr.f32.gmra.mrb[0].mxu0 %v5868
      %v6005 = vpop.f32.mrb[0].mxu0
      %v6006 = vadd.f32 0.0, %v6005
      %v6007 = vpop.f32.mrb[0].mxu0
      %v6008 = vadd.f32 0.0, %v6007
      %6009 = vmatprep.mubr.f32.mxu0 0.0
      %6010 = vmatmul.mubr.f32.gmra.mrb[0].mxu0 %v5869
      %v6011 = vpop.f32.mrb[0].mxu0
      %v6012 = vadd.f32 0.0, %v6011
      %v6013 = vpop.f32.mrb[0].mxu0
      %v6014 = vadd.f32 0.0, %v6013
      %6015 = vdwg.mxu0
      %v6016 = vadd.f32 %v5846, %v5970
      %v6017 = vadd.f32 %v5847, %v5972
      %v6018 = vadd.f32 %v5848, %v5976
      %v6019 = vadd.f32 %v5849, %v5978
      %v6020 = vadd.f32 %v5850, %v5982
      %v6021 = vadd.f32 %v5851, %v5984
      %v6022 = vadd.f32 %v5852, %v5988
      %v6023 = vadd.f32 %v5853, %v5990
      %v6024 = vadd.f32 %v5854, %v5994
      %v6025 = vadd.f32 %v5855, %v5996
      %v6026 = vadd.f32 %v5856, %v6000
      %v6027 = vadd.f32 %v5857, %v6002
      %v6028 = vadd.f32 %v5858, %v6006
      %v6029 = vadd.f32 %v5859, %v6008
      %v6030 = vadd.f32 %v5860, %v6012
      %v6031 = vadd.f32 %v5861, %v6014
      %v6032 = vld [vmem:[%s5691 + $0x2] sm:$0xff]
      %v6033 = vld [vmem:[%s5691 + $0x12] sm:$0xff]
      %v6034 = vld [vmem:[%s5691 + $0x22] sm:$0xff]
      %v6035 = vld [vmem:[%s5691 + $0x32] sm:$0xff]
      %v6036 = vld [vmem:[%s5691 + $0x42] sm:$0xff]
      %v6037 = vld [vmem:[%s5691 + $0x52] sm:$0xff]
      %v6038 = vld [vmem:[%s5691 + $0x62] sm:$0xff]
      %v6039 = vld [vmem:[%s5691 + $0x72] sm:$0xff]
      %s6040 = scalar_lea.vmem %s5, 2048
      %v6041 = vld [vmem:[%s6040] sm:$0xff]
      %v6042 = vld [vmem:[%s6040 + $0x8] sm:$0xff]
      %v6043 = vld [vmem:[%s6040 + $0x10] sm:$0xff]
      %v6044 = vld [vmem:[%s6040 + $0x18] sm:$0xff]
      %v6045 = vld [vmem:[%s6040 + $0x20] sm:$0xff]
      %v6046 = vld [vmem:[%s6040 + $0x28] sm:$0xff]
      %v6047 = vld [vmem:[%s6040 + $0x30] sm:$0xff]
      %v6048 = vld [vmem:[%s6040 + $0x38] sm:$0xff]
      %v6049 = vld [vmem:[%s6040 + $0x40] sm:$0xff]
      %v6050 = vld [vmem:[%s6040 + $0x48] sm:$0xff]
      %v6051 = vld [vmem:[%s6040 + $0x50] sm:$0xff]
      %v6052 = vld [vmem:[%s6040 + $0x58] sm:$0xff]
      %v6053 = vld [vmem:[%s6040 + $0x60] sm:$0xff]
      %v6054 = vld [vmem:[%s6040 + $0x68] sm:$0xff]
      %v6055 = vld [vmem:[%s6040 + $0x70] sm:$0xff]
      %v6056 = vld [vmem:[%s6040 + $0x78] sm:$0xff]
      %v6057 = vld [vmem:[%s6040 + $0x80] sm:$0xff]
      %v6058 = vld [vmem:[%s6040 + $0x88] sm:$0xff]
      %v6059 = vld [vmem:[%s6040 + $0x90] sm:$0xff]
      %v6060 = vld [vmem:[%s6040 + $0x98] sm:$0xff]
      %v6061 = vld [vmem:[%s6040 + $0xa0] sm:$0xff]
      %v6062 = vld [vmem:[%s6040 + $0xa8] sm:$0xff]
      %v6063 = vld [vmem:[%s6040 + $0xb0] sm:$0xff]
      %v6064 = vld [vmem:[%s6040 + $0xb8] sm:$0xff]
      %v6065 = vld [vmem:[%s6040 + $0xc0] sm:$0xff]
      %v6066 = vld [vmem:[%s6040 + $0xc8] sm:$0xff]
      %v6067 = vld [vmem:[%s6040 + $0xd0] sm:$0xff]
      %v6068 = vld [vmem:[%s6040 + $0xd8] sm:$0xff]
      %v6069 = vld [vmem:[%s6040 + $0xe0] sm:$0xff]
      %v6070 = vld [vmem:[%s6040 + $0xe8] sm:$0xff]
      %v6071 = vld [vmem:[%s6040 + $0xf0] sm:$0xff]
      %v6072 = vld [vmem:[%s6040 + $0xf8] sm:$0xff]
      %6073 = vmatprep.subr.mxu0 %v6042
      %6074 = vmatpush1.msra.mxu0 %v6041
      %6075 = vmatprep.subr.mxu0 %v6044
      %6076 = vmatpush1.msra.mxu0 %v6043
      %6077 = vmatprep.subr.mxu0 %v6046
      %6078 = vmatpush1.msra.mxu0 %v6045
      %6079 = vmatprep.subr.mxu0 %v6048
      %6080 = vmatpush1.msra.mxu0 %v6047
      %6081 = vmatprep.subr.mxu0 %v6050
      %6082 = vmatpush1.msra.mxu0 %v6049
      %6083 = vmatprep.subr.mxu0 %v6052
      %6084 = vmatpush1.msra.mxu0 %v6051
      %6085 = vmatprep.subr.mxu0 %v6054
      %6086 = vmatpush1.msra.mxu0 %v6053
      %6087 = vmatprep.subr.mxu0 %v6056
      %6088 = vmatpush1.msra.mxu0 %v6055
      %6089 = vmatprep.subr.mxu0 %v6058
      %6090 = vmatpush1.msra.mxu0 %v6057
      %6091 = vmatprep.subr.mxu0 %v6060
      %6092 = vmatpush1.msra.mxu0 %v6059
      %6093 = vmatprep.subr.mxu0 %v6062
      %6094 = vmatpush1.msra.mxu0 %v6061
      %6095 = vmatprep.subr.mxu0 %v6064
      %6096 = vmatpush1.msra.mxu0 %v6063
      %6097 = vmatprep.subr.mxu0 %v6066
      %6098 = vmatpush1.msra.mxu0 %v6065
      %6099 = vmatprep.subr.mxu0 %v6068
      %6100 = vmatpush1.msra.mxu0 %v6067
      %6101 = vmatprep.subr.mxu0 %v6070
      %6102 = vmatpush1.msra.mxu0 %v6069
      %6103 = vmatprep.subr.mxu0 %v6072
      %6104 = vmatpush1.msra.mxu0 %v6071
      %6105 = vmatprep.subr.mxu0 0.0
      %6106 = vmatpush1.msra.mxu0 0.0
      %6107 = vmatprep.subr.mxu0 0.0
      %6108 = vmatpush1.msra.mxu0 0.0
      %6109 = vmatprep.subr.mxu0 0.0
      %6110 = vmatpush1.msra.mxu0 0.0
      %6111 = vmatprep.subr.mxu0 0.0
      %6112 = vmatpush1.msra.mxu0 0.0
      %6113 = vmatprep.subr.mxu0 0.0
      %6114 = vmatpush1.msra.mxu0 0.0
      %6115 = vmatprep.subr.mxu0 0.0
      %6116 = vmatpush1.msra.mxu0 0.0
      %6117 = vmatprep.subr.mxu0 0.0
      %6118 = vmatpush1.msra.mxu0 0.0
      %6119 = vmatprep.subr.mxu0 0.0
      %6120 = vmatpush1.msra.mxu0 0.0
      %6121 = vmatprep.subr.mxu0 0.0
      %6122 = vmatpush1.msra.mxu0 0.0
      %6123 = vmatprep.subr.mxu0 0.0
      %6124 = vmatpush1.msra.mxu0 0.0
      %6125 = vmatprep.subr.mxu0 0.0
      %6126 = vmatpush1.msra.mxu0 0.0
      %6127 = vmatprep.subr.mxu0 0.0
      %6128 = vmatpush1.msra.mxu0 0.0
      %6129 = vmatprep.subr.mxu0 0.0
      %6130 = vmatpush1.msra.mxu0 0.0
      %6131 = vmatprep.subr.mxu0 0.0
      %6132 = vmatpush1.msra.mxu0 0.0
      %6133 = vmatprep.subr.mxu0 0.0
      %6134 = vmatpush1.msra.mxu0 0.0
      %6135 = vmatprep.subr.mxu0 0.0
      %6136 = vmatpush1.msra.mxu0 0.0
      %6137 = vmatprep.mubr.f32.mxu0 0.0
      %6138 = vmatmul.mubr.f32.gmra.mrb[0].mxu0 %v6032
      %v6139 = vpop.f32.mrb[0].mxu0
      %v6140 = vadd.f32 0.0, %v6139
      %v6141 = vpop.f32.mrb[0].mxu0
      %v6142 = vadd.f32 0.0, %v6141
      %6143 = vmatprep.mubr.f32.mxu0 0.0
      %6144 = vmatmul.mubr.f32.gmra.mrb[0].mxu0 %v6033
      %v6145 = vpop.f32.mrb[0].mxu0
      %v6146 = vadd.f32 0.0, %v6145
      %v6147 = vpop.f32.mrb[0].mxu0
      %v6148 = vadd.f32 0.0, %v6147
      %6149 = vmatprep.mubr.f32.mxu0 0.0
      %6150 = vmatmul.mubr.f32.gmra.mrb[0].mxu0 %v6034
      %v6151 = vpop.f32.mrb[0].mxu0
      %v6152 = vadd.f32 0.0, %v6151
      %v6153 = vpop.f32.mrb[0].mxu0
      %v6154 = vadd.f32 0.0, %v6153
      %6155 = vmatprep.mubr.f32.mxu0 0.0
      %6156 = vmatmul.mubr.f32.gmra.mrb[0].mxu0 %v6035
      %v6157 = vpop.f32.mrb[0].mxu0
      %v6158 = vadd.f32 0.0, %v6157
      %v6159 = vpop.f32.mrb[0].mxu0
      %v6160 = vadd.f32 0.0, %v6159
      %6161 = vmatprep.mubr.f32.mxu0 0.0
      %6162 = vmatmul.mubr.f32.gmra.mrb[0].mxu0 %v6036
      %v6163 = vpop.f32.mrb[0].mxu0
      %v6164 = vadd.f32 0.0, %v6163
      %v6165 = vpop.f32.mrb[0].mxu0
      %v6166 = vadd.f32 0.0, %v6165
      %6167 = vmatprep.mubr.f32.mxu0 0.0
      %6168 = vmatmul.mubr.f32.gmra.mrb[0].mxu0 %v6037
      %v6169 = vpop.f32.mrb[0].mxu0
      %v6170 = vadd.f32 0.0, %v6169
      %v6171 = vpop.f32.mrb[0].mxu0
      %v6172 = vadd.f32 0.0, %v6171
      %6173 = vmatprep.mubr.f32.mxu0 0.0
      %6174 = vmatmul.mubr.f32.gmra.mrb[0].mxu0 %v6038
      %v6175 = vpop.f32.mrb[0].mxu0
      %v6176 = vadd.f32 0.0, %v6175
      %v6177 = vpop.f32.mrb[0].mxu0
      %v6178 = vadd.f32 0.0, %v6177
      %6179 = vmatprep.mubr.f32.mxu0 0.0
      %6180 = vmatmul.mubr.f32.gmra.mrb[0].mxu0 %v6039
      %v6181 = vpop.f32.mrb[0].mxu0
      %v6182 = vadd.f32 0.0, %v6181
      %v6183 = vpop.f32.mrb[0].mxu0
      %v6184 = vadd.f32 0.0, %v6183
      %6185 = vdwg.mxu0
      %v6186 = vadd.f32 %v6016, %v6140
      %v6187 = vadd.f32 %v6017, %v6142
      %v6188 = vadd.f32 %v6018, %v6146
      %v6189 = vadd.f32 %v6019, %v6148
      %v6190 = vadd.f32 %v6020, %v6152
      %v6191 = vadd.f32 %v6021, %v6154
      %v6192 = vadd.f32 %v6022, %v6158
      %v6193 = vadd.f32 %v6023, %v6160
      %v6194 = vadd.f32 %v6024, %v6164
      %v6195 = vadd.f32 %v6025, %v6166
      %v6196 = vadd.f32 %v6026, %v6170
      %v6197 = vadd.f32 %v6027, %v6172
      %v6198 = vadd.f32 %v6028, %v6176
      %v6199 = vadd.f32 %v6029, %v6178
      %v6200 = vadd.f32 %v6030, %v6182
      %v6201 = vadd.f32 %v6031, %v6184
      %v6202 = vld [vmem:[%s6] sm:$0x3]
      %v6204 = vlaneseq
      %v6205 = vshrl.u32 %v6204, 7
      %v6206 = vsub.s32 0, %v6205
      %v6207 = vrot.slane %v6202, %v6206
      %v6208 = vlaneseq
      %v6209 = vshrl.u32 %v6208, 7
      %v6210 = vsub.s32 1, %v6209
      %v6211 = vrot.slane %v6202, %v6210
      %v6214 = vadd.f32 %v6186, %v6207
      %v6215 = vadd.f32 %v6187, %v6211
      %v6216 = vadd.f32 %v6188, %v6207
      %v6217 = vadd.f32 %v6189, %v6211
      %v6218 = vadd.f32 %v6190, %v6207
      %v6219 = vadd.f32 %v6191, %v6211
      %v6220 = vadd.f32 %v6192, %v6207
      %v6221 = vadd.f32 %v6193, %v6211
      %v6222 = vadd.f32 %v6194, %v6207
      %v6223 = vadd.f32 %v6195, %v6211
      %v6224 = vadd.f32 %v6196, %v6207
      %v6225 = vadd.f32 %v6197, %v6211
      %v6226 = vadd.f32 %v6198, %v6207
      %v6227 = vadd.f32 %v6199, %v6211
      %v6228 = vadd.f32 %v6200, %v6207
      %v6229 = vadd.f32 %v6201, %v6211
      %v6230 = vmax.f32 %v6214, 0.0
      %v6231 = vmax.f32 %v6215, 0.0
      %v6232 = vmax.f32 %v6216, 0.0
      %v6233 = vmax.f32 %v6217, 0.0
      %v6234 = vmax.f32 %v6218, 0.0
      %v6235 = vmax.f32 %v6219, 0.0
      %v6236 = vmax.f32 %v6220, 0.0
      %v6237 = vmax.f32 %v6221, 0.0
      %v6238 = vmax.f32 %v6222, 0.0
      %v6239 = vmax.f32 %v6223, 0.0
      %v6240 = vmax.f32 %v6224, 0.0
      %v6241 = vmax.f32 %v6225, 0.0
      %v6242 = vmax.f32 %v6226, 0.0
      %v6243 = vmax.f32 %v6227, 0.0
      %v6244 = vmax.f32 %v6228, 0.0
      %v6245 = vmax.f32 %v6229, 0.0
      %v6246 = vld [vmem:[%s7] sm:$0xff]
      %v6247 = vld [vmem:[%s7 + $0x8] sm:$0xff]
      %v6248 = vld [vmem:[%s7 + $0x10] sm:$0xff]
      %v6249 = vld [vmem:[%s7 + $0x18] sm:$0xff]
      %v6250 = vld [vmem:[%s7 + $0x20] sm:$0xff]
      %v6251 = vld [vmem:[%s7 + $0x28] sm:$0xff]
      %v6252 = vld [vmem:[%s7 + $0x30] sm:$0xff]
      %v6253 = vld [vmem:[%s7 + $0x38] sm:$0xff]
      %v6254 = vld [vmem:[%s7 + $0x40] sm:$0xff]
      %v6255 = vld [vmem:[%s7 + $0x48] sm:$0xff]
      %v6256 = vld [vmem:[%s7 + $0x50] sm:$0xff]
      %v6257 = vld [vmem:[%s7 + $0x58] sm:$0xff]
      %v6258 = vld [vmem:[%s7 + $0x60] sm:$0xff]
      %v6259 = vld [vmem:[%s7 + $0x68] sm:$0xff]
      %v6260 = vld [vmem:[%s7 + $0x70] sm:$0xff]
      %v6261 = vld [vmem:[%s7 + $0x78] sm:$0xff]
      %v6262 = vld [vmem:[%s7 + $0x80] sm:$0xff]
      %v6263 = vld [vmem:[%s7 + $0x88] sm:$0xff]
      %v6264 = vld [vmem:[%s7 + $0x90] sm:$0xff]
      %v6265 = vld [vmem:[%s7 + $0x98] sm:$0xff]
      %v6266 = vld [vmem:[%s7 + $0xa0] sm:$0xff]
      %v6267 = vld [vmem:[%s7 + $0xa8] sm:$0xff]
      %v6268 = vld [vmem:[%s7 + $0xb0] sm:$0xff]
      %v6269 = vld [vmem:[%s7 + $0xb8] sm:$0xff]
      %v6270 = vld [vmem:[%s7 + $0xc0] sm:$0xff]
      %v6271 = vld [vmem:[%s7 + $0xc8] sm:$0xff]
      %v6272 = vld [vmem:[%s7 + $0xd0] sm:$0xff]
      %v6273 = vld [vmem:[%s7 + $0xd8] sm:$0xff]
      %v6274 = vld [vmem:[%s7 + $0xe0] sm:$0xff]
      %v6275 = vld [vmem:[%s7 + $0xe8] sm:$0xff]
      %v6276 = vld [vmem:[%s7 + $0xf0] sm:$0xff]
      %v6277 = vld [vmem:[%s7 + $0xf8] sm:$0xff]
      %v6278 = vld [vmem:[%s7 + $0x100] sm:$0xff]
      %v6279 = vld [vmem:[%s7 + $0x108] sm:$0xff]
      %v6280 = vld [vmem:[%s7 + $0x110] sm:$0xff]
      %v6281 = vld [vmem:[%s7 + $0x118] sm:$0xff]
      %v6282 = vld [vmem:[%s7 + $0x120] sm:$0xff]
      %v6283 = vld [vmem:[%s7 + $0x128] sm:$0xff]
      %v6284 = vld [vmem:[%s7 + $0x130] sm:$0xff]
      %v6285 = vld [vmem:[%s7 + $0x138] sm:$0xff]
      %v6286 = vld [vmem:[%s7 + $0x140] sm:$0xff]
      %v6287 = vld [vmem:[%s7 + $0x148] sm:$0xff]
      %v6288 = vld [vmem:[%s7 + $0x150] sm:$0xff]
      %v6289 = vld [vmem:[%s7 + $0x158] sm:$0xff]
      %v6290 = vld [vmem:[%s7 + $0x160] sm:$0xff]
      %v6291 = vld [vmem:[%s7 + $0x168] sm:$0xff]
      %v6292 = vld [vmem:[%s7 + $0x170] sm:$0xff]
      %v6293 = vld [vmem:[%s7 + $0x178] sm:$0xff]
      %v6294 = vld [vmem:[%s7 + $0x180] sm:$0xff]
      %v6295 = vld [vmem:[%s7 + $0x188] sm:$0xff]
      %v6296 = vld [vmem:[%s7 + $0x190] sm:$0xff]
      %v6297 = vld [vmem:[%s7 + $0x198] sm:$0xff]
      %v6298 = vld [vmem:[%s7 + $0x1a0] sm:$0xff]
      %v6299 = vld [vmem:[%s7 + $0x1a8] sm:$0xff]
      %v6300 = vld [vmem:[%s7 + $0x1b0] sm:$0xff]
      %v6301 = vld [vmem:[%s7 + $0x1b8] sm:$0xff]
      %v6302 = vld [vmem:[%s7 + $0x1c0] sm:$0xff]
      %v6303 = vld [vmem:[%s7 + $0x1c8] sm:$0xff]
      %v6304 = vld [vmem:[%s7 + $0x1d0] sm:$0xff]
      %v6305 = vld [vmem:[%s7 + $0x1d8] sm:$0xff]
      %v6306 = vld [vmem:[%s7 + $0x1e0] sm:$0xff]
      %v6307 = vld [vmem:[%s7 + $0x1e8] sm:$0xff]
      %v6308 = vld [vmem:[%s7 + $0x1f0] sm:$0xff]
      %v6309 = vld [vmem:[%s7 + $0x1f8] sm:$0xff]
      %v6310 = vld [vmem:[%s7 + $0x200] sm:$0xff]
      %v6311 = vld [vmem:[%s7 + $0x208] sm:$0xff]
      %v6312 = vld [vmem:[%s7 + $0x210] sm:$0xff]
      %v6313 = vld [vmem:[%s7 + $0x218] sm:$0xff]
      %v6314 = vld [vmem:[%s7 + $0x220] sm:$0xff]
      %v6315 = vld [vmem:[%s7 + $0x228] sm:$0xff]
      %v6316 = vld [vmem:[%s7 + $0x230] sm:$0xff]
      %v6317 = vld [vmem:[%s7 + $0x238] sm:$0xff]
      %v6318 = vld [vmem:[%s7 + $0x240] sm:$0xff]
      %v6319 = vld [vmem:[%s7 + $0x248] sm:$0xff]
      %v6320 = vld [vmem:[%s7 + $0x250] sm:$0xff]
      %v6321 = vld [vmem:[%s7 + $0x258] sm:$0xff]
      %v6322 = vld [vmem:[%s7 + $0x260] sm:$0xff]
      %v6323 = vld [vmem:[%s7 + $0x268] sm:$0xff]
      %v6324 = vld [vmem:[%s7 + $0x270] sm:$0xff]
      %v6325 = vld [vmem:[%s7 + $0x278] sm:$0xff]
      %v6326 = vld [vmem:[%s7 + $0x280] sm:$0xff]
      %v6327 = vld [vmem:[%s7 + $0x288] sm:$0xff]
      %v6328 = vld [vmem:[%s7 + $0x290] sm:$0xff]
      %v6329 = vld [vmem:[%s7 + $0x298] sm:$0xff]
      %v6330 = vld [vmem:[%s7 + $0x2a0] sm:$0xff]
      %v6331 = vld [vmem:[%s7 + $0x2a8] sm:$0xff]
      %v6332 = vld [vmem:[%s7 + $0x2b0] sm:$0xff]
      %v6333 = vld [vmem:[%s7 + $0x2b8] sm:$0xff]
      %v6334 = vld [vmem:[%s7 + $0x2c0] sm:$0xff]
      %v6335 = vld [vmem:[%s7 + $0x2c8] sm:$0xff]
      %v6336 = vld [vmem:[%s7 + $0x2d0] sm:$0xff]
      %v6337 = vld [vmem:[%s7 + $0x2d8] sm:$0xff]
      %v6338 = vld [vmem:[%s7 + $0x2e0] sm:$0xff]
      %v6339 = vld [vmem:[%s7 + $0x2e8] sm:$0xff]
      %v6340 = vld [vmem:[%s7 + $0x2f0] sm:$0xff]
      %v6341 = vld [vmem:[%s7 + $0x2f8] sm:$0xff]
      %v6342 = vld [vmem:[%s7 + $0x300] sm:$0xff]
      %v6343 = vld [vmem:[%s7 + $0x308] sm:$0xff]
      %v6344 = vld [vmem:[%s7 + $0x310] sm:$0xff]
      %v6345 = vld [vmem:[%s7 + $0x318] sm:$0xff]
      %v6346 = vld [vmem:[%s7 + $0x320] sm:$0xff]
      %v6347 = vld [vmem:[%s7 + $0x328] sm:$0xff]
      %v6348 = vld [vmem:[%s7 + $0x330] sm:$0xff]
      %v6349 = vld [vmem:[%s7 + $0x338] sm:$0xff]
      %v6350 = vld [vmem:[%s7 + $0x340] sm:$0xff]
      %v6351 = vld [vmem:[%s7 + $0x348] sm:$0xff]
      %v6352 = vld [vmem:[%s7 + $0x350] sm:$0xff]
      %v6353 = vld [vmem:[%s7 + $0x358] sm:$0xff]
      %v6354 = vld [vmem:[%s7 + $0x360] sm:$0xff]
      %v6355 = vld [vmem:[%s7 + $0x368] sm:$0xff]
      %v6356 = vld [vmem:[%s7 + $0x370] sm:$0xff]
      %v6357 = vld [vmem:[%s7 + $0x378] sm:$0xff]
      %v6358 = vld [vmem:[%s7 + $0x380] sm:$0xff]
      %v6359 = vld [vmem:[%s7 + $0x388] sm:$0xff]
      %v6360 = vld [vmem:[%s7 + $0x390] sm:$0xff]
      %v6361 = vld [vmem:[%s7 + $0x398] sm:$0xff]
      %v6362 = vld [vmem:[%s7 + $0x3a0] sm:$0xff]
      %v6363 = vld [vmem:[%s7 + $0x3a8] sm:$0xff]
      %v6364 = vld [vmem:[%s7 + $0x3b0] sm:$0xff]
      %v6365 = vld [vmem:[%s7 + $0x3b8] sm:$0xff]
      %v6366 = vld [vmem:[%s7 + $0x3c0] sm:$0xff]
      %v6367 = vld [vmem:[%s7 + $0x3c8] sm:$0xff]
      %v6368 = vld [vmem:[%s7 + $0x3d0] sm:$0xff]
      %v6369 = vld [vmem:[%s7 + $0x3d8] sm:$0xff]
      %v6370 = vld [vmem:[%s7 + $0x3e0] sm:$0xff]
      %v6371 = vld [vmem:[%s7 + $0x3e8] sm:$0xff]
      %v6372 = vld [vmem:[%s7 + $0x3f0] sm:$0xff]
      %v6373 = vld [vmem:[%s7 + $0x3f8] sm:$0xff]
      %v6374 = vld [vmem:[%s8] sm:$0xf]
      %v6376 = vlaneseq
      %v6377 = vshrl.u32 %v6376, 7
      %v6378 = vsub.s32 0, %v6377
      %v6379 = vrot.slane %v6374, %v6378
      %v6380 = vlaneseq
      %v6381 = vshrl.u32 %v6380, 7
      %v6382 = vsub.s32 1, %v6381
      %v6383 = vrot.slane %v6374, %v6382
      %v6384 = vlaneseq
      %v6385 = vshrl.u32 %v6384, 7
      %v6386 = vsub.s32 2, %v6385
      %v6387 = vrot.slane %v6374, %v6386
      %v6388 = vlaneseq
      %v6389 = vshrl.u32 %v6388, 7
      %v6390 = vsub.s32 3, %v6389
      %v6391 = vrot.slane %v6374, %v6390
      %6396 = vmatprep.subr.mxu0 %v6247
      %6397 = vmatpush1.msra.mxu0 %v6246
      %6398 = vmatprep.subr.mxu0 %v6251
      %6399 = vmatpush1.msra.mxu0 %v6250
      %6400 = vmatprep.subr.mxu0 %v6255
      %6401 = vmatpush1.msra.mxu0 %v6254
      %6402 = vmatprep.subr.mxu0 %v6259
      %6403 = vmatpush1.msra.mxu0 %v6258
      %6404 = vmatprep.subr.mxu0 %v6263
      %6405 = vmatpush1.msra.mxu0 %v6262
      %6406 = vmatprep.subr.mxu0 %v6267
      %6407 = vmatpush1.msra.mxu0 %v6266
      %6408 = vmatprep.subr.mxu0 %v6271
      %6409 = vmatpush1.msra.mxu0 %v6270
      %6410 = vmatprep.subr.mxu0 %v6275
      %6411 = vmatpush1.msra.mxu0 %v6274
      %6412 = vmatprep.subr.mxu0 %v6279
      %6413 = vmatpush1.msra.mxu0 %v6278
      %6414 = vmatprep.subr.mxu0 %v6283
      %6415 = vmatpush1.msra.mxu0 %v6282
      %6416 = vmatprep.subr.mxu0 %v6287
      %6417 = vmatpush1.msra.mxu0 %v6286
      %6418 = vmatprep.subr.mxu0 %v6291
      %6419 = vmatpush1.msra.mxu0 %v6290
      %6420 = vmatprep.subr.mxu0 %v6295
      %6421 = vmatpush1.msra.mxu0 %v6294
      %6422 = vmatprep.subr.mxu0 %v6299
      %6423 = vmatpush1.msra.mxu0 %v6298
      %6424 = vmatprep.subr.mxu0 %v6303
      %6425 = vmatpush1.msra.mxu0 %v6302
      %6426 = vmatprep.subr.mxu0 %v6307
      %6427 = vmatpush1.msra.mxu0 %v6306
      %6428 = vmatprep.subr.mxu0 %v6311
      %6429 = vmatpush1.msra.mxu0 %v6310
      %6430 = vmatprep.subr.mxu0 %v6315
      %6431 = vmatpush1.msra.mxu0 %v6314
      %6432 = vmatprep.subr.mxu0 %v6319
      %6433 = vmatpush1.msra.mxu0 %v6318
      %6434 = vmatprep.subr.mxu0 %v6323
      %6435 = vmatpush1.msra.mxu0 %v6322
      %6436 = vmatprep.subr.mxu0 %v6327
      %6437 = vmatpush1.msra.mxu0 %v6326
      %6438 = vmatprep.subr.mxu0 %v6331
      %6439 = vmatpush1.msra.mxu0 %v6330
      %6440 = vmatprep.subr.mxu0 %v6335
      %6441 = vmatpush1.msra.mxu0 %v6334
      %6442 = vmatprep.subr.mxu0 %v6339
      %6443 = vmatpush1.msra.mxu0 %v6338
      %6444 = vmatprep.subr.mxu0 %v6343
      %6445 = vmatpush1.msra.mxu0 %v6342
      %6446 = vmatprep.subr.mxu0 %v6347
      %6447 = vmatpush1.msra.mxu0 %v6346
      %6448 = vmatprep.subr.mxu0 %v6351
      %6449 = vmatpush1.msra.mxu0 %v6350
      %6450 = vmatprep.subr.mxu0 %v6355
      %6451 = vmatpush1.msra.mxu0 %v6354
      %6452 = vmatprep.subr.mxu0 %v6359
      %6453 = vmatpush1.msra.mxu0 %v6358
      %6454 = vmatprep.subr.mxu0 %v6363
      %6455 = vmatpush1.msra.mxu0 %v6362
      %6456 = vmatprep.subr.mxu0 %v6367
      %6457 = vmatpush1.msra.mxu0 %v6366
      %6458 = vmatprep.subr.mxu0 %v6371
      %6459 = vmatpush1.msra.mxu0 %v6370
      %6460 = vmatprep.mubr.f32.mxu0 %v6231
      %6461 = vmatmul.mubr.f32.gmra.mrb[0].mxu0 %v6230
      %v6462 = vpop.f32.mrb[0].mxu0
      %v6463 = vadd.f32 %v6379, %v6462
      %v6464 = vpop.f32.mrb[0].mxu0
      %v6465 = vadd.f32 %v6383, %v6464
      %6466 = vmatprep.mubr.f32.mxu0 %v6233
      %6467 = vmatmul.mubr.f32.gmra.mrb[0].mxu0 %v6232
      %v6468 = vpop.f32.mrb[0].mxu0
      %v6469 = vadd.f32 %v6379, %v6468
      %v6470 = vpop.f32.mrb[0].mxu0
      %v6471 = vadd.f32 %v6383, %v6470
      %6472 = vmatprep.mubr.f32.mxu0 %v6235
      %6473 = vmatmul.mubr.f32.gmra.mrb[0].mxu0 %v6234
      %v6474 = vpop.f32.mrb[0].mxu0
      %v6475 = vadd.f32 %v6379, %v6474
      %v6476 = vpop.f32.mrb[0].mxu0
      %v6477 = vadd.f32 %v6383, %v6476
      %6478 = vmatprep.mubr.f32.mxu0 %v6237
      %6479 = vmatmul.mubr.f32.gmra.mrb[0].mxu0 %v6236
      %v6480 = vpop.f32.mrb[0].mxu0
      %v6481 = vadd.f32 %v6379, %v6480
      %v6482 = vpop.f32.mrb[0].mxu0
      %v6483 = vadd.f32 %v6383, %v6482
      %6484 = vmatprep.mubr.f32.mxu0 %v6239
      %6485 = vmatmul.mubr.f32.gmra.mrb[0].mxu0 %v6238
      %v6486 = vpop.f32.mrb[0].mxu0
      %v6487 = vadd.f32 %v6379, %v6486
      %v6488 = vpop.f32.mrb[0].mxu0
      %v6489 = vadd.f32 %v6383, %v6488
      %6490 = vmatprep.mubr.f32.mxu0 %v6241
      %6491 = vmatmul.mubr.f32.gmra.mrb[0].mxu0 %v6240
      %v6492 = vpop.f32.mrb[0].mxu0
      %v6493 = vadd.f32 %v6379, %v6492
      %v6494 = vpop.f32.mrb[0].mxu0
      %v6495 = vadd.f32 %v6383, %v6494
      %6496 = vmatprep.mubr.f32.mxu0 %v6243
      %6497 = vmatmul.mubr.f32.gmra.mrb[0].mxu0 %v6242
      %v6498 = vpop.f32.mrb[0].mxu0
      %v6499 = vadd.f32 %v6379, %v6498
      %v6500 = vpop.f32.mrb[0].mxu0
      %v6501 = vadd.f32 %v6383, %v6500
      %6502 = vmatprep.mubr.f32.mxu0 %v6245
      %6503 = vmatmul.mubr.f32.gmra.mrb[0].mxu0 %v6244
      %v6504 = vpop.f32.mrb[0].mxu0
      %v6505 = vadd.f32 %v6379, %v6504
      %v6506 = vpop.f32.mrb[0].mxu0
      %v6507 = vadd.f32 %v6383, %v6506
      %6508 = vdwg.mxu0
      %6509 = vmatprep.subr.mxu0 %v6249
      %6510 = vmatpush1.msra.mxu0 %v6248
      %6511 = vmatprep.subr.mxu0 %v6253
      %6512 = vmatpush1.msra.mxu0 %v6252
      %6513 = vmatprep.subr.mxu0 %v6257
      %6514 = vmatpush1.msra.mxu0 %v6256
      %6515 = vmatprep.subr.mxu0 %v6261
      %6516 = vmatpush1.msra.mxu0 %v6260
      %6517 = vmatprep.subr.mxu0 %v6265
      %6518 = vmatpush1.msra.mxu0 %v6264
      %6519 = vmatprep.subr.mxu0 %v6269
      %6520 = vmatpush1.msra.mxu0 %v6268
      %6521 = vmatprep.subr.mxu0 %v6273
      %6522 = vmatpush1.msra.mxu0 %v6272
      %6523 = vmatprep.subr.mxu0 %v6277
      %6524 = vmatpush1.msra.mxu0 %v6276
      %6525 = vmatprep.subr.mxu0 %v6281
      %6526 = vmatpush1.msra.mxu0 %v6280
      %6527 = vmatprep.subr.mxu0 %v6285
      %6528 = vmatpush1.msra.mxu0 %v6284
      %6529 = vmatprep.subr.mxu0 %v6289
      %6530 = vmatpush1.msra.mxu0 %v6288
      %6531 = vmatprep.subr.mxu0 %v6293
      %6532 = vmatpush1.msra.mxu0 %v6292
      %6533 = vmatprep.subr.mxu0 %v6297
      %6534 = vmatpush1.msra.mxu0 %v6296
      %6535 = vmatprep.subr.mxu0 %v6301
      %6536 = vmatpush1.msra.mxu0 %v6300
      %6537 = vmatprep.subr.mxu0 %v6305
      %6538 = vmatpush1.msra.mxu0 %v6304
      %6539 = vmatprep.subr.mxu0 %v6309
      %6540 = vmatpush1.msra.mxu0 %v6308
      %6541 = vmatprep.subr.mxu0 %v6313
      %6542 = vmatpush1.msra.mxu0 %v6312
      %6543 = vmatprep.subr.mxu0 %v6317
      %6544 = vmatpush1.msra.mxu0 %v6316
      %6545 = vmatprep.subr.mxu0 %v6321
      %6546 = vmatpush1.msra.mxu0 %v6320
      %6547 = vmatprep.subr.mxu0 %v6325
      %6548 = vmatpush1.msra.mxu0 %v6324
      %6549 = vmatprep.subr.mxu0 %v6329
      %6550 = vmatpush1.msra.mxu0 %v6328
      %6551 = vmatprep.subr.mxu0 %v6333
      %6552 = vmatpush1.msra.mxu0 %v6332
      %6553 = vmatprep.subr.mxu0 %v6337
      %6554 = vmatpush1.msra.mxu0 %v6336
      %6555 = vmatprep.subr.mxu0 %v6341
      %6556 = vmatpush1.msra.mxu0 %v6340
      %6557 = vmatprep.subr.mxu0 %v6345
      %6558 = vmatpush1.msra.mxu0 %v6344
      %6559 = vmatprep.subr.mxu0 %v6349
      %6560 = vmatpush1.msra.mxu0 %v6348
      %6561 = vmatprep.subr.mxu0 %v6353
      %6562 = vmatpush1.msra.mxu0 %v6352
      %6563 = vmatprep.subr.mxu0 %v6357
      %6564 = vmatpush1.msra.mxu0 %v6356
      %6565 = vmatprep.subr.mxu0 %v6361
      %6566 = vmatpush1.msra.mxu0 %v6360
      %6567 = vmatprep.subr.mxu0 %v6365
      %6568 = vmatpush1.msra.mxu0 %v6364
      %6569 = vmatprep.subr.mxu0 %v6369
      %6570 = vmatpush1.msra.mxu0 %v6368
      %6571 = vmatprep.subr.mxu0 %v6373
      %6572 = vmatpush1.msra.mxu0 %v6372
      %6573 = vmatprep.mubr.f32.mxu0 %v6231
      %6574 = vmatmul.mubr.f32.gmra.mrb[0].mxu0 %v6230
      %v6575 = vpop.f32.mrb[0].mxu0
      %v6576 = vadd.f32 %v6387, %v6575
      %v6577 = vpop.f32.mrb[0].mxu0
      %v6578 = vadd.f32 %v6391, %v6577
      %6579 = vmatprep.mubr.f32.mxu0 %v6233
      %6580 = vmatmul.mubr.f32.gmra.mrb[0].mxu0 %v6232
      %v6581 = vpop.f32.mrb[0].mxu0
      %v6582 = vadd.f32 %v6387, %v6581
      %v6583 = vpop.f32.mrb[0].mxu0
      %v6584 = vadd.f32 %v6391, %v6583
      %6585 = vmatprep.mubr.f32.mxu0 %v6235
      %6586 = vmatmul.mubr.f32.gmra.mrb[0].mxu0 %v6234
      %v6587 = vpop.f32.mrb[0].mxu0
      %v6588 = vadd.f32 %v6387, %v6587
      %v6589 = vpop.f32.mrb[0].mxu0
      %v6590 = vadd.f32 %v6391, %v6589
      %6591 = vmatprep.mubr.f32.mxu0 %v6237
      %6592 = vmatmul.mubr.f32.gmra.mrb[0].mxu0 %v6236
      %v6593 = vpop.f32.mrb[0].mxu0
      %v6594 = vadd.f32 %v6387, %v6593
      %v6595 = vpop.f32.mrb[0].mxu0
      %v6596 = vadd.f32 %v6391, %v6595
      %6597 = vmatprep.mubr.f32.mxu0 %v6239
      %6598 = vmatmul.mubr.f32.gmra.mrb[0].mxu0 %v6238
      %v6599 = vpop.f32.mrb[0].mxu0
      %v6600 = vadd.f32 %v6387, %v6599
      %v6601 = vpop.f32.mrb[0].mxu0
      %v6602 = vadd.f32 %v6391, %v6601
      %6603 = vmatprep.mubr.f32.mxu0 %v6241
      %6604 = vmatmul.mubr.f32.gmra.mrb[0].mxu0 %v6240
      %v6605 = vpop.f32.mrb[0].mxu0
      %v6606 = vadd.f32 %v6387, %v6605
      %v6607 = vpop.f32.mrb[0].mxu0
      %v6608 = vadd.f32 %v6391, %v6607
      %6609 = vmatprep.mubr.f32.mxu0 %v6243
      %6610 = vmatmul.mubr.f32.gmra.mrb[0].mxu0 %v6242
      %v6611 = vpop.f32.mrb[0].mxu0
      %v6612 = vadd.f32 %v6387, %v6611
      %v6613 = vpop.f32.mrb[0].mxu0
      %v6614 = vadd.f32 %v6391, %v6613
      %6615 = vmatprep.mubr.f32.mxu0 %v6245
      %6616 = vmatmul.mubr.f32.gmra.mrb[0].mxu0 %v6244
      %v6617 = vpop.f32.mrb[0].mxu0
      %v6618 = vadd.f32 %v6387, %v6617
      %v6619 = vpop.f32.mrb[0].mxu0
      %v6620 = vadd.f32 %v6391, %v6619
      %6621 = vdwg.mxu0
      %v6622 = vmax.f32 %v6463, 0.0
      %v6623 = vmax.f32 %v6465, 0.0
      %v6624 = vmax.f32 %v6576, 0.0
      %v6625 = vmax.f32 %v6578, 0.0
      %v6626 = vmax.f32 %v6469, 0.0
      %v6627 = vmax.f32 %v6471, 0.0
      %v6628 = vmax.f32 %v6582, 0.0
      %v6629 = vmax.f32 %v6584, 0.0
      %v6630 = vmax.f32 %v6475, 0.0
      %v6631 = vmax.f32 %v6477, 0.0
      %v6632 = vmax.f32 %v6588, 0.0
      %v6633 = vmax.f32 %v6590, 0.0
      %v6634 = vmax.f32 %v6481, 0.0
      %v6635 = vmax.f32 %v6483, 0.0
      %v6636 = vmax.f32 %v6594, 0.0
      %v6637 = vmax.f32 %v6596, 0.0
      %v6638 = vmax.f32 %v6487, 0.0
      %v6639 = vmax.f32 %v6489, 0.0
      %v6640 = vmax.f32 %v6600, 0.0
      %v6641 = vmax.f32 %v6602, 0.0
      %v6642 = vmax.f32 %v6493, 0.0
      %v6643 = vmax.f32 %v6495, 0.0
      %v6644 = vmax.f32 %v6606, 0.0
      %v6645 = vmax.f32 %v6608, 0.0
      %v6646 = vmax.f32 %v6499, 0.0
      %v6647 = vmax.f32 %v6501, 0.0
      %v6648 = vmax.f32 %v6612, 0.0
      %v6649 = vmax.f32 %v6614, 0.0
      %v6650 = vmax.f32 %v6505, 0.0
      %v6651 = vmax.f32 %v6507, 0.0
      %v6652 = vmax.f32 %v6618, 0.0
      %v6653 = vmax.f32 %v6620, 0.0
      %v6654 = vld [vmem:[%s9] sm:$0xff]
      %v6655 = vld [vmem:[%s9 + $0x8] sm:$0xff]
      %v6656 = vld [vmem:[%s9 + $0x10] sm:$0xff]
      %v6657 = vld [vmem:[%s9 + $0x18] sm:$0xff]
      %v6658 = vld [vmem:[%s9 + $0x20] sm:$0xff]
      %v6659 = vld [vmem:[%s9 + $0x28] sm:$0xff]
      %v6660 = vld [vmem:[%s9 + $0x30] sm:$0xff]
      %v6661 = vld [vmem:[%s9 + $0x38] sm:$0xff]
      %v6662 = vld [vmem:[%s9 + $0x40] sm:$0xff]
      %v6663 = vld [vmem:[%s9 + $0x48] sm:$0xff]
      %v6664 = vld [vmem:[%s9 + $0x50] sm:$0xff]
      %v6665 = vld [vmem:[%s9 + $0x58] sm:$0xff]
      %v6666 = vld [vmem:[%s9 + $0x60] sm:$0xff]
      %v6667 = vld [vmem:[%s9 + $0x68] sm:$0xff]
      %v6668 = vld [vmem:[%s9 + $0x70] sm:$0xff]
      %v6669 = vld [vmem:[%s9 + $0x78] sm:$0xff]
      %v6670 = vld [vmem:[%s9 + $0x80] sm:$0xff]
      %v6671 = vld [vmem:[%s9 + $0x88] sm:$0xff]
      %v6672 = vld [vmem:[%s9 + $0x90] sm:$0xff]
      %v6673 = vld [vmem:[%s9 + $0x98] sm:$0xff]
      %v6674 = vld [vmem:[%s9 + $0xa0] sm:$0xff]
      %v6675 = vld [vmem:[%s9 + $0xa8] sm:$0xff]
      %v6676 = vld [vmem:[%s9 + $0xb0] sm:$0xff]
      %v6677 = vld [vmem:[%s9 + $0xb8] sm:$0xff]
      %v6678 = vld [vmem:[%s9 + $0xc0] sm:$0xff]
      %v6679 = vld [vmem:[%s9 + $0xc8] sm:$0xff]
      %v6680 = vld [vmem:[%s9 + $0xd0] sm:$0xff]
      %v6681 = vld [vmem:[%s9 + $0xd8] sm:$0xff]
      %v6682 = vld [vmem:[%s9 + $0xe0] sm:$0xff]
      %v6683 = vld [vmem:[%s9 + $0xe8] sm:$0xff]
      %v6684 = vld [vmem:[%s9 + $0xf0] sm:$0xff]
      %v6685 = vld [vmem:[%s9 + $0xf8] sm:$0xff]
      %v6686 = vld [vmem:[%s9 + $0x100] sm:$0xff]
      %v6687 = vld [vmem:[%s9 + $0x108] sm:$0xff]
      %v6688 = vld [vmem:[%s9 + $0x110] sm:$0xff]
      %v6689 = vld [vmem:[%s9 + $0x118] sm:$0xff]
      %v6690 = vld [vmem:[%s9 + $0x120] sm:$0xff]
      %v6691 = vld [vmem:[%s9 + $0x128] sm:$0xff]
      %v6692 = vld [vmem:[%s9 + $0x130] sm:$0xff]
      %v6693 = vld [vmem:[%s9 + $0x138] sm:$0xff]
      %v6694 = vld [vmem:[%s9 + $0x140] sm:$0xff]
      %v6695 = vld [vmem:[%s9 + $0x148] sm:$0xff]
      %v6696 = vld [vmem:[%s9 + $0x150] sm:$0xff]
      %v6697 = vld [vmem:[%s9 + $0x158] sm:$0xff]
      %v6698 = vld [vmem:[%s9 + $0x160] sm:$0xff]
      %v6699 = vld [vmem:[%s9 + $0x168] sm:$0xff]
      %v6700 = vld [vmem:[%s9 + $0x170] sm:$0xff]
      %v6701 = vld [vmem:[%s9 + $0x178] sm:$0xff]
      %v6702 = vld [vmem:[%s9 + $0x180] sm:$0xff]
      %v6703 = vld [vmem:[%s9 + $0x188] sm:$0xff]
      %v6704 = vld [vmem:[%s9 + $0x190] sm:$0xff]
      %v6705 = vld [vmem:[%s9 + $0x198] sm:$0xff]
      %v6706 = vld [vmem:[%s9 + $0x1a0] sm:$0xff]
      %v6707 = vld [vmem:[%s9 + $0x1a8] sm:$0xff]
      %v6708 = vld [vmem:[%s9 + $0x1b0] sm:$0xff]
      %v6709 = vld [vmem:[%s9 + $0x1b8] sm:$0xff]
      %v6710 = vld [vmem:[%s9 + $0x1c0] sm:$0xff]
      %v6711 = vld [vmem:[%s9 + $0x1c8] sm:$0xff]
      %v6712 = vld [vmem:[%s9 + $0x1d0] sm:$0xff]
      %v6713 = vld [vmem:[%s9 + $0x1d8] sm:$0xff]
      %v6714 = vld [vmem:[%s9 + $0x1e0] sm:$0xff]
      %v6715 = vld [vmem:[%s9 + $0x1e8] sm:$0xff]
      %v6716 = vld [vmem:[%s9 + $0x1f0] sm:$0xff]
      %v6717 = vld [vmem:[%s9 + $0x1f8] sm:$0xff]
      %v6718 = vld [vmem:[%s10] sm:$0x1]
      %v6720 = vlaneseq
      %v6721 = vshrl.u32 %v6720, 7
      %v6722 = vsub.s32 0, %v6721
      %v6723 = vrot.slane %v6718, %v6722
      %6725 = vmatprep.subr.mxu0 0.0
      %6726 = vmatpush1.msra.mxu0 %v6654
      %6727 = vmatprep.subr.mxu0 0.0
      %6728 = vmatpush1.msra.mxu0 %v6655
      %6729 = vmatprep.subr.mxu0 0.0
      %6730 = vmatpush1.msra.mxu0 %v6656
      %6731 = vmatprep.subr.mxu0 0.0
      %6732 = vmatpush1.msra.mxu0 %v6657
      %6733 = vmatprep.subr.mxu0 0.0
      %6734 = vmatpush1.msra.mxu0 %v6658
      %6735 = vmatprep.subr.mxu0 0.0
      %6736 = vmatpush1.msra.mxu0 %v6659
      %6737 = vmatprep.subr.mxu0 0.0
      %6738 = vmatpush1.msra.mxu0 %v6660
      %6739 = vmatprep.subr.mxu0 0.0
      %6740 = vmatpush1.msra.mxu0 %v6661
      %6741 = vmatprep.subr.mxu0 0.0
      %6742 = vmatpush1.msra.mxu0 %v6662
      %6743 = vmatprep.subr.mxu0 0.0
      %6744 = vmatpush1.msra.mxu0 %v6663
      %6745 = vmatprep.subr.mxu0 0.0
      %6746 = vmatpush1.msra.mxu0 %v6664
      %6747 = vmatprep.subr.mxu0 0.0
      %6748 = vmatpush1.msra.mxu0 %v6665
      %6749 = vmatprep.subr.mxu0 0.0
      %6750 = vmatpush1.msra.mxu0 %v6666
      %6751 = vmatprep.subr.mxu0 0.0
      %6752 = vmatpush1.msra.mxu0 %v6667
      %6753 = vmatprep.subr.mxu0 0.0
      %6754 = vmatpush1.msra.mxu0 %v6668
      %6755 = vmatprep.subr.mxu0 0.0
      %6756 = vmatpush1.msra.mxu0 %v6669
      %6757 = vmatprep.subr.mxu0 0.0
      %6758 = vmatpush1.msra.mxu0 %v6670
      %6759 = vmatprep.subr.mxu0 0.0
      %6760 = vmatpush1.msra.mxu0 %v6671
      %6761 = vmatprep.subr.mxu0 0.0
      %6762 = vmatpush1.msra.mxu0 %v6672
      %6763 = vmatprep.subr.mxu0 0.0
      %6764 = vmatpush1.msra.mxu0 %v6673
      %6765 = vmatprep.subr.mxu0 0.0
      %6766 = vmatpush1.msra.mxu0 %v6674
      %6767 = vmatprep.subr.mxu0 0.0
      %6768 = vmatpush1.msra.mxu0 %v6675
      %6769 = vmatprep.subr.mxu0 0.0
      %6770 = vmatpush1.msra.mxu0 %v6676
      %6771 = vmatprep.subr.mxu0 0.0
      %6772 = vmatpush1.msra.mxu0 %v6677
      %6773 = vmatprep.subr.mxu0 0.0
      %6774 = vmatpush1.msra.mxu0 %v6678
      %6775 = vmatprep.subr.mxu0 0.0
      %6776 = vmatpush1.msra.mxu0 %v6679
      %6777 = vmatprep.subr.mxu0 0.0
      %6778 = vmatpush1.msra.mxu0 %v6680
      %6779 = vmatprep.subr.mxu0 0.0
      %6780 = vmatpush1.msra.mxu0 %v6681
      %6781 = vmatprep.subr.mxu0 0.0
      %6782 = vmatpush1.msra.mxu0 %v6682
      %6783 = vmatprep.subr.mxu0 0.0
      %6784 = vmatpush1.msra.mxu0 %v6683
      %6785 = vmatprep.subr.mxu0 0.0
      %6786 = vmatpush1.msra.mxu0 %v6684
      %6787 = vmatprep.subr.mxu0 0.0
      %6788 = vmatpush1.msra.mxu0 %v6685
      %6789 = vmatprep.mubr.f32.mxu0 %v6623
      %6790 = vmatmul.mubr.f32.gmra.mrb[0].mxu0 %v6622
      %v6791 = vpop.f32.mrb[0].mxu0
      %v6792 = vadd.f32 %v6723, %v6791
      %v6793 = vpop.f32.mrb[0].mxu0
      %6794 = vmatprep.mubr.f32.mxu0 %v6627
      %6795 = vmatmul.mubr.f32.gmra.mrb[0].mxu0 %v6626
      %v6796 = vpop.f32.mrb[0].mxu0
      %v6797 = vadd.f32 %v6723, %v6796
      %v6798 = vpop.f32.mrb[0].mxu0
      %6799 = vmatprep.mubr.f32.mxu0 %v6631
      %6800 = vmatmul.mubr.f32.gmra.mrb[0].mxu0 %v6630
      %v6801 = vpop.f32.mrb[0].mxu0
      %v6802 = vadd.f32 %v6723, %v6801
      %v6803 = vpop.f32.mrb[0].mxu0
      %6804 = vmatprep.mubr.f32.mxu0 %v6635
      %6805 = vmatmul.mubr.f32.gmra.mrb[0].mxu0 %v6634
      %v6806 = vpop.f32.mrb[0].mxu0
      %v6807 = vadd.f32 %v6723, %v6806
      %v6808 = vpop.f32.mrb[0].mxu0
      %6809 = vmatprep.mubr.f32.mxu0 %v6639
      %6810 = vmatmul.mubr.f32.gmra.mrb[0].mxu0 %v6638
      %v6811 = vpop.f32.mrb[0].mxu0
      %v6812 = vadd.f32 %v6723, %v6811
      %v6813 = vpop.f32.mrb[0].mxu0
      %6814 = vmatprep.mubr.f32.mxu0 %v6643
      %6815 = vmatmul.mubr.f32.gmra.mrb[0].mxu0 %v6642
      %v6816 = vpop.f32.mrb[0].mxu0
      %v6817 = vadd.f32 %v6723, %v6816
      %v6818 = vpop.f32.mrb[0].mxu0
      %6819 = vmatprep.mubr.f32.mxu0 %v6647
      %6820 = vmatmul.mubr.f32.gmra.mrb[0].mxu0 %v6646
      %v6821 = vpop.f32.mrb[0].mxu0
      %v6822 = vadd.f32 %v6723, %v6821
      %v6823 = vpop.f32.mrb[0].mxu0
      %6824 = vmatprep.mubr.f32.mxu0 %v6651
      %6825 = vmatmul.mubr.f32.gmra.mrb[0].mxu0 %v6650
      %v6826 = vpop.f32.mrb[0].mxu0
      %v6827 = vadd.f32 %v6723, %v6826
      %v6828 = vpop.f32.mrb[0].mxu0
      %6829 = vdwg.mxu0
      %6830 = vmatprep.subr.mxu0 0.0
      %6831 = vmatpush1.msra.mxu0 %v6686
      %6832 = vmatprep.subr.mxu0 0.0
      %6833 = vmatpush1.msra.mxu0 %v6687
      %6834 = vmatprep.subr.mxu0 0.0
      %6835 = vmatpush1.msra.mxu0 %v6688
      %6836 = vmatprep.subr.mxu0 0.0
      %6837 = vmatpush1.msra.mxu0 %v6689
      %6838 = vmatprep.subr.mxu0 0.0
      %6839 = vmatpush1.msra.mxu0 %v6690
      %6840 = vmatprep.subr.mxu0 0.0
      %6841 = vmatpush1.msra.mxu0 %v6691
      %6842 = vmatprep.subr.mxu0 0.0
      %6843 = vmatpush1.msra.mxu0 %v6692
      %6844 = vmatprep.subr.mxu0 0.0
      %6845 = vmatpush1.msra.mxu0 %v6693
      %6846 = vmatprep.subr.mxu0 0.0
      %6847 = vmatpush1.msra.mxu0 %v6694
      %6848 = vmatprep.subr.mxu0 0.0
      %6849 = vmatpush1.msra.mxu0 %v6695
      %6850 = vmatprep.subr.mxu0 0.0
      %6851 = vmatpush1.msra.mxu0 %v6696
      %6852 = vmatprep.subr.mxu0 0.0
      %6853 = vmatpush1.msra.mxu0 %v6697
      %6854 = vmatprep.subr.mxu0 0.0
      %6855 = vmatpush1.msra.mxu0 %v6698
      %6856 = vmatprep.subr.mxu0 0.0
      %6857 = vmatpush1.msra.mxu0 %v6699
      %6858 = vmatprep.subr.mxu0 0.0
      %6859 = vmatpush1.msra.mxu0 %v6700
      %6860 = vmatprep.subr.mxu0 0.0
      %6861 = vmatpush1.msra.mxu0 %v6701
      %6862 = vmatprep.subr.mxu0 0.0
      %6863 = vmatpush1.msra.mxu0 %v6702
      %6864 = vmatprep.subr.mxu0 0.0
      %6865 = vmatpush1.msra.mxu0 %v6703
      %6866 = vmatprep.subr.mxu0 0.0
      %6867 = vmatpush1.msra.mxu0 %v6704
      %6868 = vmatprep.subr.mxu0 0.0
      %6869 = vmatpush1.msra.mxu0 %v6705
      %6870 = vmatprep.subr.mxu0 0.0
      %6871 = vmatpush1.msra.mxu0 %v6706
      %6872 = vmatprep.subr.mxu0 0.0
      %6873 = vmatpush1.msra.mxu0 %v6707
      %6874 = vmatprep.subr.mxu0 0.0
      %6875 = vmatpush1.msra.mxu0 %v6708
      %6876 = vmatprep.subr.mxu0 0.0
      %6877 = vmatpush1.msra.mxu0 %v6709
      %6878 = vmatprep.subr.mxu0 0.0
      %6879 = vmatpush1.msra.mxu0 %v6710
      %6880 = vmatprep.subr.mxu0 0.0
      %6881 = vmatpush1.msra.mxu0 %v6711
      %6882 = vmatprep.subr.mxu0 0.0
      %6883 = vmatpush1.msra.mxu0 %v6712
      %6884 = vmatprep.subr.mxu0 0.0
      %6885 = vmatpush1.msra.mxu0 %v6713
      %6886 = vmatprep.subr.mxu0 0.0
      %6887 = vmatpush1.msra.mxu0 %v6714
      %6888 = vmatprep.subr.mxu0 0.0
      %6889 = vmatpush1.msra.mxu0 %v6715
      %6890 = vmatprep.subr.mxu0 0.0
      %6891 = vmatpush1.msra.mxu0 %v6716
      %6892 = vmatprep.subr.mxu0 0.0
      %6893 = vmatpush1.msra.mxu0 %v6717
      %6894 = vmatprep.mubr.f32.mxu0 %v6625
      %6895 = vmatmul.mubr.f32.gmra.mrb[0].mxu0 %v6624
      %v6896 = vpop.f32.mrb[0].mxu0
      %v6897 = vadd.f32 %v6792, %v6896
      %v6898 = vpop.f32.mrb[0].mxu0
      %6899 = vmatprep.mubr.f32.mxu0 %v6629
      %6900 = vmatmul.mubr.f32.gmra.mrb[0].mxu0 %v6628
      %v6901 = vpop.f32.mrb[0].mxu0
      %v6902 = vadd.f32 %v6797, %v6901
      %v6903 = vpop.f32.mrb[0].mxu0
      %6904 = vmatprep.mubr.f32.mxu0 %v6633
      %6905 = vmatmul.mubr.f32.gmra.mrb[0].mxu0 %v6632
      %v6906 = vpop.f32.mrb[0].mxu0
      %v6907 = vadd.f32 %v6802, %v6906
      %v6908 = vpop.f32.mrb[0].mxu0
      %6909 = vmatprep.mubr.f32.mxu0 %v6637
      %6910 = vmatmul.mubr.f32.gmra.mrb[0].mxu0 %v6636
      %v6911 = vpop.f32.mrb[0].mxu0
      %v6912 = vadd.f32 %v6807, %v6911
      %v6913 = vpop.f32.mrb[0].mxu0
      %6914 = vmatprep.mubr.f32.mxu0 %v6641
      %6915 = vmatmul.mubr.f32.gmra.mrb[0].mxu0 %v6640
      %v6916 = vpop.f32.mrb[0].mxu0
      %v6917 = vadd.f32 %v6812, %v6916
      %v6918 = vpop.f32.mrb[0].mxu0
      %6919 = vmatprep.mubr.f32.mxu0 %v6645
      %6920 = vmatmul.mubr.f32.gmra.mrb[0].mxu0 %v6644
      %v6921 = vpop.f32.mrb[0].mxu0
      %v6922 = vadd.f32 %v6817, %v6921
      %v6923 = vpop.f32.mrb[0].mxu0
      %6924 = vmatprep.mubr.f32.mxu0 %v6649
      %6925 = vmatmul.mubr.f32.gmra.mrb[0].mxu0 %v6648
      %v6926 = vpop.f32.mrb[0].mxu0
      %v6927 = vadd.f32 %v6822, %v6926
      %v6928 = vpop.f32.mrb[0].mxu0
      %6929 = vmatprep.mubr.f32.mxu0 %v6653
      %6930 = vmatmul.mubr.f32.gmra.mrb[0].mxu0 %v6652
      %v6931 = vpop.f32.mrb[0].mxu0
      %v6932 = vadd.f32 %v6827, %v6931
      %v6933 = vpop.f32.mrb[0].mxu0
      %6934 = vdwg.mxu0
      %vm6935 = vcmask 97280
      %6936 = vst.msk [vmem:[%s386] sm:$0xff] %vm6935, %v6897
      %6937 = vst.msk [vmem:[%s386 + $0x8] sm:$0xff] %vm6935, %v6902
      %6938 = vst.msk [vmem:[%s386 + $0x10] sm:$0xff] %vm6935, %v6907
      %6939 = vst.msk [vmem:[%s386 + $0x18] sm:$0xff] %vm6935, %v6912
      %6940 = vst.msk [vmem:[%s386 + $0x20] sm:$0xff] %vm6935, %v6917
      %6941 = vst.msk [vmem:[%s386 + $0x28] sm:$0xff] %vm6935, %v6922
      %6942 = vst.msk [vmem:[%s386 + $0x30] sm:$0xff] %vm6935, %v6927
      %6943 = vst.msk [vmem:[%s386 + $0x38] sm:$0xff] %vm6935, %v6932
      %p6944 = scmp.lt.s32.totalorder %s22, 1
      %s6945 = scalar_select %p6944, %s22, 1
      %s6946 = smul.addr %s6945, 8
      %s6947 = smul.addr %s6946, 8
      %s6948 = scalar_lea.vmem %s11, %s6947
      // Predicated region
      $region65: #{cnn_forward.1} parent=63 // pred_check
        %p6949 = pneg %p276
      $region66: #{cnn_forward.1} parent=63 // pred_check_branch
        %6951 = sbr.rel (%p6949) target = $region68
      $region67: #{cnn_forward.1} parent=63 // pred_region
        _
      $region68: #{cnn_forward.1} parent=63 // pred_fallthru
        _
    $region64: #{cnn_forward.1} parent=5 // pred_fallthru
      _
    %p6952 = scmp.le.s32.totalorder 2, %s17
    // Predicated region
    $region69: #{cnn_forward.1} parent=5 // pred_check
      %p6953 = pneg %p6952
    $region70: #{cnn_forward.1} parent=5 // pred_check_branch
      %6955 = sbr.rel (%p6953) target = $region72
    $region71: #{cnn_forward.1} parent=5 // pred_region
      %s6956 = ssub.s32 %s17, 2
      // Predicated region
      $region73: #{cnn_forward.1} parent=71 // pred_check
        %p6957 = pneg %p282
      $region74: #{cnn_forward.1} parent=71 // pred_check_branch
        %6959 = sbr.rel (%p6957) target = $region76
      $region75: #{cnn_forward.1} parent=71 // pred_region
        %p6960 = scmp.lt.s32.totalorder %s23, 1
        %s6961 = scalar_select %p6960, %s23, 1
        %s6962 = smul.addr %s6961, 8
        %s6963 = smul.addr %s6962, 8
        %s6964 = scalar_lea.vmem %s11, %s6963
      $region76: #{cnn_forward.1} parent=71 // pred_fallthru
        _
    $region72: #{cnn_forward.1} parent=5 // pred_fallthru
      _
  $region6: #{cnn_forward.1} parent=0 // loop_footer
    %s21 = sadd.s32 1, %s17
  $region7: #{cnn_forward.1} parent=0 // loop_footer_branch
    %16 = sbr.rel target = $region3
  $region8: #{cnn_forward.1} parent=0 // loop_exit
    _

</llo_original>
